<compile_context>
chip_gen: v7x
topology: tpu7x:2x2x1
jax: 0.10.0
libtpu: 0.0.40
codegen_flags: <defaults>
</compile_context>

<pallas_src>
import functools

import numpy as np
import jax
import jax.numpy as jnp
from jax import lax
from jax.experimental import pallas as pl
from jax.experimental.pallas import tpu as pltpu


# ------------------------------ fused kernel -------------------------------


def _net_kernel(p1_ref, w1_ref, b1_ref, w2_ref, b2_ref,
                g1_ref, fb1_ref, fw2_ref, fb2_ref, fw3_ref, fb3_ref,
                out_ref,
                s1_ref, xp2_ref, s2_ref, p2_ref,
                *, B, H, W):
    H2, W2 = H // 2, W // 2
    H4, W4 = H // 4, W // 4
    C1 = w1_ref.shape[1]          # 32
    C2 = w2_ref.shape[3]          # 64

    # ---- conv1 (im2col matmul, K padded to 32) + bias + ReLU -------------
    y1 = jnp.dot(p1_ref[...], w1_ref[...], preferred_element_type=jnp.float32)
    y1 = jnp.maximum(y1 + b1_ref[...], 0.0)                 # (B*H*W, C1)

    # ---- maxpool 2x2 #1 (fused epilogue) ---------------------------------
    # h-pool: free leading-dim regroup + pairwise max on values.
    y1 = y1.reshape(B * H // 2, 2, W, C1)
    s1_ref[...] = jnp.maximum(y1[:, 0], y1[:, 1])           # (B*H2, W, C1)
    # w-pool: strided sublane reads from VMEM scratch.
    a1 = jnp.maximum(s1_ref[:, pl.ds(0, W2, 2), :],
                     s1_ref[:, pl.ds(1, W2, 2), :])         # (B*H2, W2, C1)

    # ---- in-kernel 'same' zero padding for conv2 -------------------------
    xp2_ref[...] = jnp.zeros(xp2_ref.shape, jnp.float32)
    xp2_ref[:, 2:2 + H2, 2:2 + W2, :] = a1.reshape(B, H2, W2, C1)

    # ---- conv2: 25 shifted-slice matmuls, f32 accumulation ---------------
    acc = jnp.zeros((B * H2 * W2, C2), jnp.float32)
    for kh in range(5):
        for kw in range(5):
            sl = xp2_ref[:, kh:kh + H2, kw:kw + W2, :]      # (B, H2, W2, C1)
            acc = acc + jnp.dot(sl.reshape(B * H2 * W2, C1), w2_ref[kh, kw],
                                preferred_element_type=jnp.float32)
    y2 = jnp.maximum(acc + b2_ref[...], 0.0)                # (B*H2*W2, C2)

    # ---- maxpool 2x2 #2 (fused epilogue) ---------------------------------
    y2 = y2.reshape(B * H2 // 2, 2, W2, C2)
    s2_ref[...] = jnp.maximum(y2[:, 0], y2[:, 1])           # (B*H4, W2, C2)
    a2 = jnp.maximum(s2_ref[:, pl.ds(0, W4, 2), :],
                     s2_ref[:, pl.ds(1, W4, 2), :])         # (B*H4, W4, C2)
    p2_ref[...] = a2.reshape(B, H4, W4, C2)

    # ---- fc1 + ReLU (flatten permutation folded into g1 host-side) -------
    h1 = jnp.zeros((B, g1_ref.shape[2]), jnp.float32)
    for hh in range(H4):
        for ww in range(W4):
            s = hh * W4 + ww
            h1 = h1 + jnp.dot(p2_ref[:, hh, ww, :], g1_ref[s],
                              preferred_element_type=jnp.float32)
    h1 = jnp.maximum(h1 + fb1_ref[...], 0.0)                # (B, 512)

    # ---- fc2 + ReLU, fc3 --------------------------------------------------
    h2 = jnp.dot(h1, fw2_ref[...], preferred_element_type=jnp.float32) + fb2_ref[...]
    h2 = jnp.maximum(h2, 0.0)                               # (B, 256)
    out = jnp.dot(h2, fw3_ref[...], preferred_element_type=jnp.float32) + fb3_ref[...]
    out_ref[...] = out.astype(out_ref.dtype)                # (B, A)


# ------------------------------- JAX glue -----------------------------------


def _conv1_patches(x_nhwc, k_pad):
    """5x5 'same' patches for the 1-channel input -> (B*H*W, k_pad)."""
    B, H, W, C = x_nhwc.shape
    xp = jnp.pad(x_nhwc, ((0, 0), (2, 2), (2, 2), (0, 0)))
    cols = []
    for kh in range(5):
        for kw in range(5):
            cols.append(xp[:, kh:kh + H, kw:kw + W, :])
    pat = jnp.concatenate(cols, axis=-1).reshape(B * H * W, 25 * C)
    return jnp.pad(pat, ((0, 0), (0, k_pad - 25 * C)))


def prepare_params(p, H, W):
    """One-time host/XLA-side prep: matmul-shaped, K-padded, permuted weights."""
    H4, W4 = H // 4, W // 4
    K1 = 32                                            # conv1 K padded 25 -> 32
    w1m = jnp.pad(p["w1"].reshape(25, 32), ((0, K1 - 25), (0, 0)))
    # fold torch's NCHW flatten (c, h, w ordering) into fc1's weight rows so
    # the kernel can consume the NHWC-ordered pooled activation directly.
    g1 = (p["fw1"].reshape(64, H4, W4, 512)
          .transpose(1, 2, 0, 3)
          .reshape(H4 * W4, 64, 512))
    return {
        "w1": w1m, "b1": p["b1"].reshape(1, 32),
        "w2": p["w2"], "b2": p["b2"].reshape(1, 64),
        "g1": g1, "fb1": p["fb1"].reshape(1, 512),
        "fw2": p["fw2"], "fb2": p["fb2"].reshape(1, 256),
        "fw3": p["fw3"], "fb3": p["fb3"].reshape(1, -1),
    }


def net_forward(x_nchw, q):
    """Forward pass equivalent to NET.forward (params pre-processed by prepare_params)."""
    B, Cin, H, W = x_nchw.shape
    assert Cin == 1 and H % 4 == 0 and W % 4 == 0, (B, Cin, H, W)
    A = q["fb3"].shape[1]
    H2, W2, H4, W4 = H // 2, W // 2, H // 4, W // 4

    x = jnp.transpose(x_nchw.astype(jnp.float32), (0, 2, 3, 1))   # NHWC
    patches = _conv1_patches(x, 32)                               # (B*H*W, 32)

    vmem = pl.BlockSpec(memory_space=pltpu.MemorySpace.VMEM)
    kernel = functools.partial(_net_kernel, B=B, H=H, W=W)
    return pl.pallas_call(
        kernel,
        out_shape=jax.ShapeDtypeStruct((B, A), jnp.float32),
        in_specs=[vmem] * 11,
        out_specs=vmem,
        scratch_shapes=[
            pltpu.VMEM((B * H2, W, 32), jnp.float32),             # h-pooled conv1
            pltpu.VMEM((B, H2 + 4, W2 + 4, 32), jnp.float32),     # padded conv2 input
            pltpu.VMEM((B * H4, W2, 64), jnp.float32),            # h-pooled conv2
            pltpu.VMEM((B, H4, W4, 64), jnp.float32),             # pooled conv2
        ],
    )(patches, q["w1"], q["b1"], q["w2"], q["b2"],
      q["g1"], q["fb1"], q["fw2"], q["fb2"], q["fw3"], q["fb3"])


# --------------------------- params & reference ----------------------------


def init_params(key, H, W, action_dim):
    ks = jax.random.split(key, 10)

    def rnd(k, shape, scale):
        return scale * jax.random.normal(k, shape, jnp.float32)

    flat = (H // 4) * (W // 4) * 64
    return {
        # conv weights stored HWIO (kh, kw, cin, cout)
        "w1": rnd(ks[0], (5, 5, 1, 32), 0.10), "b1": rnd(ks[1], (32,), 0.10),
        "w2": rnd(ks[2], (5, 5, 32, 64), 0.05), "b2": rnd(ks[3], (64,), 0.10),
        "fw1": rnd(ks[4], (flat, 512), 0.03), "fb1": rnd(ks[5], (512,), 0.10),
        "fw2": rnd(ks[6], (512, 256), 0.05), "fb2": rnd(ks[7], (256,), 0.10),
        "fw3": rnd(ks[8], (256, action_dim), 0.05), "fb3": rnd(ks[9], (action_dim,), 0.10),
    }


def reference_forward(x_nchw, p):
    hp = lax.Precision.HIGHEST
    dn = ("NHWC", "HWIO", "NHWC")
    x = jnp.transpose(x_nchw.astype(jnp.float32), (0, 2, 3, 1))
    y = lax.conv_general_dilated(x, p["w1"], (1, 1), "SAME",
                                 dimension_numbers=dn, precision=hp) + p["b1"]
    y = jax.nn.relu(y)
    y = lax.reduce_window(y, -jnp.inf, lax.max, (1, 2, 2, 1), (1, 2, 2, 1), "VALID")
    y = lax.conv_general_dilated(y, p["w2"], (1, 1), "SAME",
                                 dimension_numbers=dn, precision=hp) + p["b2"]
    y = jax.nn.relu(y)
    y = lax.reduce_window(y, -jnp.inf, lax.max, (1, 2, 2, 1), (1, 2, 2, 1), "VALID")
    B = x.shape[0]
    feat = jnp.transpose(y, (0, 3, 1, 2)).reshape(B, -1)   # torch-style NCHW flatten
    h = jax.nn.relu(jnp.dot(feat, p["fw1"], precision=hp) + p["fb1"])
    h = jax.nn.relu(jnp.dot(h, p["fw2"], precision=hp) + p["fb2"])
    return jnp.dot(h, p["fw3"], precision=hp) + p["fb3"]


# ---------------------------------- main ------------------------------------

if __name__ == "__main__":
    key = jax.random.PRNGKey(0)
    k_x, k_p = jax.random.split(key)

    obs_h = obs_w = 16          # must be divisible by 4 (two 2x2 pools)
    action_space = 4
    batch = 2

    x = jax.random.normal(k_x, (batch, 1, obs_h, obs_w), jnp.float32)
    params = init_params(k_p, obs_h, obs_w, action_space)
    prepared = prepare_params(params, obs_h, obs_w)   # one-time weight prep

    out = jax.jit(net_forward)(x, prepared)
    out = jax.block_until_ready(out)
    assert out.shape == (batch, action_space), out.shape

    ref = reference_forward(x, params)
    np.testing.assert_allclose(np.asarray(out), np.asarray(ref), rtol=5e-3, atol=5e-3)

    print("KERNEL_OK")
</pallas_src>

<mosaic_0001>
module attributes {stable_mosaic.version = 11 : i64} {
  func.func @_net_kernel(%arg0: memref<512x32xf32, #tpu.memory_space<vmem>>, %arg1: memref<32x32xf32, #tpu.memory_space<vmem>>, %arg2: memref<1x32xf32, #tpu.memory_space<vmem>>, %arg3: memref<5x5x32x64xf32, #tpu.memory_space<vmem>>, %arg4: memref<1x64xf32, #tpu.memory_space<vmem>>, %arg5: memref<16x64x512xf32, #tpu.memory_space<vmem>>, %arg6: memref<1x512xf32, #tpu.memory_space<vmem>>, %arg7: memref<512x256xf32, #tpu.memory_space<vmem>>, %arg8: memref<1x256xf32, #tpu.memory_space<vmem>>, %arg9: memref<256x4xf32, #tpu.memory_space<vmem>>, %arg10: memref<1x4xf32, #tpu.memory_space<vmem>>, %arg11: memref<2x4xf32, #tpu.memory_space<vmem>>, %arg12: memref<16x16x32xf32, #tpu.memory_space<vmem>>, %arg13: memref<2x12x12x32xf32, #tpu.memory_space<vmem>>, %arg14: memref<8x8x64xf32, #tpu.memory_space<vmem>>, %arg15: memref<2x4x4x64xf32, #tpu.memory_space<vmem>>) attributes {dimension_semantics = [], scalar_prefetch = 0 : i64, scratch_operands = 4 : i64, tpu.core_type = #tpu.core_type<tc>} {
    %c0 = arith.constant 0 : index
    %c0_0 = arith.constant 0 : index
    %0 = vector.load %arg0[%c0, %c0_0] : memref<512x32xf32, #tpu.memory_space<vmem>>, vector<512x32xf32>
    %c0_1 = arith.constant 0 : index
    %c0_2 = arith.constant 0 : index
    %1 = vector.load %arg1[%c0_1, %c0_2] : memref<32x32xf32, #tpu.memory_space<vmem>>, vector<32x32xf32>
    %cst = arith.constant dense<0.000000e+00> : vector<512x32xf32>
    %2 = tpu.matmul %0, %1, %cst {dimension_numbers = #tpu.dot_dimension_numbers<[1], [0], [0], [1], [0, 0, 1, 1], [], []>} : vector<512x32xf32>, vector<32x32xf32>, vector<512x32xf32> -> vector<512x32xf32>
    %c0_3 = arith.constant 0 : index
    %c0_4 = arith.constant 0 : index
    %3 = vector.load %arg2[%c0_3, %c0_4] : memref<1x32xf32, #tpu.memory_space<vmem>>, vector<1x32xf32>
    %4 = vector.broadcast %3 : vector<1x32xf32> to vector<512x32xf32>
    %5 = arith.addf %2, %4 : vector<512x32xf32>
    %cst_5 = arith.constant 0.000000e+00 : f32
    %6 = vector.broadcast %cst_5 : f32 to vector<512x32xf32>
    %7 = arith.maximumf %5, %6 : vector<512x32xf32>
    %8 = vector.shape_cast %7 : vector<512x32xf32> to vector<16x2x16x32xf32>
    %9 = vector.extract_strided_slice %8 {offsets = [0, 0, 0, 0], sizes = [16, 1, 16, 32], strides = [1, 1, 1, 1]} : vector<16x2x16x32xf32> to vector<16x1x16x32xf32>
    %10 = vector.shape_cast %9 : vector<16x1x16x32xf32> to vector<16x16x32xf32>
    %11 = vector.extract_strided_slice %8 {offsets = [0, 1, 0, 0], sizes = [16, 1, 16, 32], strides = [1, 1, 1, 1]} : vector<16x2x16x32xf32> to vector<16x1x16x32xf32>
    %12 = vector.shape_cast %11 : vector<16x1x16x32xf32> to vector<16x16x32xf32>
    %13 = arith.maximumf %10, %12 : vector<16x16x32xf32>
    %c0_6 = arith.constant 0 : index
    %c0_7 = arith.constant 0 : index
    %c0_8 = arith.constant 0 : index
    %14 = vector.load %arg12[%c0_6, %c0_7, %c0_8] : memref<16x16x32xf32, #tpu.memory_space<vmem>>, vector<16x16x32xf32>
    tpu.vector_store %arg12[%c0_6, %c0_7, %c0_8], %13 {strides = array<i32>} : memref<16x16x32xf32, #tpu.memory_space<vmem>>, vector<16x16x32xf32>,
    %c0_9 = arith.constant 0 : index
    %c0_10 = arith.constant 0 : index
    %c0_11 = arith.constant 0 : index
    %15 = tpu.strided_load %arg12[%c0_9, %c0_10, %c0_11] {strides = array<i32: 1, 2, 1>} : memref<16x16x32xf32, #tpu.memory_space<vmem>>, vector<16x8x32xf32>
    %c0_12 = arith.constant 0 : index
    %c1 = arith.constant 1 : index
    %c0_13 = arith.constant 0 : index
    %16 = tpu.strided_load %arg12[%c0_12, %c1, %c0_13] {strides = array<i32: 1, 2, 1>} : memref<16x16x32xf32, #tpu.memory_space<vmem>>, vector<16x8x32xf32>
    %17 = arith.maximumf %15, %16 : vector<16x8x32xf32>
    %cst_14 = arith.constant 0.000000e+00 : f32
    %18 = vector.broadcast %cst_14 : f32 to vector<2x12x12x32xf32>
    %c0_15 = arith.constant 0 : index
    %c0_16 = arith.constant 0 : index
    %c0_17 = arith.constant 0 : index
    %c0_18 = arith.constant 0 : index
    %19 = vector.load %arg13[%c0_15, %c0_16, %c0_17, %c0_18] : memref<2x12x12x32xf32, #tpu.memory_space<vmem>>, vector<2x12x12x32xf32>
    tpu.vector_store %arg13[%c0_15, %c0_16, %c0_17, %c0_18], %18 {strides = array<i32>} : memref<2x12x12x32xf32, #tpu.memory_space<vmem>>, vector<2x12x12x32xf32>,
    %20 = vector.shape_cast %17 : vector<16x8x32xf32> to vector<2x8x8x32xf32>
    %c0_19 = arith.constant 0 : index
    %c2 = arith.constant 2 : index
    %c2_20 = arith.constant 2 : index
    %c0_21 = arith.constant 0 : index
    %21 = vector.load %arg13[%c0_19, %c2, %c2_20, %c0_21] : memref<2x12x12x32xf32, #tpu.memory_space<vmem>>, vector<2x8x8x32xf32>
    tpu.vector_store %arg13[%c0_19, %c2, %c2_20, %c0_21], %20 {strides = array<i32>} : memref<2x12x12x32xf32, #tpu.memory_space<vmem>>, vector<2x8x8x32xf32>,
    %cst_22 = arith.constant 0.000000e+00 : f32
    %22 = vector.broadcast %cst_22 : f32 to vector<128x64xf32>
    %c0_23 = arith.constant 0 : index
    %c0_24 = arith.constant 0 : index
    %c0_25 = arith.constant 0 : index
    %c0_26 = arith.constant 0 : index
    %23 = vector.load %arg13[%c0_23, %c0_24, %c0_25, %c0_26] : memref<2x12x12x32xf32, #tpu.memory_space<vmem>>, vector<2x8x8x32xf32>
    %24 = vector.shape_cast %23 : vector<2x8x8x32xf32> to vector<128x32xf32>
    %c0_27 = arith.constant 0 : index
    %c0_28 = arith.constant 0 : index
    %c0_29 = arith.constant 0 : index
    %c0_30 = arith.constant 0 : index
    %25 = vector.load %arg3[%c0_27, %c0_28, %c0_29, %c0_30] : memref<5x5x32x64xf32, #tpu.memory_space<vmem>>, vector<1x1x32x64xf32>
    %26 = vector.shape_cast %25 : vector<1x1x32x64xf32> to vector<32x64xf32>
    %cst_31 = arith.constant dense<0.000000e+00> : vector<128x64xf32>
    %27 = tpu.matmul %24, %26, %cst_31 {dimension_numbers = #tpu.dot_dimension_numbers<[1], [0], [0], [1], [0, 0, 1, 1], [], []>} : vector<128x32xf32>, vector<32x64xf32>, vector<128x64xf32> -> vector<128x64xf32>
    %28 = arith.addf %22, %27 : vector<128x64xf32>
    %c0_32 = arith.constant 0 : index
    %c0_33 = arith.constant 0 : index
    %c1_34 = arith.constant 1 : index
    %c0_35 = arith.constant 0 : index
    %29 = vector.load %arg13[%c0_32, %c0_33, %c1_34, %c0_35] : memref<2x12x12x32xf32, #tpu.memory_space<vmem>>, vector<2x8x8x32xf32>
    %30 = vector.shape_cast %29 : vector<2x8x8x32xf32> to vector<128x32xf32>
    %c0_36 = arith.constant 0 : index
    %c1_37 = arith.constant 1 : index
    %c0_38 = arith.constant 0 : index
    %c0_39 = arith.constant 0 : index
    %31 = vector.load %arg3[%c0_36, %c1_37, %c0_38, %c0_39] : memref<5x5x32x64xf32, #tpu.memory_space<vmem>>, vector<1x1x32x64xf32>
    %32 = vector.shape_cast %31 : vector<1x1x32x64xf32> to vector<32x64xf32>
    %cst_40 = arith.constant dense<0.000000e+00> : vector<128x64xf32>
    %33 = tpu.matmul %30, %32, %cst_40 {dimension_numbers = #tpu.dot_dimension_numbers<[1], [0], [0], [1], [0, 0, 1, 1], [], []>} : vector<128x32xf32>, vector<32x64xf32>, vector<128x64xf32> -> vector<128x64xf32>
    %34 = arith.addf %28, %33 : vector<128x64xf32>
    %c0_41 = arith.constant 0 : index
    %c0_42 = arith.constant 0 : index
    %c2_43 = arith.constant 2 : index
    %c0_44 = arith.constant 0 : index
    %35 = vector.load %arg13[%c0_41, %c0_42, %c2_43, %c0_44] : memref<2x12x12x32xf32, #tpu.memory_space<vmem>>, vector<2x8x8x32xf32>
    %36 = vector.shape_cast %35 : vector<2x8x8x32xf32> to vector<128x32xf32>
    %c0_45 = arith.constant 0 : index
    %c2_46 = arith.constant 2 : index
    %c0_47 = arith.constant 0 : index
    %c0_48 = arith.constant 0 : index
    %37 = vector.load %arg3[%c0_45, %c2_46, %c0_47, %c0_48] : memref<5x5x32x64xf32, #tpu.memory_space<vmem>>, vector<1x1x32x64xf32>
    %38 = vector.shape_cast %37 : vector<1x1x32x64xf32> to vector<32x64xf32>
    %cst_49 = arith.constant dense<0.000000e+00> : vector<128x64xf32>
    %39 = tpu.matmul %36, %38, %cst_49 {dimension_numbers = #tpu.dot_dimension_numbers<[1], [0], [0], [1], [0, 0, 1, 1], [], []>} : vector<128x32xf32>, vector<32x64xf32>, vector<128x64xf32> -> vector<128x64xf32>
    %40 = arith.addf %34, %39 : vector<128x64xf32>
    %c0_50 = arith.constant 0 : index
    %c0_51 = arith.constant 0 : index
    %c3 = arith.constant 3 : index
    %c0_52 = arith.constant 0 : index
    %41 = vector.load %arg13[%c0_50, %c0_51, %c3, %c0_52] : memref<2x12x12x32xf32, #tpu.memory_space<vmem>>, vector<2x8x8x32xf32>
    %42 = vector.shape_cast %41 : vector<2x8x8x32xf32> to vector<128x32xf32>
    %c0_53 = arith.constant 0 : index
    %c3_54 = arith.constant 3 : index
    %c0_55 = arith.constant 0 : index
    %c0_56 = arith.constant 0 : index
    %43 = vector.load %arg3[%c0_53, %c3_54, %c0_55, %c0_56] : memref<5x5x32x64xf32, #tpu.memory_space<vmem>>, vector<1x1x32x64xf32>
    %44 = vector.shape_cast %43 : vector<1x1x32x64xf32> to vector<32x64xf32>
    %cst_57 = arith.constant dense<0.000000e+00> : vector<128x64xf32>
    %45 = tpu.matmul %42, %44, %cst_57 {dimension_numbers = #tpu.dot_dimension_numbers<[1], [0], [0], [1], [0, 0, 1, 1], [], []>} : vector<128x32xf32>, vector<32x64xf32>, vector<128x64xf32> -> vector<128x64xf32>
    %46 = arith.addf %40, %45 : vector<128x64xf32>
    %c0_58 = arith.constant 0 : index
    %c0_59 = arith.constant 0 : index
    %c4 = arith.constant 4 : index
    %c0_60 = arith.constant 0 : index
    %47 = vector.load %arg13[%c0_58, %c0_59, %c4, %c0_60] : memref<2x12x12x32xf32, #tpu.memory_space<vmem>>, vector<2x8x8x32xf32>
    %48 = vector.shape_cast %47 : vector<2x8x8x32xf32> to vector<128x32xf32>
    %c0_61 = arith.constant 0 : index
    %c4_62 = arith.constant 4 : index
    %c0_63 = arith.constant 0 : index
    %c0_64 = arith.constant 0 : index
    %49 = vector.load %arg3[%c0_61, %c4_62, %c0_63, %c0_64] : memref<5x5x32x64xf32, #tpu.memory_space<vmem>>, vector<1x1x32x64xf32>
    %50 = vector.shape_cast %49 : vector<1x1x32x64xf32> to vector<32x64xf32>
    %cst_65 = arith.constant dense<0.000000e+00> : vector<128x64xf32>
    %51 = tpu.matmul %48, %50, %cst_65 {dimension_numbers = #tpu.dot_dimension_numbers<[1], [0], [0], [1], [0, 0, 1, 1], [], []>} : vector<128x32xf32>, vector<32x64xf32>, vector<128x64xf32> -> vector<128x64xf32>
    %52 = arith.addf %46, %51 : vector<128x64xf32>
    %c0_66 = arith.constant 0 : index
    %c1_67 = arith.constant 1 : index
    %c0_68 = arith.constant 0 : index
    %c0_69 = arith.constant 0 : index
    %53 = vector.load %arg13[%c0_66, %c1_67, %c0_68, %c0_69] : memref<2x12x12x32xf32, #tpu.memory_space<vmem>>, vector<2x8x8x32xf32>
    %54 = vector.shape_cast %53 : vector<2x8x8x32xf32> to vector<128x32xf32>
    %c1_70 = arith.constant 1 : index
    %c0_71 = arith.constant 0 : index
    %c0_72 = arith.constant 0 : index
    %c0_73 = arith.constant 0 : index
    %55 = vector.load %arg3[%c1_70, %c0_71, %c0_72, %c0_73] : memref<5x5x32x64xf32, #tpu.memory_space<vmem>>, vector<1x1x32x64xf32>
    %56 = vector.shape_cast %55 : vector<1x1x32x64xf32> to vector<32x64xf32>
    %cst_74 = arith.constant dense<0.000000e+00> : vector<128x64xf32>
    %57 = tpu.matmul %54, %56, %cst_74 {dimension_numbers = #tpu.dot_dimension_numbers<[1], [0], [0], [1], [0, 0, 1, 1], [], []>} : vector<128x32xf32>, vector<32x64xf32>, vector<128x64xf32> -> vector<128x64xf32>
    %58 = arith.addf %52, %57 : vector<128x64xf32>
    %c0_75 = arith.constant 0 : index
    %c1_76 = arith.constant 1 : index
    %c1_77 = arith.constant 1 : index
    %c0_78 = arith.constant 0 : index
    %59 = vector.load %arg13[%c0_75, %c1_76, %c1_77, %c0_78] : memref<2x12x12x32xf32, #tpu.memory_space<vmem>>, vector<2x8x8x32xf32>
    %60 = vector.shape_cast %59 : vector<2x8x8x32xf32> to vector<128x32xf32>
    %c1_79 = arith.constant 1 : index
    %c1_80 = arith.constant 1 : index
    %c0_81 = arith.constant 0 : index
    %c0_82 = arith.constant 0 : index
    %61 = vector.load %arg3[%c1_79, %c1_80, %c0_81, %c0_82] : memref<5x5x32x64xf32, #tpu.memory_space<vmem>>, vector<1x1x32x64xf32>
    %62 = vector.shape_cast %61 : vector<1x1x32x64xf32> to vector<32x64xf32>
    %cst_83 = arith.constant dense<0.000000e+00> : vector<128x64xf32>
    %63 = tpu.matmul %60, %62, %cst_83 {dimension_numbers = #tpu.dot_dimension_numbers<[1], [0], [0], [1], [0, 0, 1, 1], [], []>} : vector<128x32xf32>, vector<32x64xf32>, vector<128x64xf32> -> vector<128x64xf32>
    %64 = arith.addf %58, %63 : vector<128x64xf32>
    %c0_84 = arith.constant 0 : index
    %c1_85 = arith.constant 1 : index
    %c2_86 = arith.constant 2 : index
    %c0_87 = arith.constant 0 : index
    %65 = vector.load %arg13[%c0_84, %c1_85, %c2_86, %c0_87] : memref<2x12x12x32xf32, #tpu.memory_space<vmem>>, vector<2x8x8x32xf32>
    %66 = vector.shape_cast %65 : vector<2x8x8x32xf32> to vector<128x32xf32>
    %c1_88 = arith.constant 1 : index
    %c2_89 = arith.constant 2 : index
    %c0_90 = arith.constant 0 : index
    %c0_91 = arith.constant 0 : index
    %67 = vector.load %arg3[%c1_88, %c2_89, %c0_90, %c0_91] : memref<5x5x32x64xf32, #tpu.memory_space<vmem>>, vector<1x1x32x64xf32>
    %68 = vector.shape_cast %67 : vector<1x1x32x64xf32> to vector<32x64xf32>
    %cst_92 = arith.constant dense<0.000000e+00> : vector<128x64xf32>
    %69 = tpu.matmul %66, %68, %cst_92 {dimension_numbers = #tpu.dot_dimension_numbers<[1], [0], [0], [1], [0, 0, 1, 1], [], []>} : vector<128x32xf32>, vector<32x64xf32>, vector<128x64xf32> -> vector<128x64xf32>
    %70 = arith.addf %64, %69 : vector<128x64xf32>
    %c0_93 = arith.constant 0 : index
    %c1_94 = arith.constant 1 : index
    %c3_95 = arith.constant 3 : index
    %c0_96 = arith.constant 0 : index
    %71 = vector.load %arg13[%c0_93, %c1_94, %c3_95, %c0_96] : memref<2x12x12x32xf32, #tpu.memory_space<vmem>>, vector<2x8x8x32xf32>
    %72 = vector.shape_cast %71 : vector<2x8x8x32xf32> to vector<128x32xf32>
    %c1_97 = arith.constant 1 : index
    %c3_98 = arith.constant 3 : index
    %c0_99 = arith.constant 0 : index
    %c0_100 = arith.constant 0 : index
    %73 = vector.load %arg3[%c1_97, %c3_98, %c0_99, %c0_100] : memref<5x5x32x64xf32, #tpu.memory_space<vmem>>, vector<1x1x32x64xf32>
    %74 = vector.shape_cast %73 : vector<1x1x32x64xf32> to vector<32x64xf32>
    %cst_101 = arith.constant dense<0.000000e+00> : vector<128x64xf32>
    %75 = tpu.matmul %72, %74, %cst_101 {dimension_numbers = #tpu.dot_dimension_numbers<[1], [0], [0], [1], [0, 0, 1, 1], [], []>} : vector<128x32xf32>, vector<32x64xf32>, vector<128x64xf32> -> vector<128x64xf32>
    %76 = arith.addf %70, %75 : vector<128x64xf32>
    %c0_102 = arith.constant 0 : index
    %c1_103 = arith.constant 1 : index
    %c4_104 = arith.constant 4 : index
    %c0_105 = arith.constant 0 : index
    %77 = vector.load %arg13[%c0_102, %c1_103, %c4_104, %c0_105] : memref<2x12x12x32xf32, #tpu.memory_space<vmem>>, vector<2x8x8x32xf32>
    %78 = vector.shape_cast %77 : vector<2x8x8x32xf32> to vector<128x32xf32>
    %c1_106 = arith.constant 1 : index
    %c4_107 = arith.constant 4 : index
    %c0_108 = arith.constant 0 : index
    %c0_109 = arith.constant 0 : index
    %79 = vector.load %arg3[%c1_106, %c4_107, %c0_108, %c0_109] : memref<5x5x32x64xf32, #tpu.memory_space<vmem>>, vector<1x1x32x64xf32>
    %80 = vector.shape_cast %79 : vector<1x1x32x64xf32> to vector<32x64xf32>
    %cst_110 = arith.constant dense<0.000000e+00> : vector<128x64xf32>
    %81 = tpu.matmul %78, %80, %cst_110 {dimension_numbers = #tpu.dot_dimension_numbers<[1], [0], [0], [1], [0, 0, 1, 1], [], []>} : vector<128x32xf32>, vector<32x64xf32>, vector<128x64xf32> -> vector<128x64xf32>
    %82 = arith.addf %76, %81 : vector<128x64xf32>
    %c0_111 = arith.constant 0 : index
    %c2_112 = arith.constant 2 : index
    %c0_113 = arith.constant 0 : index
    %c0_114 = arith.constant 0 : index
    %83 = vector.load %arg13[%c0_111, %c2_112, %c0_113, %c0_114] : memref<2x12x12x32xf32, #tpu.memory_space<vmem>>, vector<2x8x8x32xf32>
    %84 = vector.shape_cast %83 : vector<2x8x8x32xf32> to vector<128x32xf32>
    %c2_115 = arith.constant 2 : index
    %c0_116 = arith.constant 0 : index
    %c0_117 = arith.constant 0 : index
    %c0_118 = arith.constant 0 : index
    %85 = vector.load %arg3[%c2_115, %c0_116, %c0_117, %c0_118] : memref<5x5x32x64xf32, #tpu.memory_space<vmem>>, vector<1x1x32x64xf32>
    %86 = vector.shape_cast %85 : vector<1x1x32x64xf32> to vector<32x64xf32>
    %cst_119 = arith.constant dense<0.000000e+00> : vector<128x64xf32>
    %87 = tpu.matmul %84, %86, %cst_119 {dimension_numbers = #tpu.dot_dimension_numbers<[1], [0], [0], [1], [0, 0, 1, 1], [], []>} : vector<128x32xf32>, vector<32x64xf32>, vector<128x64xf32> -> vector<128x64xf32>
    %88 = arith.addf %82, %87 : vector<128x64xf32>
    %c0_120 = arith.constant 0 : index
    %c2_121 = arith.constant 2 : index
    %c1_122 = arith.constant 1 : index
    %c0_123 = arith.constant 0 : index
    %89 = vector.load %arg13[%c0_120, %c2_121, %c1_122, %c0_123] : memref<2x12x12x32xf32, #tpu.memory_space<vmem>>, vector<2x8x8x32xf32>
    %90 = vector.shape_cast %89 : vector<2x8x8x32xf32> to vector<128x32xf32>
    %c2_124 = arith.constant 2 : index
    %c1_125 = arith.constant 1 : index
    %c0_126 = arith.constant 0 : index
    %c0_127 = arith.constant 0 : index
    %91 = vector.load %arg3[%c2_124, %c1_125, %c0_126, %c0_127] : memref<5x5x32x64xf32, #tpu.memory_space<vmem>>, vector<1x1x32x64xf32>
    %92 = vector.shape_cast %91 : vector<1x1x32x64xf32> to vector<32x64xf32>
    %cst_128 = arith.constant dense<0.000000e+00> : vector<128x64xf32>
    %93 = tpu.matmul %90, %92, %cst_128 {dimension_numbers = #tpu.dot_dimension_numbers<[1], [0], [0], [1], [0, 0, 1, 1], [], []>} : vector<128x32xf32>, vector<32x64xf32>, vector<128x64xf32> -> vector<128x64xf32>
    %94 = arith.addf %88, %93 : vector<128x64xf32>
    %c0_129 = arith.constant 0 : index
    %c2_130 = arith.constant 2 : index
    %c2_131 = arith.constant 2 : index
    %c0_132 = arith.constant 0 : index
    %95 = vector.load %arg13[%c0_129, %c2_130, %c2_131, %c0_132] : memref<2x12x12x32xf32, #tpu.memory_space<vmem>>, vector<2x8x8x32xf32>
    %96 = vector.shape_cast %95 : vector<2x8x8x32xf32> to vector<128x32xf32>
    %c2_133 = arith.constant 2 : index
    %c2_134 = arith.constant 2 : index
    %c0_135 = arith.constant 0 : index
    %c0_136 = arith.constant 0 : index
    %97 = vector.load %arg3[%c2_133, %c2_134, %c0_135, %c0_136] : memref<5x5x32x64xf32, #tpu.memory_space<vmem>>, vector<1x1x32x64xf32>
    %98 = vector.shape_cast %97 : vector<1x1x32x64xf32> to vector<32x64xf32>
    %cst_137 = arith.constant dense<0.000000e+00> : vector<128x64xf32>
    %99 = tpu.matmul %96, %98, %cst_137 {dimension_numbers = #tpu.dot_dimension_numbers<[1], [0], [0], [1], [0, 0, 1, 1], [], []>} : vector<128x32xf32>, vector<32x64xf32>, vector<128x64xf32> -> vector<128x64xf32>
    %100 = arith.addf %94, %99 : vector<128x64xf32>
    %c0_138 = arith.constant 0 : index
    %c2_139 = arith.constant 2 : index
    %c3_140 = arith.constant 3 : index
    %c0_141 = arith.constant 0 : index
    %101 = vector.load %arg13[%c0_138, %c2_139, %c3_140, %c0_141] : memref<2x12x12x32xf32, #tpu.memory_space<vmem>>, vector<2x8x8x32xf32>
    %102 = vector.shape_cast %101 : vector<2x8x8x32xf32> to vector<128x32xf32>
    %c2_142 = arith.constant 2 : index
    %c3_143 = arith.constant 3 : index
    %c0_144 = arith.constant 0 : index
    %c0_145 = arith.constant 0 : index
    %103 = vector.load %arg3[%c2_142, %c3_143, %c0_144, %c0_145] : memref<5x5x32x64xf32, #tpu.memory_space<vmem>>, vector<1x1x32x64xf32>
    %104 = vector.shape_cast %103 : vector<1x1x32x64xf32> to vector<32x64xf32>
    %cst_146 = arith.constant dense<0.000000e+00> : vector<128x64xf32>
    %105 = tpu.matmul %102, %104, %cst_146 {dimension_numbers = #tpu.dot_dimension_numbers<[1], [0], [0], [1], [0, 0, 1, 1], [], []>} : vector<128x32xf32>, vector<32x64xf32>, vector<128x64xf32> -> vector<128x64xf32>
    %106 = arith.addf %100, %105 : vector<128x64xf32>
    %c0_147 = arith.constant 0 : index
    %c2_148 = arith.constant 2 : index
    %c4_149 = arith.constant 4 : index
    %c0_150 = arith.constant 0 : index
    %107 = vector.load %arg13[%c0_147, %c2_148, %c4_149, %c0_150] : memref<2x12x12x32xf32, #tpu.memory_space<vmem>>, vector<2x8x8x32xf32>
    %108 = vector.shape_cast %107 : vector<2x8x8x32xf32> to vector<128x32xf32>
    %c2_151 = arith.constant 2 : index
    %c4_152 = arith.constant 4 : index
    %c0_153 = arith.constant 0 : index
    %c0_154 = arith.constant 0 : index
    %109 = vector.load %arg3[%c2_151, %c4_152, %c0_153, %c0_154] : memref<5x5x32x64xf32, #tpu.memory_space<vmem>>, vector<1x1x32x64xf32>
    %110 = vector.shape_cast %109 : vector<1x1x32x64xf32> to vector<32x64xf32>
    %cst_155 = arith.constant dense<0.000000e+00> : vector<128x64xf32>
    %111 = tpu.matmul %108, %110, %cst_155 {dimension_numbers = #tpu.dot_dimension_numbers<[1], [0], [0], [1], [0, 0, 1, 1], [], []>} : vector<128x32xf32>, vector<32x64xf32>, vector<128x64xf32> -> vector<128x64xf32>
    %112 = arith.addf %106, %111 : vector<128x64xf32>
    %c0_156 = arith.constant 0 : index
    %c3_157 = arith.constant 3 : index
    %c0_158 = arith.constant 0 : index
    %c0_159 = arith.constant 0 : index
    %113 = vector.load %arg13[%c0_156, %c3_157, %c0_158, %c0_159] : memref<2x12x12x32xf32, #tpu.memory_space<vmem>>, vector<2x8x8x32xf32>
    %114 = vector.shape_cast %113 : vector<2x8x8x32xf32> to vector<128x32xf32>
    %c3_160 = arith.constant 3 : index
    %c0_161 = arith.constant 0 : index
    %c0_162 = arith.constant 0 : index
    %c0_163 = arith.constant 0 : index
    %115 = vector.load %arg3[%c3_160, %c0_161, %c0_162, %c0_163] : memref<5x5x32x64xf32, #tpu.memory_space<vmem>>, vector<1x1x32x64xf32>
    %116 = vector.shape_cast %115 : vector<1x1x32x64xf32> to vector<32x64xf32>
    %cst_164 = arith.constant dense<0.000000e+00> : vector<128x64xf32>
    %117 = tpu.matmul %114, %116, %cst_164 {dimension_numbers = #tpu.dot_dimension_numbers<[1], [0], [0], [1], [0, 0, 1, 1], [], []>} : vector<128x32xf32>, vector<32x64xf32>, vector<128x64xf32> -> vector<128x64xf32>
    %118 = arith.addf %112, %117 : vector<128x64xf32>
    %c0_165 = arith.constant 0 : index
    %c3_166 = arith.constant 3 : index
    %c1_167 = arith.constant 1 : index
    %c0_168 = arith.constant 0 : index
    %119 = vector.load %arg13[%c0_165, %c3_166, %c1_167, %c0_168] : memref<2x12x12x32xf32, #tpu.memory_space<vmem>>, vector<2x8x8x32xf32>
    %120 = vector.shape_cast %119 : vector<2x8x8x32xf32> to vector<128x32xf32>
    %c3_169 = arith.constant 3 : index
    %c1_170 = arith.constant 1 : index
    %c0_171 = arith.constant 0 : index
    %c0_172 = arith.constant 0 : index
    %121 = vector.load %arg3[%c3_169, %c1_170, %c0_171, %c0_172] : memref<5x5x32x64xf32, #tpu.memory_space<vmem>>, vector<1x1x32x64xf32>
    %122 = vector.shape_cast %121 : vector<1x1x32x64xf32> to vector<32x64xf32>
    %cst_173 = arith.constant dense<0.000000e+00> : vector<128x64xf32>
    %123 = tpu.matmul %120, %122, %cst_173 {dimension_numbers = #tpu.dot_dimension_numbers<[1], [0], [0], [1], [0, 0, 1, 1], [], []>} : vector<128x32xf32>, vector<32x64xf32>, vector<128x64xf32> -> vector<128x64xf32>
    %124 = arith.addf %118, %123 : vector<128x64xf32>
    %c0_174 = arith.constant 0 : index
    %c3_175 = arith.constant 3 : index
    %c2_176 = arith.constant 2 : index
    %c0_177 = arith.constant 0 : index
    %125 = vector.load %arg13[%c0_174, %c3_175, %c2_176, %c0_177] : memref<2x12x12x32xf32, #tpu.memory_space<vmem>>, vector<2x8x8x32xf32>
    %126 = vector.shape_cast %125 : vector<2x8x8x32xf32> to vector<128x32xf32>
    %c3_178 = arith.constant 3 : index
    %c2_179 = arith.constant 2 : index
    %c0_180 = arith.constant 0 : index
    %c0_181 = arith.constant 0 : index
    %127 = vector.load %arg3[%c3_178, %c2_179, %c0_180, %c0_181] : memref<5x5x32x64xf32, #tpu.memory_space<vmem>>, vector<1x1x32x64xf32>
    %128 = vector.shape_cast %127 : vector<1x1x32x64xf32> to vector<32x64xf32>
    %cst_182 = arith.constant dense<0.000000e+00> : vector<128x64xf32>
    %129 = tpu.matmul %126, %128, %cst_182 {dimension_numbers = #tpu.dot_dimension_numbers<[1], [0], [0], [1], [0, 0, 1, 1], [], []>} : vector<128x32xf32>, vector<32x64xf32>, vector<128x64xf32> -> vector<128x64xf32>
    %130 = arith.addf %124, %129 : vector<128x64xf32>
    %c0_183 = arith.constant 0 : index
    %c3_184 = arith.constant 3 : index
    %c3_185 = arith.constant 3 : index
    %c0_186 = arith.constant 0 : index
    %131 = vector.load %arg13[%c0_183, %c3_184, %c3_185, %c0_186] : memref<2x12x12x32xf32, #tpu.memory_space<vmem>>, vector<2x8x8x32xf32>
    %132 = vector.shape_cast %131 : vector<2x8x8x32xf32> to vector<128x32xf32>
    %c3_187 = arith.constant 3 : index
    %c3_188 = arith.constant 3 : index
    %c0_189 = arith.constant 0 : index
    %c0_190 = arith.constant 0 : index
    %133 = vector.load %arg3[%c3_187, %c3_188, %c0_189, %c0_190] : memref<5x5x32x64xf32, #tpu.memory_space<vmem>>, vector<1x1x32x64xf32>
    %134 = vector.shape_cast %133 : vector<1x1x32x64xf32> to vector<32x64xf32>
    %cst_191 = arith.constant dense<0.000000e+00> : vector<128x64xf32>
    %135 = tpu.matmul %132, %134, %cst_191 {dimension_numbers = #tpu.dot_dimension_numbers<[1], [0], [0], [1], [0, 0, 1, 1], [], []>} : vector<128x32xf32>, vector<32x64xf32>, vector<128x64xf32> -> vector<128x64xf32>
    %136 = arith.addf %130, %135 : vector<128x64xf32>
    %c0_192 = arith.constant 0 : index
    %c3_193 = arith.constant 3 : index
    %c4_194 = arith.constant 4 : index
    %c0_195 = arith.constant 0 : index
    %137 = vector.load %arg13[%c0_192, %c3_193, %c4_194, %c0_195] : memref<2x12x12x32xf32, #tpu.memory_space<vmem>>, vector<2x8x8x32xf32>
    %138 = vector.shape_cast %137 : vector<2x8x8x32xf32> to vector<128x32xf32>
    %c3_196 = arith.constant 3 : index
    %c4_197 = arith.constant 4 : index
    %c0_198 = arith.constant 0 : index
    %c0_199 = arith.constant 0 : index
    %139 = vector.load %arg3[%c3_196, %c4_197, %c0_198, %c0_199] : memref<5x5x32x64xf32, #tpu.memory_space<vmem>>, vector<1x1x32x64xf32>
    %140 = vector.shape_cast %139 : vector<1x1x32x64xf32> to vector<32x64xf32>
    %cst_200 = arith.constant dense<0.000000e+00> : vector<128x64xf32>
    %141 = tpu.matmul %138, %140, %cst_200 {dimension_numbers = #tpu.dot_dimension_numbers<[1], [0], [0], [1], [0, 0, 1, 1], [], []>} : vector<128x32xf32>, vector<32x64xf32>, vector<128x64xf32> -> vector<128x64xf32>
    %142 = arith.addf %136, %141 : vector<128x64xf32>
    %c0_201 = arith.constant 0 : index
    %c4_202 = arith.constant 4 : index
    %c0_203 = arith.constant 0 : index
    %c0_204 = arith.constant 0 : index
    %143 = vector.load %arg13[%c0_201, %c4_202, %c0_203, %c0_204] : memref<2x12x12x32xf32, #tpu.memory_space<vmem>>, vector<2x8x8x32xf32>
    %144 = vector.shape_cast %143 : vector<2x8x8x32xf32> to vector<128x32xf32>
    %c4_205 = arith.constant 4 : index
    %c0_206 = arith.constant 0 : index
    %c0_207 = arith.constant 0 : index
    %c0_208 = arith.constant 0 : index
    %145 = vector.load %arg3[%c4_205, %c0_206, %c0_207, %c0_208] : memref<5x5x32x64xf32, #tpu.memory_space<vmem>>, vector<1x1x32x64xf32>
    %146 = vector.shape_cast %145 : vector<1x1x32x64xf32> to vector<32x64xf32>
    %cst_209 = arith.constant dense<0.000000e+00> : vector<128x64xf32>
    %147 = tpu.matmul %144, %146, %cst_209 {dimension_numbers = #tpu.dot_dimension_numbers<[1], [0], [0], [1], [0, 0, 1, 1], [], []>} : vector<128x32xf32>, vector<32x64xf32>, vector<128x64xf32> -> vector<128x64xf32>
    %148 = arith.addf %142, %147 : vector<128x64xf32>
    %c0_210 = arith.constant 0 : index
    %c4_211 = arith.constant 4 : index
    %c1_212 = arith.constant 1 : index
    %c0_213 = arith.constant 0 : index
    %149 = vector.load %arg13[%c0_210, %c4_211, %c1_212, %c0_213] : memref<2x12x12x32xf32, #tpu.memory_space<vmem>>, vector<2x8x8x32xf32>
    %150 = vector.shape_cast %149 : vector<2x8x8x32xf32> to vector<128x32xf32>
    %c4_214 = arith.constant 4 : index
    %c1_215 = arith.constant 1 : index
    %c0_216 = arith.constant 0 : index
    %c0_217 = arith.constant 0 : index
    %151 = vector.load %arg3[%c4_214, %c1_215, %c0_216, %c0_217] : memref<5x5x32x64xf32, #tpu.memory_space<vmem>>, vector<1x1x32x64xf32>
    %152 = vector.shape_cast %151 : vector<1x1x32x64xf32> to vector<32x64xf32>
    %cst_218 = arith.constant dense<0.000000e+00> : vector<128x64xf32>
    %153 = tpu.matmul %150, %152, %cst_218 {dimension_numbers = #tpu.dot_dimension_numbers<[1], [0], [0], [1], [0, 0, 1, 1], [], []>} : vector<128x32xf32>, vector<32x64xf32>, vector<128x64xf32> -> vector<128x64xf32>
    %154 = arith.addf %148, %153 : vector<128x64xf32>
    %c0_219 = arith.constant 0 : index
    %c4_220 = arith.constant 4 : index
    %c2_221 = arith.constant 2 : index
    %c0_222 = arith.constant 0 : index
    %155 = vector.load %arg13[%c0_219, %c4_220, %c2_221, %c0_222] : memref<2x12x12x32xf32, #tpu.memory_space<vmem>>, vector<2x8x8x32xf32>
    %156 = vector.shape_cast %155 : vector<2x8x8x32xf32> to vector<128x32xf32>
    %c4_223 = arith.constant 4 : index
    %c2_224 = arith.constant 2 : index
    %c0_225 = arith.constant 0 : index
    %c0_226 = arith.constant 0 : index
    %157 = vector.load %arg3[%c4_223, %c2_224, %c0_225, %c0_226] : memref<5x5x32x64xf32, #tpu.memory_space<vmem>>, vector<1x1x32x64xf32>
    %158 = vector.shape_cast %157 : vector<1x1x32x64xf32> to vector<32x64xf32>
    %cst_227 = arith.constant dense<0.000000e+00> : vector<128x64xf32>
    %159 = tpu.matmul %156, %158, %cst_227 {dimension_numbers = #tpu.dot_dimension_numbers<[1], [0], [0], [1], [0, 0, 1, 1], [], []>} : vector<128x32xf32>, vector<32x64xf32>, vector<128x64xf32> -> vector<128x64xf32>
    %160 = arith.addf %154, %159 : vector<128x64xf32>
    %c0_228 = arith.constant 0 : index
    %c4_229 = arith.constant 4 : index
    %c3_230 = arith.constant 3 : index
    %c0_231 = arith.constant 0 : index
    %161 = vector.load %arg13[%c0_228, %c4_229, %c3_230, %c0_231] : memref<2x12x12x32xf32, #tpu.memory_space<vmem>>, vector<2x8x8x32xf32>
    %162 = vector.shape_cast %161 : vector<2x8x8x32xf32> to vector<128x32xf32>
    %c4_232 = arith.constant 4 : index
    %c3_233 = arith.constant 3 : index
    %c0_234 = arith.constant 0 : index
    %c0_235 = arith.constant 0 : index
    %163 = vector.load %arg3[%c4_232, %c3_233, %c0_234, %c0_235] : memref<5x5x32x64xf32, #tpu.memory_space<vmem>>, vector<1x1x32x64xf32>
    %164 = vector.shape_cast %163 : vector<1x1x32x64xf32> to vector<32x64xf32>
    %cst_236 = arith.constant dense<0.000000e+00> : vector<128x64xf32>
    %165 = tpu.matmul %162, %164, %cst_236 {dimension_numbers = #tpu.dot_dimension_numbers<[1], [0], [0], [1], [0, 0, 1, 1], [], []>} : vector<128x32xf32>, vector<32x64xf32>, vector<128x64xf32> -> vector<128x64xf32>
    %166 = arith.addf %160, %165 : vector<128x64xf32>
    %c0_237 = arith.constant 0 : index
    %c4_238 = arith.constant 4 : index
    %c4_239 = arith.constant 4 : index
    %c0_240 = arith.constant 0 : index
    %167 = vector.load %arg13[%c0_237, %c4_238, %c4_239, %c0_240] : memref<2x12x12x32xf32, #tpu.memory_space<vmem>>, vector<2x8x8x32xf32>
    %168 = vector.shape_cast %167 : vector<2x8x8x32xf32> to vector<128x32xf32>
    %c4_241 = arith.constant 4 : index
    %c4_242 = arith.constant 4 : index
    %c0_243 = arith.constant 0 : index
    %c0_244 = arith.constant 0 : index
    %169 = vector.load %arg3[%c4_241, %c4_242, %c0_243, %c0_244] : memref<5x5x32x64xf32, #tpu.memory_space<vmem>>, vector<1x1x32x64xf32>
    %170 = vector.shape_cast %169 : vector<1x1x32x64xf32> to vector<32x64xf32>
    %cst_245 = arith.constant dense<0.000000e+00> : vector<128x64xf32>
    %171 = tpu.matmul %168, %170, %cst_245 {dimension_numbers = #tpu.dot_dimension_numbers<[1], [0], [0], [1], [0, 0, 1, 1], [], []>} : vector<128x32xf32>, vector<32x64xf32>, vector<128x64xf32> -> vector<128x64xf32>
    %172 = arith.addf %166, %171 : vector<128x64xf32>
    %c0_246 = arith.constant 0 : index
    %c0_247 = arith.constant 0 : index
    %173 = vector.load %arg4[%c0_246, %c0_247] : memref<1x64xf32, #tpu.memory_space<vmem>>, vector<1x64xf32>
    %174 = vector.broadcast %173 : vector<1x64xf32> to vector<128x64xf32>
    %175 = arith.addf %172, %174 : vector<128x64xf32>
    %cst_248 = arith.constant 0.000000e+00 : f32
    %176 = vector.broadcast %cst_248 : f32 to vector<128x64xf32>
    %177 = arith.maximumf %175, %176 : vector<128x64xf32>
    %178 = vector.shape_cast %177 : vector<128x64xf32> to vector<8x2x8x64xf32>
    %179 = vector.extract_strided_slice %178 {offsets = [0, 0, 0, 0], sizes = [8, 1, 8, 64], strides = [1, 1, 1, 1]} : vector<8x2x8x64xf32> to vector<8x1x8x64xf32>
    %180 = vector.shape_cast %179 : vector<8x1x8x64xf32> to vector<8x8x64xf32>
    %181 = vector.extract_strided_slice %178 {offsets = [0, 1, 0, 0], sizes = [8, 1, 8, 64], strides = [1, 1, 1, 1]} : vector<8x2x8x64xf32> to vector<8x1x8x64xf32>
    %182 = vector.shape_cast %181 : vector<8x1x8x64xf32> to vector<8x8x64xf32>
    %183 = arith.maximumf %180, %182 : vector<8x8x64xf32>
    %c0_249 = arith.constant 0 : index
    %c0_250 = arith.constant 0 : index
    %c0_251 = arith.constant 0 : index
    %184 = vector.load %arg14[%c0_249, %c0_250, %c0_251] : memref<8x8x64xf32, #tpu.memory_space<vmem>>, vector<8x8x64xf32>
    tpu.vector_store %arg14[%c0_249, %c0_250, %c0_251], %183 {strides = array<i32>} : memref<8x8x64xf32, #tpu.memory_space<vmem>>, vector<8x8x64xf32>,
    %c0_252 = arith.constant 0 : index
    %c0_253 = arith.constant 0 : index
    %c0_254 = arith.constant 0 : index
    %185 = tpu.strided_load %arg14[%c0_252, %c0_253, %c0_254] {strides = array<i32: 1, 2, 1>} : memref<8x8x64xf32, #tpu.memory_space<vmem>>, vector<8x4x64xf32>
    %c0_255 = arith.constant 0 : index
    %c1_256 = arith.constant 1 : index
    %c0_257 = arith.constant 0 : index
    %186 = tpu.strided_load %arg14[%c0_255, %c1_256, %c0_257] {strides = array<i32: 1, 2, 1>} : memref<8x8x64xf32, #tpu.memory_space<vmem>>, vector<8x4x64xf32>
    %187 = arith.maximumf %185, %186 : vector<8x4x64xf32>
    %188 = vector.shape_cast %187 : vector<8x4x64xf32> to vector<2x4x4x64xf32>
    %c0_258 = arith.constant 0 : index
    %c0_259 = arith.constant 0 : index
    %c0_260 = arith.constant 0 : index
    %c0_261 = arith.constant 0 : index
    %189 = vector.load %arg15[%c0_258, %c0_259, %c0_260, %c0_261] : memref<2x4x4x64xf32, #tpu.memory_space<vmem>>, vector<2x4x4x64xf32>
    tpu.vector_store %arg15[%c0_258, %c0_259, %c0_260, %c0_261], %188 {strides = array<i32>} : memref<2x4x4x64xf32, #tpu.memory_space<vmem>>, vector<2x4x4x64xf32>,
    %cst_262 = arith.constant 0.000000e+00 : f32
    %190 = vector.broadcast %cst_262 : f32 to vector<2x512xf32>
    %c0_263 = arith.constant 0 : index
    %c0_264 = arith.constant 0 : index
    %c0_265 = arith.constant 0 : index
    %c0_266 = arith.constant 0 : index
    %191 = vector.load %arg15[%c0_263, %c0_264, %c0_265, %c0_266] : memref<2x4x4x64xf32, #tpu.memory_space<vmem>>, vector<2x1x1x64xf32>
    %192 = vector.shape_cast %191 : vector<2x1x1x64xf32> to vector<2x64xf32>
    %c0_267 = arith.constant 0 : index
    %c0_268 = arith.constant 0 : index
    %c0_269 = arith.constant 0 : index
    %193 = vector.load %arg5[%c0_267, %c0_268, %c0_269] : memref<16x64x512xf32, #tpu.memory_space<vmem>>, vector<1x64x512xf32>
    %194 = vector.shape_cast %193 : vector<1x64x512xf32> to vector<64x512xf32>
    %cst_270 = arith.constant dense<0.000000e+00> : vector<2x512xf32>
    %195 = tpu.matmul %192, %194, %cst_270 {dimension_numbers = #tpu.dot_dimension_numbers<[1], [0], [0], [1], [0, 0, 1, 1], [], []>} : vector<2x64xf32>, vector<64x512xf32>, vector<2x512xf32> -> vector<2x512xf32>
    %196 = arith.addf %190, %195 : vector<2x512xf32>
    %c0_271 = arith.constant 0 : index
    %c0_272 = arith.constant 0 : index
    %c1_273 = arith.constant 1 : index
    %c0_274 = arith.constant 0 : index
    %197 = vector.load %arg15[%c0_271, %c0_272, %c1_273, %c0_274] : memref<2x4x4x64xf32, #tpu.memory_space<vmem>>, vector<2x1x1x64xf32>
    %198 = vector.shape_cast %197 : vector<2x1x1x64xf32> to vector<2x64xf32>
    %c1_275 = arith.constant 1 : index
    %c0_276 = arith.constant 0 : index
    %c0_277 = arith.constant 0 : index
    %199 = vector.load %arg5[%c1_275, %c0_276, %c0_277] : memref<16x64x512xf32, #tpu.memory_space<vmem>>, vector<1x64x512xf32>
    %200 = vector.shape_cast %199 : vector<1x64x512xf32> to vector<64x512xf32>
    %cst_278 = arith.constant dense<0.000000e+00> : vector<2x512xf32>
    %201 = tpu.matmul %198, %200, %cst_278 {dimension_numbers = #tpu.dot_dimension_numbers<[1], [0], [0], [1], [0, 0, 1, 1], [], []>} : vector<2x64xf32>, vector<64x512xf32>, vector<2x512xf32> -> vector<2x512xf32>
    %202 = arith.addf %196, %201 : vector<2x512xf32>
    %c0_279 = arith.constant 0 : index
    %c0_280 = arith.constant 0 : index
    %c2_281 = arith.constant 2 : index
    %c0_282 = arith.constant 0 : index
    %203 = vector.load %arg15[%c0_279, %c0_280, %c2_281, %c0_282] : memref<2x4x4x64xf32, #tpu.memory_space<vmem>>, vector<2x1x1x64xf32>
    %204 = vector.shape_cast %203 : vector<2x1x1x64xf32> to vector<2x64xf32>
    %c2_283 = arith.constant 2 : index
    %c0_284 = arith.constant 0 : index
    %c0_285 = arith.constant 0 : index
    %205 = vector.load %arg5[%c2_283, %c0_284, %c0_285] : memref<16x64x512xf32, #tpu.memory_space<vmem>>, vector<1x64x512xf32>
    %206 = vector.shape_cast %205 : vector<1x64x512xf32> to vector<64x512xf32>
    %cst_286 = arith.constant dense<0.000000e+00> : vector<2x512xf32>
    %207 = tpu.matmul %204, %206, %cst_286 {dimension_numbers = #tpu.dot_dimension_numbers<[1], [0], [0], [1], [0, 0, 1, 1], [], []>} : vector<2x64xf32>, vector<64x512xf32>, vector<2x512xf32> -> vector<2x512xf32>
    %208 = arith.addf %202, %207 : vector<2x512xf32>
    %c0_287 = arith.constant 0 : index
    %c0_288 = arith.constant 0 : index
    %c3_289 = arith.constant 3 : index
    %c0_290 = arith.constant 0 : index
    %209 = vector.load %arg15[%c0_287, %c0_288, %c3_289, %c0_290] : memref<2x4x4x64xf32, #tpu.memory_space<vmem>>, vector<2x1x1x64xf32>
    %210 = vector.shape_cast %209 : vector<2x1x1x64xf32> to vector<2x64xf32>
    %c3_291 = arith.constant 3 : index
    %c0_292 = arith.constant 0 : index
    %c0_293 = arith.constant 0 : index
    %211 = vector.load %arg5[%c3_291, %c0_292, %c0_293] : memref<16x64x512xf32, #tpu.memory_space<vmem>>, vector<1x64x512xf32>
    %212 = vector.shape_cast %211 : vector<1x64x512xf32> to vector<64x512xf32>
    %cst_294 = arith.constant dense<0.000000e+00> : vector<2x512xf32>
    %213 = tpu.matmul %210, %212, %cst_294 {dimension_numbers = #tpu.dot_dimension_numbers<[1], [0], [0], [1], [0, 0, 1, 1], [], []>} : vector<2x64xf32>, vector<64x512xf32>, vector<2x512xf32> -> vector<2x512xf32>
    %214 = arith.addf %208, %213 : vector<2x512xf32>
    %c0_295 = arith.constant 0 : index
    %c1_296 = arith.constant 1 : index
    %c0_297 = arith.constant 0 : index
    %c0_298 = arith.constant 0 : index
    %215 = vector.load %arg15[%c0_295, %c1_296, %c0_297, %c0_298] : memref<2x4x4x64xf32, #tpu.memory_space<vmem>>, vector<2x1x1x64xf32>
    %216 = vector.shape_cast %215 : vector<2x1x1x64xf32> to vector<2x64xf32>
    %c4_299 = arith.constant 4 : index
    %c0_300 = arith.constant 0 : index
    %c0_301 = arith.constant 0 : index
    %217 = vector.load %arg5[%c4_299, %c0_300, %c0_301] : memref<16x64x512xf32, #tpu.memory_space<vmem>>, vector<1x64x512xf32>
    %218 = vector.shape_cast %217 : vector<1x64x512xf32> to vector<64x512xf32>
    %cst_302 = arith.constant dense<0.000000e+00> : vector<2x512xf32>
    %219 = tpu.matmul %216, %218, %cst_302 {dimension_numbers = #tpu.dot_dimension_numbers<[1], [0], [0], [1], [0, 0, 1, 1], [], []>} : vector<2x64xf32>, vector<64x512xf32>, vector<2x512xf32> -> vector<2x512xf32>
    %220 = arith.addf %214, %219 : vector<2x512xf32>
    %c0_303 = arith.constant 0 : index
    %c1_304 = arith.constant 1 : index
    %c1_305 = arith.constant 1 : index
    %c0_306 = arith.constant 0 : index
    %221 = vector.load %arg15[%c0_303, %c1_304, %c1_305, %c0_306] : memref<2x4x4x64xf32, #tpu.memory_space<vmem>>, vector<2x1x1x64xf32>
    %222 = vector.shape_cast %221 : vector<2x1x1x64xf32> to vector<2x64xf32>
    %c5 = arith.constant 5 : index
    %c0_307 = arith.constant 0 : index
    %c0_308 = arith.constant 0 : index
    %223 = vector.load %arg5[%c5, %c0_307, %c0_308] : memref<16x64x512xf32, #tpu.memory_space<vmem>>, vector<1x64x512xf32>
    %224 = vector.shape_cast %223 : vector<1x64x512xf32> to vector<64x512xf32>
    %cst_309 = arith.constant dense<0.000000e+00> : vector<2x512xf32>
    %225 = tpu.matmul %222, %224, %cst_309 {dimension_numbers = #tpu.dot_dimension_numbers<[1], [0], [0], [1], [0, 0, 1, 1], [], []>} : vector<2x64xf32>, vector<64x512xf32>, vector<2x512xf32> -> vector<2x512xf32>
    %226 = arith.addf %220, %225 : vector<2x512xf32>
    %c0_310 = arith.constant 0 : index
    %c1_311 = arith.constant 1 : index
    %c2_312 = arith.constant 2 : index
    %c0_313 = arith.constant 0 : index
    %227 = vector.load %arg15[%c0_310, %c1_311, %c2_312, %c0_313] : memref<2x4x4x64xf32, #tpu.memory_space<vmem>>, vector<2x1x1x64xf32>
    %228 = vector.shape_cast %227 : vector<2x1x1x64xf32> to vector<2x64xf32>
    %c6 = arith.constant 6 : index
    %c0_314 = arith.constant 0 : index
    %c0_315 = arith.constant 0 : index
    %229 = vector.load %arg5[%c6, %c0_314, %c0_315] : memref<16x64x512xf32, #tpu.memory_space<vmem>>, vector<1x64x512xf32>
    %230 = vector.shape_cast %229 : vector<1x64x512xf32> to vector<64x512xf32>
    %cst_316 = arith.constant dense<0.000000e+00> : vector<2x512xf32>
    %231 = tpu.matmul %228, %230, %cst_316 {dimension_numbers = #tpu.dot_dimension_numbers<[1], [0], [0], [1], [0, 0, 1, 1], [], []>} : vector<2x64xf32>, vector<64x512xf32>, vector<2x512xf32> -> vector<2x512xf32>
    %232 = arith.addf %226, %231 : vector<2x512xf32>
    %c0_317 = arith.constant 0 : index
    %c1_318 = arith.constant 1 : index
    %c3_319 = arith.constant 3 : index
    %c0_320 = arith.constant 0 : index
    %233 = vector.load %arg15[%c0_317, %c1_318, %c3_319, %c0_320] : memref<2x4x4x64xf32, #tpu.memory_space<vmem>>, vector<2x1x1x64xf32>
    %234 = vector.shape_cast %233 : vector<2x1x1x64xf32> to vector<2x64xf32>
    %c7 = arith.constant 7 : index
    %c0_321 = arith.constant 0 : index
    %c0_322 = arith.constant 0 : index
    %235 = vector.load %arg5[%c7, %c0_321, %c0_322] : memref<16x64x512xf32, #tpu.memory_space<vmem>>, vector<1x64x512xf32>
    %236 = vector.shape_cast %235 : vector<1x64x512xf32> to vector<64x512xf32>
    %cst_323 = arith.constant dense<0.000000e+00> : vector<2x512xf32>
    %237 = tpu.matmul %234, %236, %cst_323 {dimension_numbers = #tpu.dot_dimension_numbers<[1], [0], [0], [1], [0, 0, 1, 1], [], []>} : vector<2x64xf32>, vector<64x512xf32>, vector<2x512xf32> -> vector<2x512xf32>
    %238 = arith.addf %232, %237 : vector<2x512xf32>
    %c0_324 = arith.constant 0 : index
    %c2_325 = arith.constant 2 : index
    %c0_326 = arith.constant 0 : index
    %c0_327 = arith.constant 0 : index
    %239 = vector.load %arg15[%c0_324, %c2_325, %c0_326, %c0_327] : memref<2x4x4x64xf32, #tpu.memory_space<vmem>>, vector<2x1x1x64xf32>
    %240 = vector.shape_cast %239 : vector<2x1x1x64xf32> to vector<2x64xf32>
    %c8 = arith.constant 8 : index
    %c0_328 = arith.constant 0 : index
    %c0_329 = arith.constant 0 : index
    %241 = vector.load %arg5[%c8, %c0_328, %c0_329] : memref<16x64x512xf32, #tpu.memory_space<vmem>>, vector<1x64x512xf32>
    %242 = vector.shape_cast %241 : vector<1x64x512xf32> to vector<64x512xf32>
    %cst_330 = arith.constant dense<0.000000e+00> : vector<2x512xf32>
    %243 = tpu.matmul %240, %242, %cst_330 {dimension_numbers = #tpu.dot_dimension_numbers<[1], [0], [0], [1], [0, 0, 1, 1], [], []>} : vector<2x64xf32>, vector<64x512xf32>, vector<2x512xf32> -> vector<2x512xf32>
    %244 = arith.addf %238, %243 : vector<2x512xf32>
    %c0_331 = arith.constant 0 : index
    %c2_332 = arith.constant 2 : index
    %c1_333 = arith.constant 1 : index
    %c0_334 = arith.constant 0 : index
    %245 = vector.load %arg15[%c0_331, %c2_332, %c1_333, %c0_334] : memref<2x4x4x64xf32, #tpu.memory_space<vmem>>, vector<2x1x1x64xf32>
    %246 = vector.shape_cast %245 : vector<2x1x1x64xf32> to vector<2x64xf32>
    %c9 = arith.constant 9 : index
    %c0_335 = arith.constant 0 : index
    %c0_336 = arith.constant 0 : index
    %247 = vector.load %arg5[%c9, %c0_335, %c0_336] : memref<16x64x512xf32, #tpu.memory_space<vmem>>, vector<1x64x512xf32>
    %248 = vector.shape_cast %247 : vector<1x64x512xf32> to vector<64x512xf32>
    %cst_337 = arith.constant dense<0.000000e+00> : vector<2x512xf32>
    %249 = tpu.matmul %246, %248, %cst_337 {dimension_numbers = #tpu.dot_dimension_numbers<[1], [0], [0], [1], [0, 0, 1, 1], [], []>} : vector<2x64xf32>, vector<64x512xf32>, vector<2x512xf32> -> vector<2x512xf32>
    %250 = arith.addf %244, %249 : vector<2x512xf32>
    %c0_338 = arith.constant 0 : index
    %c2_339 = arith.constant 2 : index
    %c2_340 = arith.constant 2 : index
    %c0_341 = arith.constant 0 : index
    %251 = vector.load %arg15[%c0_338, %c2_339, %c2_340, %c0_341] : memref<2x4x4x64xf32, #tpu.memory_space<vmem>>, vector<2x1x1x64xf32>
    %252 = vector.shape_cast %251 : vector<2x1x1x64xf32> to vector<2x64xf32>
    %c10 = arith.constant 10 : index
    %c0_342 = arith.constant 0 : index
    %c0_343 = arith.constant 0 : index
    %253 = vector.load %arg5[%c10, %c0_342, %c0_343] : memref<16x64x512xf32, #tpu.memory_space<vmem>>, vector<1x64x512xf32>
    %254 = vector.shape_cast %253 : vector<1x64x512xf32> to vector<64x512xf32>
    %cst_344 = arith.constant dense<0.000000e+00> : vector<2x512xf32>
    %255 = tpu.matmul %252, %254, %cst_344 {dimension_numbers = #tpu.dot_dimension_numbers<[1], [0], [0], [1], [0, 0, 1, 1], [], []>} : vector<2x64xf32>, vector<64x512xf32>, vector<2x512xf32> -> vector<2x512xf32>
    %256 = arith.addf %250, %255 : vector<2x512xf32>
    %c0_345 = arith.constant 0 : index
    %c2_346 = arith.constant 2 : index
    %c3_347 = arith.constant 3 : index
    %c0_348 = arith.constant 0 : index
    %257 = vector.load %arg15[%c0_345, %c2_346, %c3_347, %c0_348] : memref<2x4x4x64xf32, #tpu.memory_space<vmem>>, vector<2x1x1x64xf32>
    %258 = vector.shape_cast %257 : vector<2x1x1x64xf32> to vector<2x64xf32>
    %c11 = arith.constant 11 : index
    %c0_349 = arith.constant 0 : index
    %c0_350 = arith.constant 0 : index
    %259 = vector.load %arg5[%c11, %c0_349, %c0_350] : memref<16x64x512xf32, #tpu.memory_space<vmem>>, vector<1x64x512xf32>
    %260 = vector.shape_cast %259 : vector<1x64x512xf32> to vector<64x512xf32>
    %cst_351 = arith.constant dense<0.000000e+00> : vector<2x512xf32>
    %261 = tpu.matmul %258, %260, %cst_351 {dimension_numbers = #tpu.dot_dimension_numbers<[1], [0], [0], [1], [0, 0, 1, 1], [], []>} : vector<2x64xf32>, vector<64x512xf32>, vector<2x512xf32> -> vector<2x512xf32>
    %262 = arith.addf %256, %261 : vector<2x512xf32>
    %c0_352 = arith.constant 0 : index
    %c3_353 = arith.constant 3 : index
    %c0_354 = arith.constant 0 : index
    %c0_355 = arith.constant 0 : index
    %263 = vector.load %arg15[%c0_352, %c3_353, %c0_354, %c0_355] : memref<2x4x4x64xf32, #tpu.memory_space<vmem>>, vector<2x1x1x64xf32>
    %264 = vector.shape_cast %263 : vector<2x1x1x64xf32> to vector<2x64xf32>
    %c12 = arith.constant 12 : index
    %c0_356 = arith.constant 0 : index
    %c0_357 = arith.constant 0 : index
    %265 = vector.load %arg5[%c12, %c0_356, %c0_357] : memref<16x64x512xf32, #tpu.memory_space<vmem>>, vector<1x64x512xf32>
    %266 = vector.shape_cast %265 : vector<1x64x512xf32> to vector<64x512xf32>
    %cst_358 = arith.constant dense<0.000000e+00> : vector<2x512xf32>
    %267 = tpu.matmul %264, %266, %cst_358 {dimension_numbers = #tpu.dot_dimension_numbers<[1], [0], [0], [1], [0, 0, 1, 1], [], []>} : vector<2x64xf32>, vector<64x512xf32>, vector<2x512xf32> -> vector<2x512xf32>
    %268 = arith.addf %262, %267 : vector<2x512xf32>
    %c0_359 = arith.constant 0 : index
    %c3_360 = arith.constant 3 : index
    %c1_361 = arith.constant 1 : index
    %c0_362 = arith.constant 0 : index
    %269 = vector.load %arg15[%c0_359, %c3_360, %c1_361, %c0_362] : memref<2x4x4x64xf32, #tpu.memory_space<vmem>>, vector<2x1x1x64xf32>
    %270 = vector.shape_cast %269 : vector<2x1x1x64xf32> to vector<2x64xf32>
    %c13 = arith.constant 13 : index
    %c0_363 = arith.constant 0 : index
    %c0_364 = arith.constant 0 : index
    %271 = vector.load %arg5[%c13, %c0_363, %c0_364] : memref<16x64x512xf32, #tpu.memory_space<vmem>>, vector<1x64x512xf32>
    %272 = vector.shape_cast %271 : vector<1x64x512xf32> to vector<64x512xf32>
    %cst_365 = arith.constant dense<0.000000e+00> : vector<2x512xf32>
    %273 = tpu.matmul %270, %272, %cst_365 {dimension_numbers = #tpu.dot_dimension_numbers<[1], [0], [0], [1], [0, 0, 1, 1], [], []>} : vector<2x64xf32>, vector<64x512xf32>, vector<2x512xf32> -> vector<2x512xf32>
    %274 = arith.addf %268, %273 : vector<2x512xf32>
    %c0_366 = arith.constant 0 : index
    %c3_367 = arith.constant 3 : index
    %c2_368 = arith.constant 2 : index
    %c0_369 = arith.constant 0 : index
    %275 = vector.load %arg15[%c0_366, %c3_367, %c2_368, %c0_369] : memref<2x4x4x64xf32, #tpu.memory_space<vmem>>, vector<2x1x1x64xf32>
    %276 = vector.shape_cast %275 : vector<2x1x1x64xf32> to vector<2x64xf32>
    %c14 = arith.constant 14 : index
    %c0_370 = arith.constant 0 : index
    %c0_371 = arith.constant 0 : index
    %277 = vector.load %arg5[%c14, %c0_370, %c0_371] : memref<16x64x512xf32, #tpu.memory_space<vmem>>, vector<1x64x512xf32>
    %278 = vector.shape_cast %277 : vector<1x64x512xf32> to vector<64x512xf32>
    %cst_372 = arith.constant dense<0.000000e+00> : vector<2x512xf32>
    %279 = tpu.matmul %276, %278, %cst_372 {dimension_numbers = #tpu.dot_dimension_numbers<[1], [0], [0], [1], [0, 0, 1, 1], [], []>} : vector<2x64xf32>, vector<64x512xf32>, vector<2x512xf32> -> vector<2x512xf32>
    %280 = arith.addf %274, %279 : vector<2x512xf32>
    %c0_373 = arith.constant 0 : index
    %c3_374 = arith.constant 3 : index
    %c3_375 = arith.constant 3 : index
    %c0_376 = arith.constant 0 : index
    %281 = vector.load %arg15[%c0_373, %c3_374, %c3_375, %c0_376] : memref<2x4x4x64xf32, #tpu.memory_space<vmem>>, vector<2x1x1x64xf32>
    %282 = vector.shape_cast %281 : vector<2x1x1x64xf32> to vector<2x64xf32>
    %c15 = arith.constant 15 : index
    %c0_377 = arith.constant 0 : index
    %c0_378 = arith.constant 0 : index
    %283 = vector.load %arg5[%c15, %c0_377, %c0_378] : memref<16x64x512xf32, #tpu.memory_space<vmem>>, vector<1x64x512xf32>
    %284 = vector.shape_cast %283 : vector<1x64x512xf32> to vector<64x512xf32>
    %cst_379 = arith.constant dense<0.000000e+00> : vector<2x512xf32>
    %285 = tpu.matmul %282, %284, %cst_379 {dimension_numbers = #tpu.dot_dimension_numbers<[1], [0], [0], [1], [0, 0, 1, 1], [], []>} : vector<2x64xf32>, vector<64x512xf32>, vector<2x512xf32> -> vector<2x512xf32>
    %286 = arith.addf %280, %285 : vector<2x512xf32>
    %c0_380 = arith.constant 0 : index
    %c0_381 = arith.constant 0 : index
    %287 = vector.load %arg6[%c0_380, %c0_381] : memref<1x512xf32, #tpu.memory_space<vmem>>, vector<1x512xf32>
    %288 = vector.broadcast %287 : vector<1x512xf32> to vector<2x512xf32>
    %289 = arith.addf %286, %288 : vector<2x512xf32>
    %cst_382 = arith.constant 0.000000e+00 : f32
    %290 = vector.broadcast %cst_382 : f32 to vector<2x512xf32>
    %291 = arith.maximumf %289, %290 : vector<2x512xf32>
    %c0_383 = arith.constant 0 : index
    %c0_384 = arith.constant 0 : index
    %292 = vector.load %arg7[%c0_383, %c0_384] : memref<512x256xf32, #tpu.memory_space<vmem>>, vector<512x256xf32>
    %cst_385 = arith.constant dense<0.000000e+00> : vector<2x256xf32>
    %293 = tpu.matmul %291, %292, %cst_385 {dimension_numbers = #tpu.dot_dimension_numbers<[1], [0], [0], [1], [0, 0, 1, 1], [], []>} : vector<2x512xf32>, vector<512x256xf32>, vector<2x256xf32> -> vector<2x256xf32>
    %c0_386 = arith.constant 0 : index
    %c0_387 = arith.constant 0 : index
    %294 = vector.load %arg8[%c0_386, %c0_387] : memref<1x256xf32, #tpu.memory_space<vmem>>, vector<1x256xf32>
    %295 = vector.broadcast %294 : vector<1x256xf32> to vector<2x256xf32>
    %296 = arith.addf %293, %295 : vector<2x256xf32>
    %cst_388 = arith.constant 0.000000e+00 : f32
    %297 = vector.broadcast %cst_388 : f32 to vector<2x256xf32>
    %298 = arith.maximumf %296, %297 : vector<2x256xf32>
    %c0_389 = arith.constant 0 : index
    %c0_390 = arith.constant 0 : index
    %299 = vector.load %arg9[%c0_389, %c0_390] : memref<256x4xf32, #tpu.memory_space<vmem>>, vector<256x4xf32>
    %cst_391 = arith.constant dense<0.000000e+00> : vector<2x4xf32>
    %300 = tpu.matmul %298, %299, %cst_391 {dimension_numbers = #tpu.dot_dimension_numbers<[1], [0], [0], [1], [0, 0, 1, 1], [], []>} : vector<2x256xf32>, vector<256x4xf32>, vector<2x4xf32> -> vector<2x4xf32>
    %c0_392 = arith.constant 0 : index
    %c0_393 = arith.constant 0 : index
    %301 = vector.load %arg10[%c0_392, %c0_393] : memref<1x4xf32, #tpu.memory_space<vmem>>, vector<1x4xf32>
    %302 = vector.broadcast %301 : vector<1x4xf32> to vector<2x4xf32>
    %303 = arith.addf %300, %302 : vector<2x4xf32>
    %c0_394 = arith.constant 0 : index
    %c0_395 = arith.constant 0 : index
    %304 = vector.load %arg11[%c0_394, %c0_395] : memref<2x4xf32, #tpu.memory_space<vmem>>, vector<2x4xf32>
    tpu.vector_store %arg11[%c0_394, %c0_395], %303 {strides = array<i32>} : memref<2x4xf32, #tpu.memory_space<vmem>>, vector<2x4xf32>,
    return
  }
}

</mosaic_0001>

<llo_original>
// kernel: net_forward.1
$region0: #{net_forward.1}
  #allocation0 [shape = 'u32[]', space=smem, size = 0x4, offset = 0x4, fixed_abs, tag = 'smem constant byte address 0x4 - core index']
  #allocation1 [shape = 'u32[144,128]{1,0:T(1,128)}', space=vmem, size = 0x12000, scoped, tag = 'internal scratch']
  #allocation2 [shape = 'f32[16,16,32]{2,1,0:T(8,128)}', space=vmem, size = 0x20000, scoped, tag = 'scratch operand']
  #allocation3 [shape = 'f32[2,12,12,32]{3,2,1,0:T(8,128)}', space=vmem, size = 0x30000, scoped, tag = 'scratch operand']
  #allocation4 [shape = 'f32[8,8,64]{2,1,0:T(8,128)}', space=vmem, size = 0x8000, scoped, tag = 'scratch operand']
  #allocation5 [shape = 'f32[2,4,4,64]{3,2,1,0:T(4,128)}', space=vmem, size = 0x4000, scoped, tag = 'scratch operand']
  %s0 = inlined_call_operand.vmem [shape: f32[512,32], index: 0, kind: input, shape index: {}]
  %s1 = inlined_call_operand.hbm [shape: f32[32,32], index: 1, kind: input, shape index: {}]
  %s2 = inlined_call_operand.hbm [shape: f32[1,32], index: 2, kind: input, shape index: {}]
  %s3 = inlined_call_operand.vmem [shape: f32[5,5,32,64], index: 3, kind: input, shape index: {}]
  %s4 = inlined_call_operand.hbm [shape: f32[1,64], index: 4, kind: input, shape index: {}]
  %s5 = inlined_call_operand.hbm [shape: f32[16,64,512], index: 5, kind: input, shape index: {}]
  %s6 = inlined_call_operand.hbm [shape: f32[1,512], index: 6, kind: input, shape index: {}]
  %s7 = inlined_call_operand.vmem [shape: f32[512,256], index: 7, kind: input, shape index: {}]
  %s8 = inlined_call_operand.hbm [shape: f32[1,256], index: 8, kind: input, shape index: {}]
  %s9 = inlined_call_operand.vmem [shape: f32[256,4], index: 9, kind: input, shape index: {}]
  %s10 = inlined_call_operand.hbm [shape: f32[1,4], index: 10, kind: input, shape index: {}]
  %s11 = inlined_call_operand.hbm [shape: f32[2,4], index: 11, kind: output, shape index: {}]
  %s12 = sld [smem:[#allocation0]]
  $region82: #{net_forward.1} parent=0
    _
  %s14 = ssub.s32 1, %s12
  %s15 = scalar_select 0, %s14, %s12
  $region1: #{net_forward.1} parent=0
    #allocation6 [shape = 'u8[16384]{0}', space=vmem, size = 0x4000, scoped, tag = 'input window, operand 1, single buffered']
    #allocation7 [shape = 's32[1]{0}', space=sflag, size = 0x4, scoped, tag = 'scoped memory for net_forward.1']
    #allocation8 [shape = 's32[1]{0}', space=sflag, size = 0x4, scoped, tag = 'scoped memory for net_forward.1']
    #allocation9 [shape = 'u8[512]{0}', space=vmem, size = 0x400, scoped, tag = 'input window, operand 2, single buffered']
    #allocation10 [shape = 's32[1]{0}', space=sflag, size = 0x4, scoped, tag = 'scoped memory for net_forward.1']
    #allocation11 [shape = 'u8[512]{0}', space=vmem, size = 0x400, scoped, tag = 'input window, operand 4, single buffered']
    #allocation12 [shape = 'u8[2097152]{0}', space=vmem, size = 0x200000, scoped, tag = 'input window, operand 5, single buffered']
    #allocation13 [shape = 's32[1]{0}', space=sflag, size = 0x4, scoped, tag = 'scoped memory for net_forward.1']
    #allocation14 [shape = 'u8[2048]{0}', space=vmem, size = 0x800, scoped, tag = 'input window, operand 6, single buffered']
    #allocation15 [shape = 'u8[1024]{0}', space=vmem, size = 0x400, scoped, tag = 'input window, operand 8, single buffered']
    #allocation16 [shape = 's32[1]{0}', space=sflag, size = 0x4, scoped, tag = 'scoped memory for net_forward.1']
    #allocation17 [shape = 'u8[512]{0}', space=vmem, size = 0x400, scoped, tag = 'input window, operand 10, single buffered']
    #allocation18 [shape = 'u8[1024]{0}', space=vmem, size = 0x400, scoped, tag = 'output window, operand 0, single buffered']
    %16 = vsyncpa [#allocation7], 0
    %17 = vsyncpa [#allocation10], 0
    %18 = vsyncpa [#allocation13], 0
    %19 = vsyncpa [#allocation16], 0
    %20 = vsyncpa [#allocation8], 0
    // Predicated region
    $region2: #{net_forward.1} parent=1 // pred_check
      _
    $region3: #{net_forward.1} parent=1 // pred_check_branch
      %22 = sbr.rel (0) target = $region5
    $region4: #{net_forward.1} parent=1 // pred_region
      _
    $region5: #{net_forward.1} parent=1 // pred_fallthru
      _
    // Predicated region
    $region6: #{net_forward.1} parent=1 // pred_check
      _
    $region7: #{net_forward.1} parent=1 // pred_check_branch
      %24 = sbr.rel (0) target = $region9
    $region8: #{net_forward.1} parent=1 // pred_region
      %s26 = ssub.s32 512, 512
      %27 = vsyncadd [#allocation7], %s26
      %s28 = sshll.u32 [#allocation6], 4
      %s29 = int_to_ptr.vmem [resolvable:$true] %s28
      %34 = dma.hbm_to_vmem [thread:$0]  %s1, 512, %s29, [#allocation7], 128, 128, 8
    $region9: #{net_forward.1} parent=1 // pred_fallthru
      _
    // Predicated region
    $region10: #{net_forward.1} parent=1 // pred_check
      _
    $region11: #{net_forward.1} parent=1 // pred_check_branch
      %36 = sbr.rel (0) target = $region13
    $region12: #{net_forward.1} parent=1 // pred_region
      %s38 = ssub.s32 16, 16
      %39 = vsyncadd [#allocation10], %s38
      %s41 = sshll.u32 [#allocation9], 4
      %s42 = int_to_ptr.vmem [resolvable:$true] %s41
      %44 = dma.hbm_to_vmem [thread:$0]  %s2, 16, %s42, [#allocation10]
    $region13: #{net_forward.1} parent=1 // pred_fallthru
      _
    // Predicated region
    $region14: #{net_forward.1} parent=1 // pred_check
      _
    $region15: #{net_forward.1} parent=1 // pred_check_branch
      %46 = sbr.rel (0) target = $region17
    $region16: #{net_forward.1} parent=1 // pred_region
      _
    $region17: #{net_forward.1} parent=1 // pred_fallthru
      _
    // Predicated region
    $region18: #{net_forward.1} parent=1 // pred_check
      _
    $region19: #{net_forward.1} parent=1 // pred_check_branch
      %48 = sbr.rel (0) target = $region21
    $region20: #{net_forward.1} parent=1 // pred_region
      %s50 = ssub.s32 16, 16
      %51 = vsyncadd [#allocation10], %s50
      %s53 = sshll.u32 [#allocation11], 4
      %s54 = int_to_ptr.vmem [resolvable:$true] %s53
      %56 = dma.hbm_to_vmem [thread:$0]  %s4, 16, %s54, [#allocation10]
    $region21: #{net_forward.1} parent=1 // pred_fallthru
      _
    // Predicated region
    $region22: #{net_forward.1} parent=1 // pred_check
      _
    $region23: #{net_forward.1} parent=1 // pred_check_branch
      %58 = sbr.rel (0) target = $region25
    $region24: #{net_forward.1} parent=1 // pred_region
      %s60 = ssub.s32 65536, 65536
      %61 = vsyncadd [#allocation13], %s60
      %s62 = sshll.u32 [#allocation12], 4
      %s63 = int_to_ptr.vmem [resolvable:$true] %s62
      %68 = dma.hbm_to_vmem [thread:$0]  %s5, 65536, %s63, [#allocation13], 512, 512, 32
    $region25: #{net_forward.1} parent=1 // pred_fallthru
      _
    // Predicated region
    $region26: #{net_forward.1} parent=1 // pred_check
      _
    $region27: #{net_forward.1} parent=1 // pred_check_branch
      %70 = sbr.rel (0) target = $region29
    $region28: #{net_forward.1} parent=1 // pred_region
      %s72 = ssub.s32 64, 64
      %73 = vsyncadd [#allocation13], %s72
      %s75 = sshll.u32 [#allocation14], 4
      %s76 = int_to_ptr.vmem [resolvable:$true] %s75
      %78 = dma.hbm_to_vmem [thread:$0]  %s6, 64, %s76, [#allocation13]
    $region29: #{net_forward.1} parent=1 // pred_fallthru
      _
    // Predicated region
    $region30: #{net_forward.1} parent=1 // pred_check
      _
    $region31: #{net_forward.1} parent=1 // pred_check_branch
      %80 = sbr.rel (0) target = $region33
    $region32: #{net_forward.1} parent=1 // pred_region
      _
    $region33: #{net_forward.1} parent=1 // pred_fallthru
      _
    // Predicated region
    $region34: #{net_forward.1} parent=1 // pred_check
      _
    $region35: #{net_forward.1} parent=1 // pred_check_branch
      %82 = sbr.rel (0) target = $region37
    $region36: #{net_forward.1} parent=1 // pred_region
      %s84 = ssub.s32 32, 32
      %85 = vsyncadd [#allocation16], %s84
      %s87 = sshll.u32 [#allocation15], 4
      %s88 = int_to_ptr.vmem [resolvable:$true] %s87
      %90 = dma.hbm_to_vmem [thread:$0]  %s8, 32, %s88, [#allocation16]
    $region37: #{net_forward.1} parent=1 // pred_fallthru
      _
    // Predicated region
    $region38: #{net_forward.1} parent=1 // pred_check
      _
    $region39: #{net_forward.1} parent=1 // pred_check_branch
      %92 = sbr.rel (0) target = $region41
    $region40: #{net_forward.1} parent=1 // pred_region
      _
    $region41: #{net_forward.1} parent=1 // pred_fallthru
      _
    // Predicated region
    $region42: #{net_forward.1} parent=1 // pred_check
      _
    $region43: #{net_forward.1} parent=1 // pred_check_branch
      %94 = sbr.rel (0) target = $region45
    $region44: #{net_forward.1} parent=1 // pred_region
      %s96 = ssub.s32 16, 16
      %97 = vsyncadd [#allocation16], %s96
      %s99 = sshll.u32 [#allocation17], 4
      %s100 = int_to_ptr.vmem [resolvable:$true] %s99
      %102 = dma.hbm_to_vmem [thread:$0]  %s10, 16, %s100, [#allocation16]
    $region45: #{net_forward.1} parent=1 // pred_fallthru
      _
    // Predicated region
    $region46: #{net_forward.1} parent=1 // pred_check
      _
    $region47: #{net_forward.1} parent=1 // pred_check_branch
      %104 = sbr.rel (0) target = $region49
    $region48: #{net_forward.1} parent=1 // pred_region
      %105 = dma.done [#allocation7], 512
    $region49: #{net_forward.1} parent=1 // pred_fallthru
      _
    // Predicated region
    $region50: #{net_forward.1} parent=1 // pred_check
      _
    $region51: #{net_forward.1} parent=1 // pred_check_branch
      %107 = sbr.rel (0) target = $region53
    $region52: #{net_forward.1} parent=1 // pred_region
      %108 = dma.done [#allocation10], 16
    $region53: #{net_forward.1} parent=1 // pred_fallthru
      _
    // Predicated region
    $region54: #{net_forward.1} parent=1 // pred_check
      _
    $region55: #{net_forward.1} parent=1 // pred_check_branch
      %110 = sbr.rel (0) target = $region57
    $region56: #{net_forward.1} parent=1 // pred_region
      %111 = dma.done [#allocation10], 16
    $region57: #{net_forward.1} parent=1 // pred_fallthru
      _
    // Predicated region
    $region58: #{net_forward.1} parent=1 // pred_check
      _
    $region59: #{net_forward.1} parent=1 // pred_check_branch
      %113 = sbr.rel (0) target = $region61
    $region60: #{net_forward.1} parent=1 // pred_region
      %114 = dma.done [#allocation13], 65536
    $region61: #{net_forward.1} parent=1 // pred_fallthru
      _
    // Predicated region
    $region62: #{net_forward.1} parent=1 // pred_check
      _
    $region63: #{net_forward.1} parent=1 // pred_check_branch
      %116 = sbr.rel (0) target = $region65
    $region64: #{net_forward.1} parent=1 // pred_region
      %117 = dma.done [#allocation13], 64
    $region65: #{net_forward.1} parent=1 // pred_fallthru
      _
    // Predicated region
    $region66: #{net_forward.1} parent=1 // pred_check
      _
    $region67: #{net_forward.1} parent=1 // pred_check_branch
      %119 = sbr.rel (0) target = $region69
    $region68: #{net_forward.1} parent=1 // pred_region
      %120 = dma.done [#allocation16], 32
    $region69: #{net_forward.1} parent=1 // pred_fallthru
      _
    // Predicated region
    $region70: #{net_forward.1} parent=1 // pred_check
      _
    $region71: #{net_forward.1} parent=1 // pred_check_branch
      %122 = sbr.rel (0) target = $region73
    $region72: #{net_forward.1} parent=1 // pred_region
      %123 = dma.done [#allocation16], 16
    $region73: #{net_forward.1} parent=1 // pred_fallthru
      _
    %v124 = vld [vmem:[%s0] sm:$0xff]
    %v125 = vld [vmem:[%s0 + $0x8] sm:$0xff]
    %v126 = vld [vmem:[%s0 + $0x10] sm:$0xff]
    %v127 = vld [vmem:[%s0 + $0x18] sm:$0xff]
    %v128 = vld [vmem:[%s0 + $0x20] sm:$0xff]
    %v129 = vld [vmem:[%s0 + $0x28] sm:$0xff]
    %v130 = vld [vmem:[%s0 + $0x30] sm:$0xff]
    %v131 = vld [vmem:[%s0 + $0x38] sm:$0xff]
    %v132 = vld [vmem:[%s0 + $0x40] sm:$0xff]
    %v133 = vld [vmem:[%s0 + $0x48] sm:$0xff]
    %v134 = vld [vmem:[%s0 + $0x50] sm:$0xff]
    %v135 = vld [vmem:[%s0 + $0x58] sm:$0xff]
    %v136 = vld [vmem:[%s0 + $0x60] sm:$0xff]
    %v137 = vld [vmem:[%s0 + $0x68] sm:$0xff]
    %v138 = vld [vmem:[%s0 + $0x70] sm:$0xff]
    %v139 = vld [vmem:[%s0 + $0x78] sm:$0xff]
    %v140 = vld [vmem:[%s0 + $0x80] sm:$0xff]
    %v141 = vld [vmem:[%s0 + $0x88] sm:$0xff]
    %v142 = vld [vmem:[%s0 + $0x90] sm:$0xff]
    %v143 = vld [vmem:[%s0 + $0x98] sm:$0xff]
    %v144 = vld [vmem:[%s0 + $0xa0] sm:$0xff]
    %v145 = vld [vmem:[%s0 + $0xa8] sm:$0xff]
    %v146 = vld [vmem:[%s0 + $0xb0] sm:$0xff]
    %v147 = vld [vmem:[%s0 + $0xb8] sm:$0xff]
    %v148 = vld [vmem:[%s0 + $0xc0] sm:$0xff]
    %v149 = vld [vmem:[%s0 + $0xc8] sm:$0xff]
    %v150 = vld [vmem:[%s0 + $0xd0] sm:$0xff]
    %v151 = vld [vmem:[%s0 + $0xd8] sm:$0xff]
    %v152 = vld [vmem:[%s0 + $0xe0] sm:$0xff]
    %v153 = vld [vmem:[%s0 + $0xe8] sm:$0xff]
    %v154 = vld [vmem:[%s0 + $0xf0] sm:$0xff]
    %v155 = vld [vmem:[%s0 + $0xf8] sm:$0xff]
    %v156 = vld [vmem:[%s0 + $0x100] sm:$0xff]
    %v157 = vld [vmem:[%s0 + $0x108] sm:$0xff]
    %v158 = vld [vmem:[%s0 + $0x110] sm:$0xff]
    %v159 = vld [vmem:[%s0 + $0x118] sm:$0xff]
    %v160 = vld [vmem:[%s0 + $0x120] sm:$0xff]
    %v161 = vld [vmem:[%s0 + $0x128] sm:$0xff]
    %v162 = vld [vmem:[%s0 + $0x130] sm:$0xff]
    %v163 = vld [vmem:[%s0 + $0x138] sm:$0xff]
    %v164 = vld [vmem:[%s0 + $0x140] sm:$0xff]
    %v165 = vld [vmem:[%s0 + $0x148] sm:$0xff]
    %v166 = vld [vmem:[%s0 + $0x150] sm:$0xff]
    %v167 = vld [vmem:[%s0 + $0x158] sm:$0xff]
    %v168 = vld [vmem:[%s0 + $0x160] sm:$0xff]
    %v169 = vld [vmem:[%s0 + $0x168] sm:$0xff]
    %v170 = vld [vmem:[%s0 + $0x170] sm:$0xff]
    %v171 = vld [vmem:[%s0 + $0x178] sm:$0xff]
    %v172 = vld [vmem:[%s0 + $0x180] sm:$0xff]
    %v173 = vld [vmem:[%s0 + $0x188] sm:$0xff]
    %v174 = vld [vmem:[%s0 + $0x190] sm:$0xff]
    %v175 = vld [vmem:[%s0 + $0x198] sm:$0xff]
    %v176 = vld [vmem:[%s0 + $0x1a0] sm:$0xff]
    %v177 = vld [vmem:[%s0 + $0x1a8] sm:$0xff]
    %v178 = vld [vmem:[%s0 + $0x1b0] sm:$0xff]
    %v179 = vld [vmem:[%s0 + $0x1b8] sm:$0xff]
    %v180 = vld [vmem:[%s0 + $0x1c0] sm:$0xff]
    %v181 = vld [vmem:[%s0 + $0x1c8] sm:$0xff]
    %v182 = vld [vmem:[%s0 + $0x1d0] sm:$0xff]
    %v183 = vld [vmem:[%s0 + $0x1d8] sm:$0xff]
    %v184 = vld [vmem:[%s0 + $0x1e0] sm:$0xff]
    %v185 = vld [vmem:[%s0 + $0x1e8] sm:$0xff]
    %v186 = vld [vmem:[%s0 + $0x1f0] sm:$0xff]
    %v187 = vld [vmem:[%s0 + $0x1f8] sm:$0xff]
    %v188 = vld [vmem:[#allocation6] sm:$0xff]
    %v189 = vld [vmem:[#allocation6 + $0x8] sm:$0xff]
    %v190 = vld [vmem:[#allocation6 + $0x10] sm:$0xff]
    %v191 = vld [vmem:[#allocation6 + $0x18] sm:$0xff]
    %v192 = vld [vmem:[#allocation9] sm:$0x1]
    %v194 = vlaneseq
    %v195 = vshrl.u32 %v194, 7
    %v196 = vsub.s32 0, %v195
    %v197 = vrot.slane %v192, %v196
    %vm199 = vcmask 261120
    %v201 = vsel %vm199, %v124, 0
    %v204 = vsel %vm199, %v125, 0
    %v207 = vsel %vm199, %v126, 0
    %v210 = vsel %vm199, %v127, 0
    %v213 = vsel %vm199, %v128, 0
    %v216 = vsel %vm199, %v129, 0
    %v219 = vsel %vm199, %v130, 0
    %v222 = vsel %vm199, %v131, 0
    %v225 = vsel %vm199, %v132, 0
    %v228 = vsel %vm199, %v133, 0
    %v231 = vsel %vm199, %v134, 0
    %v234 = vsel %vm199, %v135, 0
    %v237 = vsel %vm199, %v136, 0
    %v240 = vsel %vm199, %v137, 0
    %v243 = vsel %vm199, %v138, 0
    %v246 = vsel %vm199, %v139, 0
    %v249 = vsel %vm199, %v140, 0
    %v252 = vsel %vm199, %v141, 0
    %v255 = vsel %vm199, %v142, 0
    %v258 = vsel %vm199, %v143, 0
    %v261 = vsel %vm199, %v144, 0
    %v264 = vsel %vm199, %v145, 0
    %v267 = vsel %vm199, %v146, 0
    %v270 = vsel %vm199, %v147, 0
    %v273 = vsel %vm199, %v148, 0
    %v276 = vsel %vm199, %v149, 0
    %v279 = vsel %vm199, %v150, 0
    %v282 = vsel %vm199, %v151, 0
    %v285 = vsel %vm199, %v152, 0
    %v288 = vsel %vm199, %v153, 0
    %v291 = vsel %vm199, %v154, 0
    %v294 = vsel %vm199, %v155, 0
    %v297 = vsel %vm199, %v156, 0
    %v300 = vsel %vm199, %v157, 0
    %v303 = vsel %vm199, %v158, 0
    %v306 = vsel %vm199, %v159, 0
    %v309 = vsel %vm199, %v160, 0
    %v312 = vsel %vm199, %v161, 0
    %v315 = vsel %vm199, %v162, 0
    %v318 = vsel %vm199, %v163, 0
    %v321 = vsel %vm199, %v164, 0
    %v324 = vsel %vm199, %v165, 0
    %v327 = vsel %vm199, %v166, 0
    %v330 = vsel %vm199, %v167, 0
    %v333 = vsel %vm199, %v168, 0
    %v336 = vsel %vm199, %v169, 0
    %v339 = vsel %vm199, %v170, 0
    %v342 = vsel %vm199, %v171, 0
    %v345 = vsel %vm199, %v172, 0
    %v348 = vsel %vm199, %v173, 0
    %v351 = vsel %vm199, %v174, 0
    %v354 = vsel %vm199, %v175, 0
    %v357 = vsel %vm199, %v176, 0
    %v360 = vsel %vm199, %v177, 0
    %v363 = vsel %vm199, %v178, 0
    %v366 = vsel %vm199, %v179, 0
    %v369 = vsel %vm199, %v180, 0
    %v372 = vsel %vm199, %v181, 0
    %v375 = vsel %vm199, %v182, 0
    %v378 = vsel %vm199, %v183, 0
    %v381 = vsel %vm199, %v184, 0
    %v384 = vsel %vm199, %v185, 0
    %v387 = vsel %vm199, %v186, 0
    %v390 = vsel %vm199, %v187, 0
    %392 = vmatprep.subr.mxu0 0.0
    %393 = vmatpush1.msra.mxu0 %v188
    %394 = vmatprep.subr.mxu0 0.0
    %395 = vmatpush1.msra.mxu0 %v189
    %396 = vmatprep.subr.mxu0 0.0
    %397 = vmatpush1.msra.mxu0 %v190
    %398 = vmatprep.subr.mxu0 0.0
    %399 = vmatpush1.msra.mxu0 %v191
    %400 = vmatprep.subr.mxu0 0.0
    %401 = vmatpush1.msra.mxu0 0.0
    %402 = vmatprep.subr.mxu0 0.0
    %403 = vmatpush1.msra.mxu0 0.0
    %404 = vmatprep.subr.mxu0 0.0
    %405 = vmatpush1.msra.mxu0 0.0
    %406 = vmatprep.subr.mxu0 0.0
    %407 = vmatpush1.msra.mxu0 0.0
    %408 = vmatprep.subr.mxu0 0.0
    %409 = vmatpush1.msra.mxu0 0.0
    %410 = vmatprep.subr.mxu0 0.0
    %411 = vmatpush1.msra.mxu0 0.0
    %412 = vmatprep.subr.mxu0 0.0
    %413 = vmatpush1.msra.mxu0 0.0
    %414 = vmatprep.subr.mxu0 0.0
    %415 = vmatpush1.msra.mxu0 0.0
    %416 = vmatprep.subr.mxu0 0.0
    %417 = vmatpush1.msra.mxu0 0.0
    %418 = vmatprep.subr.mxu0 0.0
    %419 = vmatpush1.msra.mxu0 0.0
    %420 = vmatprep.subr.mxu0 0.0
    %421 = vmatpush1.msra.mxu0 0.0
    %422 = vmatprep.subr.mxu0 0.0
    %423 = vmatpush1.msra.mxu0 0.0
    %424 = vmatprep.subr.mxu0 0.0
    %425 = vmatpush1.msra.mxu0 0.0
    %426 = vmatprep.subr.mxu0 0.0
    %427 = vmatpush1.msra.mxu0 0.0
    %428 = vmatprep.subr.mxu0 0.0
    %429 = vmatpush1.msra.mxu0 0.0
    %430 = vmatprep.subr.mxu0 0.0
    %431 = vmatpush1.msra.mxu0 0.0
    %432 = vmatprep.subr.mxu0 0.0
    %433 = vmatpush1.msra.mxu0 0.0
    %434 = vmatprep.subr.mxu0 0.0
    %435 = vmatpush1.msra.mxu0 0.0
    %436 = vmatprep.subr.mxu0 0.0
    %437 = vmatpush1.msra.mxu0 0.0
    %438 = vmatprep.subr.mxu0 0.0
    %439 = vmatpush1.msra.mxu0 0.0
    %440 = vmatprep.subr.mxu0 0.0
    %441 = vmatpush1.msra.mxu0 0.0
    %442 = vmatprep.subr.mxu0 0.0
    %443 = vmatpush1.msra.mxu0 0.0
    %444 = vmatprep.subr.mxu0 0.0
    %445 = vmatpush1.msra.mxu0 0.0
    %446 = vmatprep.subr.mxu0 0.0
    %447 = vmatpush1.msra.mxu0 0.0
    %448 = vmatprep.subr.mxu0 0.0
    %449 = vmatpush1.msra.mxu0 0.0
    %450 = vmatprep.subr.mxu0 0.0
    %451 = vmatpush1.msra.mxu0 0.0
    %452 = vmatprep.subr.mxu0 0.0
    %453 = vmatpush1.msra.mxu0 0.0
    %454 = vmatprep.subr.mxu0 0.0
    %455 = vmatpush1.msra.mxu0 0.0
    %456 = vmatprep.mubr.f32.mxu0 0.0
    %457 = vmatmul.mubr.f32.gmra.mrb[0].mxu0 %v201
    %v458 = vpop.f32.mrb[0].mxu0
    %v459 = vadd.f32 %v197, %v458
    %v460 = vpop.f32.mrb[0].mxu0
    %461 = vmatprep.mubr.f32.mxu0 0.0
    %462 = vmatmul.mubr.f32.gmra.mrb[0].mxu0 %v204
    %v463 = vpop.f32.mrb[0].mxu0
    %v464 = vadd.f32 %v197, %v463
    %v465 = vpop.f32.mrb[0].mxu0
    %466 = vmatprep.mubr.f32.mxu0 0.0
    %467 = vmatmul.mubr.f32.gmra.mrb[0].mxu0 %v207
    %v468 = vpop.f32.mrb[0].mxu0
    %v469 = vadd.f32 %v197, %v468
    %v470 = vpop.f32.mrb[0].mxu0
    %471 = vmatprep.mubr.f32.mxu0 0.0
    %472 = vmatmul.mubr.f32.gmra.mrb[0].mxu0 %v210
    %v473 = vpop.f32.mrb[0].mxu0
    %v474 = vadd.f32 %v197, %v473
    %v475 = vpop.f32.mrb[0].mxu0
    %476 = vmatprep.mubr.f32.mxu0 0.0
    %477 = vmatmul.mubr.f32.gmra.mrb[0].mxu0 %v213
    %v478 = vpop.f32.mrb[0].mxu0
    %v479 = vadd.f32 %v197, %v478
    %v480 = vpop.f32.mrb[0].mxu0
    %481 = vmatprep.mubr.f32.mxu0 0.0
    %482 = vmatmul.mubr.f32.gmra.mrb[0].mxu0 %v216
    %v483 = vpop.f32.mrb[0].mxu0
    %v484 = vadd.f32 %v197, %v483
    %v485 = vpop.f32.mrb[0].mxu0
    %486 = vmatprep.mubr.f32.mxu0 0.0
    %487 = vmatmul.mubr.f32.gmra.mrb[0].mxu0 %v219
    %v488 = vpop.f32.mrb[0].mxu0
    %v489 = vadd.f32 %v197, %v488
    %v490 = vpop.f32.mrb[0].mxu0
    %491 = vmatprep.mubr.f32.mxu0 0.0
    %492 = vmatmul.mubr.f32.gmra.mrb[0].mxu0 %v222
    %v493 = vpop.f32.mrb[0].mxu0
    %v494 = vadd.f32 %v197, %v493
    %v495 = vpop.f32.mrb[0].mxu0
    %496 = vmatprep.mubr.f32.mxu0 0.0
    %497 = vmatmul.mubr.f32.gmra.mrb[0].mxu0 %v225
    %v498 = vpop.f32.mrb[0].mxu0
    %v499 = vadd.f32 %v197, %v498
    %v500 = vpop.f32.mrb[0].mxu0
    %501 = vmatprep.mubr.f32.mxu0 0.0
    %502 = vmatmul.mubr.f32.gmra.mrb[0].mxu0 %v228
    %v503 = vpop.f32.mrb[0].mxu0
    %v504 = vadd.f32 %v197, %v503
    %v505 = vpop.f32.mrb[0].mxu0
    %506 = vmatprep.mubr.f32.mxu0 0.0
    %507 = vmatmul.mubr.f32.gmra.mrb[0].mxu0 %v231
    %v508 = vpop.f32.mrb[0].mxu0
    %v509 = vadd.f32 %v197, %v508
    %v510 = vpop.f32.mrb[0].mxu0
    %511 = vmatprep.mubr.f32.mxu0 0.0
    %512 = vmatmul.mubr.f32.gmra.mrb[0].mxu0 %v234
    %v513 = vpop.f32.mrb[0].mxu0
    %v514 = vadd.f32 %v197, %v513
    %v515 = vpop.f32.mrb[0].mxu0
    %516 = vmatprep.mubr.f32.mxu0 0.0
    %517 = vmatmul.mubr.f32.gmra.mrb[0].mxu0 %v237
    %v518 = vpop.f32.mrb[0].mxu0
    %v519 = vadd.f32 %v197, %v518
    %v520 = vpop.f32.mrb[0].mxu0
    %521 = vmatprep.mubr.f32.mxu0 0.0
    %522 = vmatmul.mubr.f32.gmra.mrb[0].mxu0 %v240
    %v523 = vpop.f32.mrb[0].mxu0
    %v524 = vadd.f32 %v197, %v523
    %v525 = vpop.f32.mrb[0].mxu0
    %526 = vmatprep.mubr.f32.mxu0 0.0
    %527 = vmatmul.mubr.f32.gmra.mrb[0].mxu0 %v243
    %v528 = vpop.f32.mrb[0].mxu0
    %v529 = vadd.f32 %v197, %v528
    %v530 = vpop.f32.mrb[0].mxu0
    %531 = vmatprep.mubr.f32.mxu0 0.0
    %532 = vmatmul.mubr.f32.gmra.mrb[0].mxu0 %v246
    %v533 = vpop.f32.mrb[0].mxu0
    %v534 = vadd.f32 %v197, %v533
    %v535 = vpop.f32.mrb[0].mxu0
    %536 = vmatprep.mubr.f32.mxu0 0.0
    %537 = vmatmul.mubr.f32.gmra.mrb[0].mxu0 %v249
    %v538 = vpop.f32.mrb[0].mxu0
    %v539 = vadd.f32 %v197, %v538
    %v540 = vpop.f32.mrb[0].mxu0
    %541 = vmatprep.mubr.f32.mxu0 0.0
    %542 = vmatmul.mubr.f32.gmra.mrb[0].mxu0 %v252
    %v543 = vpop.f32.mrb[0].mxu0
    %v544 = vadd.f32 %v197, %v543
    %v545 = vpop.f32.mrb[0].mxu0
    %546 = vmatprep.mubr.f32.mxu0 0.0
    %547 = vmatmul.mubr.f32.gmra.mrb[0].mxu0 %v255
    %v548 = vpop.f32.mrb[0].mxu0
    %v549 = vadd.f32 %v197, %v548
    %v550 = vpop.f32.mrb[0].mxu0
    %551 = vmatprep.mubr.f32.mxu0 0.0
    %552 = vmatmul.mubr.f32.gmra.mrb[0].mxu0 %v258
    %v553 = vpop.f32.mrb[0].mxu0
    %v554 = vadd.f32 %v197, %v553
    %v555 = vpop.f32.mrb[0].mxu0
    %556 = vmatprep.mubr.f32.mxu0 0.0
    %557 = vmatmul.mubr.f32.gmra.mrb[0].mxu0 %v261
    %v558 = vpop.f32.mrb[0].mxu0
    %v559 = vadd.f32 %v197, %v558
    %v560 = vpop.f32.mrb[0].mxu0
    %561 = vmatprep.mubr.f32.mxu0 0.0
    %562 = vmatmul.mubr.f32.gmra.mrb[0].mxu0 %v264
    %v563 = vpop.f32.mrb[0].mxu0
    %v564 = vadd.f32 %v197, %v563
    %v565 = vpop.f32.mrb[0].mxu0
    %566 = vmatprep.mubr.f32.mxu0 0.0
    %567 = vmatmul.mubr.f32.gmra.mrb[0].mxu0 %v267
    %v568 = vpop.f32.mrb[0].mxu0
    %v569 = vadd.f32 %v197, %v568
    %v570 = vpop.f32.mrb[0].mxu0
    %571 = vmatprep.mubr.f32.mxu0 0.0
    %572 = vmatmul.mubr.f32.gmra.mrb[0].mxu0 %v270
    %v573 = vpop.f32.mrb[0].mxu0
    %v574 = vadd.f32 %v197, %v573
    %v575 = vpop.f32.mrb[0].mxu0
    %576 = vmatprep.mubr.f32.mxu0 0.0
    %577 = vmatmul.mubr.f32.gmra.mrb[0].mxu0 %v273
    %v578 = vpop.f32.mrb[0].mxu0
    %v579 = vadd.f32 %v197, %v578
    %v580 = vpop.f32.mrb[0].mxu0
    %581 = vmatprep.mubr.f32.mxu0 0.0
    %582 = vmatmul.mubr.f32.gmra.mrb[0].mxu0 %v276
    %v583 = vpop.f32.mrb[0].mxu0
    %v584 = vadd.f32 %v197, %v583
    %v585 = vpop.f32.mrb[0].mxu0
    %586 = vmatprep.mubr.f32.mxu0 0.0
    %587 = vmatmul.mubr.f32.gmra.mrb[0].mxu0 %v279
    %v588 = vpop.f32.mrb[0].mxu0
    %v589 = vadd.f32 %v197, %v588
    %v590 = vpop.f32.mrb[0].mxu0
    %591 = vmatprep.mubr.f32.mxu0 0.0
    %592 = vmatmul.mubr.f32.gmra.mrb[0].mxu0 %v282
    %v593 = vpop.f32.mrb[0].mxu0
    %v594 = vadd.f32 %v197, %v593
    %v595 = vpop.f32.mrb[0].mxu0
    %596 = vmatprep.mubr.f32.mxu0 0.0
    %597 = vmatmul.mubr.f32.gmra.mrb[0].mxu0 %v285
    %v598 = vpop.f32.mrb[0].mxu0
    %v599 = vadd.f32 %v197, %v598
    %v600 = vpop.f32.mrb[0].mxu0
    %601 = vmatprep.mubr.f32.mxu0 0.0
    %602 = vmatmul.mubr.f32.gmra.mrb[0].mxu0 %v288
    %v603 = vpop.f32.mrb[0].mxu0
    %v604 = vadd.f32 %v197, %v603
    %v605 = vpop.f32.mrb[0].mxu0
    %606 = vmatprep.mubr.f32.mxu0 0.0
    %607 = vmatmul.mubr.f32.gmra.mrb[0].mxu0 %v291
    %v608 = vpop.f32.mrb[0].mxu0
    %v609 = vadd.f32 %v197, %v608
    %v610 = vpop.f32.mrb[0].mxu0
    %611 = vmatprep.mubr.f32.mxu0 0.0
    %612 = vmatmul.mubr.f32.gmra.mrb[0].mxu0 %v294
    %v613 = vpop.f32.mrb[0].mxu0
    %v614 = vadd.f32 %v197, %v613
    %v615 = vpop.f32.mrb[0].mxu0
    %616 = vmatprep.mubr.f32.mxu0 0.0
    %617 = vmatmul.mubr.f32.gmra.mrb[0].mxu0 %v297
    %v618 = vpop.f32.mrb[0].mxu0
    %v619 = vadd.f32 %v197, %v618
    %v620 = vpop.f32.mrb[0].mxu0
    %621 = vmatprep.mubr.f32.mxu0 0.0
    %622 = vmatmul.mubr.f32.gmra.mrb[0].mxu0 %v300
    %v623 = vpop.f32.mrb[0].mxu0
    %v624 = vadd.f32 %v197, %v623
    %v625 = vpop.f32.mrb[0].mxu0
    %626 = vmatprep.mubr.f32.mxu0 0.0
    %627 = vmatmul.mubr.f32.gmra.mrb[0].mxu0 %v303
    %v628 = vpop.f32.mrb[0].mxu0
    %v629 = vadd.f32 %v197, %v628
    %v630 = vpop.f32.mrb[0].mxu0
    %631 = vmatprep.mubr.f32.mxu0 0.0
    %632 = vmatmul.mubr.f32.gmra.mrb[0].mxu0 %v306
    %v633 = vpop.f32.mrb[0].mxu0
    %v634 = vadd.f32 %v197, %v633
    %v635 = vpop.f32.mrb[0].mxu0
    %636 = vmatprep.mubr.f32.mxu0 0.0
    %637 = vmatmul.mubr.f32.gmra.mrb[0].mxu0 %v309
    %v638 = vpop.f32.mrb[0].mxu0
    %v639 = vadd.f32 %v197, %v638
    %v640 = vpop.f32.mrb[0].mxu0
    %641 = vmatprep.mubr.f32.mxu0 0.0
    %642 = vmatmul.mubr.f32.gmra.mrb[0].mxu0 %v312
    %v643 = vpop.f32.mrb[0].mxu0
    %v644 = vadd.f32 %v197, %v643
    %v645 = vpop.f32.mrb[0].mxu0
    %646 = vmatprep.mubr.f32.mxu0 0.0
    %647 = vmatmul.mubr.f32.gmra.mrb[0].mxu0 %v315
    %v648 = vpop.f32.mrb[0].mxu0
    %v649 = vadd.f32 %v197, %v648
    %v650 = vpop.f32.mrb[0].mxu0
    %651 = vmatprep.mubr.f32.mxu0 0.0
    %652 = vmatmul.mubr.f32.gmra.mrb[0].mxu0 %v318
    %v653 = vpop.f32.mrb[0].mxu0
    %v654 = vadd.f32 %v197, %v653
    %v655 = vpop.f32.mrb[0].mxu0
    %656 = vmatprep.mubr.f32.mxu0 0.0
    %657 = vmatmul.mubr.f32.gmra.mrb[0].mxu0 %v321
    %v658 = vpop.f32.mrb[0].mxu0
    %v659 = vadd.f32 %v197, %v658
    %v660 = vpop.f32.mrb[0].mxu0
    %661 = vmatprep.mubr.f32.mxu0 0.0
    %662 = vmatmul.mubr.f32.gmra.mrb[0].mxu0 %v324
    %v663 = vpop.f32.mrb[0].mxu0
    %v664 = vadd.f32 %v197, %v663
    %v665 = vpop.f32.mrb[0].mxu0
    %666 = vmatprep.mubr.f32.mxu0 0.0
    %667 = vmatmul.mubr.f32.gmra.mrb[0].mxu0 %v327
    %v668 = vpop.f32.mrb[0].mxu0
    %v669 = vadd.f32 %v197, %v668
    %v670 = vpop.f32.mrb[0].mxu0
    %671 = vmatprep.mubr.f32.mxu0 0.0
    %672 = vmatmul.mubr.f32.gmra.mrb[0].mxu0 %v330
    %v673 = vpop.f32.mrb[0].mxu0
    %v674 = vadd.f32 %v197, %v673
    %v675 = vpop.f32.mrb[0].mxu0
    %676 = vmatprep.mubr.f32.mxu0 0.0
    %677 = vmatmul.mubr.f32.gmra.mrb[0].mxu0 %v333
    %v678 = vpop.f32.mrb[0].mxu0
    %v679 = vadd.f32 %v197, %v678
    %v680 = vpop.f32.mrb[0].mxu0
    %681 = vmatprep.mubr.f32.mxu0 0.0
    %682 = vmatmul.mubr.f32.gmra.mrb[0].mxu0 %v336
    %v683 = vpop.f32.mrb[0].mxu0
    %v684 = vadd.f32 %v197, %v683
    %v685 = vpop.f32.mrb[0].mxu0
    %686 = vmatprep.mubr.f32.mxu0 0.0
    %687 = vmatmul.mubr.f32.gmra.mrb[0].mxu0 %v339
    %v688 = vpop.f32.mrb[0].mxu0
    %v689 = vadd.f32 %v197, %v688
    %v690 = vpop.f32.mrb[0].mxu0
    %691 = vmatprep.mubr.f32.mxu0 0.0
    %692 = vmatmul.mubr.f32.gmra.mrb[0].mxu0 %v342
    %v693 = vpop.f32.mrb[0].mxu0
    %v694 = vadd.f32 %v197, %v693
    %v695 = vpop.f32.mrb[0].mxu0
    %696 = vmatprep.mubr.f32.mxu0 0.0
    %697 = vmatmul.mubr.f32.gmra.mrb[0].mxu0 %v345
    %v698 = vpop.f32.mrb[0].mxu0
    %v699 = vadd.f32 %v197, %v698
    %v700 = vpop.f32.mrb[0].mxu0
    %701 = vmatprep.mubr.f32.mxu0 0.0
    %702 = vmatmul.mubr.f32.gmra.mrb[0].mxu0 %v348
    %v703 = vpop.f32.mrb[0].mxu0
    %v704 = vadd.f32 %v197, %v703
    %v705 = vpop.f32.mrb[0].mxu0
    %706 = vmatprep.mubr.f32.mxu0 0.0
    %707 = vmatmul.mubr.f32.gmra.mrb[0].mxu0 %v351
    %v708 = vpop.f32.mrb[0].mxu0
    %v709 = vadd.f32 %v197, %v708
    %v710 = vpop.f32.mrb[0].mxu0
    %711 = vmatprep.mubr.f32.mxu0 0.0
    %712 = vmatmul.mubr.f32.gmra.mrb[0].mxu0 %v354
    %v713 = vpop.f32.mrb[0].mxu0
    %v714 = vadd.f32 %v197, %v713
    %v715 = vpop.f32.mrb[0].mxu0
    %716 = vmatprep.mubr.f32.mxu0 0.0
    %717 = vmatmul.mubr.f32.gmra.mrb[0].mxu0 %v357
    %v718 = vpop.f32.mrb[0].mxu0
    %v719 = vadd.f32 %v197, %v718
    %v720 = vpop.f32.mrb[0].mxu0
    %721 = vmatprep.mubr.f32.mxu0 0.0
    %722 = vmatmul.mubr.f32.gmra.mrb[0].mxu0 %v360
    %v723 = vpop.f32.mrb[0].mxu0
    %v724 = vadd.f32 %v197, %v723
    %v725 = vpop.f32.mrb[0].mxu0
    %726 = vmatprep.mubr.f32.mxu0 0.0
    %727 = vmatmul.mubr.f32.gmra.mrb[0].mxu0 %v363
    %v728 = vpop.f32.mrb[0].mxu0
    %v729 = vadd.f32 %v197, %v728
    %v730 = vpop.f32.mrb[0].mxu0
    %731 = vmatprep.mubr.f32.mxu0 0.0
    %732 = vmatmul.mubr.f32.gmra.mrb[0].mxu0 %v366
    %v733 = vpop.f32.mrb[0].mxu0
    %v734 = vadd.f32 %v197, %v733
    %v735 = vpop.f32.mrb[0].mxu0
    %736 = vmatprep.mubr.f32.mxu0 0.0
    %737 = vmatmul.mubr.f32.gmra.mrb[0].mxu0 %v369
    %v738 = vpop.f32.mrb[0].mxu0
    %v739 = vadd.f32 %v197, %v738
    %v740 = vpop.f32.mrb[0].mxu0
    %741 = vmatprep.mubr.f32.mxu0 0.0
    %742 = vmatmul.mubr.f32.gmra.mrb[0].mxu0 %v372
    %v743 = vpop.f32.mrb[0].mxu0
    %v744 = vadd.f32 %v197, %v743
    %v745 = vpop.f32.mrb[0].mxu0
    %746 = vmatprep.mubr.f32.mxu0 0.0
    %747 = vmatmul.mubr.f32.gmra.mrb[0].mxu0 %v375
    %v748 = vpop.f32.mrb[0].mxu0
    %v749 = vadd.f32 %v197, %v748
    %v750 = vpop.f32.mrb[0].mxu0
    %751 = vmatprep.mubr.f32.mxu0 0.0
    %752 = vmatmul.mubr.f32.gmra.mrb[0].mxu0 %v378
    %v753 = vpop.f32.mrb[0].mxu0
    %v754 = vadd.f32 %v197, %v753
    %v755 = vpop.f32.mrb[0].mxu0
    %756 = vmatprep.mubr.f32.mxu0 0.0
    %757 = vmatmul.mubr.f32.gmra.mrb[0].mxu0 %v381
    %v758 = vpop.f32.mrb[0].mxu0
    %v759 = vadd.f32 %v197, %v758
    %v760 = vpop.f32.mrb[0].mxu0
    %761 = vmatprep.mubr.f32.mxu0 0.0
    %762 = vmatmul.mubr.f32.gmra.mrb[0].mxu0 %v384
    %v763 = vpop.f32.mrb[0].mxu0
    %v764 = vadd.f32 %v197, %v763
    %v765 = vpop.f32.mrb[0].mxu0
    %766 = vmatprep.mubr.f32.mxu0 0.0
    %767 = vmatmul.mubr.f32.gmra.mrb[0].mxu0 %v387
    %v768 = vpop.f32.mrb[0].mxu0
    %v769 = vadd.f32 %v197, %v768
    %v770 = vpop.f32.mrb[0].mxu0
    %771 = vmatprep.mubr.f32.mxu0 0.0
    %772 = vmatmul.mubr.f32.gmra.mrb[0].mxu0 %v390
    %v773 = vpop.f32.mrb[0].mxu0
    %v774 = vadd.f32 %v197, %v773
    %v775 = vpop.f32.mrb[0].mxu0
    %776 = vdwg.mxu0
    %v777 = vmax.f32 %v459, 0.0
    %v778 = vmax.f32 %v464, 0.0
    %v779 = vmax.f32 %v469, 0.0
    %v780 = vmax.f32 %v474, 0.0
    %v781 = vmax.f32 %v479, 0.0
    %v782 = vmax.f32 %v484, 0.0
    %v783 = vmax.f32 %v489, 0.0
    %v784 = vmax.f32 %v494, 0.0
    %v785 = vmax.f32 %v499, 0.0
    %v786 = vmax.f32 %v504, 0.0
    %v787 = vmax.f32 %v509, 0.0
    %v788 = vmax.f32 %v514, 0.0
    %v789 = vmax.f32 %v519, 0.0
    %v790 = vmax.f32 %v524, 0.0
    %v791 = vmax.f32 %v529, 0.0
    %v792 = vmax.f32 %v534, 0.0
    %v793 = vmax.f32 %v539, 0.0
    %v794 = vmax.f32 %v544, 0.0
    %v795 = vmax.f32 %v549, 0.0
    %v796 = vmax.f32 %v554, 0.0
    %v797 = vmax.f32 %v559, 0.0
    %v798 = vmax.f32 %v564, 0.0
    %v799 = vmax.f32 %v569, 0.0
    %v800 = vmax.f32 %v574, 0.0
    %v801 = vmax.f32 %v579, 0.0
    %v802 = vmax.f32 %v584, 0.0
    %v803 = vmax.f32 %v589, 0.0
    %v804 = vmax.f32 %v594, 0.0
    %v805 = vmax.f32 %v599, 0.0
    %v806 = vmax.f32 %v604, 0.0
    %v807 = vmax.f32 %v609, 0.0
    %v808 = vmax.f32 %v614, 0.0
    %v809 = vmax.f32 %v619, 0.0
    %v810 = vmax.f32 %v624, 0.0
    %v811 = vmax.f32 %v629, 0.0
    %v812 = vmax.f32 %v634, 0.0
    %v813 = vmax.f32 %v639, 0.0
    %v814 = vmax.f32 %v644, 0.0
    %v815 = vmax.f32 %v649, 0.0
    %v816 = vmax.f32 %v654, 0.0
    %v817 = vmax.f32 %v659, 0.0
    %v818 = vmax.f32 %v664, 0.0
    %v819 = vmax.f32 %v669, 0.0
    %v820 = vmax.f32 %v674, 0.0
    %v821 = vmax.f32 %v679, 0.0
    %v822 = vmax.f32 %v684, 0.0
    %v823 = vmax.f32 %v689, 0.0
    %v824 = vmax.f32 %v694, 0.0
    %v825 = vmax.f32 %v699, 0.0
    %v826 = vmax.f32 %v704, 0.0
    %v827 = vmax.f32 %v709, 0.0
    %v828 = vmax.f32 %v714, 0.0
    %v829 = vmax.f32 %v719, 0.0
    %v830 = vmax.f32 %v724, 0.0
    %v831 = vmax.f32 %v729, 0.0
    %v832 = vmax.f32 %v734, 0.0
    %v833 = vmax.f32 %v739, 0.0
    %v834 = vmax.f32 %v744, 0.0
    %v835 = vmax.f32 %v749, 0.0
    %v836 = vmax.f32 %v754, 0.0
    %v837 = vmax.f32 %v759, 0.0
    %v838 = vmax.f32 %v764, 0.0
    %v839 = vmax.f32 %v769, 0.0
    %v840 = vmax.f32 %v774, 0.0
    %v841 = vmax.f32 %v777, %v779
    %v842 = vmax.f32 %v778, %v780
    %v843 = vmax.f32 %v781, %v783
    %v844 = vmax.f32 %v782, %v784
    %v845 = vmax.f32 %v785, %v787
    %v846 = vmax.f32 %v786, %v788
    %v847 = vmax.f32 %v789, %v791
    %v848 = vmax.f32 %v790, %v792
    %v849 = vmax.f32 %v793, %v795
    %v850 = vmax.f32 %v794, %v796
    %v851 = vmax.f32 %v797, %v799
    %v852 = vmax.f32 %v798, %v800
    %v853 = vmax.f32 %v801, %v803
    %v854 = vmax.f32 %v802, %v804
    %v855 = vmax.f32 %v805, %v807
    %v856 = vmax.f32 %v806, %v808
    %v857 = vmax.f32 %v809, %v811
    %v858 = vmax.f32 %v810, %v812
    %v859 = vmax.f32 %v813, %v815
    %v860 = vmax.f32 %v814, %v816
    %v861 = vmax.f32 %v817, %v819
    %v862 = vmax.f32 %v818, %v820
    %v863 = vmax.f32 %v821, %v823
    %v864 = vmax.f32 %v822, %v824
    %v865 = vmax.f32 %v825, %v827
    %v866 = vmax.f32 %v826, %v828
    %v867 = vmax.f32 %v829, %v831
    %v868 = vmax.f32 %v830, %v832
    %v869 = vmax.f32 %v833, %v835
    %v870 = vmax.f32 %v834, %v836
    %v871 = vmax.f32 %v837, %v839
    %v872 = vmax.f32 %v838, %v840
    %873 = vst.msk [vmem:[#allocation2] sm:$0xff] %vm199, %v841
    %874 = vst.msk [vmem:[#allocation2 + $0x8] sm:$0xff] %vm199, %v842
    %875 = vst.msk [vmem:[#allocation2 + $0x10] sm:$0xff] %vm199, %v843
    %876 = vst.msk [vmem:[#allocation2 + $0x18] sm:$0xff] %vm199, %v844
    %877 = vst.msk [vmem:[#allocation2 + $0x20] sm:$0xff] %vm199, %v845
    %878 = vst.msk [vmem:[#allocation2 + $0x28] sm:$0xff] %vm199, %v846
    %879 = vst.msk [vmem:[#allocation2 + $0x30] sm:$0xff] %vm199, %v847
    %880 = vst.msk [vmem:[#allocation2 + $0x38] sm:$0xff] %vm199, %v848
    %881 = vst.msk [vmem:[#allocation2 + $0x40] sm:$0xff] %vm199, %v849
    %882 = vst.msk [vmem:[#allocation2 + $0x48] sm:$0xff] %vm199, %v850
    %883 = vst.msk [vmem:[#allocation2 + $0x50] sm:$0xff] %vm199, %v851
    %884 = vst.msk [vmem:[#allocation2 + $0x58] sm:$0xff] %vm199, %v852
    %885 = vst.msk [vmem:[#allocation2 + $0x60] sm:$0xff] %vm199, %v853
    %886 = vst.msk [vmem:[#allocation2 + $0x68] sm:$0xff] %vm199, %v854
    %887 = vst.msk [vmem:[#allocation2 + $0x70] sm:$0xff] %vm199, %v855
    %888 = vst.msk [vmem:[#allocation2 + $0x78] sm:$0xff] %vm199, %v856
    %889 = vst.msk [vmem:[#allocation2 + $0x80] sm:$0xff] %vm199, %v857
    %890 = vst.msk [vmem:[#allocation2 + $0x88] sm:$0xff] %vm199, %v858
    %891 = vst.msk [vmem:[#allocation2 + $0x90] sm:$0xff] %vm199, %v859
    %892 = vst.msk [vmem:[#allocation2 + $0x98] sm:$0xff] %vm199, %v860
    %893 = vst.msk [vmem:[#allocation2 + $0xa0] sm:$0xff] %vm199, %v861
    %894 = vst.msk [vmem:[#allocation2 + $0xa8] sm:$0xff] %vm199, %v862
    %895 = vst.msk [vmem:[#allocation2 + $0xb0] sm:$0xff] %vm199, %v863
    %896 = vst.msk [vmem:[#allocation2 + $0xb8] sm:$0xff] %vm199, %v864
    %897 = vst.msk [vmem:[#allocation2 + $0xc0] sm:$0xff] %vm199, %v865
    %898 = vst.msk [vmem:[#allocation2 + $0xc8] sm:$0xff] %vm199, %v866
    %899 = vst.msk [vmem:[#allocation2 + $0xd0] sm:$0xff] %vm199, %v867
    %900 = vst.msk [vmem:[#allocation2 + $0xd8] sm:$0xff] %vm199, %v868
    %901 = vst.msk [vmem:[#allocation2 + $0xe0] sm:$0xff] %vm199, %v869
    %902 = vst.msk [vmem:[#allocation2 + $0xe8] sm:$0xff] %vm199, %v870
    %903 = vst.msk [vmem:[#allocation2 + $0xf0] sm:$0xff] %vm199, %v871
    %904 = vst.msk [vmem:[#allocation2 + $0xf8] sm:$0xff] %vm199, %v872
    %v905 = vld [vmem:[#allocation2] ss:$2 sm:$0xff]
    %s906 = scalar_lea.vmem [#allocation2], 16
    %v907 = vld [vmem:[%s906] ss:$2 sm:$0xff]
    %s908 = scalar_lea.vmem [#allocation2], 32
    %v909 = vld [vmem:[%s908] ss:$2 sm:$0xff]
    %s910 = scalar_lea.vmem [#allocation2], 48
    %v911 = vld [vmem:[%s910] ss:$2 sm:$0xff]
    %s912 = scalar_lea.vmem [#allocation2], 64
    %v913 = vld [vmem:[%s912] ss:$2 sm:$0xff]
    %s914 = scalar_lea.vmem [#allocation2], 80
    %v915 = vld [vmem:[%s914] ss:$2 sm:$0xff]
    %s916 = scalar_lea.vmem [#allocation2], 96
    %v917 = vld [vmem:[%s916] ss:$2 sm:$0xff]
    %s918 = scalar_lea.vmem [#allocation2], 112
    %v919 = vld [vmem:[%s918] ss:$2 sm:$0xff]
    %s920 = scalar_lea.vmem [#allocation2], 128
    %v921 = vld [vmem:[%s920] ss:$2 sm:$0xff]
    %s922 = scalar_lea.vmem [#allocation2], 144
    %v923 = vld [vmem:[%s922] ss:$2 sm:$0xff]
    %s924 = scalar_lea.vmem [#allocation2], 160
    %v925 = vld [vmem:[%s924] ss:$2 sm:$0xff]
    %s926 = scalar_lea.vmem [#allocation2], 176
    %v927 = vld [vmem:[%s926] ss:$2 sm:$0xff]
    %s928 = scalar_lea.vmem [#allocation2], 192
    %v929 = vld [vmem:[%s928] ss:$2 sm:$0xff]
    %s930 = scalar_lea.vmem [#allocation2], 208
    %v931 = vld [vmem:[%s930] ss:$2 sm:$0xff]
    %s932 = scalar_lea.vmem [#allocation2], 224
    %v933 = vld [vmem:[%s932] ss:$2 sm:$0xff]
    %s934 = scalar_lea.vmem [#allocation2], 240
    %v935 = vld [vmem:[%s934] ss:$2 sm:$0xff]
    %s936 = scalar_lea.vmem [#allocation2], 1
    %v937 = vld [vmem:[%s936] ss:$2 sm:$0xff]
    %s938 = scalar_lea.vmem [#allocation2], 17
    %v939 = vld [vmem:[%s938] ss:$2 sm:$0xff]
    %s940 = scalar_lea.vmem [#allocation2], 33
    %v941 = vld [vmem:[%s940] ss:$2 sm:$0xff]
    %s942 = scalar_lea.vmem [#allocation2], 49
    %v943 = vld [vmem:[%s942] ss:$2 sm:$0xff]
    %s944 = scalar_lea.vmem [#allocation2], 65
    %v945 = vld [vmem:[%s944] ss:$2 sm:$0xff]
    %s946 = scalar_lea.vmem [#allocation2], 81
    %v947 = vld [vmem:[%s946] ss:$2 sm:$0xff]
    %s948 = scalar_lea.vmem [#allocation2], 97
    %v949 = vld [vmem:[%s948] ss:$2 sm:$0xff]
    %s950 = scalar_lea.vmem [#allocation2], 113
    %v951 = vld [vmem:[%s950] ss:$2 sm:$0xff]
    %s952 = scalar_lea.vmem [#allocation2], 129
    %v953 = vld [vmem:[%s952] ss:$2 sm:$0xff]
    %s954 = scalar_lea.vmem [#allocation2], 145
    %v955 = vld [vmem:[%s954] ss:$2 sm:$0xff]
    %s956 = scalar_lea.vmem [#allocation2], 161
    %v957 = vld [vmem:[%s956] ss:$2 sm:$0xff]
    %s958 = scalar_lea.vmem [#allocation2], 177
    %v959 = vld [vmem:[%s958] ss:$2 sm:$0xff]
    %s960 = scalar_lea.vmem [#allocation2], 193
    %v961 = vld [vmem:[%s960] ss:$2 sm:$0xff]
    %s962 = scalar_lea.vmem [#allocation2], 209
    %v963 = vld [vmem:[%s962] ss:$2 sm:$0xff]
    %s964 = scalar_lea.vmem [#allocation2], 225
    %v965 = vld [vmem:[%s964] ss:$2 sm:$0xff]
    %s966 = scalar_lea.vmem [#allocation2], 241
    %v967 = vld [vmem:[%s966] ss:$2 sm:$0xff]
    %v968 = vmax.f32 %v905, %v937
    %v969 = vmax.f32 %v907, %v939
    %v970 = vmax.f32 %v909, %v941
    %v971 = vmax.f32 %v911, %v943
    %v972 = vmax.f32 %v913, %v945
    %v973 = vmax.f32 %v915, %v947
    %v974 = vmax.f32 %v917, %v949
    %v975 = vmax.f32 %v919, %v951
    %v976 = vmax.f32 %v921, %v953
    %v977 = vmax.f32 %v923, %v955
    %v978 = vmax.f32 %v925, %v957
    %v979 = vmax.f32 %v927, %v959
    %v980 = vmax.f32 %v929, %v961
    %v981 = vmax.f32 %v931, %v963
    %v982 = vmax.f32 %v933, %v965
    %v983 = vmax.f32 %v935, %v967
    %984 = vst.msk [vmem:[#allocation3] sm:$0xff] %vm199, 0.0
    %vm985 = vcmask 257024
    %986 = vst.msk [vmem:[#allocation3 + $0x8] sm:$0xf] %vm985, 0.0
    %987 = vst.msk [vmem:[#allocation3 + $0x10] sm:$0xff] %vm199, 0.0
    %988 = vst.msk [vmem:[#allocation3 + $0x18] sm:$0xf] %vm985, 0.0
    %989 = vst.msk [vmem:[#allocation3 + $0x20] sm:$0xff] %vm199, 0.0
    %990 = vst.msk [vmem:[#allocation3 + $0x28] sm:$0xf] %vm985, 0.0
    %991 = vst.msk [vmem:[#allocation3 + $0x30] sm:$0xff] %vm199, 0.0
    %992 = vst.msk [vmem:[#allocation3 + $0x38] sm:$0xf] %vm985, 0.0
    %993 = vst.msk [vmem:[#allocation3 + $0x40] sm:$0xff] %vm199, 0.0
    %994 = vst.msk [vmem:[#allocation3 + $0x48] sm:$0xf] %vm985, 0.0
    %995 = vst.msk [vmem:[#allocation3 + $0x50] sm:$0xff] %vm199, 0.0
    %996 = vst.msk [vmem:[#allocation3 + $0x58] sm:$0xf] %vm985, 0.0
    %997 = vst.msk [vmem:[#allocation3 + $0x60] sm:$0xff] %vm199, 0.0
    %998 = vst.msk [vmem:[#allocation3 + $0x68] sm:$0xf] %vm985, 0.0
    %999 = vst.msk [vmem:[#allocation3 + $0x70] sm:$0xff] %vm199, 0.0
    %1000 = vst.msk [vmem:[#allocation3 + $0x78] sm:$0xf] %vm985, 0.0
    %1001 = vst.msk [vmem:[#allocation3 + $0x80] sm:$0xff] %vm199, 0.0
    %1002 = vst.msk [vmem:[#allocation3 + $0x88] sm:$0xf] %vm985, 0.0
    %1003 = vst.msk [vmem:[#allocation3 + $0x90] sm:$0xff] %vm199, 0.0
    %1004 = vst.msk [vmem:[#allocation3 + $0x98] sm:$0xf] %vm985, 0.0
    %1005 = vst.msk [vmem:[#allocation3 + $0xa0] sm:$0xff] %vm199, 0.0
    %1006 = vst.msk [vmem:[#allocation3 + $0xa8] sm:$0xf] %vm985, 0.0
    %1007 = vst.msk [vmem:[#allocation3 + $0xb0] sm:$0xff] %vm199, 0.0
    %1008 = vst.msk [vmem:[#allocation3 + $0xb8] sm:$0xf] %vm985, 0.0
    %1009 = vst.msk [vmem:[#allocation3 + $0xc0] sm:$0xff] %vm199, 0.0
    %1010 = vst.msk [vmem:[#allocation3 + $0xc8] sm:$0xf] %vm985, 0.0
    %1011 = vst.msk [vmem:[#allocation3 + $0xd0] sm:$0xff] %vm199, 0.0
    %1012 = vst.msk [vmem:[#allocation3 + $0xd8] sm:$0xf] %vm985, 0.0
    %1013 = vst.msk [vmem:[#allocation3 + $0xe0] sm:$0xff] %vm199, 0.0
    %1014 = vst.msk [vmem:[#allocation3 + $0xe8] sm:$0xf] %vm985, 0.0
    %1015 = vst.msk [vmem:[#allocation3 + $0xf0] sm:$0xff] %vm199, 0.0
    %1016 = vst.msk [vmem:[#allocation3 + $0xf8] sm:$0xf] %vm985, 0.0
    %1017 = vst.msk [vmem:[#allocation3 + $0x100] sm:$0xff] %vm199, 0.0
    %1018 = vst.msk [vmem:[#allocation3 + $0x108] sm:$0xf] %vm985, 0.0
    %1019 = vst.msk [vmem:[#allocation3 + $0x110] sm:$0xff] %vm199, 0.0
    %1020 = vst.msk [vmem:[#allocation3 + $0x118] sm:$0xf] %vm985, 0.0
    %1021 = vst.msk [vmem:[#allocation3 + $0x120] sm:$0xff] %vm199, 0.0
    %1022 = vst.msk [vmem:[#allocation3 + $0x128] sm:$0xf] %vm985, 0.0
    %1023 = vst.msk [vmem:[#allocation3 + $0x130] sm:$0xff] %vm199, 0.0
    %1024 = vst.msk [vmem:[#allocation3 + $0x138] sm:$0xf] %vm985, 0.0
    %1025 = vst.msk [vmem:[#allocation3 + $0x140] sm:$0xff] %vm199, 0.0
    %1026 = vst.msk [vmem:[#allocation3 + $0x148] sm:$0xf] %vm985, 0.0
    %1027 = vst.msk [vmem:[#allocation3 + $0x150] sm:$0xff] %vm199, 0.0
    %1028 = vst.msk [vmem:[#allocation3 + $0x158] sm:$0xf] %vm985, 0.0
    %1029 = vst.msk [vmem:[#allocation3 + $0x160] sm:$0xff] %vm199, 0.0
    %1030 = vst.msk [vmem:[#allocation3 + $0x168] sm:$0xf] %vm985, 0.0
    %1031 = vst.msk [vmem:[#allocation3 + $0x170] sm:$0xff] %vm199, 0.0
    %1032 = vst.msk [vmem:[#allocation3 + $0x178] sm:$0xf] %vm985, 0.0
    %s1033 = scalar_lea.vmem [#allocation3], 32
    %1034 = vst.msk [vmem:[%s1033 + $0x2] sm:$0xff] %vm199, %v968
    %1035 = vst.msk [vmem:[%s1033 + $0x12] sm:$0xff] %vm199, %v969
    %1036 = vst.msk [vmem:[%s1033 + $0x22] sm:$0xff] %vm199, %v970
    %1037 = vst.msk [vmem:[%s1033 + $0x32] sm:$0xff] %vm199, %v971
    %1038 = vst.msk [vmem:[%s1033 + $0x42] sm:$0xff] %vm199, %v972
    %1039 = vst.msk [vmem:[%s1033 + $0x52] sm:$0xff] %vm199, %v973
    %1040 = vst.msk [vmem:[%s1033 + $0x62] sm:$0xff] %vm199, %v974
    %1041 = vst.msk [vmem:[%s1033 + $0x72] sm:$0xff] %vm199, %v975
    %1042 = vst.msk [vmem:[%s1033 + $0xc2] sm:$0xff] %vm199, %v976
    %1043 = vst.msk [vmem:[%s1033 + $0xd2] sm:$0xff] %vm199, %v977
    %1044 = vst.msk [vmem:[%s1033 + $0xe2] sm:$0xff] %vm199, %v978
    %1045 = vst.msk [vmem:[%s1033 + $0xf2] sm:$0xff] %vm199, %v979
    %1046 = vst.msk [vmem:[%s1033 + $0x102] sm:$0xff] %vm199, %v980
    %1047 = vst.msk [vmem:[%s1033 + $0x112] sm:$0xff] %vm199, %v981
    %1048 = vst.msk [vmem:[%s1033 + $0x122] sm:$0xff] %vm199, %v982
    %1049 = vst.msk [vmem:[%s1033 + $0x132] sm:$0xff] %vm199, %v983
    %v1050 = vld [vmem:[#allocation3] sm:$0xff]
    %v1051 = vld [vmem:[#allocation3 + $0x10] sm:$0xff]
    %v1052 = vld [vmem:[#allocation3 + $0x20] sm:$0xff]
    %v1053 = vld [vmem:[#allocation3 + $0x30] sm:$0xff]
    %v1054 = vld [vmem:[#allocation3 + $0x40] sm:$0xff]
    %v1055 = vld [vmem:[#allocation3 + $0x50] sm:$0xff]
    %v1056 = vld [vmem:[#allocation3 + $0x60] sm:$0xff]
    %v1057 = vld [vmem:[#allocation3 + $0x70] sm:$0xff]
    %v1058 = vld [vmem:[#allocation3 + $0xc0] sm:$0xff]
    %v1059 = vld [vmem:[#allocation3 + $0xd0] sm:$0xff]
    %v1060 = vld [vmem:[#allocation3 + $0xe0] sm:$0xff]
    %v1061 = vld [vmem:[#allocation3 + $0xf0] sm:$0xff]
    %v1062 = vld [vmem:[#allocation3 + $0x100] sm:$0xff]
    %v1063 = vld [vmem:[#allocation3 + $0x110] sm:$0xff]
    %v1064 = vld [vmem:[#allocation3 + $0x120] sm:$0xff]
    %v1065 = vld [vmem:[#allocation3 + $0x130] sm:$0xff]
    %v1066 = vld [vmem:[%s3] sm:$0xff]
    %v1067 = vld [vmem:[%s3 + $0x8] sm:$0xff]
    %v1068 = vld [vmem:[%s3 + $0x10] sm:$0xff]
    %v1069 = vld [vmem:[%s3 + $0x18] sm:$0xff]
    %v1070 = vld [vmem:[#allocation3 + $0x1] sm:$0xff]
    %v1071 = vld [vmem:[#allocation3 + $0x11] sm:$0xff]
    %v1072 = vld [vmem:[#allocation3 + $0x21] sm:$0xff]
    %v1073 = vld [vmem:[#allocation3 + $0x31] sm:$0xff]
    %v1074 = vld [vmem:[#allocation3 + $0x41] sm:$0xff]
    %v1075 = vld [vmem:[#allocation3 + $0x51] sm:$0xff]
    %v1076 = vld [vmem:[#allocation3 + $0x61] sm:$0xff]
    %v1077 = vld [vmem:[#allocation3 + $0x71] sm:$0xff]
    %v1078 = vld [vmem:[#allocation3 + $0xc1] sm:$0xff]
    %v1079 = vld [vmem:[#allocation3 + $0xd1] sm:$0xff]
    %v1080 = vld [vmem:[#allocation3 + $0xe1] sm:$0xff]
    %v1081 = vld [vmem:[#allocation3 + $0xf1] sm:$0xff]
    %v1082 = vld [vmem:[#allocation3 + $0x101] sm:$0xff]
    %v1083 = vld [vmem:[#allocation3 + $0x111] sm:$0xff]
    %v1084 = vld [vmem:[#allocation3 + $0x121] sm:$0xff]
    %v1085 = vld [vmem:[#allocation3 + $0x131] sm:$0xff]
    %s1086 = scalar_lea.vmem %s3, 32
    %v1087 = vld [vmem:[%s1086] sm:$0xff]
    %v1088 = vld [vmem:[%s1086 + $0x8] sm:$0xff]
    %v1089 = vld [vmem:[%s1086 + $0x10] sm:$0xff]
    %v1090 = vld [vmem:[%s1086 + $0x18] sm:$0xff]
    %v1092 = vsel %vm199, %v1070, 0
    %v1095 = vsel %vm199, %v1071, 0
    %v1098 = vsel %vm199, %v1072, 0
    %v1101 = vsel %vm199, %v1073, 0
    %v1104 = vsel %vm199, %v1074, 0
    %v1107 = vsel %vm199, %v1075, 0
    %v1110 = vsel %vm199, %v1076, 0
    %v1113 = vsel %vm199, %v1077, 0
    %v1116 = vsel %vm199, %v1078, 0
    %v1119 = vsel %vm199, %v1079, 0
    %v1122 = vsel %vm199, %v1080, 0
    %v1125 = vsel %vm199, %v1081, 0
    %v1128 = vsel %vm199, %v1082, 0
    %v1131 = vsel %vm199, %v1083, 0
    %v1134 = vsel %vm199, %v1084, 0
    %v1137 = vsel %vm199, %v1085, 0
    %1139 = vmatprep.subr.mxu0 0.0
    %1140 = vmatpush1.msra.mxu0 %v1087
    %1141 = vmatprep.subr.mxu0 0.0
    %1142 = vmatpush1.msra.mxu0 %v1088
    %1143 = vmatprep.subr.mxu0 0.0
    %1144 = vmatpush1.msra.mxu0 %v1089
    %1145 = vmatprep.subr.mxu0 0.0
    %1146 = vmatpush1.msra.mxu0 %v1090
    %1147 = vmatprep.subr.mxu0 0.0
    %1148 = vmatpush1.msra.mxu0 0.0
    %1149 = vmatprep.subr.mxu0 0.0
    %1150 = vmatpush1.msra.mxu0 0.0
    %1151 = vmatprep.subr.mxu0 0.0
    %1152 = vmatpush1.msra.mxu0 0.0
    %1153 = vmatprep.subr.mxu0 0.0
    %1154 = vmatpush1.msra.mxu0 0.0
    %1155 = vmatprep.subr.mxu0 0.0
    %1156 = vmatpush1.msra.mxu0 0.0
    %1157 = vmatprep.subr.mxu0 0.0
    %1158 = vmatpush1.msra.mxu0 0.0
    %1159 = vmatprep.subr.mxu0 0.0
    %1160 = vmatpush1.msra.mxu0 0.0
    %1161 = vmatprep.subr.mxu0 0.0
    %1162 = vmatpush1.msra.mxu0 0.0
    %1163 = vmatprep.subr.mxu0 0.0
    %1164 = vmatpush1.msra.mxu0 0.0
    %1165 = vmatprep.subr.mxu0 0.0
    %1166 = vmatpush1.msra.mxu0 0.0
    %1167 = vmatprep.subr.mxu0 0.0
    %1168 = vmatpush1.msra.mxu0 0.0
    %1169 = vmatprep.subr.mxu0 0.0
    %1170 = vmatpush1.msra.mxu0 0.0
    %1171 = vmatprep.subr.mxu0 0.0
    %1172 = vmatpush1.msra.mxu0 0.0
    %1173 = vmatprep.subr.mxu0 0.0
    %1174 = vmatpush1.msra.mxu0 0.0
    %1175 = vmatprep.subr.mxu0 0.0
    %1176 = vmatpush1.msra.mxu0 0.0
    %1177 = vmatprep.subr.mxu0 0.0
    %1178 = vmatpush1.msra.mxu0 0.0
    %1179 = vmatprep.subr.mxu0 0.0
    %1180 = vmatpush1.msra.mxu0 0.0
    %1181 = vmatprep.subr.mxu0 0.0
    %1182 = vmatpush1.msra.mxu0 0.0
    %1183 = vmatprep.subr.mxu0 0.0
    %1184 = vmatpush1.msra.mxu0 0.0
    %1185 = vmatprep.subr.mxu0 0.0
    %1186 = vmatpush1.msra.mxu0 0.0
    %1187 = vmatprep.subr.mxu0 0.0
    %1188 = vmatpush1.msra.mxu0 0.0
    %1189 = vmatprep.subr.mxu0 0.0
    %1190 = vmatpush1.msra.mxu0 0.0
    %1191 = vmatprep.subr.mxu0 0.0
    %1192 = vmatpush1.msra.mxu0 0.0
    %1193 = vmatprep.subr.mxu0 0.0
    %1194 = vmatpush1.msra.mxu0 0.0
    %1195 = vmatprep.subr.mxu0 0.0
    %1196 = vmatpush1.msra.mxu0 0.0
    %1197 = vmatprep.subr.mxu0 0.0
    %1198 = vmatpush1.msra.mxu0 0.0
    %1199 = vmatprep.subr.mxu0 0.0
    %1200 = vmatpush1.msra.mxu0 0.0
    %1201 = vmatprep.subr.mxu0 0.0
    %1202 = vmatpush1.msra.mxu0 0.0
    %1203 = vmatprep.mubr.f32.mxu0 0.0
    %1204 = vmatmul.mubr.f32.gmra.mrb[0].mxu0 %v1092
    %v1205 = vpop.f32.mrb[0].mxu0
    %v1206 = vadd.f32 0.0, %v1205
    %v1207 = vpop.f32.mrb[0].mxu0
    %1208 = vmatprep.mubr.f32.mxu0 0.0
    %1209 = vmatmul.mubr.f32.gmra.mrb[0].mxu0 %v1095
    %v1210 = vpop.f32.mrb[0].mxu0
    %v1211 = vadd.f32 0.0, %v1210
    %v1212 = vpop.f32.mrb[0].mxu0
    %1213 = vmatprep.mubr.f32.mxu0 0.0
    %1214 = vmatmul.mubr.f32.gmra.mrb[0].mxu0 %v1098
    %v1215 = vpop.f32.mrb[0].mxu0
    %v1216 = vadd.f32 0.0, %v1215
    %v1217 = vpop.f32.mrb[0].mxu0
    %1218 = vmatprep.mubr.f32.mxu0 0.0
    %1219 = vmatmul.mubr.f32.gmra.mrb[0].mxu0 %v1101
    %v1220 = vpop.f32.mrb[0].mxu0
    %v1221 = vadd.f32 0.0, %v1220
    %v1222 = vpop.f32.mrb[0].mxu0
    %1223 = vmatprep.mubr.f32.mxu0 0.0
    %1224 = vmatmul.mubr.f32.gmra.mrb[0].mxu0 %v1104
    %v1225 = vpop.f32.mrb[0].mxu0
    %v1226 = vadd.f32 0.0, %v1225
    %v1227 = vpop.f32.mrb[0].mxu0
    %1228 = vmatprep.mubr.f32.mxu0 0.0
    %1229 = vmatmul.mubr.f32.gmra.mrb[0].mxu0 %v1107
    %v1230 = vpop.f32.mrb[0].mxu0
    %v1231 = vadd.f32 0.0, %v1230
    %v1232 = vpop.f32.mrb[0].mxu0
    %1233 = vmatprep.mubr.f32.mxu0 0.0
    %1234 = vmatmul.mubr.f32.gmra.mrb[0].mxu0 %v1110
    %v1235 = vpop.f32.mrb[0].mxu0
    %v1236 = vadd.f32 0.0, %v1235
    %v1237 = vpop.f32.mrb[0].mxu0
    %1238 = vmatprep.mubr.f32.mxu0 0.0
    %1239 = vmatmul.mubr.f32.gmra.mrb[0].mxu0 %v1113
    %v1240 = vpop.f32.mrb[0].mxu0
    %v1241 = vadd.f32 0.0, %v1240
    %v1242 = vpop.f32.mrb[0].mxu0
    %1243 = vmatprep.mubr.f32.mxu0 0.0
    %1244 = vmatmul.mubr.f32.gmra.mrb[0].mxu0 %v1116
    %v1245 = vpop.f32.mrb[0].mxu0
    %v1246 = vadd.f32 0.0, %v1245
    %v1247 = vpop.f32.mrb[0].mxu0
    %1248 = vmatprep.mubr.f32.mxu0 0.0
    %1249 = vmatmul.mubr.f32.gmra.mrb[0].mxu0 %v1119
    %v1250 = vpop.f32.mrb[0].mxu0
    %v1251 = vadd.f32 0.0, %v1250
    %v1252 = vpop.f32.mrb[0].mxu0
    %1253 = vmatprep.mubr.f32.mxu0 0.0
    %1254 = vmatmul.mubr.f32.gmra.mrb[0].mxu0 %v1122
    %v1255 = vpop.f32.mrb[0].mxu0
    %v1256 = vadd.f32 0.0, %v1255
    %v1257 = vpop.f32.mrb[0].mxu0
    %1258 = vmatprep.mubr.f32.mxu0 0.0
    %1259 = vmatmul.mubr.f32.gmra.mrb[0].mxu0 %v1125
    %v1260 = vpop.f32.mrb[0].mxu0
    %v1261 = vadd.f32 0.0, %v1260
    %v1262 = vpop.f32.mrb[0].mxu0
    %1263 = vmatprep.mubr.f32.mxu0 0.0
    %1264 = vmatmul.mubr.f32.gmra.mrb[0].mxu0 %v1128
    %v1265 = vpop.f32.mrb[0].mxu0
    %v1266 = vadd.f32 0.0, %v1265
    %v1267 = vpop.f32.mrb[0].mxu0
    %1268 = vmatprep.mubr.f32.mxu0 0.0
    %1269 = vmatmul.mubr.f32.gmra.mrb[0].mxu0 %v1131
    %v1270 = vpop.f32.mrb[0].mxu0
    %v1271 = vadd.f32 0.0, %v1270
    %v1272 = vpop.f32.mrb[0].mxu0
    %1273 = vmatprep.mubr.f32.mxu0 0.0
    %1274 = vmatmul.mubr.f32.gmra.mrb[0].mxu0 %v1134
    %v1275 = vpop.f32.mrb[0].mxu0
    %v1276 = vadd.f32 0.0, %v1275
    %v1277 = vpop.f32.mrb[0].mxu0
    %1278 = vmatprep.mubr.f32.mxu0 0.0
    %1279 = vmatmul.mubr.f32.gmra.mrb[0].mxu0 %v1137
    %v1280 = vpop.f32.mrb[0].mxu0
    %v1281 = vadd.f32 0.0, %v1280
    %v1282 = vpop.f32.mrb[0].mxu0
    %1283 = vdwg.mxu0
    %v1285 = vsel %vm199, %v1050, 0
    %v1288 = vsel %vm199, %v1051, 0
    %v1291 = vsel %vm199, %v1052, 0
    %v1294 = vsel %vm199, %v1053, 0
    %v1297 = vsel %vm199, %v1054, 0
    %v1300 = vsel %vm199, %v1055, 0
    %v1303 = vsel %vm199, %v1056, 0
    %v1306 = vsel %vm199, %v1057, 0
    %v1309 = vsel %vm199, %v1058, 0
    %v1312 = vsel %vm199, %v1059, 0
    %v1315 = vsel %vm199, %v1060, 0
    %v1318 = vsel %vm199, %v1061, 0
    %v1321 = vsel %vm199, %v1062, 0
    %v1324 = vsel %vm199, %v1063, 0
    %v1327 = vsel %vm199, %v1064, 0
    %v1330 = vsel %vm199, %v1065, 0
    %1332 = vmatprep.subr.mxu0 0.0
    %1333 = vmatpush1.msra.mxu0 %v1066
    %1334 = vmatprep.subr.mxu0 0.0
    %1335 = vmatpush1.msra.mxu0 %v1067
    %1336 = vmatprep.subr.mxu0 0.0
    %1337 = vmatpush1.msra.mxu0 %v1068
    %1338 = vmatprep.subr.mxu0 0.0
    %1339 = vmatpush1.msra.mxu0 %v1069
    %1340 = vmatprep.subr.mxu0 0.0
    %1341 = vmatpush1.msra.mxu0 0.0
    %1342 = vmatprep.subr.mxu0 0.0
    %1343 = vmatpush1.msra.mxu0 0.0
    %1344 = vmatprep.subr.mxu0 0.0
    %1345 = vmatpush1.msra.mxu0 0.0
    %1346 = vmatprep.subr.mxu0 0.0
    %1347 = vmatpush1.msra.mxu0 0.0
    %1348 = vmatprep.subr.mxu0 0.0
    %1349 = vmatpush1.msra.mxu0 0.0
    %1350 = vmatprep.subr.mxu0 0.0
    %1351 = vmatpush1.msra.mxu0 0.0
    %1352 = vmatprep.subr.mxu0 0.0
    %1353 = vmatpush1.msra.mxu0 0.0
    %1354 = vmatprep.subr.mxu0 0.0
    %1355 = vmatpush1.msra.mxu0 0.0
    %1356 = vmatprep.subr.mxu0 0.0
    %1357 = vmatpush1.msra.mxu0 0.0
    %1358 = vmatprep.subr.mxu0 0.0
    %1359 = vmatpush1.msra.mxu0 0.0
    %1360 = vmatprep.subr.mxu0 0.0
    %1361 = vmatpush1.msra.mxu0 0.0
    %1362 = vmatprep.subr.mxu0 0.0
    %1363 = vmatpush1.msra.mxu0 0.0
    %1364 = vmatprep.subr.mxu0 0.0
    %1365 = vmatpush1.msra.mxu0 0.0
    %1366 = vmatprep.subr.mxu0 0.0
    %1367 = vmatpush1.msra.mxu0 0.0
    %1368 = vmatprep.subr.mxu0 0.0
    %1369 = vmatpush1.msra.mxu0 0.0
    %1370 = vmatprep.subr.mxu0 0.0
    %1371 = vmatpush1.msra.mxu0 0.0
    %1372 = vmatprep.subr.mxu0 0.0
    %1373 = vmatpush1.msra.mxu0 0.0
    %1374 = vmatprep.subr.mxu0 0.0
    %1375 = vmatpush1.msra.mxu0 0.0
    %1376 = vmatprep.subr.mxu0 0.0
    %1377 = vmatpush1.msra.mxu0 0.0
    %1378 = vmatprep.subr.mxu0 0.0
    %1379 = vmatpush1.msra.mxu0 0.0
    %1380 = vmatprep.subr.mxu0 0.0
    %1381 = vmatpush1.msra.mxu0 0.0
    %1382 = vmatprep.subr.mxu0 0.0
    %1383 = vmatpush1.msra.mxu0 0.0
    %1384 = vmatprep.subr.mxu0 0.0
    %1385 = vmatpush1.msra.mxu0 0.0
    %1386 = vmatprep.subr.mxu0 0.0
    %1387 = vmatpush1.msra.mxu0 0.0
    %1388 = vmatprep.subr.mxu0 0.0
    %1389 = vmatpush1.msra.mxu0 0.0
    %1390 = vmatprep.subr.mxu0 0.0
    %1391 = vmatpush1.msra.mxu0 0.0
    %1392 = vmatprep.subr.mxu0 0.0
    %1393 = vmatpush1.msra.mxu0 0.0
    %1394 = vmatprep.subr.mxu0 0.0
    %1395 = vmatpush1.msra.mxu0 0.0
    %1396 = vmatprep.mubr.f32.mxu0 0.0
    %1397 = vmatmul.mubr.f32.gmra.mrb[0].mxu0 %v1285
    %v1398 = vpop.f32.mrb[0].mxu0
    %v1399 = vadd.f32 %v1206, %v1398
    %v1400 = vpop.f32.mrb[0].mxu0
    %1401 = vmatprep.mubr.f32.mxu0 0.0
    %1402 = vmatmul.mubr.f32.gmra.mrb[0].mxu0 %v1288
    %v1403 = vpop.f32.mrb[0].mxu0
    %v1404 = vadd.f32 %v1211, %v1403
    %v1405 = vpop.f32.mrb[0].mxu0
    %1406 = vmatprep.mubr.f32.mxu0 0.0
    %1407 = vmatmul.mubr.f32.gmra.mrb[0].mxu0 %v1291
    %v1408 = vpop.f32.mrb[0].mxu0
    %v1409 = vadd.f32 %v1216, %v1408
    %v1410 = vpop.f32.mrb[0].mxu0
    %1411 = vmatprep.mubr.f32.mxu0 0.0
    %1412 = vmatmul.mubr.f32.gmra.mrb[0].mxu0 %v1294
    %v1413 = vpop.f32.mrb[0].mxu0
    %v1414 = vadd.f32 %v1221, %v1413
    %v1415 = vpop.f32.mrb[0].mxu0
    %1416 = vmatprep.mubr.f32.mxu0 0.0
    %1417 = vmatmul.mubr.f32.gmra.mrb[0].mxu0 %v1297
    %v1418 = vpop.f32.mrb[0].mxu0
    %v1419 = vadd.f32 %v1226, %v1418
    %v1420 = vpop.f32.mrb[0].mxu0
    %1421 = vmatprep.mubr.f32.mxu0 0.0
    %1422 = vmatmul.mubr.f32.gmra.mrb[0].mxu0 %v1300
    %v1423 = vpop.f32.mrb[0].mxu0
    %v1424 = vadd.f32 %v1231, %v1423
    %v1425 = vpop.f32.mrb[0].mxu0
    %1426 = vmatprep.mubr.f32.mxu0 0.0
    %1427 = vmatmul.mubr.f32.gmra.mrb[0].mxu0 %v1303
    %v1428 = vpop.f32.mrb[0].mxu0
    %v1429 = vadd.f32 %v1236, %v1428
    %v1430 = vpop.f32.mrb[0].mxu0
    %1431 = vmatprep.mubr.f32.mxu0 0.0
    %1432 = vmatmul.mubr.f32.gmra.mrb[0].mxu0 %v1306
    %v1433 = vpop.f32.mrb[0].mxu0
    %v1434 = vadd.f32 %v1241, %v1433
    %v1435 = vpop.f32.mrb[0].mxu0
    %1436 = vmatprep.mubr.f32.mxu0 0.0
    %1437 = vmatmul.mubr.f32.gmra.mrb[0].mxu0 %v1309
    %v1438 = vpop.f32.mrb[0].mxu0
    %v1439 = vadd.f32 %v1246, %v1438
    %v1440 = vpop.f32.mrb[0].mxu0
    %1441 = vmatprep.mubr.f32.mxu0 0.0
    %1442 = vmatmul.mubr.f32.gmra.mrb[0].mxu0 %v1312
    %v1443 = vpop.f32.mrb[0].mxu0
    %v1444 = vadd.f32 %v1251, %v1443
    %v1445 = vpop.f32.mrb[0].mxu0
    %1446 = vmatprep.mubr.f32.mxu0 0.0
    %1447 = vmatmul.mubr.f32.gmra.mrb[0].mxu0 %v1315
    %v1448 = vpop.f32.mrb[0].mxu0
    %v1449 = vadd.f32 %v1256, %v1448
    %v1450 = vpop.f32.mrb[0].mxu0
    %1451 = vmatprep.mubr.f32.mxu0 0.0
    %1452 = vmatmul.mubr.f32.gmra.mrb[0].mxu0 %v1318
    %v1453 = vpop.f32.mrb[0].mxu0
    %v1454 = vadd.f32 %v1261, %v1453
    %v1455 = vpop.f32.mrb[0].mxu0
    %1456 = vmatprep.mubr.f32.mxu0 0.0
    %1457 = vmatmul.mubr.f32.gmra.mrb[0].mxu0 %v1321
    %v1458 = vpop.f32.mrb[0].mxu0
    %v1459 = vadd.f32 %v1266, %v1458
    %v1460 = vpop.f32.mrb[0].mxu0
    %1461 = vmatprep.mubr.f32.mxu0 0.0
    %1462 = vmatmul.mubr.f32.gmra.mrb[0].mxu0 %v1324
    %v1463 = vpop.f32.mrb[0].mxu0
    %v1464 = vadd.f32 %v1271, %v1463
    %v1465 = vpop.f32.mrb[0].mxu0
    %1466 = vmatprep.mubr.f32.mxu0 0.0
    %1467 = vmatmul.mubr.f32.gmra.mrb[0].mxu0 %v1327
    %v1468 = vpop.f32.mrb[0].mxu0
    %v1469 = vadd.f32 %v1276, %v1468
    %v1470 = vpop.f32.mrb[0].mxu0
    %1471 = vmatprep.mubr.f32.mxu0 0.0
    %1472 = vmatmul.mubr.f32.gmra.mrb[0].mxu0 %v1330
    %v1473 = vpop.f32.mrb[0].mxu0
    %v1474 = vadd.f32 %v1281, %v1473
    %v1475 = vpop.f32.mrb[0].mxu0
    %1476 = vdwg.mxu0
    %v1477 = vld [vmem:[#allocation3 + $0x2] sm:$0xff]
    %v1478 = vld [vmem:[#allocation3 + $0x12] sm:$0xff]
    %v1479 = vld [vmem:[#allocation3 + $0x22] sm:$0xff]
    %v1480 = vld [vmem:[#allocation3 + $0x32] sm:$0xff]
    %v1481 = vld [vmem:[#allocation3 + $0x42] sm:$0xff]
    %v1482 = vld [vmem:[#allocation3 + $0x52] sm:$0xff]
    %v1483 = vld [vmem:[#allocation3 + $0x62] sm:$0xff]
    %v1484 = vld [vmem:[#allocation3 + $0x72] sm:$0xff]
    %v1485 = vld [vmem:[#allocation3 + $0xc2] sm:$0xff]
    %v1486 = vld [vmem:[#allocation3 + $0xd2] sm:$0xff]
    %v1487 = vld [vmem:[#allocation3 + $0xe2] sm:$0xff]
    %v1488 = vld [vmem:[#allocation3 + $0xf2] sm:$0xff]
    %v1489 = vld [vmem:[#allocation3 + $0x102] sm:$0xff]
    %v1490 = vld [vmem:[#allocation3 + $0x112] sm:$0xff]
    %v1491 = vld [vmem:[#allocation3 + $0x122] sm:$0xff]
    %v1492 = vld [vmem:[#allocation3 + $0x132] sm:$0xff]
    %s1493 = scalar_lea.vmem %s3, 64
    %v1494 = vld [vmem:[%s1493] sm:$0xff]
    %v1495 = vld [vmem:[%s1493 + $0x8] sm:$0xff]
    %v1496 = vld [vmem:[%s1493 + $0x10] sm:$0xff]
    %v1497 = vld [vmem:[%s1493 + $0x18] sm:$0xff]
    %v1499 = vsel %vm199, %v1477, 0
    %v1502 = vsel %vm199, %v1478, 0
    %v1505 = vsel %vm199, %v1479, 0
    %v1508 = vsel %vm199, %v1480, 0
    %v1511 = vsel %vm199, %v1481, 0
    %v1514 = vsel %vm199, %v1482, 0
    %v1517 = vsel %vm199, %v1483, 0
    %v1520 = vsel %vm199, %v1484, 0
    %v1523 = vsel %vm199, %v1485, 0
    %v1526 = vsel %vm199, %v1486, 0
    %v1529 = vsel %vm199, %v1487, 0
    %v1532 = vsel %vm199, %v1488, 0
    %v1535 = vsel %vm199, %v1489, 0
    %v1538 = vsel %vm199, %v1490, 0
    %v1541 = vsel %vm199, %v1491, 0
    %v1544 = vsel %vm199, %v1492, 0
    %1546 = vmatprep.subr.mxu0 0.0
    %1547 = vmatpush1.msra.mxu0 %v1494
    %1548 = vmatprep.subr.mxu0 0.0
    %1549 = vmatpush1.msra.mxu0 %v1495
    %1550 = vmatprep.subr.mxu0 0.0
    %1551 = vmatpush1.msra.mxu0 %v1496
    %1552 = vmatprep.subr.mxu0 0.0
    %1553 = vmatpush1.msra.mxu0 %v1497
    %1554 = vmatprep.subr.mxu0 0.0
    %1555 = vmatpush1.msra.mxu0 0.0
    %1556 = vmatprep.subr.mxu0 0.0
    %1557 = vmatpush1.msra.mxu0 0.0
    %1558 = vmatprep.subr.mxu0 0.0
    %1559 = vmatpush1.msra.mxu0 0.0
    %1560 = vmatprep.subr.mxu0 0.0
    %1561 = vmatpush1.msra.mxu0 0.0
    %1562 = vmatprep.subr.mxu0 0.0
    %1563 = vmatpush1.msra.mxu0 0.0
    %1564 = vmatprep.subr.mxu0 0.0
    %1565 = vmatpush1.msra.mxu0 0.0
    %1566 = vmatprep.subr.mxu0 0.0
    %1567 = vmatpush1.msra.mxu0 0.0
    %1568 = vmatprep.subr.mxu0 0.0
    %1569 = vmatpush1.msra.mxu0 0.0
    %1570 = vmatprep.subr.mxu0 0.0
    %1571 = vmatpush1.msra.mxu0 0.0
    %1572 = vmatprep.subr.mxu0 0.0
    %1573 = vmatpush1.msra.mxu0 0.0
    %1574 = vmatprep.subr.mxu0 0.0
    %1575 = vmatpush1.msra.mxu0 0.0
    %1576 = vmatprep.subr.mxu0 0.0
    %1577 = vmatpush1.msra.mxu0 0.0
    %1578 = vmatprep.subr.mxu0 0.0
    %1579 = vmatpush1.msra.mxu0 0.0
    %1580 = vmatprep.subr.mxu0 0.0
    %1581 = vmatpush1.msra.mxu0 0.0
    %1582 = vmatprep.subr.mxu0 0.0
    %1583 = vmatpush1.msra.mxu0 0.0
    %1584 = vmatprep.subr.mxu0 0.0
    %1585 = vmatpush1.msra.mxu0 0.0
    %1586 = vmatprep.subr.mxu0 0.0
    %1587 = vmatpush1.msra.mxu0 0.0
    %1588 = vmatprep.subr.mxu0 0.0
    %1589 = vmatpush1.msra.mxu0 0.0
    %1590 = vmatprep.subr.mxu0 0.0
    %1591 = vmatpush1.msra.mxu0 0.0
    %1592 = vmatprep.subr.mxu0 0.0
    %1593 = vmatpush1.msra.mxu0 0.0
    %1594 = vmatprep.subr.mxu0 0.0
    %1595 = vmatpush1.msra.mxu0 0.0
    %1596 = vmatprep.subr.mxu0 0.0
    %1597 = vmatpush1.msra.mxu0 0.0
    %1598 = vmatprep.subr.mxu0 0.0
    %1599 = vmatpush1.msra.mxu0 0.0
    %1600 = vmatprep.subr.mxu0 0.0
    %1601 = vmatpush1.msra.mxu0 0.0
    %1602 = vmatprep.subr.mxu0 0.0
    %1603 = vmatpush1.msra.mxu0 0.0
    %1604 = vmatprep.subr.mxu0 0.0
    %1605 = vmatpush1.msra.mxu0 0.0
    %1606 = vmatprep.subr.mxu0 0.0
    %1607 = vmatpush1.msra.mxu0 0.0
    %1608 = vmatprep.subr.mxu0 0.0
    %1609 = vmatpush1.msra.mxu0 0.0
    %1610 = vmatprep.mubr.f32.mxu0 0.0
    %1611 = vmatmul.mubr.f32.gmra.mrb[0].mxu0 %v1499
    %v1612 = vpop.f32.mrb[0].mxu0
    %v1613 = vadd.f32 0.0, %v1612
    %v1614 = vpop.f32.mrb[0].mxu0
    %1615 = vmatprep.mubr.f32.mxu0 0.0
    %1616 = vmatmul.mubr.f32.gmra.mrb[0].mxu0 %v1502
    %v1617 = vpop.f32.mrb[0].mxu0
    %v1618 = vadd.f32 0.0, %v1617
    %v1619 = vpop.f32.mrb[0].mxu0
    %1620 = vmatprep.mubr.f32.mxu0 0.0
    %1621 = vmatmul.mubr.f32.gmra.mrb[0].mxu0 %v1505
    %v1622 = vpop.f32.mrb[0].mxu0
    %v1623 = vadd.f32 0.0, %v1622
    %v1624 = vpop.f32.mrb[0].mxu0
    %1625 = vmatprep.mubr.f32.mxu0 0.0
    %1626 = vmatmul.mubr.f32.gmra.mrb[0].mxu0 %v1508
    %v1627 = vpop.f32.mrb[0].mxu0
    %v1628 = vadd.f32 0.0, %v1627
    %v1629 = vpop.f32.mrb[0].mxu0
    %1630 = vmatprep.mubr.f32.mxu0 0.0
    %1631 = vmatmul.mubr.f32.gmra.mrb[0].mxu0 %v1511
    %v1632 = vpop.f32.mrb[0].mxu0
    %v1633 = vadd.f32 0.0, %v1632
    %v1634 = vpop.f32.mrb[0].mxu0
    %1635 = vmatprep.mubr.f32.mxu0 0.0
    %1636 = vmatmul.mubr.f32.gmra.mrb[0].mxu0 %v1514
    %v1637 = vpop.f32.mrb[0].mxu0
    %v1638 = vadd.f32 0.0, %v1637
    %v1639 = vpop.f32.mrb[0].mxu0
    %1640 = vmatprep.mubr.f32.mxu0 0.0
    %1641 = vmatmul.mubr.f32.gmra.mrb[0].mxu0 %v1517
    %v1642 = vpop.f32.mrb[0].mxu0
    %v1643 = vadd.f32 0.0, %v1642
    %v1644 = vpop.f32.mrb[0].mxu0
    %1645 = vmatprep.mubr.f32.mxu0 0.0
    %1646 = vmatmul.mubr.f32.gmra.mrb[0].mxu0 %v1520
    %v1647 = vpop.f32.mrb[0].mxu0
    %v1648 = vadd.f32 0.0, %v1647
    %v1649 = vpop.f32.mrb[0].mxu0
    %1650 = vmatprep.mubr.f32.mxu0 0.0
    %1651 = vmatmul.mubr.f32.gmra.mrb[0].mxu0 %v1523
    %v1652 = vpop.f32.mrb[0].mxu0
    %v1653 = vadd.f32 0.0, %v1652
    %v1654 = vpop.f32.mrb[0].mxu0
    %1655 = vmatprep.mubr.f32.mxu0 0.0
    %1656 = vmatmul.mubr.f32.gmra.mrb[0].mxu0 %v1526
    %v1657 = vpop.f32.mrb[0].mxu0
    %v1658 = vadd.f32 0.0, %v1657
    %v1659 = vpop.f32.mrb[0].mxu0
    %1660 = vmatprep.mubr.f32.mxu0 0.0
    %1661 = vmatmul.mubr.f32.gmra.mrb[0].mxu0 %v1529
    %v1662 = vpop.f32.mrb[0].mxu0
    %v1663 = vadd.f32 0.0, %v1662
    %v1664 = vpop.f32.mrb[0].mxu0
    %1665 = vmatprep.mubr.f32.mxu0 0.0
    %1666 = vmatmul.mubr.f32.gmra.mrb[0].mxu0 %v1532
    %v1667 = vpop.f32.mrb[0].mxu0
    %v1668 = vadd.f32 0.0, %v1667
    %v1669 = vpop.f32.mrb[0].mxu0
    %1670 = vmatprep.mubr.f32.mxu0 0.0
    %1671 = vmatmul.mubr.f32.gmra.mrb[0].mxu0 %v1535
    %v1672 = vpop.f32.mrb[0].mxu0
    %v1673 = vadd.f32 0.0, %v1672
    %v1674 = vpop.f32.mrb[0].mxu0
    %1675 = vmatprep.mubr.f32.mxu0 0.0
    %1676 = vmatmul.mubr.f32.gmra.mrb[0].mxu0 %v1538
    %v1677 = vpop.f32.mrb[0].mxu0
    %v1678 = vadd.f32 0.0, %v1677
    %v1679 = vpop.f32.mrb[0].mxu0
    %1680 = vmatprep.mubr.f32.mxu0 0.0
    %1681 = vmatmul.mubr.f32.gmra.mrb[0].mxu0 %v1541
    %v1682 = vpop.f32.mrb[0].mxu0
    %v1683 = vadd.f32 0.0, %v1682
    %v1684 = vpop.f32.mrb[0].mxu0
    %1685 = vmatprep.mubr.f32.mxu0 0.0
    %1686 = vmatmul.mubr.f32.gmra.mrb[0].mxu0 %v1544
    %v1687 = vpop.f32.mrb[0].mxu0
    %v1688 = vadd.f32 0.0, %v1687
    %v1689 = vpop.f32.mrb[0].mxu0
    %1690 = vdwg.mxu0
    %v1691 = vadd.f32 %v1399, %v1613
    %v1692 = vadd.f32 %v1404, %v1618
    %v1693 = vadd.f32 %v1409, %v1623
    %v1694 = vadd.f32 %v1414, %v1628
    %v1695 = vadd.f32 %v1419, %v1633
    %v1696 = vadd.f32 %v1424, %v1638
    %v1697 = vadd.f32 %v1429, %v1643
    %v1698 = vadd.f32 %v1434, %v1648
    %v1699 = vadd.f32 %v1439, %v1653
    %v1700 = vadd.f32 %v1444, %v1658
    %v1701 = vadd.f32 %v1449, %v1663
    %v1702 = vadd.f32 %v1454, %v1668
    %v1703 = vadd.f32 %v1459, %v1673
    %v1704 = vadd.f32 %v1464, %v1678
    %v1705 = vadd.f32 %v1469, %v1683
    %v1706 = vadd.f32 %v1474, %v1688
    %v1707 = vld [vmem:[#allocation3 + $0x3] sm:$0xff]
    %v1708 = vld [vmem:[#allocation3 + $0x13] sm:$0xff]
    %v1709 = vld [vmem:[#allocation3 + $0x23] sm:$0xff]
    %v1710 = vld [vmem:[#allocation3 + $0x33] sm:$0xff]
    %v1711 = vld [vmem:[#allocation3 + $0x43] sm:$0xff]
    %v1712 = vld [vmem:[#allocation3 + $0x53] sm:$0xff]
    %v1713 = vld [vmem:[#allocation3 + $0x63] sm:$0xff]
    %v1714 = vld [vmem:[#allocation3 + $0x73] sm:$0xff]
    %v1715 = vld [vmem:[#allocation3 + $0xc3] sm:$0xff]
    %v1716 = vld [vmem:[#allocation3 + $0xd3] sm:$0xff]
    %v1717 = vld [vmem:[#allocation3 + $0xe3] sm:$0xff]
    %v1718 = vld [vmem:[#allocation3 + $0xf3] sm:$0xff]
    %v1719 = vld [vmem:[#allocation3 + $0x103] sm:$0xff]
    %v1720 = vld [vmem:[#allocation3 + $0x113] sm:$0xff]
    %v1721 = vld [vmem:[#allocation3 + $0x123] sm:$0xff]
    %v1722 = vld [vmem:[#allocation3 + $0x133] sm:$0xff]
    %s1723 = scalar_lea.vmem %s3, 96
    %v1724 = vld [vmem:[%s1723] sm:$0xff]
    %v1725 = vld [vmem:[%s1723 + $0x8] sm:$0xff]
    %v1726 = vld [vmem:[%s1723 + $0x10] sm:$0xff]
    %v1727 = vld [vmem:[%s1723 + $0x18] sm:$0xff]
    %v1729 = vsel %vm199, %v1707, 0
    %v1732 = vsel %vm199, %v1708, 0
    %v1735 = vsel %vm199, %v1709, 0
    %v1738 = vsel %vm199, %v1710, 0
    %v1741 = vsel %vm199, %v1711, 0
    %v1744 = vsel %vm199, %v1712, 0
    %v1747 = vsel %vm199, %v1713, 0
    %v1750 = vsel %vm199, %v1714, 0
    %v1753 = vsel %vm199, %v1715, 0
    %v1756 = vsel %vm199, %v1716, 0
    %v1759 = vsel %vm199, %v1717, 0
    %v1762 = vsel %vm199, %v1718, 0
    %v1765 = vsel %vm199, %v1719, 0
    %v1768 = vsel %vm199, %v1720, 0
    %v1771 = vsel %vm199, %v1721, 0
    %v1774 = vsel %vm199, %v1722, 0
    %1776 = vmatprep.subr.mxu0 0.0
    %1777 = vmatpush1.msra.mxu0 %v1724
    %1778 = vmatprep.subr.mxu0 0.0
    %1779 = vmatpush1.msra.mxu0 %v1725
    %1780 = vmatprep.subr.mxu0 0.0
    %1781 = vmatpush1.msra.mxu0 %v1726
    %1782 = vmatprep.subr.mxu0 0.0
    %1783 = vmatpush1.msra.mxu0 %v1727
    %1784 = vmatprep.subr.mxu0 0.0
    %1785 = vmatpush1.msra.mxu0 0.0
    %1786 = vmatprep.subr.mxu0 0.0
    %1787 = vmatpush1.msra.mxu0 0.0
    %1788 = vmatprep.subr.mxu0 0.0
    %1789 = vmatpush1.msra.mxu0 0.0
    %1790 = vmatprep.subr.mxu0 0.0
    %1791 = vmatpush1.msra.mxu0 0.0
    %1792 = vmatprep.subr.mxu0 0.0
    %1793 = vmatpush1.msra.mxu0 0.0
    %1794 = vmatprep.subr.mxu0 0.0
    %1795 = vmatpush1.msra.mxu0 0.0
    %1796 = vmatprep.subr.mxu0 0.0
    %1797 = vmatpush1.msra.mxu0 0.0
    %1798 = vmatprep.subr.mxu0 0.0
    %1799 = vmatpush1.msra.mxu0 0.0
    %1800 = vmatprep.subr.mxu0 0.0
    %1801 = vmatpush1.msra.mxu0 0.0
    %1802 = vmatprep.subr.mxu0 0.0
    %1803 = vmatpush1.msra.mxu0 0.0
    %1804 = vmatprep.subr.mxu0 0.0
    %1805 = vmatpush1.msra.mxu0 0.0
    %1806 = vmatprep.subr.mxu0 0.0
    %1807 = vmatpush1.msra.mxu0 0.0
    %1808 = vmatprep.subr.mxu0 0.0
    %1809 = vmatpush1.msra.mxu0 0.0
    %1810 = vmatprep.subr.mxu0 0.0
    %1811 = vmatpush1.msra.mxu0 0.0
    %1812 = vmatprep.subr.mxu0 0.0
    %1813 = vmatpush1.msra.mxu0 0.0
    %1814 = vmatprep.subr.mxu0 0.0
    %1815 = vmatpush1.msra.mxu0 0.0
    %1816 = vmatprep.subr.mxu0 0.0
    %1817 = vmatpush1.msra.mxu0 0.0
    %1818 = vmatprep.subr.mxu0 0.0
    %1819 = vmatpush1.msra.mxu0 0.0
    %1820 = vmatprep.subr.mxu0 0.0
    %1821 = vmatpush1.msra.mxu0 0.0
    %1822 = vmatprep.subr.mxu0 0.0
    %1823 = vmatpush1.msra.mxu0 0.0
    %1824 = vmatprep.subr.mxu0 0.0
    %1825 = vmatpush1.msra.mxu0 0.0
    %1826 = vmatprep.subr.mxu0 0.0
    %1827 = vmatpush1.msra.mxu0 0.0
    %1828 = vmatprep.subr.mxu0 0.0
    %1829 = vmatpush1.msra.mxu0 0.0
    %1830 = vmatprep.subr.mxu0 0.0
    %1831 = vmatpush1.msra.mxu0 0.0
    %1832 = vmatprep.subr.mxu0 0.0
    %1833 = vmatpush1.msra.mxu0 0.0
    %1834 = vmatprep.subr.mxu0 0.0
    %1835 = vmatpush1.msra.mxu0 0.0
    %1836 = vmatprep.subr.mxu0 0.0
    %1837 = vmatpush1.msra.mxu0 0.0
    %1838 = vmatprep.subr.mxu0 0.0
    %1839 = vmatpush1.msra.mxu0 0.0
    %1840 = vmatprep.mubr.f32.mxu0 0.0
    %1841 = vmatmul.mubr.f32.gmra.mrb[0].mxu0 %v1729
    %v1842 = vpop.f32.mrb[0].mxu0
    %v1843 = vadd.f32 0.0, %v1842
    %v1844 = vpop.f32.mrb[0].mxu0
    %1845 = vmatprep.mubr.f32.mxu0 0.0
    %1846 = vmatmul.mubr.f32.gmra.mrb[0].mxu0 %v1732
    %v1847 = vpop.f32.mrb[0].mxu0
    %v1848 = vadd.f32 0.0, %v1847
    %v1849 = vpop.f32.mrb[0].mxu0
    %1850 = vmatprep.mubr.f32.mxu0 0.0
    %1851 = vmatmul.mubr.f32.gmra.mrb[0].mxu0 %v1735
    %v1852 = vpop.f32.mrb[0].mxu0
    %v1853 = vadd.f32 0.0, %v1852
    %v1854 = vpop.f32.mrb[0].mxu0
    %1855 = vmatprep.mubr.f32.mxu0 0.0
    %1856 = vmatmul.mubr.f32.gmra.mrb[0].mxu0 %v1738
    %v1857 = vpop.f32.mrb[0].mxu0
    %v1858 = vadd.f32 0.0, %v1857
    %v1859 = vpop.f32.mrb[0].mxu0
    %1860 = vmatprep.mubr.f32.mxu0 0.0
    %1861 = vmatmul.mubr.f32.gmra.mrb[0].mxu0 %v1741
    %v1862 = vpop.f32.mrb[0].mxu0
    %v1863 = vadd.f32 0.0, %v1862
    %v1864 = vpop.f32.mrb[0].mxu0
    %1865 = vmatprep.mubr.f32.mxu0 0.0
    %1866 = vmatmul.mubr.f32.gmra.mrb[0].mxu0 %v1744
    %v1867 = vpop.f32.mrb[0].mxu0
    %v1868 = vadd.f32 0.0, %v1867
    %v1869 = vpop.f32.mrb[0].mxu0
    %1870 = vmatprep.mubr.f32.mxu0 0.0
    %1871 = vmatmul.mubr.f32.gmra.mrb[0].mxu0 %v1747
    %v1872 = vpop.f32.mrb[0].mxu0
    %v1873 = vadd.f32 0.0, %v1872
    %v1874 = vpop.f32.mrb[0].mxu0
    %1875 = vmatprep.mubr.f32.mxu0 0.0
    %1876 = vmatmul.mubr.f32.gmra.mrb[0].mxu0 %v1750
    %v1877 = vpop.f32.mrb[0].mxu0
    %v1878 = vadd.f32 0.0, %v1877
    %v1879 = vpop.f32.mrb[0].mxu0
    %1880 = vmatprep.mubr.f32.mxu0 0.0
    %1881 = vmatmul.mubr.f32.gmra.mrb[0].mxu0 %v1753
    %v1882 = vpop.f32.mrb[0].mxu0
    %v1883 = vadd.f32 0.0, %v1882
    %v1884 = vpop.f32.mrb[0].mxu0
    %1885 = vmatprep.mubr.f32.mxu0 0.0
    %1886 = vmatmul.mubr.f32.gmra.mrb[0].mxu0 %v1756
    %v1887 = vpop.f32.mrb[0].mxu0
    %v1888 = vadd.f32 0.0, %v1887
    %v1889 = vpop.f32.mrb[0].mxu0
    %1890 = vmatprep.mubr.f32.mxu0 0.0
    %1891 = vmatmul.mubr.f32.gmra.mrb[0].mxu0 %v1759
    %v1892 = vpop.f32.mrb[0].mxu0
    %v1893 = vadd.f32 0.0, %v1892
    %v1894 = vpop.f32.mrb[0].mxu0
    %1895 = vmatprep.mubr.f32.mxu0 0.0
    %1896 = vmatmul.mubr.f32.gmra.mrb[0].mxu0 %v1762
    %v1897 = vpop.f32.mrb[0].mxu0
    %v1898 = vadd.f32 0.0, %v1897
    %v1899 = vpop.f32.mrb[0].mxu0
    %1900 = vmatprep.mubr.f32.mxu0 0.0
    %1901 = vmatmul.mubr.f32.gmra.mrb[0].mxu0 %v1765
    %v1902 = vpop.f32.mrb[0].mxu0
    %v1903 = vadd.f32 0.0, %v1902
    %v1904 = vpop.f32.mrb[0].mxu0
    %1905 = vmatprep.mubr.f32.mxu0 0.0
    %1906 = vmatmul.mubr.f32.gmra.mrb[0].mxu0 %v1768
    %v1907 = vpop.f32.mrb[0].mxu0
    %v1908 = vadd.f32 0.0, %v1907
    %v1909 = vpop.f32.mrb[0].mxu0
    %1910 = vmatprep.mubr.f32.mxu0 0.0
    %1911 = vmatmul.mubr.f32.gmra.mrb[0].mxu0 %v1771
    %v1912 = vpop.f32.mrb[0].mxu0
    %v1913 = vadd.f32 0.0, %v1912
    %v1914 = vpop.f32.mrb[0].mxu0
    %1915 = vmatprep.mubr.f32.mxu0 0.0
    %1916 = vmatmul.mubr.f32.gmra.mrb[0].mxu0 %v1774
    %v1917 = vpop.f32.mrb[0].mxu0
    %v1918 = vadd.f32 0.0, %v1917
    %v1919 = vpop.f32.mrb[0].mxu0
    %1920 = vdwg.mxu0
    %v1921 = vadd.f32 %v1691, %v1843
    %v1922 = vadd.f32 %v1692, %v1848
    %v1923 = vadd.f32 %v1693, %v1853
    %v1924 = vadd.f32 %v1694, %v1858
    %v1925 = vadd.f32 %v1695, %v1863
    %v1926 = vadd.f32 %v1696, %v1868
    %v1927 = vadd.f32 %v1697, %v1873
    %v1928 = vadd.f32 %v1698, %v1878
    %v1929 = vadd.f32 %v1699, %v1883
    %v1930 = vadd.f32 %v1700, %v1888
    %v1931 = vadd.f32 %v1701, %v1893
    %v1932 = vadd.f32 %v1702, %v1898
    %v1933 = vadd.f32 %v1703, %v1903
    %v1934 = vadd.f32 %v1704, %v1908
    %v1935 = vadd.f32 %v1705, %v1913
    %v1936 = vadd.f32 %v1706, %v1918
    %v1937 = vld [vmem:[#allocation3 + $0x4] sm:$0xff]
    %v1938 = vld [vmem:[#allocation3 + $0x14] sm:$0xff]
    %v1939 = vld [vmem:[#allocation3 + $0x24] sm:$0xff]
    %v1940 = vld [vmem:[#allocation3 + $0x34] sm:$0xff]
    %v1941 = vld [vmem:[#allocation3 + $0x44] sm:$0xff]
    %v1942 = vld [vmem:[#allocation3 + $0x54] sm:$0xff]
    %v1943 = vld [vmem:[#allocation3 + $0x64] sm:$0xff]
    %v1944 = vld [vmem:[#allocation3 + $0x74] sm:$0xff]
    %v1945 = vld [vmem:[#allocation3 + $0xc4] sm:$0xff]
    %v1946 = vld [vmem:[#allocation3 + $0xd4] sm:$0xff]
    %v1947 = vld [vmem:[#allocation3 + $0xe4] sm:$0xff]
    %v1948 = vld [vmem:[#allocation3 + $0xf4] sm:$0xff]
    %v1949 = vld [vmem:[#allocation3 + $0x104] sm:$0xff]
    %v1950 = vld [vmem:[#allocation3 + $0x114] sm:$0xff]
    %v1951 = vld [vmem:[#allocation3 + $0x124] sm:$0xff]
    %v1952 = vld [vmem:[#allocation3 + $0x134] sm:$0xff]
    %s1953 = scalar_lea.vmem %s3, 128
    %v1954 = vld [vmem:[%s1953] sm:$0xff]
    %v1955 = vld [vmem:[%s1953 + $0x8] sm:$0xff]
    %v1956 = vld [vmem:[%s1953 + $0x10] sm:$0xff]
    %v1957 = vld [vmem:[%s1953 + $0x18] sm:$0xff]
    %v1959 = vsel %vm199, %v1937, 0
    %v1962 = vsel %vm199, %v1938, 0
    %v1965 = vsel %vm199, %v1939, 0
    %v1968 = vsel %vm199, %v1940, 0
    %v1971 = vsel %vm199, %v1941, 0
    %v1974 = vsel %vm199, %v1942, 0
    %v1977 = vsel %vm199, %v1943, 0
    %v1980 = vsel %vm199, %v1944, 0
    %v1983 = vsel %vm199, %v1945, 0
    %v1986 = vsel %vm199, %v1946, 0
    %v1989 = vsel %vm199, %v1947, 0
    %v1992 = vsel %vm199, %v1948, 0
    %v1995 = vsel %vm199, %v1949, 0
    %v1998 = vsel %vm199, %v1950, 0
    %v2001 = vsel %vm199, %v1951, 0
    %v2004 = vsel %vm199, %v1952, 0
    %2006 = vmatprep.subr.mxu0 0.0
    %2007 = vmatpush1.msra.mxu0 %v1954
    %2008 = vmatprep.subr.mxu0 0.0
    %2009 = vmatpush1.msra.mxu0 %v1955
    %2010 = vmatprep.subr.mxu0 0.0
    %2011 = vmatpush1.msra.mxu0 %v1956
    %2012 = vmatprep.subr.mxu0 0.0
    %2013 = vmatpush1.msra.mxu0 %v1957
    %2014 = vmatprep.subr.mxu0 0.0
    %2015 = vmatpush1.msra.mxu0 0.0
    %2016 = vmatprep.subr.mxu0 0.0
    %2017 = vmatpush1.msra.mxu0 0.0
    %2018 = vmatprep.subr.mxu0 0.0
    %2019 = vmatpush1.msra.mxu0 0.0
    %2020 = vmatprep.subr.mxu0 0.0
    %2021 = vmatpush1.msra.mxu0 0.0
    %2022 = vmatprep.subr.mxu0 0.0
    %2023 = vmatpush1.msra.mxu0 0.0
    %2024 = vmatprep.subr.mxu0 0.0
    %2025 = vmatpush1.msra.mxu0 0.0
    %2026 = vmatprep.subr.mxu0 0.0
    %2027 = vmatpush1.msra.mxu0 0.0
    %2028 = vmatprep.subr.mxu0 0.0
    %2029 = vmatpush1.msra.mxu0 0.0
    %2030 = vmatprep.subr.mxu0 0.0
    %2031 = vmatpush1.msra.mxu0 0.0
    %2032 = vmatprep.subr.mxu0 0.0
    %2033 = vmatpush1.msra.mxu0 0.0
    %2034 = vmatprep.subr.mxu0 0.0
    %2035 = vmatpush1.msra.mxu0 0.0
    %2036 = vmatprep.subr.mxu0 0.0
    %2037 = vmatpush1.msra.mxu0 0.0
    %2038 = vmatprep.subr.mxu0 0.0
    %2039 = vmatpush1.msra.mxu0 0.0
    %2040 = vmatprep.subr.mxu0 0.0
    %2041 = vmatpush1.msra.mxu0 0.0
    %2042 = vmatprep.subr.mxu0 0.0
    %2043 = vmatpush1.msra.mxu0 0.0
    %2044 = vmatprep.subr.mxu0 0.0
    %2045 = vmatpush1.msra.mxu0 0.0
    %2046 = vmatprep.subr.mxu0 0.0
    %2047 = vmatpush1.msra.mxu0 0.0
    %2048 = vmatprep.subr.mxu0 0.0
    %2049 = vmatpush1.msra.mxu0 0.0
    %2050 = vmatprep.subr.mxu0 0.0
    %2051 = vmatpush1.msra.mxu0 0.0
    %2052 = vmatprep.subr.mxu0 0.0
    %2053 = vmatpush1.msra.mxu0 0.0
    %2054 = vmatprep.subr.mxu0 0.0
    %2055 = vmatpush1.msra.mxu0 0.0
    %2056 = vmatprep.subr.mxu0 0.0
    %2057 = vmatpush1.msra.mxu0 0.0
    %2058 = vmatprep.subr.mxu0 0.0
    %2059 = vmatpush1.msra.mxu0 0.0
    %2060 = vmatprep.subr.mxu0 0.0
    %2061 = vmatpush1.msra.mxu0 0.0
    %2062 = vmatprep.subr.mxu0 0.0
    %2063 = vmatpush1.msra.mxu0 0.0
    %2064 = vmatprep.subr.mxu0 0.0
    %2065 = vmatpush1.msra.mxu0 0.0
    %2066 = vmatprep.subr.mxu0 0.0
    %2067 = vmatpush1.msra.mxu0 0.0
    %2068 = vmatprep.subr.mxu0 0.0
    %2069 = vmatpush1.msra.mxu0 0.0
    %2070 = vmatprep.mubr.f32.mxu0 0.0
    %2071 = vmatmul.mubr.f32.gmra.mrb[0].mxu0 %v1959
    %v2072 = vpop.f32.mrb[0].mxu0
    %v2073 = vadd.f32 0.0, %v2072
    %v2074 = vpop.f32.mrb[0].mxu0
    %2075 = vmatprep.mubr.f32.mxu0 0.0
    %2076 = vmatmul.mubr.f32.gmra.mrb[0].mxu0 %v1962
    %v2077 = vpop.f32.mrb[0].mxu0
    %v2078 = vadd.f32 0.0, %v2077
    %v2079 = vpop.f32.mrb[0].mxu0
    %2080 = vmatprep.mubr.f32.mxu0 0.0
    %2081 = vmatmul.mubr.f32.gmra.mrb[0].mxu0 %v1965
    %v2082 = vpop.f32.mrb[0].mxu0
    %v2083 = vadd.f32 0.0, %v2082
    %v2084 = vpop.f32.mrb[0].mxu0
    %2085 = vmatprep.mubr.f32.mxu0 0.0
    %2086 = vmatmul.mubr.f32.gmra.mrb[0].mxu0 %v1968
    %v2087 = vpop.f32.mrb[0].mxu0
    %v2088 = vadd.f32 0.0, %v2087
    %v2089 = vpop.f32.mrb[0].mxu0
    %2090 = vmatprep.mubr.f32.mxu0 0.0
    %2091 = vmatmul.mubr.f32.gmra.mrb[0].mxu0 %v1971
    %v2092 = vpop.f32.mrb[0].mxu0
    %v2093 = vadd.f32 0.0, %v2092
    %v2094 = vpop.f32.mrb[0].mxu0
    %2095 = vmatprep.mubr.f32.mxu0 0.0
    %2096 = vmatmul.mubr.f32.gmra.mrb[0].mxu0 %v1974
    %v2097 = vpop.f32.mrb[0].mxu0
    %v2098 = vadd.f32 0.0, %v2097
    %v2099 = vpop.f32.mrb[0].mxu0
    %2100 = vmatprep.mubr.f32.mxu0 0.0
    %2101 = vmatmul.mubr.f32.gmra.mrb[0].mxu0 %v1977
    %v2102 = vpop.f32.mrb[0].mxu0
    %v2103 = vadd.f32 0.0, %v2102
    %v2104 = vpop.f32.mrb[0].mxu0
    %2105 = vmatprep.mubr.f32.mxu0 0.0
    %2106 = vmatmul.mubr.f32.gmra.mrb[0].mxu0 %v1980
    %v2107 = vpop.f32.mrb[0].mxu0
    %v2108 = vadd.f32 0.0, %v2107
    %v2109 = vpop.f32.mrb[0].mxu0
    %2110 = vmatprep.mubr.f32.mxu0 0.0
    %2111 = vmatmul.mubr.f32.gmra.mrb[0].mxu0 %v1983
    %v2112 = vpop.f32.mrb[0].mxu0
    %v2113 = vadd.f32 0.0, %v2112
    %v2114 = vpop.f32.mrb[0].mxu0
    %2115 = vmatprep.mubr.f32.mxu0 0.0
    %2116 = vmatmul.mubr.f32.gmra.mrb[0].mxu0 %v1986
    %v2117 = vpop.f32.mrb[0].mxu0
    %v2118 = vadd.f32 0.0, %v2117
    %v2119 = vpop.f32.mrb[0].mxu0
    %2120 = vmatprep.mubr.f32.mxu0 0.0
    %2121 = vmatmul.mubr.f32.gmra.mrb[0].mxu0 %v1989
    %v2122 = vpop.f32.mrb[0].mxu0
    %v2123 = vadd.f32 0.0, %v2122
    %v2124 = vpop.f32.mrb[0].mxu0
    %2125 = vmatprep.mubr.f32.mxu0 0.0
    %2126 = vmatmul.mubr.f32.gmra.mrb[0].mxu0 %v1992
    %v2127 = vpop.f32.mrb[0].mxu0
    %v2128 = vadd.f32 0.0, %v2127
    %v2129 = vpop.f32.mrb[0].mxu0
    %2130 = vmatprep.mubr.f32.mxu0 0.0
    %2131 = vmatmul.mubr.f32.gmra.mrb[0].mxu0 %v1995
    %v2132 = vpop.f32.mrb[0].mxu0
    %v2133 = vadd.f32 0.0, %v2132
    %v2134 = vpop.f32.mrb[0].mxu0
    %2135 = vmatprep.mubr.f32.mxu0 0.0
    %2136 = vmatmul.mubr.f32.gmra.mrb[0].mxu0 %v1998
    %v2137 = vpop.f32.mrb[0].mxu0
    %v2138 = vadd.f32 0.0, %v2137
    %v2139 = vpop.f32.mrb[0].mxu0
    %2140 = vmatprep.mubr.f32.mxu0 0.0
    %2141 = vmatmul.mubr.f32.gmra.mrb[0].mxu0 %v2001
    %v2142 = vpop.f32.mrb[0].mxu0
    %v2143 = vadd.f32 0.0, %v2142
    %v2144 = vpop.f32.mrb[0].mxu0
    %2145 = vmatprep.mubr.f32.mxu0 0.0
    %2146 = vmatmul.mubr.f32.gmra.mrb[0].mxu0 %v2004
    %v2147 = vpop.f32.mrb[0].mxu0
    %v2148 = vadd.f32 0.0, %v2147
    %v2149 = vpop.f32.mrb[0].mxu0
    %2150 = vdwg.mxu0
    %v2151 = vadd.f32 %v1921, %v2073
    %v2152 = vadd.f32 %v1922, %v2078
    %v2153 = vadd.f32 %v1923, %v2083
    %v2154 = vadd.f32 %v1924, %v2088
    %v2155 = vadd.f32 %v1925, %v2093
    %v2156 = vadd.f32 %v1926, %v2098
    %v2157 = vadd.f32 %v1927, %v2103
    %v2158 = vadd.f32 %v1928, %v2108
    %v2159 = vadd.f32 %v1929, %v2113
    %v2160 = vadd.f32 %v1930, %v2118
    %v2161 = vadd.f32 %v1931, %v2123
    %v2162 = vadd.f32 %v1932, %v2128
    %v2163 = vadd.f32 %v1933, %v2133
    %v2164 = vadd.f32 %v1934, %v2138
    %v2165 = vadd.f32 %v1935, %v2143
    %v2166 = vadd.f32 %v1936, %v2148
    %s2167 = scalar_lea.vmem [#allocation3], 16
    %v2168 = vld [vmem:[%s2167] sm:$0xff]
    %v2169 = vld [vmem:[%s2167 + $0x10] sm:$0xff]
    %v2170 = vld [vmem:[%s2167 + $0x20] sm:$0xff]
    %v2171 = vld [vmem:[%s2167 + $0x30] sm:$0xff]
    %v2172 = vld [vmem:[%s2167 + $0x40] sm:$0xff]
    %v2173 = vld [vmem:[%s2167 + $0x50] sm:$0xff]
    %v2174 = vld [vmem:[%s2167 + $0x60] sm:$0xff]
    %v2175 = vld [vmem:[%s2167 + $0x70] sm:$0xff]
    %v2176 = vld [vmem:[%s2167 + $0xc0] sm:$0xff]
    %v2177 = vld [vmem:[%s2167 + $0xd0] sm:$0xff]
    %v2178 = vld [vmem:[%s2167 + $0xe0] sm:$0xff]
    %v2179 = vld [vmem:[%s2167 + $0xf0] sm:$0xff]
    %v2180 = vld [vmem:[%s2167 + $0x100] sm:$0xff]
    %v2181 = vld [vmem:[%s2167 + $0x110] sm:$0xff]
    %v2182 = vld [vmem:[%s2167 + $0x120] sm:$0xff]
    %v2183 = vld [vmem:[%s2167 + $0x130] sm:$0xff]
    %s2184 = scalar_lea.vmem %s3, 160
    %v2185 = vld [vmem:[%s2184] sm:$0xff]
    %v2186 = vld [vmem:[%s2184 + $0x8] sm:$0xff]
    %v2187 = vld [vmem:[%s2184 + $0x10] sm:$0xff]
    %v2188 = vld [vmem:[%s2184 + $0x18] sm:$0xff]
    %v2190 = vsel %vm199, %v2168, 0
    %v2193 = vsel %vm199, %v2169, 0
    %v2196 = vsel %vm199, %v2170, 0
    %v2199 = vsel %vm199, %v2171, 0
    %v2202 = vsel %vm199, %v2172, 0
    %v2205 = vsel %vm199, %v2173, 0
    %v2208 = vsel %vm199, %v2174, 0
    %v2211 = vsel %vm199, %v2175, 0
    %v2214 = vsel %vm199, %v2176, 0
    %v2217 = vsel %vm199, %v2177, 0
    %v2220 = vsel %vm199, %v2178, 0
    %v2223 = vsel %vm199, %v2179, 0
    %v2226 = vsel %vm199, %v2180, 0
    %v2229 = vsel %vm199, %v2181, 0
    %v2232 = vsel %vm199, %v2182, 0
    %v2235 = vsel %vm199, %v2183, 0
    %2237 = vmatprep.subr.mxu0 0.0
    %2238 = vmatpush1.msra.mxu0 %v2185
    %2239 = vmatprep.subr.mxu0 0.0
    %2240 = vmatpush1.msra.mxu0 %v2186
    %2241 = vmatprep.subr.mxu0 0.0
    %2242 = vmatpush1.msra.mxu0 %v2187
    %2243 = vmatprep.subr.mxu0 0.0
    %2244 = vmatpush1.msra.mxu0 %v2188
    %2245 = vmatprep.subr.mxu0 0.0
    %2246 = vmatpush1.msra.mxu0 0.0
    %2247 = vmatprep.subr.mxu0 0.0
    %2248 = vmatpush1.msra.mxu0 0.0
    %2249 = vmatprep.subr.mxu0 0.0
    %2250 = vmatpush1.msra.mxu0 0.0
    %2251 = vmatprep.subr.mxu0 0.0
    %2252 = vmatpush1.msra.mxu0 0.0
    %2253 = vmatprep.subr.mxu0 0.0
    %2254 = vmatpush1.msra.mxu0 0.0
    %2255 = vmatprep.subr.mxu0 0.0
    %2256 = vmatpush1.msra.mxu0 0.0
    %2257 = vmatprep.subr.mxu0 0.0
    %2258 = vmatpush1.msra.mxu0 0.0
    %2259 = vmatprep.subr.mxu0 0.0
    %2260 = vmatpush1.msra.mxu0 0.0
    %2261 = vmatprep.subr.mxu0 0.0
    %2262 = vmatpush1.msra.mxu0 0.0
    %2263 = vmatprep.subr.mxu0 0.0
    %2264 = vmatpush1.msra.mxu0 0.0
    %2265 = vmatprep.subr.mxu0 0.0
    %2266 = vmatpush1.msra.mxu0 0.0
    %2267 = vmatprep.subr.mxu0 0.0
    %2268 = vmatpush1.msra.mxu0 0.0
    %2269 = vmatprep.subr.mxu0 0.0
    %2270 = vmatpush1.msra.mxu0 0.0
    %2271 = vmatprep.subr.mxu0 0.0
    %2272 = vmatpush1.msra.mxu0 0.0
    %2273 = vmatprep.subr.mxu0 0.0
    %2274 = vmatpush1.msra.mxu0 0.0
    %2275 = vmatprep.subr.mxu0 0.0
    %2276 = vmatpush1.msra.mxu0 0.0
    %2277 = vmatprep.subr.mxu0 0.0
    %2278 = vmatpush1.msra.mxu0 0.0
    %2279 = vmatprep.subr.mxu0 0.0
    %2280 = vmatpush1.msra.mxu0 0.0
    %2281 = vmatprep.subr.mxu0 0.0
    %2282 = vmatpush1.msra.mxu0 0.0
    %2283 = vmatprep.subr.mxu0 0.0
    %2284 = vmatpush1.msra.mxu0 0.0
    %2285 = vmatprep.subr.mxu0 0.0
    %2286 = vmatpush1.msra.mxu0 0.0
    %2287 = vmatprep.subr.mxu0 0.0
    %2288 = vmatpush1.msra.mxu0 0.0
    %2289 = vmatprep.subr.mxu0 0.0
    %2290 = vmatpush1.msra.mxu0 0.0
    %2291 = vmatprep.subr.mxu0 0.0
    %2292 = vmatpush1.msra.mxu0 0.0
    %2293 = vmatprep.subr.mxu0 0.0
    %2294 = vmatpush1.msra.mxu0 0.0
    %2295 = vmatprep.subr.mxu0 0.0
    %2296 = vmatpush1.msra.mxu0 0.0
    %2297 = vmatprep.subr.mxu0 0.0
    %2298 = vmatpush1.msra.mxu0 0.0
    %2299 = vmatprep.subr.mxu0 0.0
    %2300 = vmatpush1.msra.mxu0 0.0
    %2301 = vmatprep.mubr.f32.mxu0 0.0
    %2302 = vmatmul.mubr.f32.gmra.mrb[0].mxu0 %v2190
    %v2303 = vpop.f32.mrb[0].mxu0
    %v2304 = vadd.f32 0.0, %v2303
    %v2305 = vpop.f32.mrb[0].mxu0
    %2306 = vmatprep.mubr.f32.mxu0 0.0
    %2307 = vmatmul.mubr.f32.gmra.mrb[0].mxu0 %v2193
    %v2308 = vpop.f32.mrb[0].mxu0
    %v2309 = vadd.f32 0.0, %v2308
    %v2310 = vpop.f32.mrb[0].mxu0
    %2311 = vmatprep.mubr.f32.mxu0 0.0
    %2312 = vmatmul.mubr.f32.gmra.mrb[0].mxu0 %v2196
    %v2313 = vpop.f32.mrb[0].mxu0
    %v2314 = vadd.f32 0.0, %v2313
    %v2315 = vpop.f32.mrb[0].mxu0
    %2316 = vmatprep.mubr.f32.mxu0 0.0
    %2317 = vmatmul.mubr.f32.gmra.mrb[0].mxu0 %v2199
    %v2318 = vpop.f32.mrb[0].mxu0
    %v2319 = vadd.f32 0.0, %v2318
    %v2320 = vpop.f32.mrb[0].mxu0
    %2321 = vmatprep.mubr.f32.mxu0 0.0
    %2322 = vmatmul.mubr.f32.gmra.mrb[0].mxu0 %v2202
    %v2323 = vpop.f32.mrb[0].mxu0
    %v2324 = vadd.f32 0.0, %v2323
    %v2325 = vpop.f32.mrb[0].mxu0
    %2326 = vmatprep.mubr.f32.mxu0 0.0
    %2327 = vmatmul.mubr.f32.gmra.mrb[0].mxu0 %v2205
    %v2328 = vpop.f32.mrb[0].mxu0
    %v2329 = vadd.f32 0.0, %v2328
    %v2330 = vpop.f32.mrb[0].mxu0
    %2331 = vmatprep.mubr.f32.mxu0 0.0
    %2332 = vmatmul.mubr.f32.gmra.mrb[0].mxu0 %v2208
    %v2333 = vpop.f32.mrb[0].mxu0
    %v2334 = vadd.f32 0.0, %v2333
    %v2335 = vpop.f32.mrb[0].mxu0
    %2336 = vmatprep.mubr.f32.mxu0 0.0
    %2337 = vmatmul.mubr.f32.gmra.mrb[0].mxu0 %v2211
    %v2338 = vpop.f32.mrb[0].mxu0
    %v2339 = vadd.f32 0.0, %v2338
    %v2340 = vpop.f32.mrb[0].mxu0
    %2341 = vmatprep.mubr.f32.mxu0 0.0
    %2342 = vmatmul.mubr.f32.gmra.mrb[0].mxu0 %v2214
    %v2343 = vpop.f32.mrb[0].mxu0
    %v2344 = vadd.f32 0.0, %v2343
    %v2345 = vpop.f32.mrb[0].mxu0
    %2346 = vmatprep.mubr.f32.mxu0 0.0
    %2347 = vmatmul.mubr.f32.gmra.mrb[0].mxu0 %v2217
    %v2348 = vpop.f32.mrb[0].mxu0
    %v2349 = vadd.f32 0.0, %v2348
    %v2350 = vpop.f32.mrb[0].mxu0
    %2351 = vmatprep.mubr.f32.mxu0 0.0
    %2352 = vmatmul.mubr.f32.gmra.mrb[0].mxu0 %v2220
    %v2353 = vpop.f32.mrb[0].mxu0
    %v2354 = vadd.f32 0.0, %v2353
    %v2355 = vpop.f32.mrb[0].mxu0
    %2356 = vmatprep.mubr.f32.mxu0 0.0
    %2357 = vmatmul.mubr.f32.gmra.mrb[0].mxu0 %v2223
    %v2358 = vpop.f32.mrb[0].mxu0
    %v2359 = vadd.f32 0.0, %v2358
    %v2360 = vpop.f32.mrb[0].mxu0
    %2361 = vmatprep.mubr.f32.mxu0 0.0
    %2362 = vmatmul.mubr.f32.gmra.mrb[0].mxu0 %v2226
    %v2363 = vpop.f32.mrb[0].mxu0
    %v2364 = vadd.f32 0.0, %v2363
    %v2365 = vpop.f32.mrb[0].mxu0
    %2366 = vmatprep.mubr.f32.mxu0 0.0
    %2367 = vmatmul.mubr.f32.gmra.mrb[0].mxu0 %v2229
    %v2368 = vpop.f32.mrb[0].mxu0
    %v2369 = vadd.f32 0.0, %v2368
    %v2370 = vpop.f32.mrb[0].mxu0
    %2371 = vmatprep.mubr.f32.mxu0 0.0
    %2372 = vmatmul.mubr.f32.gmra.mrb[0].mxu0 %v2232
    %v2373 = vpop.f32.mrb[0].mxu0
    %v2374 = vadd.f32 0.0, %v2373
    %v2375 = vpop.f32.mrb[0].mxu0
    %2376 = vmatprep.mubr.f32.mxu0 0.0
    %2377 = vmatmul.mubr.f32.gmra.mrb[0].mxu0 %v2235
    %v2378 = vpop.f32.mrb[0].mxu0
    %v2379 = vadd.f32 0.0, %v2378
    %v2380 = vpop.f32.mrb[0].mxu0
    %2381 = vdwg.mxu0
    %v2382 = vadd.f32 %v2151, %v2304
    %v2383 = vadd.f32 %v2152, %v2309
    %v2384 = vadd.f32 %v2153, %v2314
    %v2385 = vadd.f32 %v2154, %v2319
    %v2386 = vadd.f32 %v2155, %v2324
    %v2387 = vadd.f32 %v2156, %v2329
    %v2388 = vadd.f32 %v2157, %v2334
    %v2389 = vadd.f32 %v2158, %v2339
    %v2390 = vadd.f32 %v2159, %v2344
    %v2391 = vadd.f32 %v2160, %v2349
    %v2392 = vadd.f32 %v2161, %v2354
    %v2393 = vadd.f32 %v2162, %v2359
    %v2394 = vadd.f32 %v2163, %v2364
    %v2395 = vadd.f32 %v2164, %v2369
    %v2396 = vadd.f32 %v2165, %v2374
    %v2397 = vadd.f32 %v2166, %v2379
    %v2398 = vld [vmem:[%s2167 + $0x1] sm:$0xff]
    %v2399 = vld [vmem:[%s2167 + $0x11] sm:$0xff]
    %v2400 = vld [vmem:[%s2167 + $0x21] sm:$0xff]
    %v2401 = vld [vmem:[%s2167 + $0x31] sm:$0xff]
    %v2402 = vld [vmem:[%s2167 + $0x41] sm:$0xff]
    %v2403 = vld [vmem:[%s2167 + $0x51] sm:$0xff]
    %v2404 = vld [vmem:[%s2167 + $0x61] sm:$0xff]
    %v2405 = vld [vmem:[%s2167 + $0x71] sm:$0xff]
    %v2406 = vld [vmem:[%s2167 + $0xc1] sm:$0xff]
    %v2407 = vld [vmem:[%s2167 + $0xd1] sm:$0xff]
    %v2408 = vld [vmem:[%s2167 + $0xe1] sm:$0xff]
    %v2409 = vld [vmem:[%s2167 + $0xf1] sm:$0xff]
    %v2410 = vld [vmem:[%s2167 + $0x101] sm:$0xff]
    %v2411 = vld [vmem:[%s2167 + $0x111] sm:$0xff]
    %v2412 = vld [vmem:[%s2167 + $0x121] sm:$0xff]
    %v2413 = vld [vmem:[%s2167 + $0x131] sm:$0xff]
    %s2414 = scalar_lea.vmem %s3, 192
    %v2415 = vld [vmem:[%s2414] sm:$0xff]
    %v2416 = vld [vmem:[%s2414 + $0x8] sm:$0xff]
    %v2417 = vld [vmem:[%s2414 + $0x10] sm:$0xff]
    %v2418 = vld [vmem:[%s2414 + $0x18] sm:$0xff]
    %v2420 = vsel %vm199, %v2398, 0
    %v2423 = vsel %vm199, %v2399, 0
    %v2426 = vsel %vm199, %v2400, 0
    %v2429 = vsel %vm199, %v2401, 0
    %v2432 = vsel %vm199, %v2402, 0
    %v2435 = vsel %vm199, %v2403, 0
    %v2438 = vsel %vm199, %v2404, 0
    %v2441 = vsel %vm199, %v2405, 0
    %v2444 = vsel %vm199, %v2406, 0
    %v2447 = vsel %vm199, %v2407, 0
    %v2450 = vsel %vm199, %v2408, 0
    %v2453 = vsel %vm199, %v2409, 0
    %v2456 = vsel %vm199, %v2410, 0
    %v2459 = vsel %vm199, %v2411, 0
    %v2462 = vsel %vm199, %v2412, 0
    %v2465 = vsel %vm199, %v2413, 0
    %2467 = vmatprep.subr.mxu0 0.0
    %2468 = vmatpush1.msra.mxu0 %v2415
    %2469 = vmatprep.subr.mxu0 0.0
    %2470 = vmatpush1.msra.mxu0 %v2416
    %2471 = vmatprep.subr.mxu0 0.0
    %2472 = vmatpush1.msra.mxu0 %v2417
    %2473 = vmatprep.subr.mxu0 0.0
    %2474 = vmatpush1.msra.mxu0 %v2418
    %2475 = vmatprep.subr.mxu0 0.0
    %2476 = vmatpush1.msra.mxu0 0.0
    %2477 = vmatprep.subr.mxu0 0.0
    %2478 = vmatpush1.msra.mxu0 0.0
    %2479 = vmatprep.subr.mxu0 0.0
    %2480 = vmatpush1.msra.mxu0 0.0
    %2481 = vmatprep.subr.mxu0 0.0
    %2482 = vmatpush1.msra.mxu0 0.0
    %2483 = vmatprep.subr.mxu0 0.0
    %2484 = vmatpush1.msra.mxu0 0.0
    %2485 = vmatprep.subr.mxu0 0.0
    %2486 = vmatpush1.msra.mxu0 0.0
    %2487 = vmatprep.subr.mxu0 0.0
    %2488 = vmatpush1.msra.mxu0 0.0
    %2489 = vmatprep.subr.mxu0 0.0
    %2490 = vmatpush1.msra.mxu0 0.0
    %2491 = vmatprep.subr.mxu0 0.0
    %2492 = vmatpush1.msra.mxu0 0.0
    %2493 = vmatprep.subr.mxu0 0.0
    %2494 = vmatpush1.msra.mxu0 0.0
    %2495 = vmatprep.subr.mxu0 0.0
    %2496 = vmatpush1.msra.mxu0 0.0
    %2497 = vmatprep.subr.mxu0 0.0
    %2498 = vmatpush1.msra.mxu0 0.0
    %2499 = vmatprep.subr.mxu0 0.0
    %2500 = vmatpush1.msra.mxu0 0.0
    %2501 = vmatprep.subr.mxu0 0.0
    %2502 = vmatpush1.msra.mxu0 0.0
    %2503 = vmatprep.subr.mxu0 0.0
    %2504 = vmatpush1.msra.mxu0 0.0
    %2505 = vmatprep.subr.mxu0 0.0
    %2506 = vmatpush1.msra.mxu0 0.0
    %2507 = vmatprep.subr.mxu0 0.0
    %2508 = vmatpush1.msra.mxu0 0.0
    %2509 = vmatprep.subr.mxu0 0.0
    %2510 = vmatpush1.msra.mxu0 0.0
    %2511 = vmatprep.subr.mxu0 0.0
    %2512 = vmatpush1.msra.mxu0 0.0
    %2513 = vmatprep.subr.mxu0 0.0
    %2514 = vmatpush1.msra.mxu0 0.0
    %2515 = vmatprep.subr.mxu0 0.0
    %2516 = vmatpush1.msra.mxu0 0.0
    %2517 = vmatprep.subr.mxu0 0.0
    %2518 = vmatpush1.msra.mxu0 0.0
    %2519 = vmatprep.subr.mxu0 0.0
    %2520 = vmatpush1.msra.mxu0 0.0
    %2521 = vmatprep.subr.mxu0 0.0
    %2522 = vmatpush1.msra.mxu0 0.0
    %2523 = vmatprep.subr.mxu0 0.0
    %2524 = vmatpush1.msra.mxu0 0.0
    %2525 = vmatprep.subr.mxu0 0.0
    %2526 = vmatpush1.msra.mxu0 0.0
    %2527 = vmatprep.subr.mxu0 0.0
    %2528 = vmatpush1.msra.mxu0 0.0
    %2529 = vmatprep.subr.mxu0 0.0
    %2530 = vmatpush1.msra.mxu0 0.0
    %2531 = vmatprep.mubr.f32.mxu0 0.0
    %2532 = vmatmul.mubr.f32.gmra.mrb[0].mxu0 %v2420
    %v2533 = vpop.f32.mrb[0].mxu0
    %v2534 = vadd.f32 0.0, %v2533
    %v2535 = vpop.f32.mrb[0].mxu0
    %2536 = vmatprep.mubr.f32.mxu0 0.0
    %2537 = vmatmul.mubr.f32.gmra.mrb[0].mxu0 %v2423
    %v2538 = vpop.f32.mrb[0].mxu0
    %v2539 = vadd.f32 0.0, %v2538
    %v2540 = vpop.f32.mrb[0].mxu0
    %2541 = vmatprep.mubr.f32.mxu0 0.0
    %2542 = vmatmul.mubr.f32.gmra.mrb[0].mxu0 %v2426
    %v2543 = vpop.f32.mrb[0].mxu0
    %v2544 = vadd.f32 0.0, %v2543
    %v2545 = vpop.f32.mrb[0].mxu0
    %2546 = vmatprep.mubr.f32.mxu0 0.0
    %2547 = vmatmul.mubr.f32.gmra.mrb[0].mxu0 %v2429
    %v2548 = vpop.f32.mrb[0].mxu0
    %v2549 = vadd.f32 0.0, %v2548
    %v2550 = vpop.f32.mrb[0].mxu0
    %2551 = vmatprep.mubr.f32.mxu0 0.0
    %2552 = vmatmul.mubr.f32.gmra.mrb[0].mxu0 %v2432
    %v2553 = vpop.f32.mrb[0].mxu0
    %v2554 = vadd.f32 0.0, %v2553
    %v2555 = vpop.f32.mrb[0].mxu0
    %2556 = vmatprep.mubr.f32.mxu0 0.0
    %2557 = vmatmul.mubr.f32.gmra.mrb[0].mxu0 %v2435
    %v2558 = vpop.f32.mrb[0].mxu0
    %v2559 = vadd.f32 0.0, %v2558
    %v2560 = vpop.f32.mrb[0].mxu0
    %2561 = vmatprep.mubr.f32.mxu0 0.0
    %2562 = vmatmul.mubr.f32.gmra.mrb[0].mxu0 %v2438
    %v2563 = vpop.f32.mrb[0].mxu0
    %v2564 = vadd.f32 0.0, %v2563
    %v2565 = vpop.f32.mrb[0].mxu0
    %2566 = vmatprep.mubr.f32.mxu0 0.0
    %2567 = vmatmul.mubr.f32.gmra.mrb[0].mxu0 %v2441
    %v2568 = vpop.f32.mrb[0].mxu0
    %v2569 = vadd.f32 0.0, %v2568
    %v2570 = vpop.f32.mrb[0].mxu0
    %2571 = vmatprep.mubr.f32.mxu0 0.0
    %2572 = vmatmul.mubr.f32.gmra.mrb[0].mxu0 %v2444
    %v2573 = vpop.f32.mrb[0].mxu0
    %v2574 = vadd.f32 0.0, %v2573
    %v2575 = vpop.f32.mrb[0].mxu0
    %2576 = vmatprep.mubr.f32.mxu0 0.0
    %2577 = vmatmul.mubr.f32.gmra.mrb[0].mxu0 %v2447
    %v2578 = vpop.f32.mrb[0].mxu0
    %v2579 = vadd.f32 0.0, %v2578
    %v2580 = vpop.f32.mrb[0].mxu0
    %2581 = vmatprep.mubr.f32.mxu0 0.0
    %2582 = vmatmul.mubr.f32.gmra.mrb[0].mxu0 %v2450
    %v2583 = vpop.f32.mrb[0].mxu0
    %v2584 = vadd.f32 0.0, %v2583
    %v2585 = vpop.f32.mrb[0].mxu0
    %2586 = vmatprep.mubr.f32.mxu0 0.0
    %2587 = vmatmul.mubr.f32.gmra.mrb[0].mxu0 %v2453
    %v2588 = vpop.f32.mrb[0].mxu0
    %v2589 = vadd.f32 0.0, %v2588
    %v2590 = vpop.f32.mrb[0].mxu0
    %2591 = vmatprep.mubr.f32.mxu0 0.0
    %2592 = vmatmul.mubr.f32.gmra.mrb[0].mxu0 %v2456
    %v2593 = vpop.f32.mrb[0].mxu0
    %v2594 = vadd.f32 0.0, %v2593
    %v2595 = vpop.f32.mrb[0].mxu0
    %2596 = vmatprep.mubr.f32.mxu0 0.0
    %2597 = vmatmul.mubr.f32.gmra.mrb[0].mxu0 %v2459
    %v2598 = vpop.f32.mrb[0].mxu0
    %v2599 = vadd.f32 0.0, %v2598
    %v2600 = vpop.f32.mrb[0].mxu0
    %2601 = vmatprep.mubr.f32.mxu0 0.0
    %2602 = vmatmul.mubr.f32.gmra.mrb[0].mxu0 %v2462
    %v2603 = vpop.f32.mrb[0].mxu0
    %v2604 = vadd.f32 0.0, %v2603
    %v2605 = vpop.f32.mrb[0].mxu0
    %2606 = vmatprep.mubr.f32.mxu0 0.0
    %2607 = vmatmul.mubr.f32.gmra.mrb[0].mxu0 %v2465
    %v2608 = vpop.f32.mrb[0].mxu0
    %v2609 = vadd.f32 0.0, %v2608
    %v2610 = vpop.f32.mrb[0].mxu0
    %2611 = vdwg.mxu0
    %v2612 = vadd.f32 %v2382, %v2534
    %v2613 = vadd.f32 %v2383, %v2539
    %v2614 = vadd.f32 %v2384, %v2544
    %v2615 = vadd.f32 %v2385, %v2549
    %v2616 = vadd.f32 %v2386, %v2554
    %v2617 = vadd.f32 %v2387, %v2559
    %v2618 = vadd.f32 %v2388, %v2564
    %v2619 = vadd.f32 %v2389, %v2569
    %v2620 = vadd.f32 %v2390, %v2574
    %v2621 = vadd.f32 %v2391, %v2579
    %v2622 = vadd.f32 %v2392, %v2584
    %v2623 = vadd.f32 %v2393, %v2589
    %v2624 = vadd.f32 %v2394, %v2594
    %v2625 = vadd.f32 %v2395, %v2599
    %v2626 = vadd.f32 %v2396, %v2604
    %v2627 = vadd.f32 %v2397, %v2609
    %v2628 = vld [vmem:[%s2167 + $0x2] sm:$0xff]
    %v2629 = vld [vmem:[%s2167 + $0x12] sm:$0xff]
    %v2630 = vld [vmem:[%s2167 + $0x22] sm:$0xff]
    %v2631 = vld [vmem:[%s2167 + $0x32] sm:$0xff]
    %v2632 = vld [vmem:[%s2167 + $0x42] sm:$0xff]
    %v2633 = vld [vmem:[%s2167 + $0x52] sm:$0xff]
    %v2634 = vld [vmem:[%s2167 + $0x62] sm:$0xff]
    %v2635 = vld [vmem:[%s2167 + $0x72] sm:$0xff]
    %v2636 = vld [vmem:[%s2167 + $0xc2] sm:$0xff]
    %v2637 = vld [vmem:[%s2167 + $0xd2] sm:$0xff]
    %v2638 = vld [vmem:[%s2167 + $0xe2] sm:$0xff]
    %v2639 = vld [vmem:[%s2167 + $0xf2] sm:$0xff]
    %v2640 = vld [vmem:[%s2167 + $0x102] sm:$0xff]
    %v2641 = vld [vmem:[%s2167 + $0x112] sm:$0xff]
    %v2642 = vld [vmem:[%s2167 + $0x122] sm:$0xff]
    %v2643 = vld [vmem:[%s2167 + $0x132] sm:$0xff]
    %s2644 = scalar_lea.vmem %s3, 224
    %v2645 = vld [vmem:[%s2644] sm:$0xff]
    %v2646 = vld [vmem:[%s2644 + $0x8] sm:$0xff]
    %v2647 = vld [vmem:[%s2644 + $0x10] sm:$0xff]
    %v2648 = vld [vmem:[%s2644 + $0x18] sm:$0xff]
    %v2650 = vsel %vm199, %v2628, 0
    %v2653 = vsel %vm199, %v2629, 0
    %v2656 = vsel %vm199, %v2630, 0
    %v2659 = vsel %vm199, %v2631, 0
    %v2662 = vsel %vm199, %v2632, 0
    %v2665 = vsel %vm199, %v2633, 0
    %v2668 = vsel %vm199, %v2634, 0
    %v2671 = vsel %vm199, %v2635, 0
    %v2674 = vsel %vm199, %v2636, 0
    %v2677 = vsel %vm199, %v2637, 0
    %v2680 = vsel %vm199, %v2638, 0
    %v2683 = vsel %vm199, %v2639, 0
    %v2686 = vsel %vm199, %v2640, 0
    %v2689 = vsel %vm199, %v2641, 0
    %v2692 = vsel %vm199, %v2642, 0
    %v2695 = vsel %vm199, %v2643, 0
    %2697 = vmatprep.subr.mxu0 0.0
    %2698 = vmatpush1.msra.mxu0 %v2645
    %2699 = vmatprep.subr.mxu0 0.0
    %2700 = vmatpush1.msra.mxu0 %v2646
    %2701 = vmatprep.subr.mxu0 0.0
    %2702 = vmatpush1.msra.mxu0 %v2647
    %2703 = vmatprep.subr.mxu0 0.0
    %2704 = vmatpush1.msra.mxu0 %v2648
    %2705 = vmatprep.subr.mxu0 0.0
    %2706 = vmatpush1.msra.mxu0 0.0
    %2707 = vmatprep.subr.mxu0 0.0
    %2708 = vmatpush1.msra.mxu0 0.0
    %2709 = vmatprep.subr.mxu0 0.0
    %2710 = vmatpush1.msra.mxu0 0.0
    %2711 = vmatprep.subr.mxu0 0.0
    %2712 = vmatpush1.msra.mxu0 0.0
    %2713 = vmatprep.subr.mxu0 0.0
    %2714 = vmatpush1.msra.mxu0 0.0
    %2715 = vmatprep.subr.mxu0 0.0
    %2716 = vmatpush1.msra.mxu0 0.0
    %2717 = vmatprep.subr.mxu0 0.0
    %2718 = vmatpush1.msra.mxu0 0.0
    %2719 = vmatprep.subr.mxu0 0.0
    %2720 = vmatpush1.msra.mxu0 0.0
    %2721 = vmatprep.subr.mxu0 0.0
    %2722 = vmatpush1.msra.mxu0 0.0
    %2723 = vmatprep.subr.mxu0 0.0
    %2724 = vmatpush1.msra.mxu0 0.0
    %2725 = vmatprep.subr.mxu0 0.0
    %2726 = vmatpush1.msra.mxu0 0.0
    %2727 = vmatprep.subr.mxu0 0.0
    %2728 = vmatpush1.msra.mxu0 0.0
    %2729 = vmatprep.subr.mxu0 0.0
    %2730 = vmatpush1.msra.mxu0 0.0
    %2731 = vmatprep.subr.mxu0 0.0
    %2732 = vmatpush1.msra.mxu0 0.0
    %2733 = vmatprep.subr.mxu0 0.0
    %2734 = vmatpush1.msra.mxu0 0.0
    %2735 = vmatprep.subr.mxu0 0.0
    %2736 = vmatpush1.msra.mxu0 0.0
    %2737 = vmatprep.subr.mxu0 0.0
    %2738 = vmatpush1.msra.mxu0 0.0
    %2739 = vmatprep.subr.mxu0 0.0
    %2740 = vmatpush1.msra.mxu0 0.0
    %2741 = vmatprep.subr.mxu0 0.0
    %2742 = vmatpush1.msra.mxu0 0.0
    %2743 = vmatprep.subr.mxu0 0.0
    %2744 = vmatpush1.msra.mxu0 0.0
    %2745 = vmatprep.subr.mxu0 0.0
    %2746 = vmatpush1.msra.mxu0 0.0
    %2747 = vmatprep.subr.mxu0 0.0
    %2748 = vmatpush1.msra.mxu0 0.0
    %2749 = vmatprep.subr.mxu0 0.0
    %2750 = vmatpush1.msra.mxu0 0.0
    %2751 = vmatprep.subr.mxu0 0.0
    %2752 = vmatpush1.msra.mxu0 0.0
    %2753 = vmatprep.subr.mxu0 0.0
    %2754 = vmatpush1.msra.mxu0 0.0
    %2755 = vmatprep.subr.mxu0 0.0
    %2756 = vmatpush1.msra.mxu0 0.0
    %2757 = vmatprep.subr.mxu0 0.0
    %2758 = vmatpush1.msra.mxu0 0.0
    %2759 = vmatprep.subr.mxu0 0.0
    %2760 = vmatpush1.msra.mxu0 0.0
    %2761 = vmatprep.mubr.f32.mxu0 0.0
    %2762 = vmatmul.mubr.f32.gmra.mrb[0].mxu0 %v2650
    %v2763 = vpop.f32.mrb[0].mxu0
    %v2764 = vadd.f32 0.0, %v2763
    %v2765 = vpop.f32.mrb[0].mxu0
    %2766 = vmatprep.mubr.f32.mxu0 0.0
    %2767 = vmatmul.mubr.f32.gmra.mrb[0].mxu0 %v2653
    %v2768 = vpop.f32.mrb[0].mxu0
    %v2769 = vadd.f32 0.0, %v2768
    %v2770 = vpop.f32.mrb[0].mxu0
    %2771 = vmatprep.mubr.f32.mxu0 0.0
    %2772 = vmatmul.mubr.f32.gmra.mrb[0].mxu0 %v2656
    %v2773 = vpop.f32.mrb[0].mxu0
    %v2774 = vadd.f32 0.0, %v2773
    %v2775 = vpop.f32.mrb[0].mxu0
    %2776 = vmatprep.mubr.f32.mxu0 0.0
    %2777 = vmatmul.mubr.f32.gmra.mrb[0].mxu0 %v2659
    %v2778 = vpop.f32.mrb[0].mxu0
    %v2779 = vadd.f32 0.0, %v2778
    %v2780 = vpop.f32.mrb[0].mxu0
    %2781 = vmatprep.mubr.f32.mxu0 0.0
    %2782 = vmatmul.mubr.f32.gmra.mrb[0].mxu0 %v2662
    %v2783 = vpop.f32.mrb[0].mxu0
    %v2784 = vadd.f32 0.0, %v2783
    %v2785 = vpop.f32.mrb[0].mxu0
    %2786 = vmatprep.mubr.f32.mxu0 0.0
    %2787 = vmatmul.mubr.f32.gmra.mrb[0].mxu0 %v2665
    %v2788 = vpop.f32.mrb[0].mxu0
    %v2789 = vadd.f32 0.0, %v2788
    %v2790 = vpop.f32.mrb[0].mxu0
    %2791 = vmatprep.mubr.f32.mxu0 0.0
    %2792 = vmatmul.mubr.f32.gmra.mrb[0].mxu0 %v2668
    %v2793 = vpop.f32.mrb[0].mxu0
    %v2794 = vadd.f32 0.0, %v2793
    %v2795 = vpop.f32.mrb[0].mxu0
    %2796 = vmatprep.mubr.f32.mxu0 0.0
    %2797 = vmatmul.mubr.f32.gmra.mrb[0].mxu0 %v2671
    %v2798 = vpop.f32.mrb[0].mxu0
    %v2799 = vadd.f32 0.0, %v2798
    %v2800 = vpop.f32.mrb[0].mxu0
    %2801 = vmatprep.mubr.f32.mxu0 0.0
    %2802 = vmatmul.mubr.f32.gmra.mrb[0].mxu0 %v2674
    %v2803 = vpop.f32.mrb[0].mxu0
    %v2804 = vadd.f32 0.0, %v2803
    %v2805 = vpop.f32.mrb[0].mxu0
    %2806 = vmatprep.mubr.f32.mxu0 0.0
    %2807 = vmatmul.mubr.f32.gmra.mrb[0].mxu0 %v2677
    %v2808 = vpop.f32.mrb[0].mxu0
    %v2809 = vadd.f32 0.0, %v2808
    %v2810 = vpop.f32.mrb[0].mxu0
    %2811 = vmatprep.mubr.f32.mxu0 0.0
    %2812 = vmatmul.mubr.f32.gmra.mrb[0].mxu0 %v2680
    %v2813 = vpop.f32.mrb[0].mxu0
    %v2814 = vadd.f32 0.0, %v2813
    %v2815 = vpop.f32.mrb[0].mxu0
    %2816 = vmatprep.mubr.f32.mxu0 0.0
    %2817 = vmatmul.mubr.f32.gmra.mrb[0].mxu0 %v2683
    %v2818 = vpop.f32.mrb[0].mxu0
    %v2819 = vadd.f32 0.0, %v2818
    %v2820 = vpop.f32.mrb[0].mxu0
    %2821 = vmatprep.mubr.f32.mxu0 0.0
    %2822 = vmatmul.mubr.f32.gmra.mrb[0].mxu0 %v2686
    %v2823 = vpop.f32.mrb[0].mxu0
    %v2824 = vadd.f32 0.0, %v2823
    %v2825 = vpop.f32.mrb[0].mxu0
    %2826 = vmatprep.mubr.f32.mxu0 0.0
    %2827 = vmatmul.mubr.f32.gmra.mrb[0].mxu0 %v2689
    %v2828 = vpop.f32.mrb[0].mxu0
    %v2829 = vadd.f32 0.0, %v2828
    %v2830 = vpop.f32.mrb[0].mxu0
    %2831 = vmatprep.mubr.f32.mxu0 0.0
    %2832 = vmatmul.mubr.f32.gmra.mrb[0].mxu0 %v2692
    %v2833 = vpop.f32.mrb[0].mxu0
    %v2834 = vadd.f32 0.0, %v2833
    %v2835 = vpop.f32.mrb[0].mxu0
    %2836 = vmatprep.mubr.f32.mxu0 0.0
    %2837 = vmatmul.mubr.f32.gmra.mrb[0].mxu0 %v2695
    %v2838 = vpop.f32.mrb[0].mxu0
    %v2839 = vadd.f32 0.0, %v2838
    %v2840 = vpop.f32.mrb[0].mxu0
    %2841 = vdwg.mxu0
    %v2842 = vadd.f32 %v2612, %v2764
    %v2843 = vadd.f32 %v2613, %v2769
    %v2844 = vadd.f32 %v2614, %v2774
    %v2845 = vadd.f32 %v2615, %v2779
    %v2846 = vadd.f32 %v2616, %v2784
    %v2847 = vadd.f32 %v2617, %v2789
    %v2848 = vadd.f32 %v2618, %v2794
    %v2849 = vadd.f32 %v2619, %v2799
    %v2850 = vadd.f32 %v2620, %v2804
    %v2851 = vadd.f32 %v2621, %v2809
    %v2852 = vadd.f32 %v2622, %v2814
    %v2853 = vadd.f32 %v2623, %v2819
    %v2854 = vadd.f32 %v2624, %v2824
    %v2855 = vadd.f32 %v2625, %v2829
    %v2856 = vadd.f32 %v2626, %v2834
    %v2857 = vadd.f32 %v2627, %v2839
    %v2858 = vld [vmem:[%s2167 + $0x3] sm:$0xff]
    %v2859 = vld [vmem:[%s2167 + $0x13] sm:$0xff]
    %v2860 = vld [vmem:[%s2167 + $0x23] sm:$0xff]
    %v2861 = vld [vmem:[%s2167 + $0x33] sm:$0xff]
    %v2862 = vld [vmem:[%s2167 + $0x43] sm:$0xff]
    %v2863 = vld [vmem:[%s2167 + $0x53] sm:$0xff]
    %v2864 = vld [vmem:[%s2167 + $0x63] sm:$0xff]
    %v2865 = vld [vmem:[%s2167 + $0x73] sm:$0xff]
    %v2866 = vld [vmem:[%s2167 + $0xc3] sm:$0xff]
    %v2867 = vld [vmem:[%s2167 + $0xd3] sm:$0xff]
    %v2868 = vld [vmem:[%s2167 + $0xe3] sm:$0xff]
    %v2869 = vld [vmem:[%s2167 + $0xf3] sm:$0xff]
    %v2870 = vld [vmem:[%s2167 + $0x103] sm:$0xff]
    %v2871 = vld [vmem:[%s2167 + $0x113] sm:$0xff]
    %v2872 = vld [vmem:[%s2167 + $0x123] sm:$0xff]
    %v2873 = vld [vmem:[%s2167 + $0x133] sm:$0xff]
    %s2874 = scalar_lea.vmem %s3, 256
    %v2875 = vld [vmem:[%s2874] sm:$0xff]
    %v2876 = vld [vmem:[%s2874 + $0x8] sm:$0xff]
    %v2877 = vld [vmem:[%s2874 + $0x10] sm:$0xff]
    %v2878 = vld [vmem:[%s2874 + $0x18] sm:$0xff]
    %v2880 = vsel %vm199, %v2858, 0
    %v2883 = vsel %vm199, %v2859, 0
    %v2886 = vsel %vm199, %v2860, 0
    %v2889 = vsel %vm199, %v2861, 0
    %v2892 = vsel %vm199, %v2862, 0
    %v2895 = vsel %vm199, %v2863, 0
    %v2898 = vsel %vm199, %v2864, 0
    %v2901 = vsel %vm199, %v2865, 0
    %v2904 = vsel %vm199, %v2866, 0
    %v2907 = vsel %vm199, %v2867, 0
    %v2910 = vsel %vm199, %v2868, 0
    %v2913 = vsel %vm199, %v2869, 0
    %v2916 = vsel %vm199, %v2870, 0
    %v2919 = vsel %vm199, %v2871, 0
    %v2922 = vsel %vm199, %v2872, 0
    %v2925 = vsel %vm199, %v2873, 0
    %2927 = vmatprep.subr.mxu0 0.0
    %2928 = vmatpush1.msra.mxu0 %v2875
    %2929 = vmatprep.subr.mxu0 0.0
    %2930 = vmatpush1.msra.mxu0 %v2876
    %2931 = vmatprep.subr.mxu0 0.0
    %2932 = vmatpush1.msra.mxu0 %v2877
    %2933 = vmatprep.subr.mxu0 0.0
    %2934 = vmatpush1.msra.mxu0 %v2878
    %2935 = vmatprep.subr.mxu0 0.0
    %2936 = vmatpush1.msra.mxu0 0.0
    %2937 = vmatprep.subr.mxu0 0.0
    %2938 = vmatpush1.msra.mxu0 0.0
    %2939 = vmatprep.subr.mxu0 0.0
    %2940 = vmatpush1.msra.mxu0 0.0
    %2941 = vmatprep.subr.mxu0 0.0
    %2942 = vmatpush1.msra.mxu0 0.0
    %2943 = vmatprep.subr.mxu0 0.0
    %2944 = vmatpush1.msra.mxu0 0.0
    %2945 = vmatprep.subr.mxu0 0.0
    %2946 = vmatpush1.msra.mxu0 0.0
    %2947 = vmatprep.subr.mxu0 0.0
    %2948 = vmatpush1.msra.mxu0 0.0
    %2949 = vmatprep.subr.mxu0 0.0
    %2950 = vmatpush1.msra.mxu0 0.0
    %2951 = vmatprep.subr.mxu0 0.0
    %2952 = vmatpush1.msra.mxu0 0.0
    %2953 = vmatprep.subr.mxu0 0.0
    %2954 = vmatpush1.msra.mxu0 0.0
    %2955 = vmatprep.subr.mxu0 0.0
    %2956 = vmatpush1.msra.mxu0 0.0
    %2957 = vmatprep.subr.mxu0 0.0
    %2958 = vmatpush1.msra.mxu0 0.0
    %2959 = vmatprep.subr.mxu0 0.0
    %2960 = vmatpush1.msra.mxu0 0.0
    %2961 = vmatprep.subr.mxu0 0.0
    %2962 = vmatpush1.msra.mxu0 0.0
    %2963 = vmatprep.subr.mxu0 0.0
    %2964 = vmatpush1.msra.mxu0 0.0
    %2965 = vmatprep.subr.mxu0 0.0
    %2966 = vmatpush1.msra.mxu0 0.0
    %2967 = vmatprep.subr.mxu0 0.0
    %2968 = vmatpush1.msra.mxu0 0.0
    %2969 = vmatprep.subr.mxu0 0.0
    %2970 = vmatpush1.msra.mxu0 0.0
    %2971 = vmatprep.subr.mxu0 0.0
    %2972 = vmatpush1.msra.mxu0 0.0
    %2973 = vmatprep.subr.mxu0 0.0
    %2974 = vmatpush1.msra.mxu0 0.0
    %2975 = vmatprep.subr.mxu0 0.0
    %2976 = vmatpush1.msra.mxu0 0.0
    %2977 = vmatprep.subr.mxu0 0.0
    %2978 = vmatpush1.msra.mxu0 0.0
    %2979 = vmatprep.subr.mxu0 0.0
    %2980 = vmatpush1.msra.mxu0 0.0
    %2981 = vmatprep.subr.mxu0 0.0
    %2982 = vmatpush1.msra.mxu0 0.0
    %2983 = vmatprep.subr.mxu0 0.0
    %2984 = vmatpush1.msra.mxu0 0.0
    %2985 = vmatprep.subr.mxu0 0.0
    %2986 = vmatpush1.msra.mxu0 0.0
    %2987 = vmatprep.subr.mxu0 0.0
    %2988 = vmatpush1.msra.mxu0 0.0
    %2989 = vmatprep.subr.mxu0 0.0
    %2990 = vmatpush1.msra.mxu0 0.0
    %2991 = vmatprep.mubr.f32.mxu0 0.0
    %2992 = vmatmul.mubr.f32.gmra.mrb[0].mxu0 %v2880
    %v2993 = vpop.f32.mrb[0].mxu0
    %v2994 = vadd.f32 0.0, %v2993
    %v2995 = vpop.f32.mrb[0].mxu0
    %2996 = vmatprep.mubr.f32.mxu0 0.0
    %2997 = vmatmul.mubr.f32.gmra.mrb[0].mxu0 %v2883
    %v2998 = vpop.f32.mrb[0].mxu0
    %v2999 = vadd.f32 0.0, %v2998
    %v3000 = vpop.f32.mrb[0].mxu0
    %3001 = vmatprep.mubr.f32.mxu0 0.0
    %3002 = vmatmul.mubr.f32.gmra.mrb[0].mxu0 %v2886
    %v3003 = vpop.f32.mrb[0].mxu0
    %v3004 = vadd.f32 0.0, %v3003
    %v3005 = vpop.f32.mrb[0].mxu0
    %3006 = vmatprep.mubr.f32.mxu0 0.0
    %3007 = vmatmul.mubr.f32.gmra.mrb[0].mxu0 %v2889
    %v3008 = vpop.f32.mrb[0].mxu0
    %v3009 = vadd.f32 0.0, %v3008
    %v3010 = vpop.f32.mrb[0].mxu0
    %3011 = vmatprep.mubr.f32.mxu0 0.0
    %3012 = vmatmul.mubr.f32.gmra.mrb[0].mxu0 %v2892
    %v3013 = vpop.f32.mrb[0].mxu0
    %v3014 = vadd.f32 0.0, %v3013
    %v3015 = vpop.f32.mrb[0].mxu0
    %3016 = vmatprep.mubr.f32.mxu0 0.0
    %3017 = vmatmul.mubr.f32.gmra.mrb[0].mxu0 %v2895
    %v3018 = vpop.f32.mrb[0].mxu0
    %v3019 = vadd.f32 0.0, %v3018
    %v3020 = vpop.f32.mrb[0].mxu0
    %3021 = vmatprep.mubr.f32.mxu0 0.0
    %3022 = vmatmul.mubr.f32.gmra.mrb[0].mxu0 %v2898
    %v3023 = vpop.f32.mrb[0].mxu0
    %v3024 = vadd.f32 0.0, %v3023
    %v3025 = vpop.f32.mrb[0].mxu0
    %3026 = vmatprep.mubr.f32.mxu0 0.0
    %3027 = vmatmul.mubr.f32.gmra.mrb[0].mxu0 %v2901
    %v3028 = vpop.f32.mrb[0].mxu0
    %v3029 = vadd.f32 0.0, %v3028
    %v3030 = vpop.f32.mrb[0].mxu0
    %3031 = vmatprep.mubr.f32.mxu0 0.0
    %3032 = vmatmul.mubr.f32.gmra.mrb[0].mxu0 %v2904
    %v3033 = vpop.f32.mrb[0].mxu0
    %v3034 = vadd.f32 0.0, %v3033
    %v3035 = vpop.f32.mrb[0].mxu0
    %3036 = vmatprep.mubr.f32.mxu0 0.0
    %3037 = vmatmul.mubr.f32.gmra.mrb[0].mxu0 %v2907
    %v3038 = vpop.f32.mrb[0].mxu0
    %v3039 = vadd.f32 0.0, %v3038
    %v3040 = vpop.f32.mrb[0].mxu0
    %3041 = vmatprep.mubr.f32.mxu0 0.0
    %3042 = vmatmul.mubr.f32.gmra.mrb[0].mxu0 %v2910
    %v3043 = vpop.f32.mrb[0].mxu0
    %v3044 = vadd.f32 0.0, %v3043
    %v3045 = vpop.f32.mrb[0].mxu0
    %3046 = vmatprep.mubr.f32.mxu0 0.0
    %3047 = vmatmul.mubr.f32.gmra.mrb[0].mxu0 %v2913
    %v3048 = vpop.f32.mrb[0].mxu0
    %v3049 = vadd.f32 0.0, %v3048
    %v3050 = vpop.f32.mrb[0].mxu0
    %3051 = vmatprep.mubr.f32.mxu0 0.0
    %3052 = vmatmul.mubr.f32.gmra.mrb[0].mxu0 %v2916
    %v3053 = vpop.f32.mrb[0].mxu0
    %v3054 = vadd.f32 0.0, %v3053
    %v3055 = vpop.f32.mrb[0].mxu0
    %3056 = vmatprep.mubr.f32.mxu0 0.0
    %3057 = vmatmul.mubr.f32.gmra.mrb[0].mxu0 %v2919
    %v3058 = vpop.f32.mrb[0].mxu0
    %v3059 = vadd.f32 0.0, %v3058
    %v3060 = vpop.f32.mrb[0].mxu0
    %3061 = vmatprep.mubr.f32.mxu0 0.0
    %3062 = vmatmul.mubr.f32.gmra.mrb[0].mxu0 %v2922
    %v3063 = vpop.f32.mrb[0].mxu0
    %v3064 = vadd.f32 0.0, %v3063
    %v3065 = vpop.f32.mrb[0].mxu0
    %3066 = vmatprep.mubr.f32.mxu0 0.0
    %3067 = vmatmul.mubr.f32.gmra.mrb[0].mxu0 %v2925
    %v3068 = vpop.f32.mrb[0].mxu0
    %v3069 = vadd.f32 0.0, %v3068
    %v3070 = vpop.f32.mrb[0].mxu0
    %3071 = vdwg.mxu0
    %v3072 = vadd.f32 %v2842, %v2994
    %v3073 = vadd.f32 %v2843, %v2999
    %v3074 = vadd.f32 %v2844, %v3004
    %v3075 = vadd.f32 %v2845, %v3009
    %v3076 = vadd.f32 %v2846, %v3014
    %v3077 = vadd.f32 %v2847, %v3019
    %v3078 = vadd.f32 %v2848, %v3024
    %v3079 = vadd.f32 %v2849, %v3029
    %v3080 = vadd.f32 %v2850, %v3034
    %v3081 = vadd.f32 %v2851, %v3039
    %v3082 = vadd.f32 %v2852, %v3044
    %v3083 = vadd.f32 %v2853, %v3049
    %v3084 = vadd.f32 %v2854, %v3054
    %v3085 = vadd.f32 %v2855, %v3059
    %v3086 = vadd.f32 %v2856, %v3064
    %v3087 = vadd.f32 %v2857, %v3069
    %v3088 = vld [vmem:[%s2167 + $0x4] sm:$0xff]
    %v3089 = vld [vmem:[%s2167 + $0x14] sm:$0xff]
    %v3090 = vld [vmem:[%s2167 + $0x24] sm:$0xff]
    %v3091 = vld [vmem:[%s2167 + $0x34] sm:$0xff]
    %v3092 = vld [vmem:[%s2167 + $0x44] sm:$0xff]
    %v3093 = vld [vmem:[%s2167 + $0x54] sm:$0xff]
    %v3094 = vld [vmem:[%s2167 + $0x64] sm:$0xff]
    %v3095 = vld [vmem:[%s2167 + $0x74] sm:$0xff]
    %v3096 = vld [vmem:[%s2167 + $0xc4] sm:$0xff]
    %v3097 = vld [vmem:[%s2167 + $0xd4] sm:$0xff]
    %v3098 = vld [vmem:[%s2167 + $0xe4] sm:$0xff]
    %v3099 = vld [vmem:[%s2167 + $0xf4] sm:$0xff]
    %v3100 = vld [vmem:[%s2167 + $0x104] sm:$0xff]
    %v3101 = vld [vmem:[%s2167 + $0x114] sm:$0xff]
    %v3102 = vld [vmem:[%s2167 + $0x124] sm:$0xff]
    %v3103 = vld [vmem:[%s2167 + $0x134] sm:$0xff]
    %s3104 = scalar_lea.vmem %s3, 288
    %v3105 = vld [vmem:[%s3104] sm:$0xff]
    %v3106 = vld [vmem:[%s3104 + $0x8] sm:$0xff]
    %v3107 = vld [vmem:[%s3104 + $0x10] sm:$0xff]
    %v3108 = vld [vmem:[%s3104 + $0x18] sm:$0xff]
    %v3110 = vsel %vm199, %v3088, 0
    %v3113 = vsel %vm199, %v3089, 0
    %v3116 = vsel %vm199, %v3090, 0
    %v3119 = vsel %vm199, %v3091, 0
    %v3122 = vsel %vm199, %v3092, 0
    %v3125 = vsel %vm199, %v3093, 0
    %v3128 = vsel %vm199, %v3094, 0
    %v3131 = vsel %vm199, %v3095, 0
    %v3134 = vsel %vm199, %v3096, 0
    %v3137 = vsel %vm199, %v3097, 0
    %v3140 = vsel %vm199, %v3098, 0
    %v3143 = vsel %vm199, %v3099, 0
    %v3146 = vsel %vm199, %v3100, 0
    %v3149 = vsel %vm199, %v3101, 0
    %v3152 = vsel %vm199, %v3102, 0
    %v3155 = vsel %vm199, %v3103, 0
    %3157 = vmatprep.subr.mxu0 0.0
    %3158 = vmatpush1.msra.mxu0 %v3105
    %3159 = vmatprep.subr.mxu0 0.0
    %3160 = vmatpush1.msra.mxu0 %v3106
    %3161 = vmatprep.subr.mxu0 0.0
    %3162 = vmatpush1.msra.mxu0 %v3107
    %3163 = vmatprep.subr.mxu0 0.0
    %3164 = vmatpush1.msra.mxu0 %v3108
    %3165 = vmatprep.subr.mxu0 0.0
    %3166 = vmatpush1.msra.mxu0 0.0
    %3167 = vmatprep.subr.mxu0 0.0
    %3168 = vmatpush1.msra.mxu0 0.0
    %3169 = vmatprep.subr.mxu0 0.0
    %3170 = vmatpush1.msra.mxu0 0.0
    %3171 = vmatprep.subr.mxu0 0.0
    %3172 = vmatpush1.msra.mxu0 0.0
    %3173 = vmatprep.subr.mxu0 0.0
    %3174 = vmatpush1.msra.mxu0 0.0
    %3175 = vmatprep.subr.mxu0 0.0
    %3176 = vmatpush1.msra.mxu0 0.0
    %3177 = vmatprep.subr.mxu0 0.0
    %3178 = vmatpush1.msra.mxu0 0.0
    %3179 = vmatprep.subr.mxu0 0.0
    %3180 = vmatpush1.msra.mxu0 0.0
    %3181 = vmatprep.subr.mxu0 0.0
    %3182 = vmatpush1.msra.mxu0 0.0
    %3183 = vmatprep.subr.mxu0 0.0
    %3184 = vmatpush1.msra.mxu0 0.0
    %3185 = vmatprep.subr.mxu0 0.0
    %3186 = vmatpush1.msra.mxu0 0.0
    %3187 = vmatprep.subr.mxu0 0.0
    %3188 = vmatpush1.msra.mxu0 0.0
    %3189 = vmatprep.subr.mxu0 0.0
    %3190 = vmatpush1.msra.mxu0 0.0
    %3191 = vmatprep.subr.mxu0 0.0
    %3192 = vmatpush1.msra.mxu0 0.0
    %3193 = vmatprep.subr.mxu0 0.0
    %3194 = vmatpush1.msra.mxu0 0.0
    %3195 = vmatprep.subr.mxu0 0.0
    %3196 = vmatpush1.msra.mxu0 0.0
    %3197 = vmatprep.subr.mxu0 0.0
    %3198 = vmatpush1.msra.mxu0 0.0
    %3199 = vmatprep.subr.mxu0 0.0
    %3200 = vmatpush1.msra.mxu0 0.0
    %3201 = vmatprep.subr.mxu0 0.0
    %3202 = vmatpush1.msra.mxu0 0.0
    %3203 = vmatprep.subr.mxu0 0.0
    %3204 = vmatpush1.msra.mxu0 0.0
    %3205 = vmatprep.subr.mxu0 0.0
    %3206 = vmatpush1.msra.mxu0 0.0
    %3207 = vmatprep.subr.mxu0 0.0
    %3208 = vmatpush1.msra.mxu0 0.0
    %3209 = vmatprep.subr.mxu0 0.0
    %3210 = vmatpush1.msra.mxu0 0.0
    %3211 = vmatprep.subr.mxu0 0.0
    %3212 = vmatpush1.msra.mxu0 0.0
    %3213 = vmatprep.subr.mxu0 0.0
    %3214 = vmatpush1.msra.mxu0 0.0
    %3215 = vmatprep.subr.mxu0 0.0
    %3216 = vmatpush1.msra.mxu0 0.0
    %3217 = vmatprep.subr.mxu0 0.0
    %3218 = vmatpush1.msra.mxu0 0.0
    %3219 = vmatprep.subr.mxu0 0.0
    %3220 = vmatpush1.msra.mxu0 0.0
    %3221 = vmatprep.mubr.f32.mxu0 0.0
    %3222 = vmatmul.mubr.f32.gmra.mrb[0].mxu0 %v3110
    %v3223 = vpop.f32.mrb[0].mxu0
    %v3224 = vadd.f32 0.0, %v3223
    %v3225 = vpop.f32.mrb[0].mxu0
    %3226 = vmatprep.mubr.f32.mxu0 0.0
    %3227 = vmatmul.mubr.f32.gmra.mrb[0].mxu0 %v3113
    %v3228 = vpop.f32.mrb[0].mxu0
    %v3229 = vadd.f32 0.0, %v3228
    %v3230 = vpop.f32.mrb[0].mxu0
    %3231 = vmatprep.mubr.f32.mxu0 0.0
    %3232 = vmatmul.mubr.f32.gmra.mrb[0].mxu0 %v3116
    %v3233 = vpop.f32.mrb[0].mxu0
    %v3234 = vadd.f32 0.0, %v3233
    %v3235 = vpop.f32.mrb[0].mxu0
    %3236 = vmatprep.mubr.f32.mxu0 0.0
    %3237 = vmatmul.mubr.f32.gmra.mrb[0].mxu0 %v3119
    %v3238 = vpop.f32.mrb[0].mxu0
    %v3239 = vadd.f32 0.0, %v3238
    %v3240 = vpop.f32.mrb[0].mxu0
    %3241 = vmatprep.mubr.f32.mxu0 0.0
    %3242 = vmatmul.mubr.f32.gmra.mrb[0].mxu0 %v3122
    %v3243 = vpop.f32.mrb[0].mxu0
    %v3244 = vadd.f32 0.0, %v3243
    %v3245 = vpop.f32.mrb[0].mxu0
    %3246 = vmatprep.mubr.f32.mxu0 0.0
    %3247 = vmatmul.mubr.f32.gmra.mrb[0].mxu0 %v3125
    %v3248 = vpop.f32.mrb[0].mxu0
    %v3249 = vadd.f32 0.0, %v3248
    %v3250 = vpop.f32.mrb[0].mxu0
    %3251 = vmatprep.mubr.f32.mxu0 0.0
    %3252 = vmatmul.mubr.f32.gmra.mrb[0].mxu0 %v3128
    %v3253 = vpop.f32.mrb[0].mxu0
    %v3254 = vadd.f32 0.0, %v3253
    %v3255 = vpop.f32.mrb[0].mxu0
    %3256 = vmatprep.mubr.f32.mxu0 0.0
    %3257 = vmatmul.mubr.f32.gmra.mrb[0].mxu0 %v3131
    %v3258 = vpop.f32.mrb[0].mxu0
    %v3259 = vadd.f32 0.0, %v3258
    %v3260 = vpop.f32.mrb[0].mxu0
    %3261 = vmatprep.mubr.f32.mxu0 0.0
    %3262 = vmatmul.mubr.f32.gmra.mrb[0].mxu0 %v3134
    %v3263 = vpop.f32.mrb[0].mxu0
    %v3264 = vadd.f32 0.0, %v3263
    %v3265 = vpop.f32.mrb[0].mxu0
    %3266 = vmatprep.mubr.f32.mxu0 0.0
    %3267 = vmatmul.mubr.f32.gmra.mrb[0].mxu0 %v3137
    %v3268 = vpop.f32.mrb[0].mxu0
    %v3269 = vadd.f32 0.0, %v3268
    %v3270 = vpop.f32.mrb[0].mxu0
    %3271 = vmatprep.mubr.f32.mxu0 0.0
    %3272 = vmatmul.mubr.f32.gmra.mrb[0].mxu0 %v3140
    %v3273 = vpop.f32.mrb[0].mxu0
    %v3274 = vadd.f32 0.0, %v3273
    %v3275 = vpop.f32.mrb[0].mxu0
    %3276 = vmatprep.mubr.f32.mxu0 0.0
    %3277 = vmatmul.mubr.f32.gmra.mrb[0].mxu0 %v3143
    %v3278 = vpop.f32.mrb[0].mxu0
    %v3279 = vadd.f32 0.0, %v3278
    %v3280 = vpop.f32.mrb[0].mxu0
    %3281 = vmatprep.mubr.f32.mxu0 0.0
    %3282 = vmatmul.mubr.f32.gmra.mrb[0].mxu0 %v3146
    %v3283 = vpop.f32.mrb[0].mxu0
    %v3284 = vadd.f32 0.0, %v3283
    %v3285 = vpop.f32.mrb[0].mxu0
    %3286 = vmatprep.mubr.f32.mxu0 0.0
    %3287 = vmatmul.mubr.f32.gmra.mrb[0].mxu0 %v3149
    %v3288 = vpop.f32.mrb[0].mxu0
    %v3289 = vadd.f32 0.0, %v3288
    %v3290 = vpop.f32.mrb[0].mxu0
    %3291 = vmatprep.mubr.f32.mxu0 0.0
    %3292 = vmatmul.mubr.f32.gmra.mrb[0].mxu0 %v3152
    %v3293 = vpop.f32.mrb[0].mxu0
    %v3294 = vadd.f32 0.0, %v3293
    %v3295 = vpop.f32.mrb[0].mxu0
    %3296 = vmatprep.mubr.f32.mxu0 0.0
    %3297 = vmatmul.mubr.f32.gmra.mrb[0].mxu0 %v3155
    %v3298 = vpop.f32.mrb[0].mxu0
    %v3299 = vadd.f32 0.0, %v3298
    %v3300 = vpop.f32.mrb[0].mxu0
    %3301 = vdwg.mxu0
    %v3302 = vadd.f32 %v3072, %v3224
    %v3303 = vadd.f32 %v3073, %v3229
    %v3304 = vadd.f32 %v3074, %v3234
    %v3305 = vadd.f32 %v3075, %v3239
    %v3306 = vadd.f32 %v3076, %v3244
    %v3307 = vadd.f32 %v3077, %v3249
    %v3308 = vadd.f32 %v3078, %v3254
    %v3309 = vadd.f32 %v3079, %v3259
    %v3310 = vadd.f32 %v3080, %v3264
    %v3311 = vadd.f32 %v3081, %v3269
    %v3312 = vadd.f32 %v3082, %v3274
    %v3313 = vadd.f32 %v3083, %v3279
    %v3314 = vadd.f32 %v3084, %v3284
    %v3315 = vadd.f32 %v3085, %v3289
    %v3316 = vadd.f32 %v3086, %v3294
    %v3317 = vadd.f32 %v3087, %v3299
    %v3318 = vld [vmem:[%s1033] sm:$0xff]
    %v3319 = vld [vmem:[%s1033 + $0x10] sm:$0xff]
    %v3320 = vld [vmem:[%s1033 + $0x20] sm:$0xff]
    %v3321 = vld [vmem:[%s1033 + $0x30] sm:$0xff]
    %v3322 = vld [vmem:[%s1033 + $0x40] sm:$0xff]
    %v3323 = vld [vmem:[%s1033 + $0x50] sm:$0xff]
    %v3324 = vld [vmem:[%s1033 + $0x60] sm:$0xff]
    %v3325 = vld [vmem:[%s1033 + $0x70] sm:$0xff]
    %v3326 = vld [vmem:[%s1033 + $0xc0] sm:$0xff]
    %v3327 = vld [vmem:[%s1033 + $0xd0] sm:$0xff]
    %v3328 = vld [vmem:[%s1033 + $0xe0] sm:$0xff]
    %v3329 = vld [vmem:[%s1033 + $0xf0] sm:$0xff]
    %v3330 = vld [vmem:[%s1033 + $0x100] sm:$0xff]
    %v3331 = vld [vmem:[%s1033 + $0x110] sm:$0xff]
    %v3332 = vld [vmem:[%s1033 + $0x120] sm:$0xff]
    %v3333 = vld [vmem:[%s1033 + $0x130] sm:$0xff]
    %s3334 = scalar_lea.vmem %s3, 320
    %v3335 = vld [vmem:[%s3334] sm:$0xff]
    %v3336 = vld [vmem:[%s3334 + $0x8] sm:$0xff]
    %v3337 = vld [vmem:[%s3334 + $0x10] sm:$0xff]
    %v3338 = vld [vmem:[%s3334 + $0x18] sm:$0xff]
    %v3340 = vsel %vm199, %v3318, 0
    %v3343 = vsel %vm199, %v3319, 0
    %v3346 = vsel %vm199, %v3320, 0
    %v3349 = vsel %vm199, %v3321, 0
    %v3352 = vsel %vm199, %v3322, 0
    %v3355 = vsel %vm199, %v3323, 0
    %v3358 = vsel %vm199, %v3324, 0
    %v3361 = vsel %vm199, %v3325, 0
    %v3364 = vsel %vm199, %v3326, 0
    %v3367 = vsel %vm199, %v3327, 0
    %v3370 = vsel %vm199, %v3328, 0
    %v3373 = vsel %vm199, %v3329, 0
    %v3376 = vsel %vm199, %v3330, 0
    %v3379 = vsel %vm199, %v3331, 0
    %v3382 = vsel %vm199, %v3332, 0
    %v3385 = vsel %vm199, %v3333, 0
    %3387 = vmatprep.subr.mxu0 0.0
    %3388 = vmatpush1.msra.mxu0 %v3335
    %3389 = vmatprep.subr.mxu0 0.0
    %3390 = vmatpush1.msra.mxu0 %v3336
    %3391 = vmatprep.subr.mxu0 0.0
    %3392 = vmatpush1.msra.mxu0 %v3337
    %3393 = vmatprep.subr.mxu0 0.0
    %3394 = vmatpush1.msra.mxu0 %v3338
    %3395 = vmatprep.subr.mxu0 0.0
    %3396 = vmatpush1.msra.mxu0 0.0
    %3397 = vmatprep.subr.mxu0 0.0
    %3398 = vmatpush1.msra.mxu0 0.0
    %3399 = vmatprep.subr.mxu0 0.0
    %3400 = vmatpush1.msra.mxu0 0.0
    %3401 = vmatprep.subr.mxu0 0.0
    %3402 = vmatpush1.msra.mxu0 0.0
    %3403 = vmatprep.subr.mxu0 0.0
    %3404 = vmatpush1.msra.mxu0 0.0
    %3405 = vmatprep.subr.mxu0 0.0
    %3406 = vmatpush1.msra.mxu0 0.0
    %3407 = vmatprep.subr.mxu0 0.0
    %3408 = vmatpush1.msra.mxu0 0.0
    %3409 = vmatprep.subr.mxu0 0.0
    %3410 = vmatpush1.msra.mxu0 0.0
    %3411 = vmatprep.subr.mxu0 0.0
    %3412 = vmatpush1.msra.mxu0 0.0
    %3413 = vmatprep.subr.mxu0 0.0
    %3414 = vmatpush1.msra.mxu0 0.0
    %3415 = vmatprep.subr.mxu0 0.0
    %3416 = vmatpush1.msra.mxu0 0.0
    %3417 = vmatprep.subr.mxu0 0.0
    %3418 = vmatpush1.msra.mxu0 0.0
    %3419 = vmatprep.subr.mxu0 0.0
    %3420 = vmatpush1.msra.mxu0 0.0
    %3421 = vmatprep.subr.mxu0 0.0
    %3422 = vmatpush1.msra.mxu0 0.0
    %3423 = vmatprep.subr.mxu0 0.0
    %3424 = vmatpush1.msra.mxu0 0.0
    %3425 = vmatprep.subr.mxu0 0.0
    %3426 = vmatpush1.msra.mxu0 0.0
    %3427 = vmatprep.subr.mxu0 0.0
    %3428 = vmatpush1.msra.mxu0 0.0
    %3429 = vmatprep.subr.mxu0 0.0
    %3430 = vmatpush1.msra.mxu0 0.0
    %3431 = vmatprep.subr.mxu0 0.0
    %3432 = vmatpush1.msra.mxu0 0.0
    %3433 = vmatprep.subr.mxu0 0.0
    %3434 = vmatpush1.msra.mxu0 0.0
    %3435 = vmatprep.subr.mxu0 0.0
    %3436 = vmatpush1.msra.mxu0 0.0
    %3437 = vmatprep.subr.mxu0 0.0
    %3438 = vmatpush1.msra.mxu0 0.0
    %3439 = vmatprep.subr.mxu0 0.0
    %3440 = vmatpush1.msra.mxu0 0.0
    %3441 = vmatprep.subr.mxu0 0.0
    %3442 = vmatpush1.msra.mxu0 0.0
    %3443 = vmatprep.subr.mxu0 0.0
    %3444 = vmatpush1.msra.mxu0 0.0
    %3445 = vmatprep.subr.mxu0 0.0
    %3446 = vmatpush1.msra.mxu0 0.0
    %3447 = vmatprep.subr.mxu0 0.0
    %3448 = vmatpush1.msra.mxu0 0.0
    %3449 = vmatprep.subr.mxu0 0.0
    %3450 = vmatpush1.msra.mxu0 0.0
    %3451 = vmatprep.mubr.f32.mxu0 0.0
    %3452 = vmatmul.mubr.f32.gmra.mrb[0].mxu0 %v3340
    %v3453 = vpop.f32.mrb[0].mxu0
    %v3454 = vadd.f32 0.0, %v3453
    %v3455 = vpop.f32.mrb[0].mxu0
    %3456 = vmatprep.mubr.f32.mxu0 0.0
    %3457 = vmatmul.mubr.f32.gmra.mrb[0].mxu0 %v3343
    %v3458 = vpop.f32.mrb[0].mxu0
    %v3459 = vadd.f32 0.0, %v3458
    %v3460 = vpop.f32.mrb[0].mxu0
    %3461 = vmatprep.mubr.f32.mxu0 0.0
    %3462 = vmatmul.mubr.f32.gmra.mrb[0].mxu0 %v3346
    %v3463 = vpop.f32.mrb[0].mxu0
    %v3464 = vadd.f32 0.0, %v3463
    %v3465 = vpop.f32.mrb[0].mxu0
    %3466 = vmatprep.mubr.f32.mxu0 0.0
    %3467 = vmatmul.mubr.f32.gmra.mrb[0].mxu0 %v3349
    %v3468 = vpop.f32.mrb[0].mxu0
    %v3469 = vadd.f32 0.0, %v3468
    %v3470 = vpop.f32.mrb[0].mxu0
    %3471 = vmatprep.mubr.f32.mxu0 0.0
    %3472 = vmatmul.mubr.f32.gmra.mrb[0].mxu0 %v3352
    %v3473 = vpop.f32.mrb[0].mxu0
    %v3474 = vadd.f32 0.0, %v3473
    %v3475 = vpop.f32.mrb[0].mxu0
    %3476 = vmatprep.mubr.f32.mxu0 0.0
    %3477 = vmatmul.mubr.f32.gmra.mrb[0].mxu0 %v3355
    %v3478 = vpop.f32.mrb[0].mxu0
    %v3479 = vadd.f32 0.0, %v3478
    %v3480 = vpop.f32.mrb[0].mxu0
    %3481 = vmatprep.mubr.f32.mxu0 0.0
    %3482 = vmatmul.mubr.f32.gmra.mrb[0].mxu0 %v3358
    %v3483 = vpop.f32.mrb[0].mxu0
    %v3484 = vadd.f32 0.0, %v3483
    %v3485 = vpop.f32.mrb[0].mxu0
    %3486 = vmatprep.mubr.f32.mxu0 0.0
    %3487 = vmatmul.mubr.f32.gmra.mrb[0].mxu0 %v3361
    %v3488 = vpop.f32.mrb[0].mxu0
    %v3489 = vadd.f32 0.0, %v3488
    %v3490 = vpop.f32.mrb[0].mxu0
    %3491 = vmatprep.mubr.f32.mxu0 0.0
    %3492 = vmatmul.mubr.f32.gmra.mrb[0].mxu0 %v3364
    %v3493 = vpop.f32.mrb[0].mxu0
    %v3494 = vadd.f32 0.0, %v3493
    %v3495 = vpop.f32.mrb[0].mxu0
    %3496 = vmatprep.mubr.f32.mxu0 0.0
    %3497 = vmatmul.mubr.f32.gmra.mrb[0].mxu0 %v3367
    %v3498 = vpop.f32.mrb[0].mxu0
    %v3499 = vadd.f32 0.0, %v3498
    %v3500 = vpop.f32.mrb[0].mxu0
    %3501 = vmatprep.mubr.f32.mxu0 0.0
    %3502 = vmatmul.mubr.f32.gmra.mrb[0].mxu0 %v3370
    %v3503 = vpop.f32.mrb[0].mxu0
    %v3504 = vadd.f32 0.0, %v3503
    %v3505 = vpop.f32.mrb[0].mxu0
    %3506 = vmatprep.mubr.f32.mxu0 0.0
    %3507 = vmatmul.mubr.f32.gmra.mrb[0].mxu0 %v3373
    %v3508 = vpop.f32.mrb[0].mxu0
    %v3509 = vadd.f32 0.0, %v3508
    %v3510 = vpop.f32.mrb[0].mxu0
    %3511 = vmatprep.mubr.f32.mxu0 0.0
    %3512 = vmatmul.mubr.f32.gmra.mrb[0].mxu0 %v3376
    %v3513 = vpop.f32.mrb[0].mxu0
    %v3514 = vadd.f32 0.0, %v3513
    %v3515 = vpop.f32.mrb[0].mxu0
    %3516 = vmatprep.mubr.f32.mxu0 0.0
    %3517 = vmatmul.mubr.f32.gmra.mrb[0].mxu0 %v3379
    %v3518 = vpop.f32.mrb[0].mxu0
    %v3519 = vadd.f32 0.0, %v3518
    %v3520 = vpop.f32.mrb[0].mxu0
    %3521 = vmatprep.mubr.f32.mxu0 0.0
    %3522 = vmatmul.mubr.f32.gmra.mrb[0].mxu0 %v3382
    %v3523 = vpop.f32.mrb[0].mxu0
    %v3524 = vadd.f32 0.0, %v3523
    %v3525 = vpop.f32.mrb[0].mxu0
    %3526 = vmatprep.mubr.f32.mxu0 0.0
    %3527 = vmatmul.mubr.f32.gmra.mrb[0].mxu0 %v3385
    %v3528 = vpop.f32.mrb[0].mxu0
    %v3529 = vadd.f32 0.0, %v3528
    %v3530 = vpop.f32.mrb[0].mxu0
    %3531 = vdwg.mxu0
    %v3532 = vadd.f32 %v3302, %v3454
    %v3533 = vadd.f32 %v3303, %v3459
    %v3534 = vadd.f32 %v3304, %v3464
    %v3535 = vadd.f32 %v3305, %v3469
    %v3536 = vadd.f32 %v3306, %v3474
    %v3537 = vadd.f32 %v3307, %v3479
    %v3538 = vadd.f32 %v3308, %v3484
    %v3539 = vadd.f32 %v3309, %v3489
    %v3540 = vadd.f32 %v3310, %v3494
    %v3541 = vadd.f32 %v3311, %v3499
    %v3542 = vadd.f32 %v3312, %v3504
    %v3543 = vadd.f32 %v3313, %v3509
    %v3544 = vadd.f32 %v3314, %v3514
    %v3545 = vadd.f32 %v3315, %v3519
    %v3546 = vadd.f32 %v3316, %v3524
    %v3547 = vadd.f32 %v3317, %v3529
    %v3548 = vld [vmem:[%s1033 + $0x1] sm:$0xff]
    %v3549 = vld [vmem:[%s1033 + $0x11] sm:$0xff]
    %v3550 = vld [vmem:[%s1033 + $0x21] sm:$0xff]
    %v3551 = vld [vmem:[%s1033 + $0x31] sm:$0xff]
    %v3552 = vld [vmem:[%s1033 + $0x41] sm:$0xff]
    %v3553 = vld [vmem:[%s1033 + $0x51] sm:$0xff]
    %v3554 = vld [vmem:[%s1033 + $0x61] sm:$0xff]
    %v3555 = vld [vmem:[%s1033 + $0x71] sm:$0xff]
    %v3556 = vld [vmem:[%s1033 + $0xc1] sm:$0xff]
    %v3557 = vld [vmem:[%s1033 + $0xd1] sm:$0xff]
    %v3558 = vld [vmem:[%s1033 + $0xe1] sm:$0xff]
    %v3559 = vld [vmem:[%s1033 + $0xf1] sm:$0xff]
    %v3560 = vld [vmem:[%s1033 + $0x101] sm:$0xff]
    %v3561 = vld [vmem:[%s1033 + $0x111] sm:$0xff]
    %v3562 = vld [vmem:[%s1033 + $0x121] sm:$0xff]
    %v3563 = vld [vmem:[%s1033 + $0x131] sm:$0xff]
    %s3564 = scalar_lea.vmem %s3, 352
    %v3565 = vld [vmem:[%s3564] sm:$0xff]
    %v3566 = vld [vmem:[%s3564 + $0x8] sm:$0xff]
    %v3567 = vld [vmem:[%s3564 + $0x10] sm:$0xff]
    %v3568 = vld [vmem:[%s3564 + $0x18] sm:$0xff]
    %v3570 = vsel %vm199, %v3548, 0
    %v3573 = vsel %vm199, %v3549, 0
    %v3576 = vsel %vm199, %v3550, 0
    %v3579 = vsel %vm199, %v3551, 0
    %v3582 = vsel %vm199, %v3552, 0
    %v3585 = vsel %vm199, %v3553, 0
    %v3588 = vsel %vm199, %v3554, 0
    %v3591 = vsel %vm199, %v3555, 0
    %v3594 = vsel %vm199, %v3556, 0
    %v3597 = vsel %vm199, %v3557, 0
    %v3600 = vsel %vm199, %v3558, 0
    %v3603 = vsel %vm199, %v3559, 0
    %v3606 = vsel %vm199, %v3560, 0
    %v3609 = vsel %vm199, %v3561, 0
    %v3612 = vsel %vm199, %v3562, 0
    %v3615 = vsel %vm199, %v3563, 0
    %3617 = vmatprep.subr.mxu0 0.0
    %3618 = vmatpush1.msra.mxu0 %v3565
    %3619 = vmatprep.subr.mxu0 0.0
    %3620 = vmatpush1.msra.mxu0 %v3566
    %3621 = vmatprep.subr.mxu0 0.0
    %3622 = vmatpush1.msra.mxu0 %v3567
    %3623 = vmatprep.subr.mxu0 0.0
    %3624 = vmatpush1.msra.mxu0 %v3568
    %3625 = vmatprep.subr.mxu0 0.0
    %3626 = vmatpush1.msra.mxu0 0.0
    %3627 = vmatprep.subr.mxu0 0.0
    %3628 = vmatpush1.msra.mxu0 0.0
    %3629 = vmatprep.subr.mxu0 0.0
    %3630 = vmatpush1.msra.mxu0 0.0
    %3631 = vmatprep.subr.mxu0 0.0
    %3632 = vmatpush1.msra.mxu0 0.0
    %3633 = vmatprep.subr.mxu0 0.0
    %3634 = vmatpush1.msra.mxu0 0.0
    %3635 = vmatprep.subr.mxu0 0.0
    %3636 = vmatpush1.msra.mxu0 0.0
    %3637 = vmatprep.subr.mxu0 0.0
    %3638 = vmatpush1.msra.mxu0 0.0
    %3639 = vmatprep.subr.mxu0 0.0
    %3640 = vmatpush1.msra.mxu0 0.0
    %3641 = vmatprep.subr.mxu0 0.0
    %3642 = vmatpush1.msra.mxu0 0.0
    %3643 = vmatprep.subr.mxu0 0.0
    %3644 = vmatpush1.msra.mxu0 0.0
    %3645 = vmatprep.subr.mxu0 0.0
    %3646 = vmatpush1.msra.mxu0 0.0
    %3647 = vmatprep.subr.mxu0 0.0
    %3648 = vmatpush1.msra.mxu0 0.0
    %3649 = vmatprep.subr.mxu0 0.0
    %3650 = vmatpush1.msra.mxu0 0.0
    %3651 = vmatprep.subr.mxu0 0.0
    %3652 = vmatpush1.msra.mxu0 0.0
    %3653 = vmatprep.subr.mxu0 0.0
    %3654 = vmatpush1.msra.mxu0 0.0
    %3655 = vmatprep.subr.mxu0 0.0
    %3656 = vmatpush1.msra.mxu0 0.0
    %3657 = vmatprep.subr.mxu0 0.0
    %3658 = vmatpush1.msra.mxu0 0.0
    %3659 = vmatprep.subr.mxu0 0.0
    %3660 = vmatpush1.msra.mxu0 0.0
    %3661 = vmatprep.subr.mxu0 0.0
    %3662 = vmatpush1.msra.mxu0 0.0
    %3663 = vmatprep.subr.mxu0 0.0
    %3664 = vmatpush1.msra.mxu0 0.0
    %3665 = vmatprep.subr.mxu0 0.0
    %3666 = vmatpush1.msra.mxu0 0.0
    %3667 = vmatprep.subr.mxu0 0.0
    %3668 = vmatpush1.msra.mxu0 0.0
    %3669 = vmatprep.subr.mxu0 0.0
    %3670 = vmatpush1.msra.mxu0 0.0
    %3671 = vmatprep.subr.mxu0 0.0
    %3672 = vmatpush1.msra.mxu0 0.0
    %3673 = vmatprep.subr.mxu0 0.0
    %3674 = vmatpush1.msra.mxu0 0.0
    %3675 = vmatprep.subr.mxu0 0.0
    %3676 = vmatpush1.msra.mxu0 0.0
    %3677 = vmatprep.subr.mxu0 0.0
    %3678 = vmatpush1.msra.mxu0 0.0
    %3679 = vmatprep.subr.mxu0 0.0
    %3680 = vmatpush1.msra.mxu0 0.0
    %3681 = vmatprep.mubr.f32.mxu0 0.0
    %3682 = vmatmul.mubr.f32.gmra.mrb[0].mxu0 %v3570
    %v3683 = vpop.f32.mrb[0].mxu0
    %v3684 = vadd.f32 0.0, %v3683
    %v3685 = vpop.f32.mrb[0].mxu0
    %3686 = vmatprep.mubr.f32.mxu0 0.0
    %3687 = vmatmul.mubr.f32.gmra.mrb[0].mxu0 %v3573
    %v3688 = vpop.f32.mrb[0].mxu0
    %v3689 = vadd.f32 0.0, %v3688
    %v3690 = vpop.f32.mrb[0].mxu0
    %3691 = vmatprep.mubr.f32.mxu0 0.0
    %3692 = vmatmul.mubr.f32.gmra.mrb[0].mxu0 %v3576
    %v3693 = vpop.f32.mrb[0].mxu0
    %v3694 = vadd.f32 0.0, %v3693
    %v3695 = vpop.f32.mrb[0].mxu0
    %3696 = vmatprep.mubr.f32.mxu0 0.0
    %3697 = vmatmul.mubr.f32.gmra.mrb[0].mxu0 %v3579
    %v3698 = vpop.f32.mrb[0].mxu0
    %v3699 = vadd.f32 0.0, %v3698
    %v3700 = vpop.f32.mrb[0].mxu0
    %3701 = vmatprep.mubr.f32.mxu0 0.0
    %3702 = vmatmul.mubr.f32.gmra.mrb[0].mxu0 %v3582
    %v3703 = vpop.f32.mrb[0].mxu0
    %v3704 = vadd.f32 0.0, %v3703
    %v3705 = vpop.f32.mrb[0].mxu0
    %3706 = vmatprep.mubr.f32.mxu0 0.0
    %3707 = vmatmul.mubr.f32.gmra.mrb[0].mxu0 %v3585
    %v3708 = vpop.f32.mrb[0].mxu0
    %v3709 = vadd.f32 0.0, %v3708
    %v3710 = vpop.f32.mrb[0].mxu0
    %3711 = vmatprep.mubr.f32.mxu0 0.0
    %3712 = vmatmul.mubr.f32.gmra.mrb[0].mxu0 %v3588
    %v3713 = vpop.f32.mrb[0].mxu0
    %v3714 = vadd.f32 0.0, %v3713
    %v3715 = vpop.f32.mrb[0].mxu0
    %3716 = vmatprep.mubr.f32.mxu0 0.0
    %3717 = vmatmul.mubr.f32.gmra.mrb[0].mxu0 %v3591
    %v3718 = vpop.f32.mrb[0].mxu0
    %v3719 = vadd.f32 0.0, %v3718
    %v3720 = vpop.f32.mrb[0].mxu0
    %3721 = vmatprep.mubr.f32.mxu0 0.0
    %3722 = vmatmul.mubr.f32.gmra.mrb[0].mxu0 %v3594
    %v3723 = vpop.f32.mrb[0].mxu0
    %v3724 = vadd.f32 0.0, %v3723
    %v3725 = vpop.f32.mrb[0].mxu0
    %3726 = vmatprep.mubr.f32.mxu0 0.0
    %3727 = vmatmul.mubr.f32.gmra.mrb[0].mxu0 %v3597
    %v3728 = vpop.f32.mrb[0].mxu0
    %v3729 = vadd.f32 0.0, %v3728
    %v3730 = vpop.f32.mrb[0].mxu0
    %3731 = vmatprep.mubr.f32.mxu0 0.0
    %3732 = vmatmul.mubr.f32.gmra.mrb[0].mxu0 %v3600
    %v3733 = vpop.f32.mrb[0].mxu0
    %v3734 = vadd.f32 0.0, %v3733
    %v3735 = vpop.f32.mrb[0].mxu0
    %3736 = vmatprep.mubr.f32.mxu0 0.0
    %3737 = vmatmul.mubr.f32.gmra.mrb[0].mxu0 %v3603
    %v3738 = vpop.f32.mrb[0].mxu0
    %v3739 = vadd.f32 0.0, %v3738
    %v3740 = vpop.f32.mrb[0].mxu0
    %3741 = vmatprep.mubr.f32.mxu0 0.0
    %3742 = vmatmul.mubr.f32.gmra.mrb[0].mxu0 %v3606
    %v3743 = vpop.f32.mrb[0].mxu0
    %v3744 = vadd.f32 0.0, %v3743
    %v3745 = vpop.f32.mrb[0].mxu0
    %3746 = vmatprep.mubr.f32.mxu0 0.0
    %3747 = vmatmul.mubr.f32.gmra.mrb[0].mxu0 %v3609
    %v3748 = vpop.f32.mrb[0].mxu0
    %v3749 = vadd.f32 0.0, %v3748
    %v3750 = vpop.f32.mrb[0].mxu0
    %3751 = vmatprep.mubr.f32.mxu0 0.0
    %3752 = vmatmul.mubr.f32.gmra.mrb[0].mxu0 %v3612
    %v3753 = vpop.f32.mrb[0].mxu0
    %v3754 = vadd.f32 0.0, %v3753
    %v3755 = vpop.f32.mrb[0].mxu0
    %3756 = vmatprep.mubr.f32.mxu0 0.0
    %3757 = vmatmul.mubr.f32.gmra.mrb[0].mxu0 %v3615
    %v3758 = vpop.f32.mrb[0].mxu0
    %v3759 = vadd.f32 0.0, %v3758
    %v3760 = vpop.f32.mrb[0].mxu0
    %3761 = vdwg.mxu0
    %v3762 = vadd.f32 %v3532, %v3684
    %v3763 = vadd.f32 %v3533, %v3689
    %v3764 = vadd.f32 %v3534, %v3694
    %v3765 = vadd.f32 %v3535, %v3699
    %v3766 = vadd.f32 %v3536, %v3704
    %v3767 = vadd.f32 %v3537, %v3709
    %v3768 = vadd.f32 %v3538, %v3714
    %v3769 = vadd.f32 %v3539, %v3719
    %v3770 = vadd.f32 %v3540, %v3724
    %v3771 = vadd.f32 %v3541, %v3729
    %v3772 = vadd.f32 %v3542, %v3734
    %v3773 = vadd.f32 %v3543, %v3739
    %v3774 = vadd.f32 %v3544, %v3744
    %v3775 = vadd.f32 %v3545, %v3749
    %v3776 = vadd.f32 %v3546, %v3754
    %v3777 = vadd.f32 %v3547, %v3759
    %v3778 = vld [vmem:[%s1033 + $0x2] sm:$0xff]
    %v3779 = vld [vmem:[%s1033 + $0x12] sm:$0xff]
    %v3780 = vld [vmem:[%s1033 + $0x22] sm:$0xff]
    %v3781 = vld [vmem:[%s1033 + $0x32] sm:$0xff]
    %v3782 = vld [vmem:[%s1033 + $0x42] sm:$0xff]
    %v3783 = vld [vmem:[%s1033 + $0x52] sm:$0xff]
    %v3784 = vld [vmem:[%s1033 + $0x62] sm:$0xff]
    %v3785 = vld [vmem:[%s1033 + $0x72] sm:$0xff]
    %v3786 = vld [vmem:[%s1033 + $0xc2] sm:$0xff]
    %v3787 = vld [vmem:[%s1033 + $0xd2] sm:$0xff]
    %v3788 = vld [vmem:[%s1033 + $0xe2] sm:$0xff]
    %v3789 = vld [vmem:[%s1033 + $0xf2] sm:$0xff]
    %v3790 = vld [vmem:[%s1033 + $0x102] sm:$0xff]
    %v3791 = vld [vmem:[%s1033 + $0x112] sm:$0xff]
    %v3792 = vld [vmem:[%s1033 + $0x122] sm:$0xff]
    %v3793 = vld [vmem:[%s1033 + $0x132] sm:$0xff]
    %s3794 = scalar_lea.vmem %s3, 384
    %v3795 = vld [vmem:[%s3794] sm:$0xff]
    %v3796 = vld [vmem:[%s3794 + $0x8] sm:$0xff]
    %v3797 = vld [vmem:[%s3794 + $0x10] sm:$0xff]
    %v3798 = vld [vmem:[%s3794 + $0x18] sm:$0xff]
    %v3800 = vsel %vm199, %v3778, 0
    %v3803 = vsel %vm199, %v3779, 0
    %v3806 = vsel %vm199, %v3780, 0
    %v3809 = vsel %vm199, %v3781, 0
    %v3812 = vsel %vm199, %v3782, 0
    %v3815 = vsel %vm199, %v3783, 0
    %v3818 = vsel %vm199, %v3784, 0
    %v3821 = vsel %vm199, %v3785, 0
    %v3824 = vsel %vm199, %v3786, 0
    %v3827 = vsel %vm199, %v3787, 0
    %v3830 = vsel %vm199, %v3788, 0
    %v3833 = vsel %vm199, %v3789, 0
    %v3836 = vsel %vm199, %v3790, 0
    %v3839 = vsel %vm199, %v3791, 0
    %v3842 = vsel %vm199, %v3792, 0
    %v3845 = vsel %vm199, %v3793, 0
    %3847 = vmatprep.subr.mxu0 0.0
    %3848 = vmatpush1.msra.mxu0 %v3795
    %3849 = vmatprep.subr.mxu0 0.0
    %3850 = vmatpush1.msra.mxu0 %v3796
    %3851 = vmatprep.subr.mxu0 0.0
    %3852 = vmatpush1.msra.mxu0 %v3797
    %3853 = vmatprep.subr.mxu0 0.0
    %3854 = vmatpush1.msra.mxu0 %v3798
    %3855 = vmatprep.subr.mxu0 0.0
    %3856 = vmatpush1.msra.mxu0 0.0
    %3857 = vmatprep.subr.mxu0 0.0
    %3858 = vmatpush1.msra.mxu0 0.0
    %3859 = vmatprep.subr.mxu0 0.0
    %3860 = vmatpush1.msra.mxu0 0.0
    %3861 = vmatprep.subr.mxu0 0.0
    %3862 = vmatpush1.msra.mxu0 0.0
    %3863 = vmatprep.subr.mxu0 0.0
    %3864 = vmatpush1.msra.mxu0 0.0
    %3865 = vmatprep.subr.mxu0 0.0
    %3866 = vmatpush1.msra.mxu0 0.0
    %3867 = vmatprep.subr.mxu0 0.0
    %3868 = vmatpush1.msra.mxu0 0.0
    %3869 = vmatprep.subr.mxu0 0.0
    %3870 = vmatpush1.msra.mxu0 0.0
    %3871 = vmatprep.subr.mxu0 0.0
    %3872 = vmatpush1.msra.mxu0 0.0
    %3873 = vmatprep.subr.mxu0 0.0
    %3874 = vmatpush1.msra.mxu0 0.0
    %3875 = vmatprep.subr.mxu0 0.0
    %3876 = vmatpush1.msra.mxu0 0.0
    %3877 = vmatprep.subr.mxu0 0.0
    %3878 = vmatpush1.msra.mxu0 0.0
    %3879 = vmatprep.subr.mxu0 0.0
    %3880 = vmatpush1.msra.mxu0 0.0
    %3881 = vmatprep.subr.mxu0 0.0
    %3882 = vmatpush1.msra.mxu0 0.0
    %3883 = vmatprep.subr.mxu0 0.0
    %3884 = vmatpush1.msra.mxu0 0.0
    %3885 = vmatprep.subr.mxu0 0.0
    %3886 = vmatpush1.msra.mxu0 0.0
    %3887 = vmatprep.subr.mxu0 0.0
    %3888 = vmatpush1.msra.mxu0 0.0
    %3889 = vmatprep.subr.mxu0 0.0
    %3890 = vmatpush1.msra.mxu0 0.0
    %3891 = vmatprep.subr.mxu0 0.0
    %3892 = vmatpush1.msra.mxu0 0.0
    %3893 = vmatprep.subr.mxu0 0.0
    %3894 = vmatpush1.msra.mxu0 0.0
    %3895 = vmatprep.subr.mxu0 0.0
    %3896 = vmatpush1.msra.mxu0 0.0
    %3897 = vmatprep.subr.mxu0 0.0
    %3898 = vmatpush1.msra.mxu0 0.0
    %3899 = vmatprep.subr.mxu0 0.0
    %3900 = vmatpush1.msra.mxu0 0.0
    %3901 = vmatprep.subr.mxu0 0.0
    %3902 = vmatpush1.msra.mxu0 0.0
    %3903 = vmatprep.subr.mxu0 0.0
    %3904 = vmatpush1.msra.mxu0 0.0
    %3905 = vmatprep.subr.mxu0 0.0
    %3906 = vmatpush1.msra.mxu0 0.0
    %3907 = vmatprep.subr.mxu0 0.0
    %3908 = vmatpush1.msra.mxu0 0.0
    %3909 = vmatprep.subr.mxu0 0.0
    %3910 = vmatpush1.msra.mxu0 0.0
    %3911 = vmatprep.mubr.f32.mxu0 0.0
    %3912 = vmatmul.mubr.f32.gmra.mrb[0].mxu0 %v3800
    %v3913 = vpop.f32.mrb[0].mxu0
    %v3914 = vadd.f32 0.0, %v3913
    %v3915 = vpop.f32.mrb[0].mxu0
    %3916 = vmatprep.mubr.f32.mxu0 0.0
    %3917 = vmatmul.mubr.f32.gmra.mrb[0].mxu0 %v3803
    %v3918 = vpop.f32.mrb[0].mxu0
    %v3919 = vadd.f32 0.0, %v3918
    %v3920 = vpop.f32.mrb[0].mxu0
    %3921 = vmatprep.mubr.f32.mxu0 0.0
    %3922 = vmatmul.mubr.f32.gmra.mrb[0].mxu0 %v3806
    %v3923 = vpop.f32.mrb[0].mxu0
    %v3924 = vadd.f32 0.0, %v3923
    %v3925 = vpop.f32.mrb[0].mxu0
    %3926 = vmatprep.mubr.f32.mxu0 0.0
    %3927 = vmatmul.mubr.f32.gmra.mrb[0].mxu0 %v3809
    %v3928 = vpop.f32.mrb[0].mxu0
    %v3929 = vadd.f32 0.0, %v3928
    %v3930 = vpop.f32.mrb[0].mxu0
    %3931 = vmatprep.mubr.f32.mxu0 0.0
    %3932 = vmatmul.mubr.f32.gmra.mrb[0].mxu0 %v3812
    %v3933 = vpop.f32.mrb[0].mxu0
    %v3934 = vadd.f32 0.0, %v3933
    %v3935 = vpop.f32.mrb[0].mxu0
    %3936 = vmatprep.mubr.f32.mxu0 0.0
    %3937 = vmatmul.mubr.f32.gmra.mrb[0].mxu0 %v3815
    %v3938 = vpop.f32.mrb[0].mxu0
    %v3939 = vadd.f32 0.0, %v3938
    %v3940 = vpop.f32.mrb[0].mxu0
    %3941 = vmatprep.mubr.f32.mxu0 0.0
    %3942 = vmatmul.mubr.f32.gmra.mrb[0].mxu0 %v3818
    %v3943 = vpop.f32.mrb[0].mxu0
    %v3944 = vadd.f32 0.0, %v3943
    %v3945 = vpop.f32.mrb[0].mxu0
    %3946 = vmatprep.mubr.f32.mxu0 0.0
    %3947 = vmatmul.mubr.f32.gmra.mrb[0].mxu0 %v3821
    %v3948 = vpop.f32.mrb[0].mxu0
    %v3949 = vadd.f32 0.0, %v3948
    %v3950 = vpop.f32.mrb[0].mxu0
    %3951 = vmatprep.mubr.f32.mxu0 0.0
    %3952 = vmatmul.mubr.f32.gmra.mrb[0].mxu0 %v3824
    %v3953 = vpop.f32.mrb[0].mxu0
    %v3954 = vadd.f32 0.0, %v3953
    %v3955 = vpop.f32.mrb[0].mxu0
    %3956 = vmatprep.mubr.f32.mxu0 0.0
    %3957 = vmatmul.mubr.f32.gmra.mrb[0].mxu0 %v3827
    %v3958 = vpop.f32.mrb[0].mxu0
    %v3959 = vadd.f32 0.0, %v3958
    %v3960 = vpop.f32.mrb[0].mxu0
    %3961 = vmatprep.mubr.f32.mxu0 0.0
    %3962 = vmatmul.mubr.f32.gmra.mrb[0].mxu0 %v3830
    %v3963 = vpop.f32.mrb[0].mxu0
    %v3964 = vadd.f32 0.0, %v3963
    %v3965 = vpop.f32.mrb[0].mxu0
    %3966 = vmatprep.mubr.f32.mxu0 0.0
    %3967 = vmatmul.mubr.f32.gmra.mrb[0].mxu0 %v3833
    %v3968 = vpop.f32.mrb[0].mxu0
    %v3969 = vadd.f32 0.0, %v3968
    %v3970 = vpop.f32.mrb[0].mxu0
    %3971 = vmatprep.mubr.f32.mxu0 0.0
    %3972 = vmatmul.mubr.f32.gmra.mrb[0].mxu0 %v3836
    %v3973 = vpop.f32.mrb[0].mxu0
    %v3974 = vadd.f32 0.0, %v3973
    %v3975 = vpop.f32.mrb[0].mxu0
    %3976 = vmatprep.mubr.f32.mxu0 0.0
    %3977 = vmatmul.mubr.f32.gmra.mrb[0].mxu0 %v3839
    %v3978 = vpop.f32.mrb[0].mxu0
    %v3979 = vadd.f32 0.0, %v3978
    %v3980 = vpop.f32.mrb[0].mxu0
    %3981 = vmatprep.mubr.f32.mxu0 0.0
    %3982 = vmatmul.mubr.f32.gmra.mrb[0].mxu0 %v3842
    %v3983 = vpop.f32.mrb[0].mxu0
    %v3984 = vadd.f32 0.0, %v3983
    %v3985 = vpop.f32.mrb[0].mxu0
    %3986 = vmatprep.mubr.f32.mxu0 0.0
    %3987 = vmatmul.mubr.f32.gmra.mrb[0].mxu0 %v3845
    %v3988 = vpop.f32.mrb[0].mxu0
    %v3989 = vadd.f32 0.0, %v3988
    %v3990 = vpop.f32.mrb[0].mxu0
    %3991 = vdwg.mxu0
    %v3992 = vadd.f32 %v3762, %v3914
    %v3993 = vadd.f32 %v3763, %v3919
    %v3994 = vadd.f32 %v3764, %v3924
    %v3995 = vadd.f32 %v3765, %v3929
    %v3996 = vadd.f32 %v3766, %v3934
    %v3997 = vadd.f32 %v3767, %v3939
    %v3998 = vadd.f32 %v3768, %v3944
    %v3999 = vadd.f32 %v3769, %v3949
    %v4000 = vadd.f32 %v3770, %v3954
    %v4001 = vadd.f32 %v3771, %v3959
    %v4002 = vadd.f32 %v3772, %v3964
    %v4003 = vadd.f32 %v3773, %v3969
    %v4004 = vadd.f32 %v3774, %v3974
    %v4005 = vadd.f32 %v3775, %v3979
    %v4006 = vadd.f32 %v3776, %v3984
    %v4007 = vadd.f32 %v3777, %v3989
    %v4008 = vld [vmem:[%s1033 + $0x3] sm:$0xff]
    %v4009 = vld [vmem:[%s1033 + $0x13] sm:$0xff]
    %v4010 = vld [vmem:[%s1033 + $0x23] sm:$0xff]
    %v4011 = vld [vmem:[%s1033 + $0x33] sm:$0xff]
    %v4012 = vld [vmem:[%s1033 + $0x43] sm:$0xff]
    %v4013 = vld [vmem:[%s1033 + $0x53] sm:$0xff]
    %v4014 = vld [vmem:[%s1033 + $0x63] sm:$0xff]
    %v4015 = vld [vmem:[%s1033 + $0x73] sm:$0xff]
    %v4016 = vld [vmem:[%s1033 + $0xc3] sm:$0xff]
    %v4017 = vld [vmem:[%s1033 + $0xd3] sm:$0xff]
    %v4018 = vld [vmem:[%s1033 + $0xe3] sm:$0xff]
    %v4019 = vld [vmem:[%s1033 + $0xf3] sm:$0xff]
    %v4020 = vld [vmem:[%s1033 + $0x103] sm:$0xff]
    %v4021 = vld [vmem:[%s1033 + $0x113] sm:$0xff]
    %v4022 = vld [vmem:[%s1033 + $0x123] sm:$0xff]
    %v4023 = vld [vmem:[%s1033 + $0x133] sm:$0xff]
    %s4024 = scalar_lea.vmem %s3, 416
    %v4025 = vld [vmem:[%s4024] sm:$0xff]
    %v4026 = vld [vmem:[%s4024 + $0x8] sm:$0xff]
    %v4027 = vld [vmem:[%s4024 + $0x10] sm:$0xff]
    %v4028 = vld [vmem:[%s4024 + $0x18] sm:$0xff]
    %v4030 = vsel %vm199, %v4008, 0
    %v4033 = vsel %vm199, %v4009, 0
    %v4036 = vsel %vm199, %v4010, 0
    %v4039 = vsel %vm199, %v4011, 0
    %v4042 = vsel %vm199, %v4012, 0
    %v4045 = vsel %vm199, %v4013, 0
    %v4048 = vsel %vm199, %v4014, 0
    %v4051 = vsel %vm199, %v4015, 0
    %v4054 = vsel %vm199, %v4016, 0
    %v4057 = vsel %vm199, %v4017, 0
    %v4060 = vsel %vm199, %v4018, 0
    %v4063 = vsel %vm199, %v4019, 0
    %v4066 = vsel %vm199, %v4020, 0
    %v4069 = vsel %vm199, %v4021, 0
    %v4072 = vsel %vm199, %v4022, 0
    %v4075 = vsel %vm199, %v4023, 0
    %4077 = vmatprep.subr.mxu0 0.0
    %4078 = vmatpush1.msra.mxu0 %v4025
    %4079 = vmatprep.subr.mxu0 0.0
    %4080 = vmatpush1.msra.mxu0 %v4026
    %4081 = vmatprep.subr.mxu0 0.0
    %4082 = vmatpush1.msra.mxu0 %v4027
    %4083 = vmatprep.subr.mxu0 0.0
    %4084 = vmatpush1.msra.mxu0 %v4028
    %4085 = vmatprep.subr.mxu0 0.0
    %4086 = vmatpush1.msra.mxu0 0.0
    %4087 = vmatprep.subr.mxu0 0.0
    %4088 = vmatpush1.msra.mxu0 0.0
    %4089 = vmatprep.subr.mxu0 0.0
    %4090 = vmatpush1.msra.mxu0 0.0
    %4091 = vmatprep.subr.mxu0 0.0
    %4092 = vmatpush1.msra.mxu0 0.0
    %4093 = vmatprep.subr.mxu0 0.0
    %4094 = vmatpush1.msra.mxu0 0.0
    %4095 = vmatprep.subr.mxu0 0.0
    %4096 = vmatpush1.msra.mxu0 0.0
    %4097 = vmatprep.subr.mxu0 0.0
    %4098 = vmatpush1.msra.mxu0 0.0
    %4099 = vmatprep.subr.mxu0 0.0
    %4100 = vmatpush1.msra.mxu0 0.0
    %4101 = vmatprep.subr.mxu0 0.0
    %4102 = vmatpush1.msra.mxu0 0.0
    %4103 = vmatprep.subr.mxu0 0.0
    %4104 = vmatpush1.msra.mxu0 0.0
    %4105 = vmatprep.subr.mxu0 0.0
    %4106 = vmatpush1.msra.mxu0 0.0
    %4107 = vmatprep.subr.mxu0 0.0
    %4108 = vmatpush1.msra.mxu0 0.0
    %4109 = vmatprep.subr.mxu0 0.0
    %4110 = vmatpush1.msra.mxu0 0.0
    %4111 = vmatprep.subr.mxu0 0.0
    %4112 = vmatpush1.msra.mxu0 0.0
    %4113 = vmatprep.subr.mxu0 0.0
    %4114 = vmatpush1.msra.mxu0 0.0
    %4115 = vmatprep.subr.mxu0 0.0
    %4116 = vmatpush1.msra.mxu0 0.0
    %4117 = vmatprep.subr.mxu0 0.0
    %4118 = vmatpush1.msra.mxu0 0.0
    %4119 = vmatprep.subr.mxu0 0.0
    %4120 = vmatpush1.msra.mxu0 0.0
    %4121 = vmatprep.subr.mxu0 0.0
    %4122 = vmatpush1.msra.mxu0 0.0
    %4123 = vmatprep.subr.mxu0 0.0
    %4124 = vmatpush1.msra.mxu0 0.0
    %4125 = vmatprep.subr.mxu0 0.0
    %4126 = vmatpush1.msra.mxu0 0.0
    %4127 = vmatprep.subr.mxu0 0.0
    %4128 = vmatpush1.msra.mxu0 0.0
    %4129 = vmatprep.subr.mxu0 0.0
    %4130 = vmatpush1.msra.mxu0 0.0
    %4131 = vmatprep.subr.mxu0 0.0
    %4132 = vmatpush1.msra.mxu0 0.0
    %4133 = vmatprep.subr.mxu0 0.0
    %4134 = vmatpush1.msra.mxu0 0.0
    %4135 = vmatprep.subr.mxu0 0.0
    %4136 = vmatpush1.msra.mxu0 0.0
    %4137 = vmatprep.subr.mxu0 0.0
    %4138 = vmatpush1.msra.mxu0 0.0
    %4139 = vmatprep.subr.mxu0 0.0
    %4140 = vmatpush1.msra.mxu0 0.0
    %4141 = vmatprep.mubr.f32.mxu0 0.0
    %4142 = vmatmul.mubr.f32.gmra.mrb[0].mxu0 %v4030
    %v4143 = vpop.f32.mrb[0].mxu0
    %v4144 = vadd.f32 0.0, %v4143
    %v4145 = vpop.f32.mrb[0].mxu0
    %4146 = vmatprep.mubr.f32.mxu0 0.0
    %4147 = vmatmul.mubr.f32.gmra.mrb[0].mxu0 %v4033
    %v4148 = vpop.f32.mrb[0].mxu0
    %v4149 = vadd.f32 0.0, %v4148
    %v4150 = vpop.f32.mrb[0].mxu0
    %4151 = vmatprep.mubr.f32.mxu0 0.0
    %4152 = vmatmul.mubr.f32.gmra.mrb[0].mxu0 %v4036
    %v4153 = vpop.f32.mrb[0].mxu0
    %v4154 = vadd.f32 0.0, %v4153
    %v4155 = vpop.f32.mrb[0].mxu0
    %4156 = vmatprep.mubr.f32.mxu0 0.0
    %4157 = vmatmul.mubr.f32.gmra.mrb[0].mxu0 %v4039
    %v4158 = vpop.f32.mrb[0].mxu0
    %v4159 = vadd.f32 0.0, %v4158
    %v4160 = vpop.f32.mrb[0].mxu0
    %4161 = vmatprep.mubr.f32.mxu0 0.0
    %4162 = vmatmul.mubr.f32.gmra.mrb[0].mxu0 %v4042
    %v4163 = vpop.f32.mrb[0].mxu0
    %v4164 = vadd.f32 0.0, %v4163
    %v4165 = vpop.f32.mrb[0].mxu0
    %4166 = vmatprep.mubr.f32.mxu0 0.0
    %4167 = vmatmul.mubr.f32.gmra.mrb[0].mxu0 %v4045
    %v4168 = vpop.f32.mrb[0].mxu0
    %v4169 = vadd.f32 0.0, %v4168
    %v4170 = vpop.f32.mrb[0].mxu0
    %4171 = vmatprep.mubr.f32.mxu0 0.0
    %4172 = vmatmul.mubr.f32.gmra.mrb[0].mxu0 %v4048
    %v4173 = vpop.f32.mrb[0].mxu0
    %v4174 = vadd.f32 0.0, %v4173
    %v4175 = vpop.f32.mrb[0].mxu0
    %4176 = vmatprep.mubr.f32.mxu0 0.0
    %4177 = vmatmul.mubr.f32.gmra.mrb[0].mxu0 %v4051
    %v4178 = vpop.f32.mrb[0].mxu0
    %v4179 = vadd.f32 0.0, %v4178
    %v4180 = vpop.f32.mrb[0].mxu0
    %4181 = vmatprep.mubr.f32.mxu0 0.0
    %4182 = vmatmul.mubr.f32.gmra.mrb[0].mxu0 %v4054
    %v4183 = vpop.f32.mrb[0].mxu0
    %v4184 = vadd.f32 0.0, %v4183
    %v4185 = vpop.f32.mrb[0].mxu0
    %4186 = vmatprep.mubr.f32.mxu0 0.0
    %4187 = vmatmul.mubr.f32.gmra.mrb[0].mxu0 %v4057
    %v4188 = vpop.f32.mrb[0].mxu0
    %v4189 = vadd.f32 0.0, %v4188
    %v4190 = vpop.f32.mrb[0].mxu0
    %4191 = vmatprep.mubr.f32.mxu0 0.0
    %4192 = vmatmul.mubr.f32.gmra.mrb[0].mxu0 %v4060
    %v4193 = vpop.f32.mrb[0].mxu0
    %v4194 = vadd.f32 0.0, %v4193
    %v4195 = vpop.f32.mrb[0].mxu0
    %4196 = vmatprep.mubr.f32.mxu0 0.0
    %4197 = vmatmul.mubr.f32.gmra.mrb[0].mxu0 %v4063
    %v4198 = vpop.f32.mrb[0].mxu0
    %v4199 = vadd.f32 0.0, %v4198
    %v4200 = vpop.f32.mrb[0].mxu0
    %4201 = vmatprep.mubr.f32.mxu0 0.0
    %4202 = vmatmul.mubr.f32.gmra.mrb[0].mxu0 %v4066
    %v4203 = vpop.f32.mrb[0].mxu0
    %v4204 = vadd.f32 0.0, %v4203
    %v4205 = vpop.f32.mrb[0].mxu0
    %4206 = vmatprep.mubr.f32.mxu0 0.0
    %4207 = vmatmul.mubr.f32.gmra.mrb[0].mxu0 %v4069
    %v4208 = vpop.f32.mrb[0].mxu0
    %v4209 = vadd.f32 0.0, %v4208
    %v4210 = vpop.f32.mrb[0].mxu0
    %4211 = vmatprep.mubr.f32.mxu0 0.0
    %4212 = vmatmul.mubr.f32.gmra.mrb[0].mxu0 %v4072
    %v4213 = vpop.f32.mrb[0].mxu0
    %v4214 = vadd.f32 0.0, %v4213
    %v4215 = vpop.f32.mrb[0].mxu0
    %4216 = vmatprep.mubr.f32.mxu0 0.0
    %4217 = vmatmul.mubr.f32.gmra.mrb[0].mxu0 %v4075
    %v4218 = vpop.f32.mrb[0].mxu0
    %v4219 = vadd.f32 0.0, %v4218
    %v4220 = vpop.f32.mrb[0].mxu0
    %4221 = vdwg.mxu0
    %v4222 = vadd.f32 %v3992, %v4144
    %v4223 = vadd.f32 %v3993, %v4149
    %v4224 = vadd.f32 %v3994, %v4154
    %v4225 = vadd.f32 %v3995, %v4159
    %v4226 = vadd.f32 %v3996, %v4164
    %v4227 = vadd.f32 %v3997, %v4169
    %v4228 = vadd.f32 %v3998, %v4174
    %v4229 = vadd.f32 %v3999, %v4179
    %v4230 = vadd.f32 %v4000, %v4184
    %v4231 = vadd.f32 %v4001, %v4189
    %v4232 = vadd.f32 %v4002, %v4194
    %v4233 = vadd.f32 %v4003, %v4199
    %v4234 = vadd.f32 %v4004, %v4204
    %v4235 = vadd.f32 %v4005, %v4209
    %v4236 = vadd.f32 %v4006, %v4214
    %v4237 = vadd.f32 %v4007, %v4219
    %v4238 = vld [vmem:[%s1033 + $0x4] sm:$0xff]
    %v4239 = vld [vmem:[%s1033 + $0x14] sm:$0xff]
    %v4240 = vld [vmem:[%s1033 + $0x24] sm:$0xff]
    %v4241 = vld [vmem:[%s1033 + $0x34] sm:$0xff]
    %v4242 = vld [vmem:[%s1033 + $0x44] sm:$0xff]
    %v4243 = vld [vmem:[%s1033 + $0x54] sm:$0xff]
    %v4244 = vld [vmem:[%s1033 + $0x64] sm:$0xff]
    %v4245 = vld [vmem:[%s1033 + $0x74] sm:$0xff]
    %v4246 = vld [vmem:[%s1033 + $0xc4] sm:$0xff]
    %v4247 = vld [vmem:[%s1033 + $0xd4] sm:$0xff]
    %v4248 = vld [vmem:[%s1033 + $0xe4] sm:$0xff]
    %v4249 = vld [vmem:[%s1033 + $0xf4] sm:$0xff]
    %v4250 = vld [vmem:[%s1033 + $0x104] sm:$0xff]
    %v4251 = vld [vmem:[%s1033 + $0x114] sm:$0xff]
    %v4252 = vld [vmem:[%s1033 + $0x124] sm:$0xff]
    %v4253 = vld [vmem:[%s1033 + $0x134] sm:$0xff]
    %s4254 = scalar_lea.vmem %s3, 448
    %v4255 = vld [vmem:[%s4254] sm:$0xff]
    %v4256 = vld [vmem:[%s4254 + $0x8] sm:$0xff]
    %v4257 = vld [vmem:[%s4254 + $0x10] sm:$0xff]
    %v4258 = vld [vmem:[%s4254 + $0x18] sm:$0xff]
    %v4260 = vsel %vm199, %v4238, 0
    %v4263 = vsel %vm199, %v4239, 0
    %v4266 = vsel %vm199, %v4240, 0
    %v4269 = vsel %vm199, %v4241, 0
    %v4272 = vsel %vm199, %v4242, 0
    %v4275 = vsel %vm199, %v4243, 0
    %v4278 = vsel %vm199, %v4244, 0
    %v4281 = vsel %vm199, %v4245, 0
    %v4284 = vsel %vm199, %v4246, 0
    %v4287 = vsel %vm199, %v4247, 0
    %v4290 = vsel %vm199, %v4248, 0
    %v4293 = vsel %vm199, %v4249, 0
    %v4296 = vsel %vm199, %v4250, 0
    %v4299 = vsel %vm199, %v4251, 0
    %v4302 = vsel %vm199, %v4252, 0
    %v4305 = vsel %vm199, %v4253, 0
    %4307 = vmatprep.subr.mxu0 0.0
    %4308 = vmatpush1.msra.mxu0 %v4255
    %4309 = vmatprep.subr.mxu0 0.0
    %4310 = vmatpush1.msra.mxu0 %v4256
    %4311 = vmatprep.subr.mxu0 0.0
    %4312 = vmatpush1.msra.mxu0 %v4257
    %4313 = vmatprep.subr.mxu0 0.0
    %4314 = vmatpush1.msra.mxu0 %v4258
    %4315 = vmatprep.subr.mxu0 0.0
    %4316 = vmatpush1.msra.mxu0 0.0
    %4317 = vmatprep.subr.mxu0 0.0
    %4318 = vmatpush1.msra.mxu0 0.0
    %4319 = vmatprep.subr.mxu0 0.0
    %4320 = vmatpush1.msra.mxu0 0.0
    %4321 = vmatprep.subr.mxu0 0.0
    %4322 = vmatpush1.msra.mxu0 0.0
    %4323 = vmatprep.subr.mxu0 0.0
    %4324 = vmatpush1.msra.mxu0 0.0
    %4325 = vmatprep.subr.mxu0 0.0
    %4326 = vmatpush1.msra.mxu0 0.0
    %4327 = vmatprep.subr.mxu0 0.0
    %4328 = vmatpush1.msra.mxu0 0.0
    %4329 = vmatprep.subr.mxu0 0.0
    %4330 = vmatpush1.msra.mxu0 0.0
    %4331 = vmatprep.subr.mxu0 0.0
    %4332 = vmatpush1.msra.mxu0 0.0
    %4333 = vmatprep.subr.mxu0 0.0
    %4334 = vmatpush1.msra.mxu0 0.0
    %4335 = vmatprep.subr.mxu0 0.0
    %4336 = vmatpush1.msra.mxu0 0.0
    %4337 = vmatprep.subr.mxu0 0.0
    %4338 = vmatpush1.msra.mxu0 0.0
    %4339 = vmatprep.subr.mxu0 0.0
    %4340 = vmatpush1.msra.mxu0 0.0
    %4341 = vmatprep.subr.mxu0 0.0
    %4342 = vmatpush1.msra.mxu0 0.0
    %4343 = vmatprep.subr.mxu0 0.0
    %4344 = vmatpush1.msra.mxu0 0.0
    %4345 = vmatprep.subr.mxu0 0.0
    %4346 = vmatpush1.msra.mxu0 0.0
    %4347 = vmatprep.subr.mxu0 0.0
    %4348 = vmatpush1.msra.mxu0 0.0
    %4349 = vmatprep.subr.mxu0 0.0
    %4350 = vmatpush1.msra.mxu0 0.0
    %4351 = vmatprep.subr.mxu0 0.0
    %4352 = vmatpush1.msra.mxu0 0.0
    %4353 = vmatprep.subr.mxu0 0.0
    %4354 = vmatpush1.msra.mxu0 0.0
    %4355 = vmatprep.subr.mxu0 0.0
    %4356 = vmatpush1.msra.mxu0 0.0
    %4357 = vmatprep.subr.mxu0 0.0
    %4358 = vmatpush1.msra.mxu0 0.0
    %4359 = vmatprep.subr.mxu0 0.0
    %4360 = vmatpush1.msra.mxu0 0.0
    %4361 = vmatprep.subr.mxu0 0.0
    %4362 = vmatpush1.msra.mxu0 0.0
    %4363 = vmatprep.subr.mxu0 0.0
    %4364 = vmatpush1.msra.mxu0 0.0
    %4365 = vmatprep.subr.mxu0 0.0
    %4366 = vmatpush1.msra.mxu0 0.0
    %4367 = vmatprep.subr.mxu0 0.0
    %4368 = vmatpush1.msra.mxu0 0.0
    %4369 = vmatprep.subr.mxu0 0.0
    %4370 = vmatpush1.msra.mxu0 0.0
    %4371 = vmatprep.mubr.f32.mxu0 0.0
    %4372 = vmatmul.mubr.f32.gmra.mrb[0].mxu0 %v4260
    %v4373 = vpop.f32.mrb[0].mxu0
    %v4374 = vadd.f32 0.0, %v4373
    %v4375 = vpop.f32.mrb[0].mxu0
    %4376 = vmatprep.mubr.f32.mxu0 0.0
    %4377 = vmatmul.mubr.f32.gmra.mrb[0].mxu0 %v4263
    %v4378 = vpop.f32.mrb[0].mxu0
    %v4379 = vadd.f32 0.0, %v4378
    %v4380 = vpop.f32.mrb[0].mxu0
    %4381 = vmatprep.mubr.f32.mxu0 0.0
    %4382 = vmatmul.mubr.f32.gmra.mrb[0].mxu0 %v4266
    %v4383 = vpop.f32.mrb[0].mxu0
    %v4384 = vadd.f32 0.0, %v4383
    %v4385 = vpop.f32.mrb[0].mxu0
    %4386 = vmatprep.mubr.f32.mxu0 0.0
    %4387 = vmatmul.mubr.f32.gmra.mrb[0].mxu0 %v4269
    %v4388 = vpop.f32.mrb[0].mxu0
    %v4389 = vadd.f32 0.0, %v4388
    %v4390 = vpop.f32.mrb[0].mxu0
    %4391 = vmatprep.mubr.f32.mxu0 0.0
    %4392 = vmatmul.mubr.f32.gmra.mrb[0].mxu0 %v4272
    %v4393 = vpop.f32.mrb[0].mxu0
    %v4394 = vadd.f32 0.0, %v4393
    %v4395 = vpop.f32.mrb[0].mxu0
    %4396 = vmatprep.mubr.f32.mxu0 0.0
    %4397 = vmatmul.mubr.f32.gmra.mrb[0].mxu0 %v4275
    %v4398 = vpop.f32.mrb[0].mxu0
    %v4399 = vadd.f32 0.0, %v4398
    %v4400 = vpop.f32.mrb[0].mxu0
    %4401 = vmatprep.mubr.f32.mxu0 0.0
    %4402 = vmatmul.mubr.f32.gmra.mrb[0].mxu0 %v4278
    %v4403 = vpop.f32.mrb[0].mxu0
    %v4404 = vadd.f32 0.0, %v4403
    %v4405 = vpop.f32.mrb[0].mxu0
    %4406 = vmatprep.mubr.f32.mxu0 0.0
    %4407 = vmatmul.mubr.f32.gmra.mrb[0].mxu0 %v4281
    %v4408 = vpop.f32.mrb[0].mxu0
    %v4409 = vadd.f32 0.0, %v4408
    %v4410 = vpop.f32.mrb[0].mxu0
    %4411 = vmatprep.mubr.f32.mxu0 0.0
    %4412 = vmatmul.mubr.f32.gmra.mrb[0].mxu0 %v4284
    %v4413 = vpop.f32.mrb[0].mxu0
    %v4414 = vadd.f32 0.0, %v4413
    %v4415 = vpop.f32.mrb[0].mxu0
    %4416 = vmatprep.mubr.f32.mxu0 0.0
    %4417 = vmatmul.mubr.f32.gmra.mrb[0].mxu0 %v4287
    %v4418 = vpop.f32.mrb[0].mxu0
    %v4419 = vadd.f32 0.0, %v4418
    %v4420 = vpop.f32.mrb[0].mxu0
    %4421 = vmatprep.mubr.f32.mxu0 0.0
    %4422 = vmatmul.mubr.f32.gmra.mrb[0].mxu0 %v4290
    %v4423 = vpop.f32.mrb[0].mxu0
    %v4424 = vadd.f32 0.0, %v4423
    %v4425 = vpop.f32.mrb[0].mxu0
    %4426 = vmatprep.mubr.f32.mxu0 0.0
    %4427 = vmatmul.mubr.f32.gmra.mrb[0].mxu0 %v4293
    %v4428 = vpop.f32.mrb[0].mxu0
    %v4429 = vadd.f32 0.0, %v4428
    %v4430 = vpop.f32.mrb[0].mxu0
    %4431 = vmatprep.mubr.f32.mxu0 0.0
    %4432 = vmatmul.mubr.f32.gmra.mrb[0].mxu0 %v4296
    %v4433 = vpop.f32.mrb[0].mxu0
    %v4434 = vadd.f32 0.0, %v4433
    %v4435 = vpop.f32.mrb[0].mxu0
    %4436 = vmatprep.mubr.f32.mxu0 0.0
    %4437 = vmatmul.mubr.f32.gmra.mrb[0].mxu0 %v4299
    %v4438 = vpop.f32.mrb[0].mxu0
    %v4439 = vadd.f32 0.0, %v4438
    %v4440 = vpop.f32.mrb[0].mxu0
    %4441 = vmatprep.mubr.f32.mxu0 0.0
    %4442 = vmatmul.mubr.f32.gmra.mrb[0].mxu0 %v4302
    %v4443 = vpop.f32.mrb[0].mxu0
    %v4444 = vadd.f32 0.0, %v4443
    %v4445 = vpop.f32.mrb[0].mxu0
    %4446 = vmatprep.mubr.f32.mxu0 0.0
    %4447 = vmatmul.mubr.f32.gmra.mrb[0].mxu0 %v4305
    %v4448 = vpop.f32.mrb[0].mxu0
    %v4449 = vadd.f32 0.0, %v4448
    %v4450 = vpop.f32.mrb[0].mxu0
    %4451 = vdwg.mxu0
    %v4452 = vadd.f32 %v4222, %v4374
    %v4453 = vadd.f32 %v4223, %v4379
    %v4454 = vadd.f32 %v4224, %v4384
    %v4455 = vadd.f32 %v4225, %v4389
    %v4456 = vadd.f32 %v4226, %v4394
    %v4457 = vadd.f32 %v4227, %v4399
    %v4458 = vadd.f32 %v4228, %v4404
    %v4459 = vadd.f32 %v4229, %v4409
    %v4460 = vadd.f32 %v4230, %v4414
    %v4461 = vadd.f32 %v4231, %v4419
    %v4462 = vadd.f32 %v4232, %v4424
    %v4463 = vadd.f32 %v4233, %v4429
    %v4464 = vadd.f32 %v4234, %v4434
    %v4465 = vadd.f32 %v4235, %v4439
    %v4466 = vadd.f32 %v4236, %v4444
    %v4467 = vadd.f32 %v4237, %v4449
    %s4468 = scalar_lea.vmem [#allocation3], 48
    %v4469 = vld [vmem:[%s4468] sm:$0xff]
    %v4470 = vld [vmem:[%s4468 + $0x10] sm:$0xff]
    %v4471 = vld [vmem:[%s4468 + $0x20] sm:$0xff]
    %v4472 = vld [vmem:[%s4468 + $0x30] sm:$0xff]
    %v4473 = vld [vmem:[%s4468 + $0x40] sm:$0xff]
    %v4474 = vld [vmem:[%s4468 + $0x50] sm:$0xff]
    %v4475 = vld [vmem:[%s4468 + $0x60] sm:$0xff]
    %v4476 = vld [vmem:[%s4468 + $0x70] sm:$0xff]
    %v4477 = vld [vmem:[%s4468 + $0xc0] sm:$0xff]
    %v4478 = vld [vmem:[%s4468 + $0xd0] sm:$0xff]
    %v4479 = vld [vmem:[%s4468 + $0xe0] sm:$0xff]
    %v4480 = vld [vmem:[%s4468 + $0xf0] sm:$0xff]
    %v4481 = vld [vmem:[%s4468 + $0x100] sm:$0xff]
    %v4482 = vld [vmem:[%s4468 + $0x110] sm:$0xff]
    %v4483 = vld [vmem:[%s4468 + $0x120] sm:$0xff]
    %v4484 = vld [vmem:[%s4468 + $0x130] sm:$0xff]
    %s4485 = scalar_lea.vmem %s3, 480
    %v4486 = vld [vmem:[%s4485] sm:$0xff]
    %v4487 = vld [vmem:[%s4485 + $0x8] sm:$0xff]
    %v4488 = vld [vmem:[%s4485 + $0x10] sm:$0xff]
    %v4489 = vld [vmem:[%s4485 + $0x18] sm:$0xff]
    %v4491 = vsel %vm199, %v4469, 0
    %v4494 = vsel %vm199, %v4470, 0
    %v4497 = vsel %vm199, %v4471, 0
    %v4500 = vsel %vm199, %v4472, 0
    %v4503 = vsel %vm199, %v4473, 0
    %v4506 = vsel %vm199, %v4474, 0
    %v4509 = vsel %vm199, %v4475, 0
    %v4512 = vsel %vm199, %v4476, 0
    %v4515 = vsel %vm199, %v4477, 0
    %v4518 = vsel %vm199, %v4478, 0
    %v4521 = vsel %vm199, %v4479, 0
    %v4524 = vsel %vm199, %v4480, 0
    %v4527 = vsel %vm199, %v4481, 0
    %v4530 = vsel %vm199, %v4482, 0
    %v4533 = vsel %vm199, %v4483, 0
    %v4536 = vsel %vm199, %v4484, 0
    %4538 = vmatprep.subr.mxu0 0.0
    %4539 = vmatpush1.msra.mxu0 %v4486
    %4540 = vmatprep.subr.mxu0 0.0
    %4541 = vmatpush1.msra.mxu0 %v4487
    %4542 = vmatprep.subr.mxu0 0.0
    %4543 = vmatpush1.msra.mxu0 %v4488
    %4544 = vmatprep.subr.mxu0 0.0
    %4545 = vmatpush1.msra.mxu0 %v4489
    %4546 = vmatprep.subr.mxu0 0.0
    %4547 = vmatpush1.msra.mxu0 0.0
    %4548 = vmatprep.subr.mxu0 0.0
    %4549 = vmatpush1.msra.mxu0 0.0
    %4550 = vmatprep.subr.mxu0 0.0
    %4551 = vmatpush1.msra.mxu0 0.0
    %4552 = vmatprep.subr.mxu0 0.0
    %4553 = vmatpush1.msra.mxu0 0.0
    %4554 = vmatprep.subr.mxu0 0.0
    %4555 = vmatpush1.msra.mxu0 0.0
    %4556 = vmatprep.subr.mxu0 0.0
    %4557 = vmatpush1.msra.mxu0 0.0
    %4558 = vmatprep.subr.mxu0 0.0
    %4559 = vmatpush1.msra.mxu0 0.0
    %4560 = vmatprep.subr.mxu0 0.0
    %4561 = vmatpush1.msra.mxu0 0.0
    %4562 = vmatprep.subr.mxu0 0.0
    %4563 = vmatpush1.msra.mxu0 0.0
    %4564 = vmatprep.subr.mxu0 0.0
    %4565 = vmatpush1.msra.mxu0 0.0
    %4566 = vmatprep.subr.mxu0 0.0
    %4567 = vmatpush1.msra.mxu0 0.0
    %4568 = vmatprep.subr.mxu0 0.0
    %4569 = vmatpush1.msra.mxu0 0.0
    %4570 = vmatprep.subr.mxu0 0.0
    %4571 = vmatpush1.msra.mxu0 0.0
    %4572 = vmatprep.subr.mxu0 0.0
    %4573 = vmatpush1.msra.mxu0 0.0
    %4574 = vmatprep.subr.mxu0 0.0
    %4575 = vmatpush1.msra.mxu0 0.0
    %4576 = vmatprep.subr.mxu0 0.0
    %4577 = vmatpush1.msra.mxu0 0.0
    %4578 = vmatprep.subr.mxu0 0.0
    %4579 = vmatpush1.msra.mxu0 0.0
    %4580 = vmatprep.subr.mxu0 0.0
    %4581 = vmatpush1.msra.mxu0 0.0
    %4582 = vmatprep.subr.mxu0 0.0
    %4583 = vmatpush1.msra.mxu0 0.0
    %4584 = vmatprep.subr.mxu0 0.0
    %4585 = vmatpush1.msra.mxu0 0.0
    %4586 = vmatprep.subr.mxu0 0.0
    %4587 = vmatpush1.msra.mxu0 0.0
    %4588 = vmatprep.subr.mxu0 0.0
    %4589 = vmatpush1.msra.mxu0 0.0
    %4590 = vmatprep.subr.mxu0 0.0
    %4591 = vmatpush1.msra.mxu0 0.0
    %4592 = vmatprep.subr.mxu0 0.0
    %4593 = vmatpush1.msra.mxu0 0.0
    %4594 = vmatprep.subr.mxu0 0.0
    %4595 = vmatpush1.msra.mxu0 0.0
    %4596 = vmatprep.subr.mxu0 0.0
    %4597 = vmatpush1.msra.mxu0 0.0
    %4598 = vmatprep.subr.mxu0 0.0
    %4599 = vmatpush1.msra.mxu0 0.0
    %4600 = vmatprep.subr.mxu0 0.0
    %4601 = vmatpush1.msra.mxu0 0.0
    %4602 = vmatprep.mubr.f32.mxu0 0.0
    %4603 = vmatmul.mubr.f32.gmra.mrb[0].mxu0 %v4491
    %v4604 = vpop.f32.mrb[0].mxu0
    %v4605 = vadd.f32 0.0, %v4604
    %v4606 = vpop.f32.mrb[0].mxu0
    %4607 = vmatprep.mubr.f32.mxu0 0.0
    %4608 = vmatmul.mubr.f32.gmra.mrb[0].mxu0 %v4494
    %v4609 = vpop.f32.mrb[0].mxu0
    %v4610 = vadd.f32 0.0, %v4609
    %v4611 = vpop.f32.mrb[0].mxu0
    %4612 = vmatprep.mubr.f32.mxu0 0.0
    %4613 = vmatmul.mubr.f32.gmra.mrb[0].mxu0 %v4497
    %v4614 = vpop.f32.mrb[0].mxu0
    %v4615 = vadd.f32 0.0, %v4614
    %v4616 = vpop.f32.mrb[0].mxu0
    %4617 = vmatprep.mubr.f32.mxu0 0.0
    %4618 = vmatmul.mubr.f32.gmra.mrb[0].mxu0 %v4500
    %v4619 = vpop.f32.mrb[0].mxu0
    %v4620 = vadd.f32 0.0, %v4619
    %v4621 = vpop.f32.mrb[0].mxu0
    %4622 = vmatprep.mubr.f32.mxu0 0.0
    %4623 = vmatmul.mubr.f32.gmra.mrb[0].mxu0 %v4503
    %v4624 = vpop.f32.mrb[0].mxu0
    %v4625 = vadd.f32 0.0, %v4624
    %v4626 = vpop.f32.mrb[0].mxu0
    %4627 = vmatprep.mubr.f32.mxu0 0.0
    %4628 = vmatmul.mubr.f32.gmra.mrb[0].mxu0 %v4506
    %v4629 = vpop.f32.mrb[0].mxu0
    %v4630 = vadd.f32 0.0, %v4629
    %v4631 = vpop.f32.mrb[0].mxu0
    %4632 = vmatprep.mubr.f32.mxu0 0.0
    %4633 = vmatmul.mubr.f32.gmra.mrb[0].mxu0 %v4509
    %v4634 = vpop.f32.mrb[0].mxu0
    %v4635 = vadd.f32 0.0, %v4634
    %v4636 = vpop.f32.mrb[0].mxu0
    %4637 = vmatprep.mubr.f32.mxu0 0.0
    %4638 = vmatmul.mubr.f32.gmra.mrb[0].mxu0 %v4512
    %v4639 = vpop.f32.mrb[0].mxu0
    %v4640 = vadd.f32 0.0, %v4639
    %v4641 = vpop.f32.mrb[0].mxu0
    %4642 = vmatprep.mubr.f32.mxu0 0.0
    %4643 = vmatmul.mubr.f32.gmra.mrb[0].mxu0 %v4515
    %v4644 = vpop.f32.mrb[0].mxu0
    %v4645 = vadd.f32 0.0, %v4644
    %v4646 = vpop.f32.mrb[0].mxu0
    %4647 = vmatprep.mubr.f32.mxu0 0.0
    %4648 = vmatmul.mubr.f32.gmra.mrb[0].mxu0 %v4518
    %v4649 = vpop.f32.mrb[0].mxu0
    %v4650 = vadd.f32 0.0, %v4649
    %v4651 = vpop.f32.mrb[0].mxu0
    %4652 = vmatprep.mubr.f32.mxu0 0.0
    %4653 = vmatmul.mubr.f32.gmra.mrb[0].mxu0 %v4521
    %v4654 = vpop.f32.mrb[0].mxu0
    %v4655 = vadd.f32 0.0, %v4654
    %v4656 = vpop.f32.mrb[0].mxu0
    %4657 = vmatprep.mubr.f32.mxu0 0.0
    %4658 = vmatmul.mubr.f32.gmra.mrb[0].mxu0 %v4524
    %v4659 = vpop.f32.mrb[0].mxu0
    %v4660 = vadd.f32 0.0, %v4659
    %v4661 = vpop.f32.mrb[0].mxu0
    %4662 = vmatprep.mubr.f32.mxu0 0.0
    %4663 = vmatmul.mubr.f32.gmra.mrb[0].mxu0 %v4527
    %v4664 = vpop.f32.mrb[0].mxu0
    %v4665 = vadd.f32 0.0, %v4664
    %v4666 = vpop.f32.mrb[0].mxu0
    %4667 = vmatprep.mubr.f32.mxu0 0.0
    %4668 = vmatmul.mubr.f32.gmra.mrb[0].mxu0 %v4530
    %v4669 = vpop.f32.mrb[0].mxu0
    %v4670 = vadd.f32 0.0, %v4669
    %v4671 = vpop.f32.mrb[0].mxu0
    %4672 = vmatprep.mubr.f32.mxu0 0.0
    %4673 = vmatmul.mubr.f32.gmra.mrb[0].mxu0 %v4533
    %v4674 = vpop.f32.mrb[0].mxu0
    %v4675 = vadd.f32 0.0, %v4674
    %v4676 = vpop.f32.mrb[0].mxu0
    %4677 = vmatprep.mubr.f32.mxu0 0.0
    %4678 = vmatmul.mubr.f32.gmra.mrb[0].mxu0 %v4536
    %v4679 = vpop.f32.mrb[0].mxu0
    %v4680 = vadd.f32 0.0, %v4679
    %v4681 = vpop.f32.mrb[0].mxu0
    %4682 = vdwg.mxu0
    %v4683 = vadd.f32 %v4452, %v4605
    %v4684 = vadd.f32 %v4453, %v4610
    %v4685 = vadd.f32 %v4454, %v4615
    %v4686 = vadd.f32 %v4455, %v4620
    %v4687 = vadd.f32 %v4456, %v4625
    %v4688 = vadd.f32 %v4457, %v4630
    %v4689 = vadd.f32 %v4458, %v4635
    %v4690 = vadd.f32 %v4459, %v4640
    %v4691 = vadd.f32 %v4460, %v4645
    %v4692 = vadd.f32 %v4461, %v4650
    %v4693 = vadd.f32 %v4462, %v4655
    %v4694 = vadd.f32 %v4463, %v4660
    %v4695 = vadd.f32 %v4464, %v4665
    %v4696 = vadd.f32 %v4465, %v4670
    %v4697 = vadd.f32 %v4466, %v4675
    %v4698 = vadd.f32 %v4467, %v4680
    %v4699 = vld [vmem:[%s4468 + $0x1] sm:$0xff]
    %v4700 = vld [vmem:[%s4468 + $0x11] sm:$0xff]
    %v4701 = vld [vmem:[%s4468 + $0x21] sm:$0xff]
    %v4702 = vld [vmem:[%s4468 + $0x31] sm:$0xff]
    %v4703 = vld [vmem:[%s4468 + $0x41] sm:$0xff]
    %v4704 = vld [vmem:[%s4468 + $0x51] sm:$0xff]
    %v4705 = vld [vmem:[%s4468 + $0x61] sm:$0xff]
    %v4706 = vld [vmem:[%s4468 + $0x71] sm:$0xff]
    %v4707 = vld [vmem:[%s4468 + $0xc1] sm:$0xff]
    %v4708 = vld [vmem:[%s4468 + $0xd1] sm:$0xff]
    %v4709 = vld [vmem:[%s4468 + $0xe1] sm:$0xff]
    %v4710 = vld [vmem:[%s4468 + $0xf1] sm:$0xff]
    %v4711 = vld [vmem:[%s4468 + $0x101] sm:$0xff]
    %v4712 = vld [vmem:[%s4468 + $0x111] sm:$0xff]
    %v4713 = vld [vmem:[%s4468 + $0x121] sm:$0xff]
    %v4714 = vld [vmem:[%s4468 + $0x131] sm:$0xff]
    %s4715 = scalar_lea.vmem %s3, 512
    %v4716 = vld [vmem:[%s4715] sm:$0xff]
    %v4717 = vld [vmem:[%s4715 + $0x8] sm:$0xff]
    %v4718 = vld [vmem:[%s4715 + $0x10] sm:$0xff]
    %v4719 = vld [vmem:[%s4715 + $0x18] sm:$0xff]
    %v4721 = vsel %vm199, %v4699, 0
    %v4724 = vsel %vm199, %v4700, 0
    %v4727 = vsel %vm199, %v4701, 0
    %v4730 = vsel %vm199, %v4702, 0
    %v4733 = vsel %vm199, %v4703, 0
    %v4736 = vsel %vm199, %v4704, 0
    %v4739 = vsel %vm199, %v4705, 0
    %v4742 = vsel %vm199, %v4706, 0
    %v4745 = vsel %vm199, %v4707, 0
    %v4748 = vsel %vm199, %v4708, 0
    %v4751 = vsel %vm199, %v4709, 0
    %v4754 = vsel %vm199, %v4710, 0
    %v4757 = vsel %vm199, %v4711, 0
    %v4760 = vsel %vm199, %v4712, 0
    %v4763 = vsel %vm199, %v4713, 0
    %v4766 = vsel %vm199, %v4714, 0
    %4768 = vmatprep.subr.mxu0 0.0
    %4769 = vmatpush1.msra.mxu0 %v4716
    %4770 = vmatprep.subr.mxu0 0.0
    %4771 = vmatpush1.msra.mxu0 %v4717
    %4772 = vmatprep.subr.mxu0 0.0
    %4773 = vmatpush1.msra.mxu0 %v4718
    %4774 = vmatprep.subr.mxu0 0.0
    %4775 = vmatpush1.msra.mxu0 %v4719
    %4776 = vmatprep.subr.mxu0 0.0
    %4777 = vmatpush1.msra.mxu0 0.0
    %4778 = vmatprep.subr.mxu0 0.0
    %4779 = vmatpush1.msra.mxu0 0.0
    %4780 = vmatprep.subr.mxu0 0.0
    %4781 = vmatpush1.msra.mxu0 0.0
    %4782 = vmatprep.subr.mxu0 0.0
    %4783 = vmatpush1.msra.mxu0 0.0
    %4784 = vmatprep.subr.mxu0 0.0
    %4785 = vmatpush1.msra.mxu0 0.0
    %4786 = vmatprep.subr.mxu0 0.0
    %4787 = vmatpush1.msra.mxu0 0.0
    %4788 = vmatprep.subr.mxu0 0.0
    %4789 = vmatpush1.msra.mxu0 0.0
    %4790 = vmatprep.subr.mxu0 0.0
    %4791 = vmatpush1.msra.mxu0 0.0
    %4792 = vmatprep.subr.mxu0 0.0
    %4793 = vmatpush1.msra.mxu0 0.0
    %4794 = vmatprep.subr.mxu0 0.0
    %4795 = vmatpush1.msra.mxu0 0.0
    %4796 = vmatprep.subr.mxu0 0.0
    %4797 = vmatpush1.msra.mxu0 0.0
    %4798 = vmatprep.subr.mxu0 0.0
    %4799 = vmatpush1.msra.mxu0 0.0
    %4800 = vmatprep.subr.mxu0 0.0
    %4801 = vmatpush1.msra.mxu0 0.0
    %4802 = vmatprep.subr.mxu0 0.0
    %4803 = vmatpush1.msra.mxu0 0.0
    %4804 = vmatprep.subr.mxu0 0.0
    %4805 = vmatpush1.msra.mxu0 0.0
    %4806 = vmatprep.subr.mxu0 0.0
    %4807 = vmatpush1.msra.mxu0 0.0
    %4808 = vmatprep.subr.mxu0 0.0
    %4809 = vmatpush1.msra.mxu0 0.0
    %4810 = vmatprep.subr.mxu0 0.0
    %4811 = vmatpush1.msra.mxu0 0.0
    %4812 = vmatprep.subr.mxu0 0.0
    %4813 = vmatpush1.msra.mxu0 0.0
    %4814 = vmatprep.subr.mxu0 0.0
    %4815 = vmatpush1.msra.mxu0 0.0
    %4816 = vmatprep.subr.mxu0 0.0
    %4817 = vmatpush1.msra.mxu0 0.0
    %4818 = vmatprep.subr.mxu0 0.0
    %4819 = vmatpush1.msra.mxu0 0.0
    %4820 = vmatprep.subr.mxu0 0.0
    %4821 = vmatpush1.msra.mxu0 0.0
    %4822 = vmatprep.subr.mxu0 0.0
    %4823 = vmatpush1.msra.mxu0 0.0
    %4824 = vmatprep.subr.mxu0 0.0
    %4825 = vmatpush1.msra.mxu0 0.0
    %4826 = vmatprep.subr.mxu0 0.0
    %4827 = vmatpush1.msra.mxu0 0.0
    %4828 = vmatprep.subr.mxu0 0.0
    %4829 = vmatpush1.msra.mxu0 0.0
    %4830 = vmatprep.subr.mxu0 0.0
    %4831 = vmatpush1.msra.mxu0 0.0
    %4832 = vmatprep.mubr.f32.mxu0 0.0
    %4833 = vmatmul.mubr.f32.gmra.mrb[0].mxu0 %v4721
    %v4834 = vpop.f32.mrb[0].mxu0
    %v4835 = vadd.f32 0.0, %v4834
    %v4836 = vpop.f32.mrb[0].mxu0
    %4837 = vmatprep.mubr.f32.mxu0 0.0
    %4838 = vmatmul.mubr.f32.gmra.mrb[0].mxu0 %v4724
    %v4839 = vpop.f32.mrb[0].mxu0
    %v4840 = vadd.f32 0.0, %v4839
    %v4841 = vpop.f32.mrb[0].mxu0
    %4842 = vmatprep.mubr.f32.mxu0 0.0
    %4843 = vmatmul.mubr.f32.gmra.mrb[0].mxu0 %v4727
    %v4844 = vpop.f32.mrb[0].mxu0
    %v4845 = vadd.f32 0.0, %v4844
    %v4846 = vpop.f32.mrb[0].mxu0
    %4847 = vmatprep.mubr.f32.mxu0 0.0
    %4848 = vmatmul.mubr.f32.gmra.mrb[0].mxu0 %v4730
    %v4849 = vpop.f32.mrb[0].mxu0
    %v4850 = vadd.f32 0.0, %v4849
    %v4851 = vpop.f32.mrb[0].mxu0
    %4852 = vmatprep.mubr.f32.mxu0 0.0
    %4853 = vmatmul.mubr.f32.gmra.mrb[0].mxu0 %v4733
    %v4854 = vpop.f32.mrb[0].mxu0
    %v4855 = vadd.f32 0.0, %v4854
    %v4856 = vpop.f32.mrb[0].mxu0
    %4857 = vmatprep.mubr.f32.mxu0 0.0
    %4858 = vmatmul.mubr.f32.gmra.mrb[0].mxu0 %v4736
    %v4859 = vpop.f32.mrb[0].mxu0
    %v4860 = vadd.f32 0.0, %v4859
    %v4861 = vpop.f32.mrb[0].mxu0
    %4862 = vmatprep.mubr.f32.mxu0 0.0
    %4863 = vmatmul.mubr.f32.gmra.mrb[0].mxu0 %v4739
    %v4864 = vpop.f32.mrb[0].mxu0
    %v4865 = vadd.f32 0.0, %v4864
    %v4866 = vpop.f32.mrb[0].mxu0
    %4867 = vmatprep.mubr.f32.mxu0 0.0
    %4868 = vmatmul.mubr.f32.gmra.mrb[0].mxu0 %v4742
    %v4869 = vpop.f32.mrb[0].mxu0
    %v4870 = vadd.f32 0.0, %v4869
    %v4871 = vpop.f32.mrb[0].mxu0
    %4872 = vmatprep.mubr.f32.mxu0 0.0
    %4873 = vmatmul.mubr.f32.gmra.mrb[0].mxu0 %v4745
    %v4874 = vpop.f32.mrb[0].mxu0
    %v4875 = vadd.f32 0.0, %v4874
    %v4876 = vpop.f32.mrb[0].mxu0
    %4877 = vmatprep.mubr.f32.mxu0 0.0
    %4878 = vmatmul.mubr.f32.gmra.mrb[0].mxu0 %v4748
    %v4879 = vpop.f32.mrb[0].mxu0
    %v4880 = vadd.f32 0.0, %v4879
    %v4881 = vpop.f32.mrb[0].mxu0
    %4882 = vmatprep.mubr.f32.mxu0 0.0
    %4883 = vmatmul.mubr.f32.gmra.mrb[0].mxu0 %v4751
    %v4884 = vpop.f32.mrb[0].mxu0
    %v4885 = vadd.f32 0.0, %v4884
    %v4886 = vpop.f32.mrb[0].mxu0
    %4887 = vmatprep.mubr.f32.mxu0 0.0
    %4888 = vmatmul.mubr.f32.gmra.mrb[0].mxu0 %v4754
    %v4889 = vpop.f32.mrb[0].mxu0
    %v4890 = vadd.f32 0.0, %v4889
    %v4891 = vpop.f32.mrb[0].mxu0
    %4892 = vmatprep.mubr.f32.mxu0 0.0
    %4893 = vmatmul.mubr.f32.gmra.mrb[0].mxu0 %v4757
    %v4894 = vpop.f32.mrb[0].mxu0
    %v4895 = vadd.f32 0.0, %v4894
    %v4896 = vpop.f32.mrb[0].mxu0
    %4897 = vmatprep.mubr.f32.mxu0 0.0
    %4898 = vmatmul.mubr.f32.gmra.mrb[0].mxu0 %v4760
    %v4899 = vpop.f32.mrb[0].mxu0
    %v4900 = vadd.f32 0.0, %v4899
    %v4901 = vpop.f32.mrb[0].mxu0
    %4902 = vmatprep.mubr.f32.mxu0 0.0
    %4903 = vmatmul.mubr.f32.gmra.mrb[0].mxu0 %v4763
    %v4904 = vpop.f32.mrb[0].mxu0
    %v4905 = vadd.f32 0.0, %v4904
    %v4906 = vpop.f32.mrb[0].mxu0
    %4907 = vmatprep.mubr.f32.mxu0 0.0
    %4908 = vmatmul.mubr.f32.gmra.mrb[0].mxu0 %v4766
    %v4909 = vpop.f32.mrb[0].mxu0
    %v4910 = vadd.f32 0.0, %v4909
    %v4911 = vpop.f32.mrb[0].mxu0
    %4912 = vdwg.mxu0
    %v4913 = vadd.f32 %v4683, %v4835
    %v4914 = vadd.f32 %v4684, %v4840
    %v4915 = vadd.f32 %v4685, %v4845
    %v4916 = vadd.f32 %v4686, %v4850
    %v4917 = vadd.f32 %v4687, %v4855
    %v4918 = vadd.f32 %v4688, %v4860
    %v4919 = vadd.f32 %v4689, %v4865
    %v4920 = vadd.f32 %v4690, %v4870
    %v4921 = vadd.f32 %v4691, %v4875
    %v4922 = vadd.f32 %v4692, %v4880
    %v4923 = vadd.f32 %v4693, %v4885
    %v4924 = vadd.f32 %v4694, %v4890
    %v4925 = vadd.f32 %v4695, %v4895
    %v4926 = vadd.f32 %v4696, %v4900
    %v4927 = vadd.f32 %v4697, %v4905
    %v4928 = vadd.f32 %v4698, %v4910
    %v4929 = vld [vmem:[%s4468 + $0x2] sm:$0xff]
    %v4930 = vld [vmem:[%s4468 + $0x12] sm:$0xff]
    %v4931 = vld [vmem:[%s4468 + $0x22] sm:$0xff]
    %v4932 = vld [vmem:[%s4468 + $0x32] sm:$0xff]
    %v4933 = vld [vmem:[%s4468 + $0x42] sm:$0xff]
    %v4934 = vld [vmem:[%s4468 + $0x52] sm:$0xff]
    %v4935 = vld [vmem:[%s4468 + $0x62] sm:$0xff]
    %v4936 = vld [vmem:[%s4468 + $0x72] sm:$0xff]
    %v4937 = vld [vmem:[%s4468 + $0xc2] sm:$0xff]
    %v4938 = vld [vmem:[%s4468 + $0xd2] sm:$0xff]
    %v4939 = vld [vmem:[%s4468 + $0xe2] sm:$0xff]
    %v4940 = vld [vmem:[%s4468 + $0xf2] sm:$0xff]
    %v4941 = vld [vmem:[%s4468 + $0x102] sm:$0xff]
    %v4942 = vld [vmem:[%s4468 + $0x112] sm:$0xff]
    %v4943 = vld [vmem:[%s4468 + $0x122] sm:$0xff]
    %v4944 = vld [vmem:[%s4468 + $0x132] sm:$0xff]
    %s4945 = scalar_lea.vmem %s3, 544
    %v4946 = vld [vmem:[%s4945] sm:$0xff]
    %v4947 = vld [vmem:[%s4945 + $0x8] sm:$0xff]
    %v4948 = vld [vmem:[%s4945 + $0x10] sm:$0xff]
    %v4949 = vld [vmem:[%s4945 + $0x18] sm:$0xff]
    %v4951 = vsel %vm199, %v4929, 0
    %v4954 = vsel %vm199, %v4930, 0
    %v4957 = vsel %vm199, %v4931, 0
    %v4960 = vsel %vm199, %v4932, 0
    %v4963 = vsel %vm199, %v4933, 0
    %v4966 = vsel %vm199, %v4934, 0
    %v4969 = vsel %vm199, %v4935, 0
    %v4972 = vsel %vm199, %v4936, 0
    %v4975 = vsel %vm199, %v4937, 0
    %v4978 = vsel %vm199, %v4938, 0
    %v4981 = vsel %vm199, %v4939, 0
    %v4984 = vsel %vm199, %v4940, 0
    %v4987 = vsel %vm199, %v4941, 0
    %v4990 = vsel %vm199, %v4942, 0
    %v4993 = vsel %vm199, %v4943, 0
    %v4996 = vsel %vm199, %v4944, 0
    %4998 = vmatprep.subr.mxu0 0.0
    %4999 = vmatpush1.msra.mxu0 %v4946
    %5000 = vmatprep.subr.mxu0 0.0
    %5001 = vmatpush1.msra.mxu0 %v4947
    %5002 = vmatprep.subr.mxu0 0.0
    %5003 = vmatpush1.msra.mxu0 %v4948
    %5004 = vmatprep.subr.mxu0 0.0
    %5005 = vmatpush1.msra.mxu0 %v4949
    %5006 = vmatprep.subr.mxu0 0.0
    %5007 = vmatpush1.msra.mxu0 0.0
    %5008 = vmatprep.subr.mxu0 0.0
    %5009 = vmatpush1.msra.mxu0 0.0
    %5010 = vmatprep.subr.mxu0 0.0
    %5011 = vmatpush1.msra.mxu0 0.0
    %5012 = vmatprep.subr.mxu0 0.0
    %5013 = vmatpush1.msra.mxu0 0.0
    %5014 = vmatprep.subr.mxu0 0.0
    %5015 = vmatpush1.msra.mxu0 0.0
    %5016 = vmatprep.subr.mxu0 0.0
    %5017 = vmatpush1.msra.mxu0 0.0
    %5018 = vmatprep.subr.mxu0 0.0
    %5019 = vmatpush1.msra.mxu0 0.0
    %5020 = vmatprep.subr.mxu0 0.0
    %5021 = vmatpush1.msra.mxu0 0.0
    %5022 = vmatprep.subr.mxu0 0.0
    %5023 = vmatpush1.msra.mxu0 0.0
    %5024 = vmatprep.subr.mxu0 0.0
    %5025 = vmatpush1.msra.mxu0 0.0
    %5026 = vmatprep.subr.mxu0 0.0
    %5027 = vmatpush1.msra.mxu0 0.0
    %5028 = vmatprep.subr.mxu0 0.0
    %5029 = vmatpush1.msra.mxu0 0.0
    %5030 = vmatprep.subr.mxu0 0.0
    %5031 = vmatpush1.msra.mxu0 0.0
    %5032 = vmatprep.subr.mxu0 0.0
    %5033 = vmatpush1.msra.mxu0 0.0
    %5034 = vmatprep.subr.mxu0 0.0
    %5035 = vmatpush1.msra.mxu0 0.0
    %5036 = vmatprep.subr.mxu0 0.0
    %5037 = vmatpush1.msra.mxu0 0.0
    %5038 = vmatprep.subr.mxu0 0.0
    %5039 = vmatpush1.msra.mxu0 0.0
    %5040 = vmatprep.subr.mxu0 0.0
    %5041 = vmatpush1.msra.mxu0 0.0
    %5042 = vmatprep.subr.mxu0 0.0
    %5043 = vmatpush1.msra.mxu0 0.0
    %5044 = vmatprep.subr.mxu0 0.0
    %5045 = vmatpush1.msra.mxu0 0.0
    %5046 = vmatprep.subr.mxu0 0.0
    %5047 = vmatpush1.msra.mxu0 0.0
    %5048 = vmatprep.subr.mxu0 0.0
    %5049 = vmatpush1.msra.mxu0 0.0
    %5050 = vmatprep.subr.mxu0 0.0
    %5051 = vmatpush1.msra.mxu0 0.0
    %5052 = vmatprep.subr.mxu0 0.0
    %5053 = vmatpush1.msra.mxu0 0.0
    %5054 = vmatprep.subr.mxu0 0.0
    %5055 = vmatpush1.msra.mxu0 0.0
    %5056 = vmatprep.subr.mxu0 0.0
    %5057 = vmatpush1.msra.mxu0 0.0
    %5058 = vmatprep.subr.mxu0 0.0
    %5059 = vmatpush1.msra.mxu0 0.0
    %5060 = vmatprep.subr.mxu0 0.0
    %5061 = vmatpush1.msra.mxu0 0.0
    %5062 = vmatprep.mubr.f32.mxu0 0.0
    %5063 = vmatmul.mubr.f32.gmra.mrb[0].mxu0 %v4951
    %v5064 = vpop.f32.mrb[0].mxu0
    %v5065 = vadd.f32 0.0, %v5064
    %v5066 = vpop.f32.mrb[0].mxu0
    %5067 = vmatprep.mubr.f32.mxu0 0.0
    %5068 = vmatmul.mubr.f32.gmra.mrb[0].mxu0 %v4954
    %v5069 = vpop.f32.mrb[0].mxu0
    %v5070 = vadd.f32 0.0, %v5069
    %v5071 = vpop.f32.mrb[0].mxu0
    %5072 = vmatprep.mubr.f32.mxu0 0.0
    %5073 = vmatmul.mubr.f32.gmra.mrb[0].mxu0 %v4957
    %v5074 = vpop.f32.mrb[0].mxu0
    %v5075 = vadd.f32 0.0, %v5074
    %v5076 = vpop.f32.mrb[0].mxu0
    %5077 = vmatprep.mubr.f32.mxu0 0.0
    %5078 = vmatmul.mubr.f32.gmra.mrb[0].mxu0 %v4960
    %v5079 = vpop.f32.mrb[0].mxu0
    %v5080 = vadd.f32 0.0, %v5079
    %v5081 = vpop.f32.mrb[0].mxu0
    %5082 = vmatprep.mubr.f32.mxu0 0.0
    %5083 = vmatmul.mubr.f32.gmra.mrb[0].mxu0 %v4963
    %v5084 = vpop.f32.mrb[0].mxu0
    %v5085 = vadd.f32 0.0, %v5084
    %v5086 = vpop.f32.mrb[0].mxu0
    %5087 = vmatprep.mubr.f32.mxu0 0.0
    %5088 = vmatmul.mubr.f32.gmra.mrb[0].mxu0 %v4966
    %v5089 = vpop.f32.mrb[0].mxu0
    %v5090 = vadd.f32 0.0, %v5089
    %v5091 = vpop.f32.mrb[0].mxu0
    %5092 = vmatprep.mubr.f32.mxu0 0.0
    %5093 = vmatmul.mubr.f32.gmra.mrb[0].mxu0 %v4969
    %v5094 = vpop.f32.mrb[0].mxu0
    %v5095 = vadd.f32 0.0, %v5094
    %v5096 = vpop.f32.mrb[0].mxu0
    %5097 = vmatprep.mubr.f32.mxu0 0.0
    %5098 = vmatmul.mubr.f32.gmra.mrb[0].mxu0 %v4972
    %v5099 = vpop.f32.mrb[0].mxu0
    %v5100 = vadd.f32 0.0, %v5099
    %v5101 = vpop.f32.mrb[0].mxu0
    %5102 = vmatprep.mubr.f32.mxu0 0.0
    %5103 = vmatmul.mubr.f32.gmra.mrb[0].mxu0 %v4975
    %v5104 = vpop.f32.mrb[0].mxu0
    %v5105 = vadd.f32 0.0, %v5104
    %v5106 = vpop.f32.mrb[0].mxu0
    %5107 = vmatprep.mubr.f32.mxu0 0.0
    %5108 = vmatmul.mubr.f32.gmra.mrb[0].mxu0 %v4978
    %v5109 = vpop.f32.mrb[0].mxu0
    %v5110 = vadd.f32 0.0, %v5109
    %v5111 = vpop.f32.mrb[0].mxu0
    %5112 = vmatprep.mubr.f32.mxu0 0.0
    %5113 = vmatmul.mubr.f32.gmra.mrb[0].mxu0 %v4981
    %v5114 = vpop.f32.mrb[0].mxu0
    %v5115 = vadd.f32 0.0, %v5114
    %v5116 = vpop.f32.mrb[0].mxu0
    %5117 = vmatprep.mubr.f32.mxu0 0.0
    %5118 = vmatmul.mubr.f32.gmra.mrb[0].mxu0 %v4984
    %v5119 = vpop.f32.mrb[0].mxu0
    %v5120 = vadd.f32 0.0, %v5119
    %v5121 = vpop.f32.mrb[0].mxu0
    %5122 = vmatprep.mubr.f32.mxu0 0.0
    %5123 = vmatmul.mubr.f32.gmra.mrb[0].mxu0 %v4987
    %v5124 = vpop.f32.mrb[0].mxu0
    %v5125 = vadd.f32 0.0, %v5124
    %v5126 = vpop.f32.mrb[0].mxu0
    %5127 = vmatprep.mubr.f32.mxu0 0.0
    %5128 = vmatmul.mubr.f32.gmra.mrb[0].mxu0 %v4990
    %v5129 = vpop.f32.mrb[0].mxu0
    %v5130 = vadd.f32 0.0, %v5129
    %v5131 = vpop.f32.mrb[0].mxu0
    %5132 = vmatprep.mubr.f32.mxu0 0.0
    %5133 = vmatmul.mubr.f32.gmra.mrb[0].mxu0 %v4993
    %v5134 = vpop.f32.mrb[0].mxu0
    %v5135 = vadd.f32 0.0, %v5134
    %v5136 = vpop.f32.mrb[0].mxu0
    %5137 = vmatprep.mubr.f32.mxu0 0.0
    %5138 = vmatmul.mubr.f32.gmra.mrb[0].mxu0 %v4996
    %v5139 = vpop.f32.mrb[0].mxu0
    %v5140 = vadd.f32 0.0, %v5139
    %v5141 = vpop.f32.mrb[0].mxu0
    %5142 = vdwg.mxu0
    %v5143 = vadd.f32 %v4913, %v5065
    %v5144 = vadd.f32 %v4914, %v5070
    %v5145 = vadd.f32 %v4915, %v5075
    %v5146 = vadd.f32 %v4916, %v5080
    %v5147 = vadd.f32 %v4917, %v5085
    %v5148 = vadd.f32 %v4918, %v5090
    %v5149 = vadd.f32 %v4919, %v5095
    %v5150 = vadd.f32 %v4920, %v5100
    %v5151 = vadd.f32 %v4921, %v5105
    %v5152 = vadd.f32 %v4922, %v5110
    %v5153 = vadd.f32 %v4923, %v5115
    %v5154 = vadd.f32 %v4924, %v5120
    %v5155 = vadd.f32 %v4925, %v5125
    %v5156 = vadd.f32 %v4926, %v5130
    %v5157 = vadd.f32 %v4927, %v5135
    %v5158 = vadd.f32 %v4928, %v5140
    %v5159 = vld [vmem:[%s4468 + $0x3] sm:$0xff]
    %v5160 = vld [vmem:[%s4468 + $0x13] sm:$0xff]
    %v5161 = vld [vmem:[%s4468 + $0x23] sm:$0xff]
    %v5162 = vld [vmem:[%s4468 + $0x33] sm:$0xff]
    %v5163 = vld [vmem:[%s4468 + $0x43] sm:$0xff]
    %v5164 = vld [vmem:[%s4468 + $0x53] sm:$0xff]
    %v5165 = vld [vmem:[%s4468 + $0x63] sm:$0xff]
    %v5166 = vld [vmem:[%s4468 + $0x73] sm:$0xff]
    %v5167 = vld [vmem:[%s4468 + $0xc3] sm:$0xff]
    %v5168 = vld [vmem:[%s4468 + $0xd3] sm:$0xff]
    %v5169 = vld [vmem:[%s4468 + $0xe3] sm:$0xff]
    %v5170 = vld [vmem:[%s4468 + $0xf3] sm:$0xff]
    %v5171 = vld [vmem:[%s4468 + $0x103] sm:$0xff]
    %v5172 = vld [vmem:[%s4468 + $0x113] sm:$0xff]
    %v5173 = vld [vmem:[%s4468 + $0x123] sm:$0xff]
    %v5174 = vld [vmem:[%s4468 + $0x133] sm:$0xff]
    %s5175 = scalar_lea.vmem %s3, 576
    %v5176 = vld [vmem:[%s5175] sm:$0xff]
    %v5177 = vld [vmem:[%s5175 + $0x8] sm:$0xff]
    %v5178 = vld [vmem:[%s5175 + $0x10] sm:$0xff]
    %v5179 = vld [vmem:[%s5175 + $0x18] sm:$0xff]
    %v5181 = vsel %vm199, %v5159, 0
    %v5184 = vsel %vm199, %v5160, 0
    %v5187 = vsel %vm199, %v5161, 0
    %v5190 = vsel %vm199, %v5162, 0
    %v5193 = vsel %vm199, %v5163, 0
    %v5196 = vsel %vm199, %v5164, 0
    %v5199 = vsel %vm199, %v5165, 0
    %v5202 = vsel %vm199, %v5166, 0
    %v5205 = vsel %vm199, %v5167, 0
    %v5208 = vsel %vm199, %v5168, 0
    %v5211 = vsel %vm199, %v5169, 0
    %v5214 = vsel %vm199, %v5170, 0
    %v5217 = vsel %vm199, %v5171, 0
    %v5220 = vsel %vm199, %v5172, 0
    %v5223 = vsel %vm199, %v5173, 0
    %v5226 = vsel %vm199, %v5174, 0
    %5228 = vmatprep.subr.mxu0 0.0
    %5229 = vmatpush1.msra.mxu0 %v5176
    %5230 = vmatprep.subr.mxu0 0.0
    %5231 = vmatpush1.msra.mxu0 %v5177
    %5232 = vmatprep.subr.mxu0 0.0
    %5233 = vmatpush1.msra.mxu0 %v5178
    %5234 = vmatprep.subr.mxu0 0.0
    %5235 = vmatpush1.msra.mxu0 %v5179
    %5236 = vmatprep.subr.mxu0 0.0
    %5237 = vmatpush1.msra.mxu0 0.0
    %5238 = vmatprep.subr.mxu0 0.0
    %5239 = vmatpush1.msra.mxu0 0.0
    %5240 = vmatprep.subr.mxu0 0.0
    %5241 = vmatpush1.msra.mxu0 0.0
    %5242 = vmatprep.subr.mxu0 0.0
    %5243 = vmatpush1.msra.mxu0 0.0
    %5244 = vmatprep.subr.mxu0 0.0
    %5245 = vmatpush1.msra.mxu0 0.0
    %5246 = vmatprep.subr.mxu0 0.0
    %5247 = vmatpush1.msra.mxu0 0.0
    %5248 = vmatprep.subr.mxu0 0.0
    %5249 = vmatpush1.msra.mxu0 0.0
    %5250 = vmatprep.subr.mxu0 0.0
    %5251 = vmatpush1.msra.mxu0 0.0
    %5252 = vmatprep.subr.mxu0 0.0
    %5253 = vmatpush1.msra.mxu0 0.0
    %5254 = vmatprep.subr.mxu0 0.0
    %5255 = vmatpush1.msra.mxu0 0.0
    %5256 = vmatprep.subr.mxu0 0.0
    %5257 = vmatpush1.msra.mxu0 0.0
    %5258 = vmatprep.subr.mxu0 0.0
    %5259 = vmatpush1.msra.mxu0 0.0
    %5260 = vmatprep.subr.mxu0 0.0
    %5261 = vmatpush1.msra.mxu0 0.0
    %5262 = vmatprep.subr.mxu0 0.0
    %5263 = vmatpush1.msra.mxu0 0.0
    %5264 = vmatprep.subr.mxu0 0.0
    %5265 = vmatpush1.msra.mxu0 0.0
    %5266 = vmatprep.subr.mxu0 0.0
    %5267 = vmatpush1.msra.mxu0 0.0
    %5268 = vmatprep.subr.mxu0 0.0
    %5269 = vmatpush1.msra.mxu0 0.0
    %5270 = vmatprep.subr.mxu0 0.0
    %5271 = vmatpush1.msra.mxu0 0.0
    %5272 = vmatprep.subr.mxu0 0.0
    %5273 = vmatpush1.msra.mxu0 0.0
    %5274 = vmatprep.subr.mxu0 0.0
    %5275 = vmatpush1.msra.mxu0 0.0
    %5276 = vmatprep.subr.mxu0 0.0
    %5277 = vmatpush1.msra.mxu0 0.0
    %5278 = vmatprep.subr.mxu0 0.0
    %5279 = vmatpush1.msra.mxu0 0.0
    %5280 = vmatprep.subr.mxu0 0.0
    %5281 = vmatpush1.msra.mxu0 0.0
    %5282 = vmatprep.subr.mxu0 0.0
    %5283 = vmatpush1.msra.mxu0 0.0
    %5284 = vmatprep.subr.mxu0 0.0
    %5285 = vmatpush1.msra.mxu0 0.0
    %5286 = vmatprep.subr.mxu0 0.0
    %5287 = vmatpush1.msra.mxu0 0.0
    %5288 = vmatprep.subr.mxu0 0.0
    %5289 = vmatpush1.msra.mxu0 0.0
    %5290 = vmatprep.subr.mxu0 0.0
    %5291 = vmatpush1.msra.mxu0 0.0
    %5292 = vmatprep.mubr.f32.mxu0 0.0
    %5293 = vmatmul.mubr.f32.gmra.mrb[0].mxu0 %v5181
    %v5294 = vpop.f32.mrb[0].mxu0
    %v5295 = vadd.f32 0.0, %v5294
    %v5296 = vpop.f32.mrb[0].mxu0
    %5297 = vmatprep.mubr.f32.mxu0 0.0
    %5298 = vmatmul.mubr.f32.gmra.mrb[0].mxu0 %v5184
    %v5299 = vpop.f32.mrb[0].mxu0
    %v5300 = vadd.f32 0.0, %v5299
    %v5301 = vpop.f32.mrb[0].mxu0
    %5302 = vmatprep.mubr.f32.mxu0 0.0
    %5303 = vmatmul.mubr.f32.gmra.mrb[0].mxu0 %v5187
    %v5304 = vpop.f32.mrb[0].mxu0
    %v5305 = vadd.f32 0.0, %v5304
    %v5306 = vpop.f32.mrb[0].mxu0
    %5307 = vmatprep.mubr.f32.mxu0 0.0
    %5308 = vmatmul.mubr.f32.gmra.mrb[0].mxu0 %v5190
    %v5309 = vpop.f32.mrb[0].mxu0
    %v5310 = vadd.f32 0.0, %v5309
    %v5311 = vpop.f32.mrb[0].mxu0
    %5312 = vmatprep.mubr.f32.mxu0 0.0
    %5313 = vmatmul.mubr.f32.gmra.mrb[0].mxu0 %v5193
    %v5314 = vpop.f32.mrb[0].mxu0
    %v5315 = vadd.f32 0.0, %v5314
    %v5316 = vpop.f32.mrb[0].mxu0
    %5317 = vmatprep.mubr.f32.mxu0 0.0
    %5318 = vmatmul.mubr.f32.gmra.mrb[0].mxu0 %v5196
    %v5319 = vpop.f32.mrb[0].mxu0
    %v5320 = vadd.f32 0.0, %v5319
    %v5321 = vpop.f32.mrb[0].mxu0
    %5322 = vmatprep.mubr.f32.mxu0 0.0
    %5323 = vmatmul.mubr.f32.gmra.mrb[0].mxu0 %v5199
    %v5324 = vpop.f32.mrb[0].mxu0
    %v5325 = vadd.f32 0.0, %v5324
    %v5326 = vpop.f32.mrb[0].mxu0
    %5327 = vmatprep.mubr.f32.mxu0 0.0
    %5328 = vmatmul.mubr.f32.gmra.mrb[0].mxu0 %v5202
    %v5329 = vpop.f32.mrb[0].mxu0
    %v5330 = vadd.f32 0.0, %v5329
    %v5331 = vpop.f32.mrb[0].mxu0
    %5332 = vmatprep.mubr.f32.mxu0 0.0
    %5333 = vmatmul.mubr.f32.gmra.mrb[0].mxu0 %v5205
    %v5334 = vpop.f32.mrb[0].mxu0
    %v5335 = vadd.f32 0.0, %v5334
    %v5336 = vpop.f32.mrb[0].mxu0
    %5337 = vmatprep.mubr.f32.mxu0 0.0
    %5338 = vmatmul.mubr.f32.gmra.mrb[0].mxu0 %v5208
    %v5339 = vpop.f32.mrb[0].mxu0
    %v5340 = vadd.f32 0.0, %v5339
    %v5341 = vpop.f32.mrb[0].mxu0
    %5342 = vmatprep.mubr.f32.mxu0 0.0
    %5343 = vmatmul.mubr.f32.gmra.mrb[0].mxu0 %v5211
    %v5344 = vpop.f32.mrb[0].mxu0
    %v5345 = vadd.f32 0.0, %v5344
    %v5346 = vpop.f32.mrb[0].mxu0
    %5347 = vmatprep.mubr.f32.mxu0 0.0
    %5348 = vmatmul.mubr.f32.gmra.mrb[0].mxu0 %v5214
    %v5349 = vpop.f32.mrb[0].mxu0
    %v5350 = vadd.f32 0.0, %v5349
    %v5351 = vpop.f32.mrb[0].mxu0
    %5352 = vmatprep.mubr.f32.mxu0 0.0
    %5353 = vmatmul.mubr.f32.gmra.mrb[0].mxu0 %v5217
    %v5354 = vpop.f32.mrb[0].mxu0
    %v5355 = vadd.f32 0.0, %v5354
    %v5356 = vpop.f32.mrb[0].mxu0
    %5357 = vmatprep.mubr.f32.mxu0 0.0
    %5358 = vmatmul.mubr.f32.gmra.mrb[0].mxu0 %v5220
    %v5359 = vpop.f32.mrb[0].mxu0
    %v5360 = vadd.f32 0.0, %v5359
    %v5361 = vpop.f32.mrb[0].mxu0
    %5362 = vmatprep.mubr.f32.mxu0 0.0
    %5363 = vmatmul.mubr.f32.gmra.mrb[0].mxu0 %v5223
    %v5364 = vpop.f32.mrb[0].mxu0
    %v5365 = vadd.f32 0.0, %v5364
    %v5366 = vpop.f32.mrb[0].mxu0
    %5367 = vmatprep.mubr.f32.mxu0 0.0
    %5368 = vmatmul.mubr.f32.gmra.mrb[0].mxu0 %v5226
    %v5369 = vpop.f32.mrb[0].mxu0
    %v5370 = vadd.f32 0.0, %v5369
    %v5371 = vpop.f32.mrb[0].mxu0
    %5372 = vdwg.mxu0
    %v5373 = vadd.f32 %v5143, %v5295
    %v5374 = vadd.f32 %v5144, %v5300
    %v5375 = vadd.f32 %v5145, %v5305
    %v5376 = vadd.f32 %v5146, %v5310
    %v5377 = vadd.f32 %v5147, %v5315
    %v5378 = vadd.f32 %v5148, %v5320
    %v5379 = vadd.f32 %v5149, %v5325
    %v5380 = vadd.f32 %v5150, %v5330
    %v5381 = vadd.f32 %v5151, %v5335
    %v5382 = vadd.f32 %v5152, %v5340
    %v5383 = vadd.f32 %v5153, %v5345
    %v5384 = vadd.f32 %v5154, %v5350
    %v5385 = vadd.f32 %v5155, %v5355
    %v5386 = vadd.f32 %v5156, %v5360
    %v5387 = vadd.f32 %v5157, %v5365
    %v5388 = vadd.f32 %v5158, %v5370
    %v5389 = vld [vmem:[%s4468 + $0x4] sm:$0xff]
    %v5390 = vld [vmem:[%s4468 + $0x14] sm:$0xff]
    %v5391 = vld [vmem:[%s4468 + $0x24] sm:$0xff]
    %v5392 = vld [vmem:[%s4468 + $0x34] sm:$0xff]
    %v5393 = vld [vmem:[%s4468 + $0x44] sm:$0xff]
    %v5394 = vld [vmem:[%s4468 + $0x54] sm:$0xff]
    %v5395 = vld [vmem:[%s4468 + $0x64] sm:$0xff]
    %v5396 = vld [vmem:[%s4468 + $0x74] sm:$0xff]
    %v5397 = vld [vmem:[%s4468 + $0xc4] sm:$0xff]
    %v5398 = vld [vmem:[%s4468 + $0xd4] sm:$0xff]
    %v5399 = vld [vmem:[%s4468 + $0xe4] sm:$0xff]
    %v5400 = vld [vmem:[%s4468 + $0xf4] sm:$0xff]
    %v5401 = vld [vmem:[%s4468 + $0x104] sm:$0xff]
    %v5402 = vld [vmem:[%s4468 + $0x114] sm:$0xff]
    %v5403 = vld [vmem:[%s4468 + $0x124] sm:$0xff]
    %v5404 = vld [vmem:[%s4468 + $0x134] sm:$0xff]
    %s5405 = scalar_lea.vmem %s3, 608
    %v5406 = vld [vmem:[%s5405] sm:$0xff]
    %v5407 = vld [vmem:[%s5405 + $0x8] sm:$0xff]
    %v5408 = vld [vmem:[%s5405 + $0x10] sm:$0xff]
    %v5409 = vld [vmem:[%s5405 + $0x18] sm:$0xff]
    %v5411 = vsel %vm199, %v5389, 0
    %v5414 = vsel %vm199, %v5390, 0
    %v5417 = vsel %vm199, %v5391, 0
    %v5420 = vsel %vm199, %v5392, 0
    %v5423 = vsel %vm199, %v5393, 0
    %v5426 = vsel %vm199, %v5394, 0
    %v5429 = vsel %vm199, %v5395, 0
    %v5432 = vsel %vm199, %v5396, 0
    %v5435 = vsel %vm199, %v5397, 0
    %v5438 = vsel %vm199, %v5398, 0
    %v5441 = vsel %vm199, %v5399, 0
    %v5444 = vsel %vm199, %v5400, 0
    %v5447 = vsel %vm199, %v5401, 0
    %v5450 = vsel %vm199, %v5402, 0
    %v5453 = vsel %vm199, %v5403, 0
    %v5456 = vsel %vm199, %v5404, 0
    %5458 = vmatprep.subr.mxu0 0.0
    %5459 = vmatpush1.msra.mxu0 %v5406
    %5460 = vmatprep.subr.mxu0 0.0
    %5461 = vmatpush1.msra.mxu0 %v5407
    %5462 = vmatprep.subr.mxu0 0.0
    %5463 = vmatpush1.msra.mxu0 %v5408
    %5464 = vmatprep.subr.mxu0 0.0
    %5465 = vmatpush1.msra.mxu0 %v5409
    %5466 = vmatprep.subr.mxu0 0.0
    %5467 = vmatpush1.msra.mxu0 0.0
    %5468 = vmatprep.subr.mxu0 0.0
    %5469 = vmatpush1.msra.mxu0 0.0
    %5470 = vmatprep.subr.mxu0 0.0
    %5471 = vmatpush1.msra.mxu0 0.0
    %5472 = vmatprep.subr.mxu0 0.0
    %5473 = vmatpush1.msra.mxu0 0.0
    %5474 = vmatprep.subr.mxu0 0.0
    %5475 = vmatpush1.msra.mxu0 0.0
    %5476 = vmatprep.subr.mxu0 0.0
    %5477 = vmatpush1.msra.mxu0 0.0
    %5478 = vmatprep.subr.mxu0 0.0
    %5479 = vmatpush1.msra.mxu0 0.0
    %5480 = vmatprep.subr.mxu0 0.0
    %5481 = vmatpush1.msra.mxu0 0.0
    %5482 = vmatprep.subr.mxu0 0.0
    %5483 = vmatpush1.msra.mxu0 0.0
    %5484 = vmatprep.subr.mxu0 0.0
    %5485 = vmatpush1.msra.mxu0 0.0
    %5486 = vmatprep.subr.mxu0 0.0
    %5487 = vmatpush1.msra.mxu0 0.0
    %5488 = vmatprep.subr.mxu0 0.0
    %5489 = vmatpush1.msra.mxu0 0.0
    %5490 = vmatprep.subr.mxu0 0.0
    %5491 = vmatpush1.msra.mxu0 0.0
    %5492 = vmatprep.subr.mxu0 0.0
    %5493 = vmatpush1.msra.mxu0 0.0
    %5494 = vmatprep.subr.mxu0 0.0
    %5495 = vmatpush1.msra.mxu0 0.0
    %5496 = vmatprep.subr.mxu0 0.0
    %5497 = vmatpush1.msra.mxu0 0.0
    %5498 = vmatprep.subr.mxu0 0.0
    %5499 = vmatpush1.msra.mxu0 0.0
    %5500 = vmatprep.subr.mxu0 0.0
    %5501 = vmatpush1.msra.mxu0 0.0
    %5502 = vmatprep.subr.mxu0 0.0
    %5503 = vmatpush1.msra.mxu0 0.0
    %5504 = vmatprep.subr.mxu0 0.0
    %5505 = vmatpush1.msra.mxu0 0.0
    %5506 = vmatprep.subr.mxu0 0.0
    %5507 = vmatpush1.msra.mxu0 0.0
    %5508 = vmatprep.subr.mxu0 0.0
    %5509 = vmatpush1.msra.mxu0 0.0
    %5510 = vmatprep.subr.mxu0 0.0
    %5511 = vmatpush1.msra.mxu0 0.0
    %5512 = vmatprep.subr.mxu0 0.0
    %5513 = vmatpush1.msra.mxu0 0.0
    %5514 = vmatprep.subr.mxu0 0.0
    %5515 = vmatpush1.msra.mxu0 0.0
    %5516 = vmatprep.subr.mxu0 0.0
    %5517 = vmatpush1.msra.mxu0 0.0
    %5518 = vmatprep.subr.mxu0 0.0
    %5519 = vmatpush1.msra.mxu0 0.0
    %5520 = vmatprep.subr.mxu0 0.0
    %5521 = vmatpush1.msra.mxu0 0.0
    %5522 = vmatprep.mubr.f32.mxu0 0.0
    %5523 = vmatmul.mubr.f32.gmra.mrb[0].mxu0 %v5411
    %v5524 = vpop.f32.mrb[0].mxu0
    %v5525 = vadd.f32 0.0, %v5524
    %v5526 = vpop.f32.mrb[0].mxu0
    %5527 = vmatprep.mubr.f32.mxu0 0.0
    %5528 = vmatmul.mubr.f32.gmra.mrb[0].mxu0 %v5414
    %v5529 = vpop.f32.mrb[0].mxu0
    %v5530 = vadd.f32 0.0, %v5529
    %v5531 = vpop.f32.mrb[0].mxu0
    %5532 = vmatprep.mubr.f32.mxu0 0.0
    %5533 = vmatmul.mubr.f32.gmra.mrb[0].mxu0 %v5417
    %v5534 = vpop.f32.mrb[0].mxu0
    %v5535 = vadd.f32 0.0, %v5534
    %v5536 = vpop.f32.mrb[0].mxu0
    %5537 = vmatprep.mubr.f32.mxu0 0.0
    %5538 = vmatmul.mubr.f32.gmra.mrb[0].mxu0 %v5420
    %v5539 = vpop.f32.mrb[0].mxu0
    %v5540 = vadd.f32 0.0, %v5539
    %v5541 = vpop.f32.mrb[0].mxu0
    %5542 = vmatprep.mubr.f32.mxu0 0.0
    %5543 = vmatmul.mubr.f32.gmra.mrb[0].mxu0 %v5423
    %v5544 = vpop.f32.mrb[0].mxu0
    %v5545 = vadd.f32 0.0, %v5544
    %v5546 = vpop.f32.mrb[0].mxu0
    %5547 = vmatprep.mubr.f32.mxu0 0.0
    %5548 = vmatmul.mubr.f32.gmra.mrb[0].mxu0 %v5426
    %v5549 = vpop.f32.mrb[0].mxu0
    %v5550 = vadd.f32 0.0, %v5549
    %v5551 = vpop.f32.mrb[0].mxu0
    %5552 = vmatprep.mubr.f32.mxu0 0.0
    %5553 = vmatmul.mubr.f32.gmra.mrb[0].mxu0 %v5429
    %v5554 = vpop.f32.mrb[0].mxu0
    %v5555 = vadd.f32 0.0, %v5554
    %v5556 = vpop.f32.mrb[0].mxu0
    %5557 = vmatprep.mubr.f32.mxu0 0.0
    %5558 = vmatmul.mubr.f32.gmra.mrb[0].mxu0 %v5432
    %v5559 = vpop.f32.mrb[0].mxu0
    %v5560 = vadd.f32 0.0, %v5559
    %v5561 = vpop.f32.mrb[0].mxu0
    %5562 = vmatprep.mubr.f32.mxu0 0.0
    %5563 = vmatmul.mubr.f32.gmra.mrb[0].mxu0 %v5435
    %v5564 = vpop.f32.mrb[0].mxu0
    %v5565 = vadd.f32 0.0, %v5564
    %v5566 = vpop.f32.mrb[0].mxu0
    %5567 = vmatprep.mubr.f32.mxu0 0.0
    %5568 = vmatmul.mubr.f32.gmra.mrb[0].mxu0 %v5438
    %v5569 = vpop.f32.mrb[0].mxu0
    %v5570 = vadd.f32 0.0, %v5569
    %v5571 = vpop.f32.mrb[0].mxu0
    %5572 = vmatprep.mubr.f32.mxu0 0.0
    %5573 = vmatmul.mubr.f32.gmra.mrb[0].mxu0 %v5441
    %v5574 = vpop.f32.mrb[0].mxu0
    %v5575 = vadd.f32 0.0, %v5574
    %v5576 = vpop.f32.mrb[0].mxu0
    %5577 = vmatprep.mubr.f32.mxu0 0.0
    %5578 = vmatmul.mubr.f32.gmra.mrb[0].mxu0 %v5444
    %v5579 = vpop.f32.mrb[0].mxu0
    %v5580 = vadd.f32 0.0, %v5579
    %v5581 = vpop.f32.mrb[0].mxu0
    %5582 = vmatprep.mubr.f32.mxu0 0.0
    %5583 = vmatmul.mubr.f32.gmra.mrb[0].mxu0 %v5447
    %v5584 = vpop.f32.mrb[0].mxu0
    %v5585 = vadd.f32 0.0, %v5584
    %v5586 = vpop.f32.mrb[0].mxu0
    %5587 = vmatprep.mubr.f32.mxu0 0.0
    %5588 = vmatmul.mubr.f32.gmra.mrb[0].mxu0 %v5450
    %v5589 = vpop.f32.mrb[0].mxu0
    %v5590 = vadd.f32 0.0, %v5589
    %v5591 = vpop.f32.mrb[0].mxu0
    %5592 = vmatprep.mubr.f32.mxu0 0.0
    %5593 = vmatmul.mubr.f32.gmra.mrb[0].mxu0 %v5453
    %v5594 = vpop.f32.mrb[0].mxu0
    %v5595 = vadd.f32 0.0, %v5594
    %v5596 = vpop.f32.mrb[0].mxu0
    %5597 = vmatprep.mubr.f32.mxu0 0.0
    %5598 = vmatmul.mubr.f32.gmra.mrb[0].mxu0 %v5456
    %v5599 = vpop.f32.mrb[0].mxu0
    %v5600 = vadd.f32 0.0, %v5599
    %v5601 = vpop.f32.mrb[0].mxu0
    %5602 = vdwg.mxu0
    %v5603 = vadd.f32 %v5373, %v5525
    %v5604 = vadd.f32 %v5374, %v5530
    %v5605 = vadd.f32 %v5375, %v5535
    %v5606 = vadd.f32 %v5376, %v5540
    %v5607 = vadd.f32 %v5377, %v5545
    %v5608 = vadd.f32 %v5378, %v5550
    %v5609 = vadd.f32 %v5379, %v5555
    %v5610 = vadd.f32 %v5380, %v5560
    %v5611 = vadd.f32 %v5381, %v5565
    %v5612 = vadd.f32 %v5382, %v5570
    %v5613 = vadd.f32 %v5383, %v5575
    %v5614 = vadd.f32 %v5384, %v5580
    %v5615 = vadd.f32 %v5385, %v5585
    %v5616 = vadd.f32 %v5386, %v5590
    %v5617 = vadd.f32 %v5387, %v5595
    %v5618 = vadd.f32 %v5388, %v5600
    %s5619 = scalar_lea.vmem [#allocation3], 64
    %v5620 = vld [vmem:[%s5619] sm:$0xff]
    %v5621 = vld [vmem:[%s5619 + $0x10] sm:$0xff]
    %v5622 = vld [vmem:[%s5619 + $0x20] sm:$0xff]
    %v5623 = vld [vmem:[%s5619 + $0x30] sm:$0xff]
    %v5624 = vld [vmem:[%s5619 + $0x40] sm:$0xff]
    %v5625 = vld [vmem:[%s5619 + $0x50] sm:$0xff]
    %v5626 = vld [vmem:[%s5619 + $0x60] sm:$0xff]
    %v5627 = vld [vmem:[%s5619 + $0x70] sm:$0xff]
    %v5628 = vld [vmem:[%s5619 + $0xc0] sm:$0xff]
    %v5629 = vld [vmem:[%s5619 + $0xd0] sm:$0xff]
    %v5630 = vld [vmem:[%s5619 + $0xe0] sm:$0xff]
    %v5631 = vld [vmem:[%s5619 + $0xf0] sm:$0xff]
    %v5632 = vld [vmem:[%s5619 + $0x100] sm:$0xff]
    %v5633 = vld [vmem:[%s5619 + $0x110] sm:$0xff]
    %v5634 = vld [vmem:[%s5619 + $0x120] sm:$0xff]
    %v5635 = vld [vmem:[%s5619 + $0x130] sm:$0xff]
    %s5636 = scalar_lea.vmem %s3, 640
    %v5637 = vld [vmem:[%s5636] sm:$0xff]
    %v5638 = vld [vmem:[%s5636 + $0x8] sm:$0xff]
    %v5639 = vld [vmem:[%s5636 + $0x10] sm:$0xff]
    %v5640 = vld [vmem:[%s5636 + $0x18] sm:$0xff]
    %v5642 = vsel %vm199, %v5620, 0
    %v5645 = vsel %vm199, %v5621, 0
    %v5648 = vsel %vm199, %v5622, 0
    %v5651 = vsel %vm199, %v5623, 0
    %v5654 = vsel %vm199, %v5624, 0
    %v5657 = vsel %vm199, %v5625, 0
    %v5660 = vsel %vm199, %v5626, 0
    %v5663 = vsel %vm199, %v5627, 0
    %v5666 = vsel %vm199, %v5628, 0
    %v5669 = vsel %vm199, %v5629, 0
    %v5672 = vsel %vm199, %v5630, 0
    %v5675 = vsel %vm199, %v5631, 0
    %v5678 = vsel %vm199, %v5632, 0
    %v5681 = vsel %vm199, %v5633, 0
    %v5684 = vsel %vm199, %v5634, 0
    %v5687 = vsel %vm199, %v5635, 0
    %5689 = vmatprep.subr.mxu0 0.0
    %5690 = vmatpush1.msra.mxu0 %v5637
    %5691 = vmatprep.subr.mxu0 0.0
    %5692 = vmatpush1.msra.mxu0 %v5638
    %5693 = vmatprep.subr.mxu0 0.0
    %5694 = vmatpush1.msra.mxu0 %v5639
    %5695 = vmatprep.subr.mxu0 0.0
    %5696 = vmatpush1.msra.mxu0 %v5640
    %5697 = vmatprep.subr.mxu0 0.0
    %5698 = vmatpush1.msra.mxu0 0.0
    %5699 = vmatprep.subr.mxu0 0.0
    %5700 = vmatpush1.msra.mxu0 0.0
    %5701 = vmatprep.subr.mxu0 0.0
    %5702 = vmatpush1.msra.mxu0 0.0
    %5703 = vmatprep.subr.mxu0 0.0
    %5704 = vmatpush1.msra.mxu0 0.0
    %5705 = vmatprep.subr.mxu0 0.0
    %5706 = vmatpush1.msra.mxu0 0.0
    %5707 = vmatprep.subr.mxu0 0.0
    %5708 = vmatpush1.msra.mxu0 0.0
    %5709 = vmatprep.subr.mxu0 0.0
    %5710 = vmatpush1.msra.mxu0 0.0
    %5711 = vmatprep.subr.mxu0 0.0
    %5712 = vmatpush1.msra.mxu0 0.0
    %5713 = vmatprep.subr.mxu0 0.0
    %5714 = vmatpush1.msra.mxu0 0.0
    %5715 = vmatprep.subr.mxu0 0.0
    %5716 = vmatpush1.msra.mxu0 0.0
    %5717 = vmatprep.subr.mxu0 0.0
    %5718 = vmatpush1.msra.mxu0 0.0
    %5719 = vmatprep.subr.mxu0 0.0
    %5720 = vmatpush1.msra.mxu0 0.0
    %5721 = vmatprep.subr.mxu0 0.0
    %5722 = vmatpush1.msra.mxu0 0.0
    %5723 = vmatprep.subr.mxu0 0.0
    %5724 = vmatpush1.msra.mxu0 0.0
    %5725 = vmatprep.subr.mxu0 0.0
    %5726 = vmatpush1.msra.mxu0 0.0
    %5727 = vmatprep.subr.mxu0 0.0
    %5728 = vmatpush1.msra.mxu0 0.0
    %5729 = vmatprep.subr.mxu0 0.0
    %5730 = vmatpush1.msra.mxu0 0.0
    %5731 = vmatprep.subr.mxu0 0.0
    %5732 = vmatpush1.msra.mxu0 0.0
    %5733 = vmatprep.subr.mxu0 0.0
    %5734 = vmatpush1.msra.mxu0 0.0
    %5735 = vmatprep.subr.mxu0 0.0
    %5736 = vmatpush1.msra.mxu0 0.0
    %5737 = vmatprep.subr.mxu0 0.0
    %5738 = vmatpush1.msra.mxu0 0.0
    %5739 = vmatprep.subr.mxu0 0.0
    %5740 = vmatpush1.msra.mxu0 0.0
    %5741 = vmatprep.subr.mxu0 0.0
    %5742 = vmatpush1.msra.mxu0 0.0
    %5743 = vmatprep.subr.mxu0 0.0
    %5744 = vmatpush1.msra.mxu0 0.0
    %5745 = vmatprep.subr.mxu0 0.0
    %5746 = vmatpush1.msra.mxu0 0.0
    %5747 = vmatprep.subr.mxu0 0.0
    %5748 = vmatpush1.msra.mxu0 0.0
    %5749 = vmatprep.subr.mxu0 0.0
    %5750 = vmatpush1.msra.mxu0 0.0
    %5751 = vmatprep.subr.mxu0 0.0
    %5752 = vmatpush1.msra.mxu0 0.0
    %5753 = vmatprep.mubr.f32.mxu0 0.0
    %5754 = vmatmul.mubr.f32.gmra.mrb[0].mxu0 %v5642
    %v5755 = vpop.f32.mrb[0].mxu0
    %v5756 = vadd.f32 0.0, %v5755
    %v5757 = vpop.f32.mrb[0].mxu0
    %5758 = vmatprep.mubr.f32.mxu0 0.0
    %5759 = vmatmul.mubr.f32.gmra.mrb[0].mxu0 %v5645
    %v5760 = vpop.f32.mrb[0].mxu0
    %v5761 = vadd.f32 0.0, %v5760
    %v5762 = vpop.f32.mrb[0].mxu0
    %5763 = vmatprep.mubr.f32.mxu0 0.0
    %5764 = vmatmul.mubr.f32.gmra.mrb[0].mxu0 %v5648
    %v5765 = vpop.f32.mrb[0].mxu0
    %v5766 = vadd.f32 0.0, %v5765
    %v5767 = vpop.f32.mrb[0].mxu0
    %5768 = vmatprep.mubr.f32.mxu0 0.0
    %5769 = vmatmul.mubr.f32.gmra.mrb[0].mxu0 %v5651
    %v5770 = vpop.f32.mrb[0].mxu0
    %v5771 = vadd.f32 0.0, %v5770
    %v5772 = vpop.f32.mrb[0].mxu0
    %5773 = vmatprep.mubr.f32.mxu0 0.0
    %5774 = vmatmul.mubr.f32.gmra.mrb[0].mxu0 %v5654
    %v5775 = vpop.f32.mrb[0].mxu0
    %v5776 = vadd.f32 0.0, %v5775
    %v5777 = vpop.f32.mrb[0].mxu0
    %5778 = vmatprep.mubr.f32.mxu0 0.0
    %5779 = vmatmul.mubr.f32.gmra.mrb[0].mxu0 %v5657
    %v5780 = vpop.f32.mrb[0].mxu0
    %v5781 = vadd.f32 0.0, %v5780
    %v5782 = vpop.f32.mrb[0].mxu0
    %5783 = vmatprep.mubr.f32.mxu0 0.0
    %5784 = vmatmul.mubr.f32.gmra.mrb[0].mxu0 %v5660
    %v5785 = vpop.f32.mrb[0].mxu0
    %v5786 = vadd.f32 0.0, %v5785
    %v5787 = vpop.f32.mrb[0].mxu0
    %5788 = vmatprep.mubr.f32.mxu0 0.0
    %5789 = vmatmul.mubr.f32.gmra.mrb[0].mxu0 %v5663
    %v5790 = vpop.f32.mrb[0].mxu0
    %v5791 = vadd.f32 0.0, %v5790
    %v5792 = vpop.f32.mrb[0].mxu0
    %5793 = vmatprep.mubr.f32.mxu0 0.0
    %5794 = vmatmul.mubr.f32.gmra.mrb[0].mxu0 %v5666
    %v5795 = vpop.f32.mrb[0].mxu0
    %v5796 = vadd.f32 0.0, %v5795
    %v5797 = vpop.f32.mrb[0].mxu0
    %5798 = vmatprep.mubr.f32.mxu0 0.0
    %5799 = vmatmul.mubr.f32.gmra.mrb[0].mxu0 %v5669
    %v5800 = vpop.f32.mrb[0].mxu0
    %v5801 = vadd.f32 0.0, %v5800
    %v5802 = vpop.f32.mrb[0].mxu0
    %5803 = vmatprep.mubr.f32.mxu0 0.0
    %5804 = vmatmul.mubr.f32.gmra.mrb[0].mxu0 %v5672
    %v5805 = vpop.f32.mrb[0].mxu0
    %v5806 = vadd.f32 0.0, %v5805
    %v5807 = vpop.f32.mrb[0].mxu0
    %5808 = vmatprep.mubr.f32.mxu0 0.0
    %5809 = vmatmul.mubr.f32.gmra.mrb[0].mxu0 %v5675
    %v5810 = vpop.f32.mrb[0].mxu0
    %v5811 = vadd.f32 0.0, %v5810
    %v5812 = vpop.f32.mrb[0].mxu0
    %5813 = vmatprep.mubr.f32.mxu0 0.0
    %5814 = vmatmul.mubr.f32.gmra.mrb[0].mxu0 %v5678
    %v5815 = vpop.f32.mrb[0].mxu0
    %v5816 = vadd.f32 0.0, %v5815
    %v5817 = vpop.f32.mrb[0].mxu0
    %5818 = vmatprep.mubr.f32.mxu0 0.0
    %5819 = vmatmul.mubr.f32.gmra.mrb[0].mxu0 %v5681
    %v5820 = vpop.f32.mrb[0].mxu0
    %v5821 = vadd.f32 0.0, %v5820
    %v5822 = vpop.f32.mrb[0].mxu0
    %5823 = vmatprep.mubr.f32.mxu0 0.0
    %5824 = vmatmul.mubr.f32.gmra.mrb[0].mxu0 %v5684
    %v5825 = vpop.f32.mrb[0].mxu0
    %v5826 = vadd.f32 0.0, %v5825
    %v5827 = vpop.f32.mrb[0].mxu0
    %5828 = vmatprep.mubr.f32.mxu0 0.0
    %5829 = vmatmul.mubr.f32.gmra.mrb[0].mxu0 %v5687
    %v5830 = vpop.f32.mrb[0].mxu0
    %v5831 = vadd.f32 0.0, %v5830
    %v5832 = vpop.f32.mrb[0].mxu0
    %5833 = vdwg.mxu0
    %v5834 = vadd.f32 %v5603, %v5756
    %v5835 = vadd.f32 %v5604, %v5761
    %v5836 = vadd.f32 %v5605, %v5766
    %v5837 = vadd.f32 %v5606, %v5771
    %v5838 = vadd.f32 %v5607, %v5776
    %v5839 = vadd.f32 %v5608, %v5781
    %v5840 = vadd.f32 %v5609, %v5786
    %v5841 = vadd.f32 %v5610, %v5791
    %v5842 = vadd.f32 %v5611, %v5796
    %v5843 = vadd.f32 %v5612, %v5801
    %v5844 = vadd.f32 %v5613, %v5806
    %v5845 = vadd.f32 %v5614, %v5811
    %v5846 = vadd.f32 %v5615, %v5816
    %v5847 = vadd.f32 %v5616, %v5821
    %v5848 = vadd.f32 %v5617, %v5826
    %v5849 = vadd.f32 %v5618, %v5831
    %v5850 = vld [vmem:[%s5619 + $0x1] sm:$0xff]
    %v5851 = vld [vmem:[%s5619 + $0x11] sm:$0xff]
    %v5852 = vld [vmem:[%s5619 + $0x21] sm:$0xff]
    %v5853 = vld [vmem:[%s5619 + $0x31] sm:$0xff]
    %v5854 = vld [vmem:[%s5619 + $0x41] sm:$0xff]
    %v5855 = vld [vmem:[%s5619 + $0x51] sm:$0xff]
    %v5856 = vld [vmem:[%s5619 + $0x61] sm:$0xff]
    %v5857 = vld [vmem:[%s5619 + $0x71] sm:$0xff]
    %v5858 = vld [vmem:[%s5619 + $0xc1] sm:$0xff]
    %v5859 = vld [vmem:[%s5619 + $0xd1] sm:$0xff]
    %v5860 = vld [vmem:[%s5619 + $0xe1] sm:$0xff]
    %v5861 = vld [vmem:[%s5619 + $0xf1] sm:$0xff]
    %v5862 = vld [vmem:[%s5619 + $0x101] sm:$0xff]
    %v5863 = vld [vmem:[%s5619 + $0x111] sm:$0xff]
    %v5864 = vld [vmem:[%s5619 + $0x121] sm:$0xff]
    %v5865 = vld [vmem:[%s5619 + $0x131] sm:$0xff]
    %s5866 = scalar_lea.vmem %s3, 672
    %v5867 = vld [vmem:[%s5866] sm:$0xff]
    %v5868 = vld [vmem:[%s5866 + $0x8] sm:$0xff]
    %v5869 = vld [vmem:[%s5866 + $0x10] sm:$0xff]
    %v5870 = vld [vmem:[%s5866 + $0x18] sm:$0xff]
    %v5872 = vsel %vm199, %v5850, 0
    %v5875 = vsel %vm199, %v5851, 0
    %v5878 = vsel %vm199, %v5852, 0
    %v5881 = vsel %vm199, %v5853, 0
    %v5884 = vsel %vm199, %v5854, 0
    %v5887 = vsel %vm199, %v5855, 0
    %v5890 = vsel %vm199, %v5856, 0
    %v5893 = vsel %vm199, %v5857, 0
    %v5896 = vsel %vm199, %v5858, 0
    %v5899 = vsel %vm199, %v5859, 0
    %v5902 = vsel %vm199, %v5860, 0
    %v5905 = vsel %vm199, %v5861, 0
    %v5908 = vsel %vm199, %v5862, 0
    %v5911 = vsel %vm199, %v5863, 0
    %v5914 = vsel %vm199, %v5864, 0
    %v5917 = vsel %vm199, %v5865, 0
    %5919 = vmatprep.subr.mxu0 0.0
    %5920 = vmatpush1.msra.mxu0 %v5867
    %5921 = vmatprep.subr.mxu0 0.0
    %5922 = vmatpush1.msra.mxu0 %v5868
    %5923 = vmatprep.subr.mxu0 0.0
    %5924 = vmatpush1.msra.mxu0 %v5869
    %5925 = vmatprep.subr.mxu0 0.0
    %5926 = vmatpush1.msra.mxu0 %v5870
    %5927 = vmatprep.subr.mxu0 0.0
    %5928 = vmatpush1.msra.mxu0 0.0
    %5929 = vmatprep.subr.mxu0 0.0
    %5930 = vmatpush1.msra.mxu0 0.0
    %5931 = vmatprep.subr.mxu0 0.0
    %5932 = vmatpush1.msra.mxu0 0.0
    %5933 = vmatprep.subr.mxu0 0.0
    %5934 = vmatpush1.msra.mxu0 0.0
    %5935 = vmatprep.subr.mxu0 0.0
    %5936 = vmatpush1.msra.mxu0 0.0
    %5937 = vmatprep.subr.mxu0 0.0
    %5938 = vmatpush1.msra.mxu0 0.0
    %5939 = vmatprep.subr.mxu0 0.0
    %5940 = vmatpush1.msra.mxu0 0.0
    %5941 = vmatprep.subr.mxu0 0.0
    %5942 = vmatpush1.msra.mxu0 0.0
    %5943 = vmatprep.subr.mxu0 0.0
    %5944 = vmatpush1.msra.mxu0 0.0
    %5945 = vmatprep.subr.mxu0 0.0
    %5946 = vmatpush1.msra.mxu0 0.0
    %5947 = vmatprep.subr.mxu0 0.0
    %5948 = vmatpush1.msra.mxu0 0.0
    %5949 = vmatprep.subr.mxu0 0.0
    %5950 = vmatpush1.msra.mxu0 0.0
    %5951 = vmatprep.subr.mxu0 0.0
    %5952 = vmatpush1.msra.mxu0 0.0
    %5953 = vmatprep.subr.mxu0 0.0
    %5954 = vmatpush1.msra.mxu0 0.0
    %5955 = vmatprep.subr.mxu0 0.0
    %5956 = vmatpush1.msra.mxu0 0.0
    %5957 = vmatprep.subr.mxu0 0.0
    %5958 = vmatpush1.msra.mxu0 0.0
    %5959 = vmatprep.subr.mxu0 0.0
    %5960 = vmatpush1.msra.mxu0 0.0
    %5961 = vmatprep.subr.mxu0 0.0
    %5962 = vmatpush1.msra.mxu0 0.0
    %5963 = vmatprep.subr.mxu0 0.0
    %5964 = vmatpush1.msra.mxu0 0.0
    %5965 = vmatprep.subr.mxu0 0.0
    %5966 = vmatpush1.msra.mxu0 0.0
    %5967 = vmatprep.subr.mxu0 0.0
    %5968 = vmatpush1.msra.mxu0 0.0
    %5969 = vmatprep.subr.mxu0 0.0
    %5970 = vmatpush1.msra.mxu0 0.0
    %5971 = vmatprep.subr.mxu0 0.0
    %5972 = vmatpush1.msra.mxu0 0.0
    %5973 = vmatprep.subr.mxu0 0.0
    %5974 = vmatpush1.msra.mxu0 0.0
    %5975 = vmatprep.subr.mxu0 0.0
    %5976 = vmatpush1.msra.mxu0 0.0
    %5977 = vmatprep.subr.mxu0 0.0
    %5978 = vmatpush1.msra.mxu0 0.0
    %5979 = vmatprep.subr.mxu0 0.0
    %5980 = vmatpush1.msra.mxu0 0.0
    %5981 = vmatprep.subr.mxu0 0.0
    %5982 = vmatpush1.msra.mxu0 0.0
    %5983 = vmatprep.mubr.f32.mxu0 0.0
    %5984 = vmatmul.mubr.f32.gmra.mrb[0].mxu0 %v5872
    %v5985 = vpop.f32.mrb[0].mxu0
    %v5986 = vadd.f32 0.0, %v5985
    %v5987 = vpop.f32.mrb[0].mxu0
    %5988 = vmatprep.mubr.f32.mxu0 0.0
    %5989 = vmatmul.mubr.f32.gmra.mrb[0].mxu0 %v5875
    %v5990 = vpop.f32.mrb[0].mxu0
    %v5991 = vadd.f32 0.0, %v5990
    %v5992 = vpop.f32.mrb[0].mxu0
    %5993 = vmatprep.mubr.f32.mxu0 0.0
    %5994 = vmatmul.mubr.f32.gmra.mrb[0].mxu0 %v5878
    %v5995 = vpop.f32.mrb[0].mxu0
    %v5996 = vadd.f32 0.0, %v5995
    %v5997 = vpop.f32.mrb[0].mxu0
    %5998 = vmatprep.mubr.f32.mxu0 0.0
    %5999 = vmatmul.mubr.f32.gmra.mrb[0].mxu0 %v5881
    %v6000 = vpop.f32.mrb[0].mxu0
    %v6001 = vadd.f32 0.0, %v6000
    %v6002 = vpop.f32.mrb[0].mxu0
    %6003 = vmatprep.mubr.f32.mxu0 0.0
    %6004 = vmatmul.mubr.f32.gmra.mrb[0].mxu0 %v5884
    %v6005 = vpop.f32.mrb[0].mxu0
    %v6006 = vadd.f32 0.0, %v6005
    %v6007 = vpop.f32.mrb[0].mxu0
    %6008 = vmatprep.mubr.f32.mxu0 0.0
    %6009 = vmatmul.mubr.f32.gmra.mrb[0].mxu0 %v5887
    %v6010 = vpop.f32.mrb[0].mxu0
    %v6011 = vadd.f32 0.0, %v6010
    %v6012 = vpop.f32.mrb[0].mxu0
    %6013 = vmatprep.mubr.f32.mxu0 0.0
    %6014 = vmatmul.mubr.f32.gmra.mrb[0].mxu0 %v5890
    %v6015 = vpop.f32.mrb[0].mxu0
    %v6016 = vadd.f32 0.0, %v6015
    %v6017 = vpop.f32.mrb[0].mxu0
    %6018 = vmatprep.mubr.f32.mxu0 0.0
    %6019 = vmatmul.mubr.f32.gmra.mrb[0].mxu0 %v5893
    %v6020 = vpop.f32.mrb[0].mxu0
    %v6021 = vadd.f32 0.0, %v6020
    %v6022 = vpop.f32.mrb[0].mxu0
    %6023 = vmatprep.mubr.f32.mxu0 0.0
    %6024 = vmatmul.mubr.f32.gmra.mrb[0].mxu0 %v5896
    %v6025 = vpop.f32.mrb[0].mxu0
    %v6026 = vadd.f32 0.0, %v6025
    %v6027 = vpop.f32.mrb[0].mxu0
    %6028 = vmatprep.mubr.f32.mxu0 0.0
    %6029 = vmatmul.mubr.f32.gmra.mrb[0].mxu0 %v5899
    %v6030 = vpop.f32.mrb[0].mxu0
    %v6031 = vadd.f32 0.0, %v6030
    %v6032 = vpop.f32.mrb[0].mxu0
    %6033 = vmatprep.mubr.f32.mxu0 0.0
    %6034 = vmatmul.mubr.f32.gmra.mrb[0].mxu0 %v5902
    %v6035 = vpop.f32.mrb[0].mxu0
    %v6036 = vadd.f32 0.0, %v6035
    %v6037 = vpop.f32.mrb[0].mxu0
    %6038 = vmatprep.mubr.f32.mxu0 0.0
    %6039 = vmatmul.mubr.f32.gmra.mrb[0].mxu0 %v5905
    %v6040 = vpop.f32.mrb[0].mxu0
    %v6041 = vadd.f32 0.0, %v6040
    %v6042 = vpop.f32.mrb[0].mxu0
    %6043 = vmatprep.mubr.f32.mxu0 0.0
    %6044 = vmatmul.mubr.f32.gmra.mrb[0].mxu0 %v5908
    %v6045 = vpop.f32.mrb[0].mxu0
    %v6046 = vadd.f32 0.0, %v6045
    %v6047 = vpop.f32.mrb[0].mxu0
    %6048 = vmatprep.mubr.f32.mxu0 0.0
    %6049 = vmatmul.mubr.f32.gmra.mrb[0].mxu0 %v5911
    %v6050 = vpop.f32.mrb[0].mxu0
    %v6051 = vadd.f32 0.0, %v6050
    %v6052 = vpop.f32.mrb[0].mxu0
    %6053 = vmatprep.mubr.f32.mxu0 0.0
    %6054 = vmatmul.mubr.f32.gmra.mrb[0].mxu0 %v5914
    %v6055 = vpop.f32.mrb[0].mxu0
    %v6056 = vadd.f32 0.0, %v6055
    %v6057 = vpop.f32.mrb[0].mxu0
    %6058 = vmatprep.mubr.f32.mxu0 0.0
    %6059 = vmatmul.mubr.f32.gmra.mrb[0].mxu0 %v5917
    %v6060 = vpop.f32.mrb[0].mxu0
    %v6061 = vadd.f32 0.0, %v6060
    %v6062 = vpop.f32.mrb[0].mxu0
    %6063 = vdwg.mxu0
    %v6064 = vadd.f32 %v5834, %v5986
    %v6065 = vadd.f32 %v5835, %v5991
    %v6066 = vadd.f32 %v5836, %v5996
    %v6067 = vadd.f32 %v5837, %v6001
    %v6068 = vadd.f32 %v5838, %v6006
    %v6069 = vadd.f32 %v5839, %v6011
    %v6070 = vadd.f32 %v5840, %v6016
    %v6071 = vadd.f32 %v5841, %v6021
    %v6072 = vadd.f32 %v5842, %v6026
    %v6073 = vadd.f32 %v5843, %v6031
    %v6074 = vadd.f32 %v5844, %v6036
    %v6075 = vadd.f32 %v5845, %v6041
    %v6076 = vadd.f32 %v5846, %v6046
    %v6077 = vadd.f32 %v5847, %v6051
    %v6078 = vadd.f32 %v5848, %v6056
    %v6079 = vadd.f32 %v5849, %v6061
    %v6080 = vld [vmem:[%s5619 + $0x2] sm:$0xff]
    %v6081 = vld [vmem:[%s5619 + $0x12] sm:$0xff]
    %v6082 = vld [vmem:[%s5619 + $0x22] sm:$0xff]
    %v6083 = vld [vmem:[%s5619 + $0x32] sm:$0xff]
    %v6084 = vld [vmem:[%s5619 + $0x42] sm:$0xff]
    %v6085 = vld [vmem:[%s5619 + $0x52] sm:$0xff]
    %v6086 = vld [vmem:[%s5619 + $0x62] sm:$0xff]
    %v6087 = vld [vmem:[%s5619 + $0x72] sm:$0xff]
    %v6088 = vld [vmem:[%s5619 + $0xc2] sm:$0xff]
    %v6089 = vld [vmem:[%s5619 + $0xd2] sm:$0xff]
    %v6090 = vld [vmem:[%s5619 + $0xe2] sm:$0xff]
    %v6091 = vld [vmem:[%s5619 + $0xf2] sm:$0xff]
    %v6092 = vld [vmem:[%s5619 + $0x102] sm:$0xff]
    %v6093 = vld [vmem:[%s5619 + $0x112] sm:$0xff]
    %v6094 = vld [vmem:[%s5619 + $0x122] sm:$0xff]
    %v6095 = vld [vmem:[%s5619 + $0x132] sm:$0xff]
    %s6096 = scalar_lea.vmem %s3, 704
    %v6097 = vld [vmem:[%s6096] sm:$0xff]
    %v6098 = vld [vmem:[%s6096 + $0x8] sm:$0xff]
    %v6099 = vld [vmem:[%s6096 + $0x10] sm:$0xff]
    %v6100 = vld [vmem:[%s6096 + $0x18] sm:$0xff]
    %v6102 = vsel %vm199, %v6080, 0
    %v6105 = vsel %vm199, %v6081, 0
    %v6108 = vsel %vm199, %v6082, 0
    %v6111 = vsel %vm199, %v6083, 0
    %v6114 = vsel %vm199, %v6084, 0
    %v6117 = vsel %vm199, %v6085, 0
    %v6120 = vsel %vm199, %v6086, 0
    %v6123 = vsel %vm199, %v6087, 0
    %v6126 = vsel %vm199, %v6088, 0
    %v6129 = vsel %vm199, %v6089, 0
    %v6132 = vsel %vm199, %v6090, 0
    %v6135 = vsel %vm199, %v6091, 0
    %v6138 = vsel %vm199, %v6092, 0
    %v6141 = vsel %vm199, %v6093, 0
    %v6144 = vsel %vm199, %v6094, 0
    %v6147 = vsel %vm199, %v6095, 0
    %6149 = vmatprep.subr.mxu0 0.0
    %6150 = vmatpush1.msra.mxu0 %v6097
    %6151 = vmatprep.subr.mxu0 0.0
    %6152 = vmatpush1.msra.mxu0 %v6098
    %6153 = vmatprep.subr.mxu0 0.0
    %6154 = vmatpush1.msra.mxu0 %v6099
    %6155 = vmatprep.subr.mxu0 0.0
    %6156 = vmatpush1.msra.mxu0 %v6100
    %6157 = vmatprep.subr.mxu0 0.0
    %6158 = vmatpush1.msra.mxu0 0.0
    %6159 = vmatprep.subr.mxu0 0.0
    %6160 = vmatpush1.msra.mxu0 0.0
    %6161 = vmatprep.subr.mxu0 0.0
    %6162 = vmatpush1.msra.mxu0 0.0
    %6163 = vmatprep.subr.mxu0 0.0
    %6164 = vmatpush1.msra.mxu0 0.0
    %6165 = vmatprep.subr.mxu0 0.0
    %6166 = vmatpush1.msra.mxu0 0.0
    %6167 = vmatprep.subr.mxu0 0.0
    %6168 = vmatpush1.msra.mxu0 0.0
    %6169 = vmatprep.subr.mxu0 0.0
    %6170 = vmatpush1.msra.mxu0 0.0
    %6171 = vmatprep.subr.mxu0 0.0
    %6172 = vmatpush1.msra.mxu0 0.0
    %6173 = vmatprep.subr.mxu0 0.0
    %6174 = vmatpush1.msra.mxu0 0.0
    %6175 = vmatprep.subr.mxu0 0.0
    %6176 = vmatpush1.msra.mxu0 0.0
    %6177 = vmatprep.subr.mxu0 0.0
    %6178 = vmatpush1.msra.mxu0 0.0
    %6179 = vmatprep.subr.mxu0 0.0
    %6180 = vmatpush1.msra.mxu0 0.0
    %6181 = vmatprep.subr.mxu0 0.0
    %6182 = vmatpush1.msra.mxu0 0.0
    %6183 = vmatprep.subr.mxu0 0.0
    %6184 = vmatpush1.msra.mxu0 0.0
    %6185 = vmatprep.subr.mxu0 0.0
    %6186 = vmatpush1.msra.mxu0 0.0
    %6187 = vmatprep.subr.mxu0 0.0
    %6188 = vmatpush1.msra.mxu0 0.0
    %6189 = vmatprep.subr.mxu0 0.0
    %6190 = vmatpush1.msra.mxu0 0.0
    %6191 = vmatprep.subr.mxu0 0.0
    %6192 = vmatpush1.msra.mxu0 0.0
    %6193 = vmatprep.subr.mxu0 0.0
    %6194 = vmatpush1.msra.mxu0 0.0
    %6195 = vmatprep.subr.mxu0 0.0
    %6196 = vmatpush1.msra.mxu0 0.0
    %6197 = vmatprep.subr.mxu0 0.0
    %6198 = vmatpush1.msra.mxu0 0.0
    %6199 = vmatprep.subr.mxu0 0.0
    %6200 = vmatpush1.msra.mxu0 0.0
    %6201 = vmatprep.subr.mxu0 0.0
    %6202 = vmatpush1.msra.mxu0 0.0
    %6203 = vmatprep.subr.mxu0 0.0
    %6204 = vmatpush1.msra.mxu0 0.0
    %6205 = vmatprep.subr.mxu0 0.0
    %6206 = vmatpush1.msra.mxu0 0.0
    %6207 = vmatprep.subr.mxu0 0.0
    %6208 = vmatpush1.msra.mxu0 0.0
    %6209 = vmatprep.subr.mxu0 0.0
    %6210 = vmatpush1.msra.mxu0 0.0
    %6211 = vmatprep.subr.mxu0 0.0
    %6212 = vmatpush1.msra.mxu0 0.0
    %6213 = vmatprep.mubr.f32.mxu0 0.0
    %6214 = vmatmul.mubr.f32.gmra.mrb[0].mxu0 %v6102
    %v6215 = vpop.f32.mrb[0].mxu0
    %v6216 = vadd.f32 0.0, %v6215
    %v6217 = vpop.f32.mrb[0].mxu0
    %6218 = vmatprep.mubr.f32.mxu0 0.0
    %6219 = vmatmul.mubr.f32.gmra.mrb[0].mxu0 %v6105
    %v6220 = vpop.f32.mrb[0].mxu0
    %v6221 = vadd.f32 0.0, %v6220
    %v6222 = vpop.f32.mrb[0].mxu0
    %6223 = vmatprep.mubr.f32.mxu0 0.0
    %6224 = vmatmul.mubr.f32.gmra.mrb[0].mxu0 %v6108
    %v6225 = vpop.f32.mrb[0].mxu0
    %v6226 = vadd.f32 0.0, %v6225
    %v6227 = vpop.f32.mrb[0].mxu0
    %6228 = vmatprep.mubr.f32.mxu0 0.0
    %6229 = vmatmul.mubr.f32.gmra.mrb[0].mxu0 %v6111
    %v6230 = vpop.f32.mrb[0].mxu0
    %v6231 = vadd.f32 0.0, %v6230
    %v6232 = vpop.f32.mrb[0].mxu0
    %6233 = vmatprep.mubr.f32.mxu0 0.0
    %6234 = vmatmul.mubr.f32.gmra.mrb[0].mxu0 %v6114
    %v6235 = vpop.f32.mrb[0].mxu0
    %v6236 = vadd.f32 0.0, %v6235
    %v6237 = vpop.f32.mrb[0].mxu0
    %6238 = vmatprep.mubr.f32.mxu0 0.0
    %6239 = vmatmul.mubr.f32.gmra.mrb[0].mxu0 %v6117
    %v6240 = vpop.f32.mrb[0].mxu0
    %v6241 = vadd.f32 0.0, %v6240
    %v6242 = vpop.f32.mrb[0].mxu0
    %6243 = vmatprep.mubr.f32.mxu0 0.0
    %6244 = vmatmul.mubr.f32.gmra.mrb[0].mxu0 %v6120
    %v6245 = vpop.f32.mrb[0].mxu0
    %v6246 = vadd.f32 0.0, %v6245
    %v6247 = vpop.f32.mrb[0].mxu0
    %6248 = vmatprep.mubr.f32.mxu0 0.0
    %6249 = vmatmul.mubr.f32.gmra.mrb[0].mxu0 %v6123
    %v6250 = vpop.f32.mrb[0].mxu0
    %v6251 = vadd.f32 0.0, %v6250
    %v6252 = vpop.f32.mrb[0].mxu0
    %6253 = vmatprep.mubr.f32.mxu0 0.0
    %6254 = vmatmul.mubr.f32.gmra.mrb[0].mxu0 %v6126
    %v6255 = vpop.f32.mrb[0].mxu0
    %v6256 = vadd.f32 0.0, %v6255
    %v6257 = vpop.f32.mrb[0].mxu0
    %6258 = vmatprep.mubr.f32.mxu0 0.0
    %6259 = vmatmul.mubr.f32.gmra.mrb[0].mxu0 %v6129
    %v6260 = vpop.f32.mrb[0].mxu0
    %v6261 = vadd.f32 0.0, %v6260
    %v6262 = vpop.f32.mrb[0].mxu0
    %6263 = vmatprep.mubr.f32.mxu0 0.0
    %6264 = vmatmul.mubr.f32.gmra.mrb[0].mxu0 %v6132
    %v6265 = vpop.f32.mrb[0].mxu0
    %v6266 = vadd.f32 0.0, %v6265
    %v6267 = vpop.f32.mrb[0].mxu0
    %6268 = vmatprep.mubr.f32.mxu0 0.0
    %6269 = vmatmul.mubr.f32.gmra.mrb[0].mxu0 %v6135
    %v6270 = vpop.f32.mrb[0].mxu0
    %v6271 = vadd.f32 0.0, %v6270
    %v6272 = vpop.f32.mrb[0].mxu0
    %6273 = vmatprep.mubr.f32.mxu0 0.0
    %6274 = vmatmul.mubr.f32.gmra.mrb[0].mxu0 %v6138
    %v6275 = vpop.f32.mrb[0].mxu0
    %v6276 = vadd.f32 0.0, %v6275
    %v6277 = vpop.f32.mrb[0].mxu0
    %6278 = vmatprep.mubr.f32.mxu0 0.0
    %6279 = vmatmul.mubr.f32.gmra.mrb[0].mxu0 %v6141
    %v6280 = vpop.f32.mrb[0].mxu0
    %v6281 = vadd.f32 0.0, %v6280
    %v6282 = vpop.f32.mrb[0].mxu0
    %6283 = vmatprep.mubr.f32.mxu0 0.0
    %6284 = vmatmul.mubr.f32.gmra.mrb[0].mxu0 %v6144
    %v6285 = vpop.f32.mrb[0].mxu0
    %v6286 = vadd.f32 0.0, %v6285
    %v6287 = vpop.f32.mrb[0].mxu0
    %6288 = vmatprep.mubr.f32.mxu0 0.0
    %6289 = vmatmul.mubr.f32.gmra.mrb[0].mxu0 %v6147
    %v6290 = vpop.f32.mrb[0].mxu0
    %v6291 = vadd.f32 0.0, %v6290
    %v6292 = vpop.f32.mrb[0].mxu0
    %6293 = vdwg.mxu0
    %v6294 = vadd.f32 %v6064, %v6216
    %v6295 = vadd.f32 %v6065, %v6221
    %v6296 = vadd.f32 %v6066, %v6226
    %v6297 = vadd.f32 %v6067, %v6231
    %v6298 = vadd.f32 %v6068, %v6236
    %v6299 = vadd.f32 %v6069, %v6241
    %v6300 = vadd.f32 %v6070, %v6246
    %v6301 = vadd.f32 %v6071, %v6251
    %v6302 = vadd.f32 %v6072, %v6256
    %v6303 = vadd.f32 %v6073, %v6261
    %v6304 = vadd.f32 %v6074, %v6266
    %v6305 = vadd.f32 %v6075, %v6271
    %v6306 = vadd.f32 %v6076, %v6276
    %v6307 = vadd.f32 %v6077, %v6281
    %v6308 = vadd.f32 %v6078, %v6286
    %v6309 = vadd.f32 %v6079, %v6291
    %v6310 = vld [vmem:[%s5619 + $0x3] sm:$0xff]
    %v6311 = vld [vmem:[%s5619 + $0x13] sm:$0xff]
    %v6312 = vld [vmem:[%s5619 + $0x23] sm:$0xff]
    %v6313 = vld [vmem:[%s5619 + $0x33] sm:$0xff]
    %v6314 = vld [vmem:[%s5619 + $0x43] sm:$0xff]
    %v6315 = vld [vmem:[%s5619 + $0x53] sm:$0xff]
    %v6316 = vld [vmem:[%s5619 + $0x63] sm:$0xff]
    %v6317 = vld [vmem:[%s5619 + $0x73] sm:$0xff]
    %v6318 = vld [vmem:[%s5619 + $0xc3] sm:$0xff]
    %v6319 = vld [vmem:[%s5619 + $0xd3] sm:$0xff]
    %v6320 = vld [vmem:[%s5619 + $0xe3] sm:$0xff]
    %v6321 = vld [vmem:[%s5619 + $0xf3] sm:$0xff]
    %v6322 = vld [vmem:[%s5619 + $0x103] sm:$0xff]
    %v6323 = vld [vmem:[%s5619 + $0x113] sm:$0xff]
    %v6324 = vld [vmem:[%s5619 + $0x123] sm:$0xff]
    %v6325 = vld [vmem:[%s5619 + $0x133] sm:$0xff]
    %s6326 = scalar_lea.vmem %s3, 736
    %v6327 = vld [vmem:[%s6326] sm:$0xff]
    %v6328 = vld [vmem:[%s6326 + $0x8] sm:$0xff]
    %v6329 = vld [vmem:[%s6326 + $0x10] sm:$0xff]
    %v6330 = vld [vmem:[%s6326 + $0x18] sm:$0xff]
    %v6332 = vsel %vm199, %v6310, 0
    %v6335 = vsel %vm199, %v6311, 0
    %v6338 = vsel %vm199, %v6312, 0
    %v6341 = vsel %vm199, %v6313, 0
    %v6344 = vsel %vm199, %v6314, 0
    %v6347 = vsel %vm199, %v6315, 0
    %v6350 = vsel %vm199, %v6316, 0
    %v6353 = vsel %vm199, %v6317, 0
    %v6356 = vsel %vm199, %v6318, 0
    %v6359 = vsel %vm199, %v6319, 0
    %v6362 = vsel %vm199, %v6320, 0
    %v6365 = vsel %vm199, %v6321, 0
    %v6368 = vsel %vm199, %v6322, 0
    %v6371 = vsel %vm199, %v6323, 0
    %v6374 = vsel %vm199, %v6324, 0
    %v6377 = vsel %vm199, %v6325, 0
    %6379 = vmatprep.subr.mxu0 0.0
    %6380 = vmatpush1.msra.mxu0 %v6327
    %6381 = vmatprep.subr.mxu0 0.0
    %6382 = vmatpush1.msra.mxu0 %v6328
    %6383 = vmatprep.subr.mxu0 0.0
    %6384 = vmatpush1.msra.mxu0 %v6329
    %6385 = vmatprep.subr.mxu0 0.0
    %6386 = vmatpush1.msra.mxu0 %v6330
    %6387 = vmatprep.subr.mxu0 0.0
    %6388 = vmatpush1.msra.mxu0 0.0
    %6389 = vmatprep.subr.mxu0 0.0
    %6390 = vmatpush1.msra.mxu0 0.0
    %6391 = vmatprep.subr.mxu0 0.0
    %6392 = vmatpush1.msra.mxu0 0.0
    %6393 = vmatprep.subr.mxu0 0.0
    %6394 = vmatpush1.msra.mxu0 0.0
    %6395 = vmatprep.subr.mxu0 0.0
    %6396 = vmatpush1.msra.mxu0 0.0
    %6397 = vmatprep.subr.mxu0 0.0
    %6398 = vmatpush1.msra.mxu0 0.0
    %6399 = vmatprep.subr.mxu0 0.0
    %6400 = vmatpush1.msra.mxu0 0.0
    %6401 = vmatprep.subr.mxu0 0.0
    %6402 = vmatpush1.msra.mxu0 0.0
    %6403 = vmatprep.subr.mxu0 0.0
    %6404 = vmatpush1.msra.mxu0 0.0
    %6405 = vmatprep.subr.mxu0 0.0
    %6406 = vmatpush1.msra.mxu0 0.0
    %6407 = vmatprep.subr.mxu0 0.0
    %6408 = vmatpush1.msra.mxu0 0.0
    %6409 = vmatprep.subr.mxu0 0.0
    %6410 = vmatpush1.msra.mxu0 0.0
    %6411 = vmatprep.subr.mxu0 0.0
    %6412 = vmatpush1.msra.mxu0 0.0
    %6413 = vmatprep.subr.mxu0 0.0
    %6414 = vmatpush1.msra.mxu0 0.0
    %6415 = vmatprep.subr.mxu0 0.0
    %6416 = vmatpush1.msra.mxu0 0.0
    %6417 = vmatprep.subr.mxu0 0.0
    %6418 = vmatpush1.msra.mxu0 0.0
    %6419 = vmatprep.subr.mxu0 0.0
    %6420 = vmatpush1.msra.mxu0 0.0
    %6421 = vmatprep.subr.mxu0 0.0
    %6422 = vmatpush1.msra.mxu0 0.0
    %6423 = vmatprep.subr.mxu0 0.0
    %6424 = vmatpush1.msra.mxu0 0.0
    %6425 = vmatprep.subr.mxu0 0.0
    %6426 = vmatpush1.msra.mxu0 0.0
    %6427 = vmatprep.subr.mxu0 0.0
    %6428 = vmatpush1.msra.mxu0 0.0
    %6429 = vmatprep.subr.mxu0 0.0
    %6430 = vmatpush1.msra.mxu0 0.0
    %6431 = vmatprep.subr.mxu0 0.0
    %6432 = vmatpush1.msra.mxu0 0.0
    %6433 = vmatprep.subr.mxu0 0.0
    %6434 = vmatpush1.msra.mxu0 0.0
    %6435 = vmatprep.subr.mxu0 0.0
    %6436 = vmatpush1.msra.mxu0 0.0
    %6437 = vmatprep.subr.mxu0 0.0
    %6438 = vmatpush1.msra.mxu0 0.0
    %6439 = vmatprep.subr.mxu0 0.0
    %6440 = vmatpush1.msra.mxu0 0.0
    %6441 = vmatprep.subr.mxu0 0.0
    %6442 = vmatpush1.msra.mxu0 0.0
    %6443 = vmatprep.mubr.f32.mxu0 0.0
    %6444 = vmatmul.mubr.f32.gmra.mrb[0].mxu0 %v6332
    %v6445 = vpop.f32.mrb[0].mxu0
    %v6446 = vadd.f32 0.0, %v6445
    %v6447 = vpop.f32.mrb[0].mxu0
    %6448 = vmatprep.mubr.f32.mxu0 0.0
    %6449 = vmatmul.mubr.f32.gmra.mrb[0].mxu0 %v6335
    %v6450 = vpop.f32.mrb[0].mxu0
    %v6451 = vadd.f32 0.0, %v6450
    %v6452 = vpop.f32.mrb[0].mxu0
    %6453 = vmatprep.mubr.f32.mxu0 0.0
    %6454 = vmatmul.mubr.f32.gmra.mrb[0].mxu0 %v6338
    %v6455 = vpop.f32.mrb[0].mxu0
    %v6456 = vadd.f32 0.0, %v6455
    %v6457 = vpop.f32.mrb[0].mxu0
    %6458 = vmatprep.mubr.f32.mxu0 0.0
    %6459 = vmatmul.mubr.f32.gmra.mrb[0].mxu0 %v6341
    %v6460 = vpop.f32.mrb[0].mxu0
    %v6461 = vadd.f32 0.0, %v6460
    %v6462 = vpop.f32.mrb[0].mxu0
    %6463 = vmatprep.mubr.f32.mxu0 0.0
    %6464 = vmatmul.mubr.f32.gmra.mrb[0].mxu0 %v6344
    %v6465 = vpop.f32.mrb[0].mxu0
    %v6466 = vadd.f32 0.0, %v6465
    %v6467 = vpop.f32.mrb[0].mxu0
    %6468 = vmatprep.mubr.f32.mxu0 0.0
    %6469 = vmatmul.mubr.f32.gmra.mrb[0].mxu0 %v6347
    %v6470 = vpop.f32.mrb[0].mxu0
    %v6471 = vadd.f32 0.0, %v6470
    %v6472 = vpop.f32.mrb[0].mxu0
    %6473 = vmatprep.mubr.f32.mxu0 0.0
    %6474 = vmatmul.mubr.f32.gmra.mrb[0].mxu0 %v6350
    %v6475 = vpop.f32.mrb[0].mxu0
    %v6476 = vadd.f32 0.0, %v6475
    %v6477 = vpop.f32.mrb[0].mxu0
    %6478 = vmatprep.mubr.f32.mxu0 0.0
    %6479 = vmatmul.mubr.f32.gmra.mrb[0].mxu0 %v6353
    %v6480 = vpop.f32.mrb[0].mxu0
    %v6481 = vadd.f32 0.0, %v6480
    %v6482 = vpop.f32.mrb[0].mxu0
    %6483 = vmatprep.mubr.f32.mxu0 0.0
    %6484 = vmatmul.mubr.f32.gmra.mrb[0].mxu0 %v6356
    %v6485 = vpop.f32.mrb[0].mxu0
    %v6486 = vadd.f32 0.0, %v6485
    %v6487 = vpop.f32.mrb[0].mxu0
    %6488 = vmatprep.mubr.f32.mxu0 0.0
    %6489 = vmatmul.mubr.f32.gmra.mrb[0].mxu0 %v6359
    %v6490 = vpop.f32.mrb[0].mxu0
    %v6491 = vadd.f32 0.0, %v6490
    %v6492 = vpop.f32.mrb[0].mxu0
    %6493 = vmatprep.mubr.f32.mxu0 0.0
    %6494 = vmatmul.mubr.f32.gmra.mrb[0].mxu0 %v6362
    %v6495 = vpop.f32.mrb[0].mxu0
    %v6496 = vadd.f32 0.0, %v6495
    %v6497 = vpop.f32.mrb[0].mxu0
    %6498 = vmatprep.mubr.f32.mxu0 0.0
    %6499 = vmatmul.mubr.f32.gmra.mrb[0].mxu0 %v6365
    %v6500 = vpop.f32.mrb[0].mxu0
    %v6501 = vadd.f32 0.0, %v6500
    %v6502 = vpop.f32.mrb[0].mxu0
    %6503 = vmatprep.mubr.f32.mxu0 0.0
    %6504 = vmatmul.mubr.f32.gmra.mrb[0].mxu0 %v6368
    %v6505 = vpop.f32.mrb[0].mxu0
    %v6506 = vadd.f32 0.0, %v6505
    %v6507 = vpop.f32.mrb[0].mxu0
    %6508 = vmatprep.mubr.f32.mxu0 0.0
    %6509 = vmatmul.mubr.f32.gmra.mrb[0].mxu0 %v6371
    %v6510 = vpop.f32.mrb[0].mxu0
    %v6511 = vadd.f32 0.0, %v6510
    %v6512 = vpop.f32.mrb[0].mxu0
    %6513 = vmatprep.mubr.f32.mxu0 0.0
    %6514 = vmatmul.mubr.f32.gmra.mrb[0].mxu0 %v6374
    %v6515 = vpop.f32.mrb[0].mxu0
    %v6516 = vadd.f32 0.0, %v6515
    %v6517 = vpop.f32.mrb[0].mxu0
    %6518 = vmatprep.mubr.f32.mxu0 0.0
    %6519 = vmatmul.mubr.f32.gmra.mrb[0].mxu0 %v6377
    %v6520 = vpop.f32.mrb[0].mxu0
    %v6521 = vadd.f32 0.0, %v6520
    %v6522 = vpop.f32.mrb[0].mxu0
    %6523 = vdwg.mxu0
    %v6524 = vadd.f32 %v6294, %v6446
    %v6525 = vadd.f32 %v6295, %v6451
    %v6526 = vadd.f32 %v6296, %v6456
    %v6527 = vadd.f32 %v6297, %v6461
    %v6528 = vadd.f32 %v6298, %v6466
    %v6529 = vadd.f32 %v6299, %v6471
    %v6530 = vadd.f32 %v6300, %v6476
    %v6531 = vadd.f32 %v6301, %v6481
    %v6532 = vadd.f32 %v6302, %v6486
    %v6533 = vadd.f32 %v6303, %v6491
    %v6534 = vadd.f32 %v6304, %v6496
    %v6535 = vadd.f32 %v6305, %v6501
    %v6536 = vadd.f32 %v6306, %v6506
    %v6537 = vadd.f32 %v6307, %v6511
    %v6538 = vadd.f32 %v6308, %v6516
    %v6539 = vadd.f32 %v6309, %v6521
    %v6540 = vld [vmem:[%s5619 + $0x4] sm:$0xff]
    %v6541 = vld [vmem:[%s5619 + $0x14] sm:$0xff]
    %v6542 = vld [vmem:[%s5619 + $0x24] sm:$0xff]
    %v6543 = vld [vmem:[%s5619 + $0x34] sm:$0xff]
    %v6544 = vld [vmem:[%s5619 + $0x44] sm:$0xff]
    %v6545 = vld [vmem:[%s5619 + $0x54] sm:$0xff]
    %v6546 = vld [vmem:[%s5619 + $0x64] sm:$0xff]
    %v6547 = vld [vmem:[%s5619 + $0x74] sm:$0xff]
    %v6548 = vld [vmem:[%s5619 + $0xc4] sm:$0xff]
    %v6549 = vld [vmem:[%s5619 + $0xd4] sm:$0xff]
    %v6550 = vld [vmem:[%s5619 + $0xe4] sm:$0xff]
    %v6551 = vld [vmem:[%s5619 + $0xf4] sm:$0xff]
    %v6552 = vld [vmem:[%s5619 + $0x104] sm:$0xff]
    %v6553 = vld [vmem:[%s5619 + $0x114] sm:$0xff]
    %v6554 = vld [vmem:[%s5619 + $0x124] sm:$0xff]
    %v6555 = vld [vmem:[%s5619 + $0x134] sm:$0xff]
    %s6556 = scalar_lea.vmem %s3, 768
    %v6557 = vld [vmem:[%s6556] sm:$0xff]
    %v6558 = vld [vmem:[%s6556 + $0x8] sm:$0xff]
    %v6559 = vld [vmem:[%s6556 + $0x10] sm:$0xff]
    %v6560 = vld [vmem:[%s6556 + $0x18] sm:$0xff]
    %v6562 = vsel %vm199, %v6540, 0
    %v6565 = vsel %vm199, %v6541, 0
    %v6568 = vsel %vm199, %v6542, 0
    %v6571 = vsel %vm199, %v6543, 0
    %v6574 = vsel %vm199, %v6544, 0
    %v6577 = vsel %vm199, %v6545, 0
    %v6580 = vsel %vm199, %v6546, 0
    %v6583 = vsel %vm199, %v6547, 0
    %v6586 = vsel %vm199, %v6548, 0
    %v6589 = vsel %vm199, %v6549, 0
    %v6592 = vsel %vm199, %v6550, 0
    %v6595 = vsel %vm199, %v6551, 0
    %v6598 = vsel %vm199, %v6552, 0
    %v6601 = vsel %vm199, %v6553, 0
    %v6604 = vsel %vm199, %v6554, 0
    %v6607 = vsel %vm199, %v6555, 0
    %6609 = vmatprep.subr.mxu0 0.0
    %6610 = vmatpush1.msra.mxu0 %v6557
    %6611 = vmatprep.subr.mxu0 0.0
    %6612 = vmatpush1.msra.mxu0 %v6558
    %6613 = vmatprep.subr.mxu0 0.0
    %6614 = vmatpush1.msra.mxu0 %v6559
    %6615 = vmatprep.subr.mxu0 0.0
    %6616 = vmatpush1.msra.mxu0 %v6560
    %6617 = vmatprep.subr.mxu0 0.0
    %6618 = vmatpush1.msra.mxu0 0.0
    %6619 = vmatprep.subr.mxu0 0.0
    %6620 = vmatpush1.msra.mxu0 0.0
    %6621 = vmatprep.subr.mxu0 0.0
    %6622 = vmatpush1.msra.mxu0 0.0
    %6623 = vmatprep.subr.mxu0 0.0
    %6624 = vmatpush1.msra.mxu0 0.0
    %6625 = vmatprep.subr.mxu0 0.0
    %6626 = vmatpush1.msra.mxu0 0.0
    %6627 = vmatprep.subr.mxu0 0.0
    %6628 = vmatpush1.msra.mxu0 0.0
    %6629 = vmatprep.subr.mxu0 0.0
    %6630 = vmatpush1.msra.mxu0 0.0
    %6631 = vmatprep.subr.mxu0 0.0
    %6632 = vmatpush1.msra.mxu0 0.0
    %6633 = vmatprep.subr.mxu0 0.0
    %6634 = vmatpush1.msra.mxu0 0.0
    %6635 = vmatprep.subr.mxu0 0.0
    %6636 = vmatpush1.msra.mxu0 0.0
    %6637 = vmatprep.subr.mxu0 0.0
    %6638 = vmatpush1.msra.mxu0 0.0
    %6639 = vmatprep.subr.mxu0 0.0
    %6640 = vmatpush1.msra.mxu0 0.0
    %6641 = vmatprep.subr.mxu0 0.0
    %6642 = vmatpush1.msra.mxu0 0.0
    %6643 = vmatprep.subr.mxu0 0.0
    %6644 = vmatpush1.msra.mxu0 0.0
    %6645 = vmatprep.subr.mxu0 0.0
    %6646 = vmatpush1.msra.mxu0 0.0
    %6647 = vmatprep.subr.mxu0 0.0
    %6648 = vmatpush1.msra.mxu0 0.0
    %6649 = vmatprep.subr.mxu0 0.0
    %6650 = vmatpush1.msra.mxu0 0.0
    %6651 = vmatprep.subr.mxu0 0.0
    %6652 = vmatpush1.msra.mxu0 0.0
    %6653 = vmatprep.subr.mxu0 0.0
    %6654 = vmatpush1.msra.mxu0 0.0
    %6655 = vmatprep.subr.mxu0 0.0
    %6656 = vmatpush1.msra.mxu0 0.0
    %6657 = vmatprep.subr.mxu0 0.0
    %6658 = vmatpush1.msra.mxu0 0.0
    %6659 = vmatprep.subr.mxu0 0.0
    %6660 = vmatpush1.msra.mxu0 0.0
    %6661 = vmatprep.subr.mxu0 0.0
    %6662 = vmatpush1.msra.mxu0 0.0
    %6663 = vmatprep.subr.mxu0 0.0
    %6664 = vmatpush1.msra.mxu0 0.0
    %6665 = vmatprep.subr.mxu0 0.0
    %6666 = vmatpush1.msra.mxu0 0.0
    %6667 = vmatprep.subr.mxu0 0.0
    %6668 = vmatpush1.msra.mxu0 0.0
    %6669 = vmatprep.subr.mxu0 0.0
    %6670 = vmatpush1.msra.mxu0 0.0
    %6671 = vmatprep.subr.mxu0 0.0
    %6672 = vmatpush1.msra.mxu0 0.0
    %6673 = vmatprep.mubr.f32.mxu0 0.0
    %6674 = vmatmul.mubr.f32.gmra.mrb[0].mxu0 %v6562
    %v6675 = vpop.f32.mrb[0].mxu0
    %v6676 = vadd.f32 0.0, %v6675
    %v6677 = vpop.f32.mrb[0].mxu0
    %6678 = vmatprep.mubr.f32.mxu0 0.0
    %6679 = vmatmul.mubr.f32.gmra.mrb[0].mxu0 %v6565
    %v6680 = vpop.f32.mrb[0].mxu0
    %v6681 = vadd.f32 0.0, %v6680
    %v6682 = vpop.f32.mrb[0].mxu0
    %6683 = vmatprep.mubr.f32.mxu0 0.0
    %6684 = vmatmul.mubr.f32.gmra.mrb[0].mxu0 %v6568
    %v6685 = vpop.f32.mrb[0].mxu0
    %v6686 = vadd.f32 0.0, %v6685
    %v6687 = vpop.f32.mrb[0].mxu0
    %6688 = vmatprep.mubr.f32.mxu0 0.0
    %6689 = vmatmul.mubr.f32.gmra.mrb[0].mxu0 %v6571
    %v6690 = vpop.f32.mrb[0].mxu0
    %v6691 = vadd.f32 0.0, %v6690
    %v6692 = vpop.f32.mrb[0].mxu0
    %6693 = vmatprep.mubr.f32.mxu0 0.0
    %6694 = vmatmul.mubr.f32.gmra.mrb[0].mxu0 %v6574
    %v6695 = vpop.f32.mrb[0].mxu0
    %v6696 = vadd.f32 0.0, %v6695
    %v6697 = vpop.f32.mrb[0].mxu0
    %6698 = vmatprep.mubr.f32.mxu0 0.0
    %6699 = vmatmul.mubr.f32.gmra.mrb[0].mxu0 %v6577
    %v6700 = vpop.f32.mrb[0].mxu0
    %v6701 = vadd.f32 0.0, %v6700
    %v6702 = vpop.f32.mrb[0].mxu0
    %6703 = vmatprep.mubr.f32.mxu0 0.0
    %6704 = vmatmul.mubr.f32.gmra.mrb[0].mxu0 %v6580
    %v6705 = vpop.f32.mrb[0].mxu0
    %v6706 = vadd.f32 0.0, %v6705
    %v6707 = vpop.f32.mrb[0].mxu0
    %6708 = vmatprep.mubr.f32.mxu0 0.0
    %6709 = vmatmul.mubr.f32.gmra.mrb[0].mxu0 %v6583
    %v6710 = vpop.f32.mrb[0].mxu0
    %v6711 = vadd.f32 0.0, %v6710
    %v6712 = vpop.f32.mrb[0].mxu0
    %6713 = vmatprep.mubr.f32.mxu0 0.0
    %6714 = vmatmul.mubr.f32.gmra.mrb[0].mxu0 %v6586
    %v6715 = vpop.f32.mrb[0].mxu0
    %v6716 = vadd.f32 0.0, %v6715
    %v6717 = vpop.f32.mrb[0].mxu0
    %6718 = vmatprep.mubr.f32.mxu0 0.0
    %6719 = vmatmul.mubr.f32.gmra.mrb[0].mxu0 %v6589
    %v6720 = vpop.f32.mrb[0].mxu0
    %v6721 = vadd.f32 0.0, %v6720
    %v6722 = vpop.f32.mrb[0].mxu0
    %6723 = vmatprep.mubr.f32.mxu0 0.0
    %6724 = vmatmul.mubr.f32.gmra.mrb[0].mxu0 %v6592
    %v6725 = vpop.f32.mrb[0].mxu0
    %v6726 = vadd.f32 0.0, %v6725
    %v6727 = vpop.f32.mrb[0].mxu0
    %6728 = vmatprep.mubr.f32.mxu0 0.0
    %6729 = vmatmul.mubr.f32.gmra.mrb[0].mxu0 %v6595
    %v6730 = vpop.f32.mrb[0].mxu0
    %v6731 = vadd.f32 0.0, %v6730
    %v6732 = vpop.f32.mrb[0].mxu0
    %6733 = vmatprep.mubr.f32.mxu0 0.0
    %6734 = vmatmul.mubr.f32.gmra.mrb[0].mxu0 %v6598
    %v6735 = vpop.f32.mrb[0].mxu0
    %v6736 = vadd.f32 0.0, %v6735
    %v6737 = vpop.f32.mrb[0].mxu0
    %6738 = vmatprep.mubr.f32.mxu0 0.0
    %6739 = vmatmul.mubr.f32.gmra.mrb[0].mxu0 %v6601
    %v6740 = vpop.f32.mrb[0].mxu0
    %v6741 = vadd.f32 0.0, %v6740
    %v6742 = vpop.f32.mrb[0].mxu0
    %6743 = vmatprep.mubr.f32.mxu0 0.0
    %6744 = vmatmul.mubr.f32.gmra.mrb[0].mxu0 %v6604
    %v6745 = vpop.f32.mrb[0].mxu0
    %v6746 = vadd.f32 0.0, %v6745
    %v6747 = vpop.f32.mrb[0].mxu0
    %6748 = vmatprep.mubr.f32.mxu0 0.0
    %6749 = vmatmul.mubr.f32.gmra.mrb[0].mxu0 %v6607
    %v6750 = vpop.f32.mrb[0].mxu0
    %v6751 = vadd.f32 0.0, %v6750
    %v6752 = vpop.f32.mrb[0].mxu0
    %6753 = vdwg.mxu0
    %v6754 = vadd.f32 %v6524, %v6676
    %v6755 = vadd.f32 %v6525, %v6681
    %v6756 = vadd.f32 %v6526, %v6686
    %v6757 = vadd.f32 %v6527, %v6691
    %v6758 = vadd.f32 %v6528, %v6696
    %v6759 = vadd.f32 %v6529, %v6701
    %v6760 = vadd.f32 %v6530, %v6706
    %v6761 = vadd.f32 %v6531, %v6711
    %v6762 = vadd.f32 %v6532, %v6716
    %v6763 = vadd.f32 %v6533, %v6721
    %v6764 = vadd.f32 %v6534, %v6726
    %v6765 = vadd.f32 %v6535, %v6731
    %v6766 = vadd.f32 %v6536, %v6736
    %v6767 = vadd.f32 %v6537, %v6741
    %v6768 = vadd.f32 %v6538, %v6746
    %v6769 = vadd.f32 %v6539, %v6751
    %v6770 = vld [vmem:[#allocation11] sm:$0x1]
    %v6772 = vlaneseq
    %v6773 = vshrl.u32 %v6772, 7
    %v6774 = vsub.s32 0, %v6773
    %v6775 = vrot.slane %v6770, %v6774
    %v6777 = vadd.f32 %v6754, %v6775
    %v6778 = vadd.f32 %v6755, %v6775
    %v6779 = vadd.f32 %v6756, %v6775
    %v6780 = vadd.f32 %v6757, %v6775
    %v6781 = vadd.f32 %v6758, %v6775
    %v6782 = vadd.f32 %v6759, %v6775
    %v6783 = vadd.f32 %v6760, %v6775
    %v6784 = vadd.f32 %v6761, %v6775
    %v6785 = vadd.f32 %v6762, %v6775
    %v6786 = vadd.f32 %v6763, %v6775
    %v6787 = vadd.f32 %v6764, %v6775
    %v6788 = vadd.f32 %v6765, %v6775
    %v6789 = vadd.f32 %v6766, %v6775
    %v6790 = vadd.f32 %v6767, %v6775
    %v6791 = vadd.f32 %v6768, %v6775
    %v6792 = vadd.f32 %v6769, %v6775
    %v6793 = vmax.f32 %v6777, 0.0
    %v6794 = vmax.f32 %v6778, 0.0
    %v6795 = vmax.f32 %v6779, 0.0
    %v6796 = vmax.f32 %v6780, 0.0
    %v6797 = vmax.f32 %v6781, 0.0
    %v6798 = vmax.f32 %v6782, 0.0
    %v6799 = vmax.f32 %v6783, 0.0
    %v6800 = vmax.f32 %v6784, 0.0
    %v6801 = vmax.f32 %v6785, 0.0
    %v6802 = vmax.f32 %v6786, 0.0
    %v6803 = vmax.f32 %v6787, 0.0
    %v6804 = vmax.f32 %v6788, 0.0
    %v6805 = vmax.f32 %v6789, 0.0
    %v6806 = vmax.f32 %v6790, 0.0
    %v6807 = vmax.f32 %v6791, 0.0
    %v6808 = vmax.f32 %v6792, 0.0
    %v6809 = vmax.f32 %v6793, %v6794
    %v6810 = vmax.f32 %v6795, %v6796
    %v6811 = vmax.f32 %v6797, %v6798
    %v6812 = vmax.f32 %v6799, %v6800
    %v6813 = vmax.f32 %v6801, %v6802
    %v6814 = vmax.f32 %v6803, %v6804
    %v6815 = vmax.f32 %v6805, %v6806
    %v6816 = vmax.f32 %v6807, %v6808
    %vm6817 = vcmask 523264
    %6818 = vst.msk [vmem:[#allocation4] sm:$0xff] %vm6817, %v6809
    %6819 = vst.msk [vmem:[#allocation4 + $0x8] sm:$0xff] %vm6817, %v6810
    %6820 = vst.msk [vmem:[#allocation4 + $0x10] sm:$0xff] %vm6817, %v6811
    %6821 = vst.msk [vmem:[#allocation4 + $0x18] sm:$0xff] %vm6817, %v6812
    %6822 = vst.msk [vmem:[#allocation4 + $0x20] sm:$0xff] %vm6817, %v6813
    %6823 = vst.msk [vmem:[#allocation4 + $0x28] sm:$0xff] %vm6817, %v6814
    %6824 = vst.msk [vmem:[#allocation4 + $0x30] sm:$0xff] %vm6817, %v6815
    %6825 = vst.msk [vmem:[#allocation4 + $0x38] sm:$0xff] %vm6817, %v6816
    %v6826 = vld [vmem:[#allocation4] ss:$2 sm:$0xf]
    %s6827 = scalar_lea.vmem [#allocation4], 8
    %v6828 = vld [vmem:[%s6827] ss:$2 sm:$0xf]
    %s6829 = scalar_lea.vmem [#allocation4], 16
    %v6830 = vld [vmem:[%s6829] ss:$2 sm:$0xf]
    %s6831 = scalar_lea.vmem [#allocation4], 24
    %v6832 = vld [vmem:[%s6831] ss:$2 sm:$0xf]
    %s6833 = scalar_lea.vmem [#allocation4], 32
    %v6834 = vld [vmem:[%s6833] ss:$2 sm:$0xf]
    %s6835 = scalar_lea.vmem [#allocation4], 40
    %v6836 = vld [vmem:[%s6835] ss:$2 sm:$0xf]
    %s6837 = scalar_lea.vmem [#allocation4], 48
    %v6838 = vld [vmem:[%s6837] ss:$2 sm:$0xf]
    %s6839 = scalar_lea.vmem [#allocation4], 56
    %v6840 = vld [vmem:[%s6839] ss:$2 sm:$0xf]
    %s6841 = scalar_lea.vmem [#allocation4], 1
    %v6842 = vld [vmem:[%s6841] ss:$2 sm:$0xf]
    %s6843 = scalar_lea.vmem [#allocation4], 9
    %v6844 = vld [vmem:[%s6843] ss:$2 sm:$0xf]
    %s6845 = scalar_lea.vmem [#allocation4], 17
    %v6846 = vld [vmem:[%s6845] ss:$2 sm:$0xf]
    %s6847 = scalar_lea.vmem [#allocation4], 25
    %v6848 = vld [vmem:[%s6847] ss:$2 sm:$0xf]
    %s6849 = scalar_lea.vmem [#allocation4], 33
    %v6850 = vld [vmem:[%s6849] ss:$2 sm:$0xf]
    %s6851 = scalar_lea.vmem [#allocation4], 41
    %v6852 = vld [vmem:[%s6851] ss:$2 sm:$0xf]
    %s6853 = scalar_lea.vmem [#allocation4], 49
    %v6854 = vld [vmem:[%s6853] ss:$2 sm:$0xf]
    %s6855 = scalar_lea.vmem [#allocation4], 57
    %v6856 = vld [vmem:[%s6855] ss:$2 sm:$0xf]
    %v6857 = vmax.f32 %v6826, %v6842
    %v6858 = vmax.f32 %v6828, %v6844
    %v6859 = vmax.f32 %v6830, %v6846
    %v6860 = vmax.f32 %v6832, %v6848
    %v6861 = vmax.f32 %v6834, %v6850
    %v6862 = vmax.f32 %v6836, %v6852
    %v6863 = vmax.f32 %v6838, %v6854
    %v6864 = vmax.f32 %v6840, %v6856
    %vm6865 = vcmask 519168
    %6866 = vst.msk [vmem:[#allocation5] sm:$0xf] %vm6865, %v6857
    %6867 = vst.msk [vmem:[#allocation5 + $0x4] sm:$0xf] %vm6865, %v6858
    %6868 = vst.msk [vmem:[#allocation5 + $0x8] sm:$0xf] %vm6865, %v6859
    %6869 = vst.msk [vmem:[#allocation5 + $0xc] sm:$0xf] %vm6865, %v6860
    %6870 = vst.msk [vmem:[#allocation5 + $0x10] sm:$0xf] %vm6865, %v6861
    %6871 = vst.msk [vmem:[#allocation5 + $0x14] sm:$0xf] %vm6865, %v6862
    %6872 = vst.msk [vmem:[#allocation5 + $0x18] sm:$0xf] %vm6865, %v6863
    %6873 = vst.msk [vmem:[#allocation5 + $0x1c] sm:$0xf] %vm6865, %v6864
    %v6874 = vld [vmem:[#allocation5] sm:$0x1]
    %v6875 = vld [vmem:[#allocation5 + $0x10] sm:$0x1]
    %v6876 = vld [vmem:[#allocation12] sm:$0xff]
    %v6877 = vld [vmem:[#allocation12 + $0x8] sm:$0xff]
    %v6878 = vld [vmem:[#allocation12 + $0x10] sm:$0xff]
    %v6879 = vld [vmem:[#allocation12 + $0x18] sm:$0xff]
    %v6880 = vld [vmem:[#allocation12 + $0x20] sm:$0xff]
    %v6881 = vld [vmem:[#allocation12 + $0x28] sm:$0xff]
    %v6882 = vld [vmem:[#allocation12 + $0x30] sm:$0xff]
    %v6883 = vld [vmem:[#allocation12 + $0x38] sm:$0xff]
    %v6884 = vld [vmem:[#allocation12 + $0x40] sm:$0xff]
    %v6885 = vld [vmem:[#allocation12 + $0x48] sm:$0xff]
    %v6886 = vld [vmem:[#allocation12 + $0x50] sm:$0xff]
    %v6887 = vld [vmem:[#allocation12 + $0x58] sm:$0xff]
    %v6888 = vld [vmem:[#allocation12 + $0x60] sm:$0xff]
    %v6889 = vld [vmem:[#allocation12 + $0x68] sm:$0xff]
    %v6890 = vld [vmem:[#allocation12 + $0x70] sm:$0xff]
    %v6891 = vld [vmem:[#allocation12 + $0x78] sm:$0xff]
    %v6892 = vld [vmem:[#allocation12 + $0x80] sm:$0xff]
    %v6893 = vld [vmem:[#allocation12 + $0x88] sm:$0xff]
    %v6894 = vld [vmem:[#allocation12 + $0x90] sm:$0xff]
    %v6895 = vld [vmem:[#allocation12 + $0x98] sm:$0xff]
    %v6896 = vld [vmem:[#allocation12 + $0xa0] sm:$0xff]
    %v6897 = vld [vmem:[#allocation12 + $0xa8] sm:$0xff]
    %v6898 = vld [vmem:[#allocation12 + $0xb0] sm:$0xff]
    %v6899 = vld [vmem:[#allocation12 + $0xb8] sm:$0xff]
    %v6900 = vld [vmem:[#allocation12 + $0xc0] sm:$0xff]
    %v6901 = vld [vmem:[#allocation12 + $0xc8] sm:$0xff]
    %v6902 = vld [vmem:[#allocation12 + $0xd0] sm:$0xff]
    %v6903 = vld [vmem:[#allocation12 + $0xd8] sm:$0xff]
    %v6904 = vld [vmem:[#allocation12 + $0xe0] sm:$0xff]
    %v6905 = vld [vmem:[#allocation12 + $0xe8] sm:$0xff]
    %v6906 = vld [vmem:[#allocation12 + $0xf0] sm:$0xff]
    %v6907 = vld [vmem:[#allocation12 + $0xf8] sm:$0xff]
    %v6908 = vld [vmem:[#allocation5 + $0x1] sm:$0x1]
    %v6909 = vld [vmem:[#allocation5 + $0x11] sm:$0x1]
    %s6910 = scalar_lea.vmem [#allocation12], 256
    %v6911 = vld [vmem:[%s6910] sm:$0xff]
    %v6912 = vld [vmem:[%s6910 + $0x8] sm:$0xff]
    %v6913 = vld [vmem:[%s6910 + $0x10] sm:$0xff]
    %v6914 = vld [vmem:[%s6910 + $0x18] sm:$0xff]
    %v6915 = vld [vmem:[%s6910 + $0x20] sm:$0xff]
    %v6916 = vld [vmem:[%s6910 + $0x28] sm:$0xff]
    %v6917 = vld [vmem:[%s6910 + $0x30] sm:$0xff]
    %v6918 = vld [vmem:[%s6910 + $0x38] sm:$0xff]
    %v6919 = vld [vmem:[%s6910 + $0x40] sm:$0xff]
    %v6920 = vld [vmem:[%s6910 + $0x48] sm:$0xff]
    %v6921 = vld [vmem:[%s6910 + $0x50] sm:$0xff]
    %v6922 = vld [vmem:[%s6910 + $0x58] sm:$0xff]
    %v6923 = vld [vmem:[%s6910 + $0x60] sm:$0xff]
    %v6924 = vld [vmem:[%s6910 + $0x68] sm:$0xff]
    %v6925 = vld [vmem:[%s6910 + $0x70] sm:$0xff]
    %v6926 = vld [vmem:[%s6910 + $0x78] sm:$0xff]
    %v6927 = vld [vmem:[%s6910 + $0x80] sm:$0xff]
    %v6928 = vld [vmem:[%s6910 + $0x88] sm:$0xff]
    %v6929 = vld [vmem:[%s6910 + $0x90] sm:$0xff]
    %v6930 = vld [vmem:[%s6910 + $0x98] sm:$0xff]
    %v6931 = vld [vmem:[%s6910 + $0xa0] sm:$0xff]
    %v6932 = vld [vmem:[%s6910 + $0xa8] sm:$0xff]
    %v6933 = vld [vmem:[%s6910 + $0xb0] sm:$0xff]
    %v6934 = vld [vmem:[%s6910 + $0xb8] sm:$0xff]
    %v6935 = vld [vmem:[%s6910 + $0xc0] sm:$0xff]
    %v6936 = vld [vmem:[%s6910 + $0xc8] sm:$0xff]
    %v6937 = vld [vmem:[%s6910 + $0xd0] sm:$0xff]
    %v6938 = vld [vmem:[%s6910 + $0xd8] sm:$0xff]
    %v6939 = vld [vmem:[%s6910 + $0xe0] sm:$0xff]
    %v6940 = vld [vmem:[%s6910 + $0xe8] sm:$0xff]
    %v6941 = vld [vmem:[%s6910 + $0xf0] sm:$0xff]
    %v6942 = vld [vmem:[%s6910 + $0xf8] sm:$0xff]
    %v6945 = vrot.slane %v6909, 7
    %vm6946 = vcmask 1041409
    %v6947 = vsel %vm6946, %v6945, %v6908
    %v6948 = vsel %vm6817, %v6947, 0
    %6950 = vmatprep.subr.mxu0 %v6912
    %6951 = vmatpush1.msra.mxu0 %v6911
    %6952 = vmatprep.subr.mxu0 %v6916
    %6953 = vmatpush1.msra.mxu0 %v6915
    %6954 = vmatprep.subr.mxu0 %v6920
    %6955 = vmatpush1.msra.mxu0 %v6919
    %6956 = vmatprep.subr.mxu0 %v6924
    %6957 = vmatpush1.msra.mxu0 %v6923
    %6958 = vmatprep.subr.mxu0 %v6928
    %6959 = vmatpush1.msra.mxu0 %v6927
    %6960 = vmatprep.subr.mxu0 %v6932
    %6961 = vmatpush1.msra.mxu0 %v6931
    %6962 = vmatprep.subr.mxu0 %v6936
    %6963 = vmatpush1.msra.mxu0 %v6935
    %6964 = vmatprep.subr.mxu0 %v6940
    %6965 = vmatpush1.msra.mxu0 %v6939
    %6966 = vmatprep.subr.mxu0 0.0
    %6967 = vmatpush1.msra.mxu0 0.0
    %6968 = vmatprep.subr.mxu0 0.0
    %6969 = vmatpush1.msra.mxu0 0.0
    %6970 = vmatprep.subr.mxu0 0.0
    %6971 = vmatpush1.msra.mxu0 0.0
    %6972 = vmatprep.subr.mxu0 0.0
    %6973 = vmatpush1.msra.mxu0 0.0
    %6974 = vmatprep.subr.mxu0 0.0
    %6975 = vmatpush1.msra.mxu0 0.0
    %6976 = vmatprep.subr.mxu0 0.0
    %6977 = vmatpush1.msra.mxu0 0.0
    %6978 = vmatprep.subr.mxu0 0.0
    %6979 = vmatpush1.msra.mxu0 0.0
    %6980 = vmatprep.subr.mxu0 0.0
    %6981 = vmatpush1.msra.mxu0 0.0
    %6982 = vmatprep.subr.mxu0 0.0
    %6983 = vmatpush1.msra.mxu0 0.0
    %6984 = vmatprep.subr.mxu0 0.0
    %6985 = vmatpush1.msra.mxu0 0.0
    %6986 = vmatprep.subr.mxu0 0.0
    %6987 = vmatpush1.msra.mxu0 0.0
    %6988 = vmatprep.subr.mxu0 0.0
    %6989 = vmatpush1.msra.mxu0 0.0
    %6990 = vmatprep.subr.mxu0 0.0
    %6991 = vmatpush1.msra.mxu0 0.0
    %6992 = vmatprep.subr.mxu0 0.0
    %6993 = vmatpush1.msra.mxu0 0.0
    %6994 = vmatprep.subr.mxu0 0.0
    %6995 = vmatpush1.msra.mxu0 0.0
    %6996 = vmatprep.subr.mxu0 0.0
    %6997 = vmatpush1.msra.mxu0 0.0
    %6998 = vmatprep.subr.mxu0 0.0
    %6999 = vmatpush1.msra.mxu0 0.0
    %7000 = vmatprep.subr.mxu0 0.0
    %7001 = vmatpush1.msra.mxu0 0.0
    %7002 = vmatprep.subr.mxu0 0.0
    %7003 = vmatpush1.msra.mxu0 0.0
    %7004 = vmatprep.subr.mxu0 0.0
    %7005 = vmatpush1.msra.mxu0 0.0
    %7006 = vmatprep.subr.mxu0 0.0
    %7007 = vmatpush1.msra.mxu0 0.0
    %7008 = vmatprep.subr.mxu0 0.0
    %7009 = vmatpush1.msra.mxu0 0.0
    %7010 = vmatprep.subr.mxu0 0.0
    %7011 = vmatpush1.msra.mxu0 0.0
    %7012 = vmatprep.subr.mxu0 0.0
    %7013 = vmatpush1.msra.mxu0 0.0
    %7014 = vmatprep.mubr.f32.mxu0 0.0
    %7015 = vmatmul.mubr.f32.gmra.mrb[0].mxu0 %v6948
    %v7016 = vpop.f32.mrb[0].mxu0
    %v7017 = vadd.f32 0.0, %v7016
    %v7018 = vpop.f32.mrb[0].mxu0
    %v7019 = vadd.f32 0.0, %v7018
    %7020 = vdwg.mxu0
    %7021 = vmatprep.subr.mxu0 %v6914
    %7022 = vmatpush1.msra.mxu0 %v6913
    %7023 = vmatprep.subr.mxu0 %v6918
    %7024 = vmatpush1.msra.mxu0 %v6917
    %7025 = vmatprep.subr.mxu0 %v6922
    %7026 = vmatpush1.msra.mxu0 %v6921
    %7027 = vmatprep.subr.mxu0 %v6926
    %7028 = vmatpush1.msra.mxu0 %v6925
    %7029 = vmatprep.subr.mxu0 %v6930
    %7030 = vmatpush1.msra.mxu0 %v6929
    %7031 = vmatprep.subr.mxu0 %v6934
    %7032 = vmatpush1.msra.mxu0 %v6933
    %7033 = vmatprep.subr.mxu0 %v6938
    %7034 = vmatpush1.msra.mxu0 %v6937
    %7035 = vmatprep.subr.mxu0 %v6942
    %7036 = vmatpush1.msra.mxu0 %v6941
    %7037 = vmatprep.subr.mxu0 0.0
    %7038 = vmatpush1.msra.mxu0 0.0
    %7039 = vmatprep.subr.mxu0 0.0
    %7040 = vmatpush1.msra.mxu0 0.0
    %7041 = vmatprep.subr.mxu0 0.0
    %7042 = vmatpush1.msra.mxu0 0.0
    %7043 = vmatprep.subr.mxu0 0.0
    %7044 = vmatpush1.msra.mxu0 0.0
    %7045 = vmatprep.subr.mxu0 0.0
    %7046 = vmatpush1.msra.mxu0 0.0
    %7047 = vmatprep.subr.mxu0 0.0
    %7048 = vmatpush1.msra.mxu0 0.0
    %7049 = vmatprep.subr.mxu0 0.0
    %7050 = vmatpush1.msra.mxu0 0.0
    %7051 = vmatprep.subr.mxu0 0.0
    %7052 = vmatpush1.msra.mxu0 0.0
    %7053 = vmatprep.subr.mxu0 0.0
    %7054 = vmatpush1.msra.mxu0 0.0
    %7055 = vmatprep.subr.mxu0 0.0
    %7056 = vmatpush1.msra.mxu0 0.0
    %7057 = vmatprep.subr.mxu0 0.0
    %7058 = vmatpush1.msra.mxu0 0.0
    %7059 = vmatprep.subr.mxu0 0.0
    %7060 = vmatpush1.msra.mxu0 0.0
    %7061 = vmatprep.subr.mxu0 0.0
    %7062 = vmatpush1.msra.mxu0 0.0
    %7063 = vmatprep.subr.mxu0 0.0
    %7064 = vmatpush1.msra.mxu0 0.0
    %7065 = vmatprep.subr.mxu0 0.0
    %7066 = vmatpush1.msra.mxu0 0.0
    %7067 = vmatprep.subr.mxu0 0.0
    %7068 = vmatpush1.msra.mxu0 0.0
    %7069 = vmatprep.subr.mxu0 0.0
    %7070 = vmatpush1.msra.mxu0 0.0
    %7071 = vmatprep.subr.mxu0 0.0
    %7072 = vmatpush1.msra.mxu0 0.0
    %7073 = vmatprep.subr.mxu0 0.0
    %7074 = vmatpush1.msra.mxu0 0.0
    %7075 = vmatprep.subr.mxu0 0.0
    %7076 = vmatpush1.msra.mxu0 0.0
    %7077 = vmatprep.subr.mxu0 0.0
    %7078 = vmatpush1.msra.mxu0 0.0
    %7079 = vmatprep.subr.mxu0 0.0
    %7080 = vmatpush1.msra.mxu0 0.0
    %7081 = vmatprep.subr.mxu0 0.0
    %7082 = vmatpush1.msra.mxu0 0.0
    %7083 = vmatprep.subr.mxu0 0.0
    %7084 = vmatpush1.msra.mxu0 0.0
    %7085 = vmatprep.mubr.f32.mxu0 0.0
    %7086 = vmatmul.mubr.f32.gmra.mrb[0].mxu0 %v6948
    %v7087 = vpop.f32.mrb[0].mxu0
    %v7088 = vadd.f32 0.0, %v7087
    %v7089 = vpop.f32.mrb[0].mxu0
    %v7090 = vadd.f32 0.0, %v7089
    %7091 = vdwg.mxu0
    %v7094 = vrot.slane %v6875, 7
    %v7095 = vsel %vm6946, %v7094, %v6874
    %v7096 = vsel %vm6817, %v7095, 0
    %7098 = vmatprep.subr.mxu0 %v6877
    %7099 = vmatpush1.msra.mxu0 %v6876
    %7100 = vmatprep.subr.mxu0 %v6881
    %7101 = vmatpush1.msra.mxu0 %v6880
    %7102 = vmatprep.subr.mxu0 %v6885
    %7103 = vmatpush1.msra.mxu0 %v6884
    %7104 = vmatprep.subr.mxu0 %v6889
    %7105 = vmatpush1.msra.mxu0 %v6888
    %7106 = vmatprep.subr.mxu0 %v6893
    %7107 = vmatpush1.msra.mxu0 %v6892
    %7108 = vmatprep.subr.mxu0 %v6897
    %7109 = vmatpush1.msra.mxu0 %v6896
    %7110 = vmatprep.subr.mxu0 %v6901
    %7111 = vmatpush1.msra.mxu0 %v6900
    %7112 = vmatprep.subr.mxu0 %v6905
    %7113 = vmatpush1.msra.mxu0 %v6904
    %7114 = vmatprep.subr.mxu0 0.0
    %7115 = vmatpush1.msra.mxu0 0.0
    %7116 = vmatprep.subr.mxu0 0.0
    %7117 = vmatpush1.msra.mxu0 0.0
    %7118 = vmatprep.subr.mxu0 0.0
    %7119 = vmatpush1.msra.mxu0 0.0
    %7120 = vmatprep.subr.mxu0 0.0
    %7121 = vmatpush1.msra.mxu0 0.0
    %7122 = vmatprep.subr.mxu0 0.0
    %7123 = vmatpush1.msra.mxu0 0.0
    %7124 = vmatprep.subr.mxu0 0.0
    %7125 = vmatpush1.msra.mxu0 0.0
    %7126 = vmatprep.subr.mxu0 0.0
    %7127 = vmatpush1.msra.mxu0 0.0
    %7128 = vmatprep.subr.mxu0 0.0
    %7129 = vmatpush1.msra.mxu0 0.0
    %7130 = vmatprep.subr.mxu0 0.0
    %7131 = vmatpush1.msra.mxu0 0.0
    %7132 = vmatprep.subr.mxu0 0.0
    %7133 = vmatpush1.msra.mxu0 0.0
    %7134 = vmatprep.subr.mxu0 0.0
    %7135 = vmatpush1.msra.mxu0 0.0
    %7136 = vmatprep.subr.mxu0 0.0
    %7137 = vmatpush1.msra.mxu0 0.0
    %7138 = vmatprep.subr.mxu0 0.0
    %7139 = vmatpush1.msra.mxu0 0.0
    %7140 = vmatprep.subr.mxu0 0.0
    %7141 = vmatpush1.msra.mxu0 0.0
    %7142 = vmatprep.subr.mxu0 0.0
    %7143 = vmatpush1.msra.mxu0 0.0
    %7144 = vmatprep.subr.mxu0 0.0
    %7145 = vmatpush1.msra.mxu0 0.0
    %7146 = vmatprep.subr.mxu0 0.0
    %7147 = vmatpush1.msra.mxu0 0.0
    %7148 = vmatprep.subr.mxu0 0.0
    %7149 = vmatpush1.msra.mxu0 0.0
    %7150 = vmatprep.subr.mxu0 0.0
    %7151 = vmatpush1.msra.mxu0 0.0
    %7152 = vmatprep.subr.mxu0 0.0
    %7153 = vmatpush1.msra.mxu0 0.0
    %7154 = vmatprep.subr.mxu0 0.0
    %7155 = vmatpush1.msra.mxu0 0.0
    %7156 = vmatprep.subr.mxu0 0.0
    %7157 = vmatpush1.msra.mxu0 0.0
    %7158 = vmatprep.subr.mxu0 0.0
    %7159 = vmatpush1.msra.mxu0 0.0
    %7160 = vmatprep.subr.mxu0 0.0
    %7161 = vmatpush1.msra.mxu0 0.0
    %7162 = vmatprep.mubr.f32.mxu0 0.0
    %7163 = vmatmul.mubr.f32.gmra.mrb[0].mxu0 %v7096
    %v7164 = vpop.f32.mrb[0].mxu0
    %v7165 = vadd.f32 %v7017, %v7164
    %v7166 = vpop.f32.mrb[0].mxu0
    %v7167 = vadd.f32 %v7019, %v7166
    %7168 = vdwg.mxu0
    %7169 = vmatprep.subr.mxu0 %v6879
    %7170 = vmatpush1.msra.mxu0 %v6878
    %7171 = vmatprep.subr.mxu0 %v6883
    %7172 = vmatpush1.msra.mxu0 %v6882
    %7173 = vmatprep.subr.mxu0 %v6887
    %7174 = vmatpush1.msra.mxu0 %v6886
    %7175 = vmatprep.subr.mxu0 %v6891
    %7176 = vmatpush1.msra.mxu0 %v6890
    %7177 = vmatprep.subr.mxu0 %v6895
    %7178 = vmatpush1.msra.mxu0 %v6894
    %7179 = vmatprep.subr.mxu0 %v6899
    %7180 = vmatpush1.msra.mxu0 %v6898
    %7181 = vmatprep.subr.mxu0 %v6903
    %7182 = vmatpush1.msra.mxu0 %v6902
    %7183 = vmatprep.subr.mxu0 %v6907
    %7184 = vmatpush1.msra.mxu0 %v6906
    %7185 = vmatprep.subr.mxu0 0.0
    %7186 = vmatpush1.msra.mxu0 0.0
    %7187 = vmatprep.subr.mxu0 0.0
    %7188 = vmatpush1.msra.mxu0 0.0
    %7189 = vmatprep.subr.mxu0 0.0
    %7190 = vmatpush1.msra.mxu0 0.0
    %7191 = vmatprep.subr.mxu0 0.0
    %7192 = vmatpush1.msra.mxu0 0.0
    %7193 = vmatprep.subr.mxu0 0.0
    %7194 = vmatpush1.msra.mxu0 0.0
    %7195 = vmatprep.subr.mxu0 0.0
    %7196 = vmatpush1.msra.mxu0 0.0
    %7197 = vmatprep.subr.mxu0 0.0
    %7198 = vmatpush1.msra.mxu0 0.0
    %7199 = vmatprep.subr.mxu0 0.0
    %7200 = vmatpush1.msra.mxu0 0.0
    %7201 = vmatprep.subr.mxu0 0.0
    %7202 = vmatpush1.msra.mxu0 0.0
    %7203 = vmatprep.subr.mxu0 0.0
    %7204 = vmatpush1.msra.mxu0 0.0
    %7205 = vmatprep.subr.mxu0 0.0
    %7206 = vmatpush1.msra.mxu0 0.0
    %7207 = vmatprep.subr.mxu0 0.0
    %7208 = vmatpush1.msra.mxu0 0.0
    %7209 = vmatprep.subr.mxu0 0.0
    %7210 = vmatpush1.msra.mxu0 0.0
    %7211 = vmatprep.subr.mxu0 0.0
    %7212 = vmatpush1.msra.mxu0 0.0
    %7213 = vmatprep.subr.mxu0 0.0
    %7214 = vmatpush1.msra.mxu0 0.0
    %7215 = vmatprep.subr.mxu0 0.0
    %7216 = vmatpush1.msra.mxu0 0.0
    %7217 = vmatprep.subr.mxu0 0.0
    %7218 = vmatpush1.msra.mxu0 0.0
    %7219 = vmatprep.subr.mxu0 0.0
    %7220 = vmatpush1.msra.mxu0 0.0
    %7221 = vmatprep.subr.mxu0 0.0
    %7222 = vmatpush1.msra.mxu0 0.0
    %7223 = vmatprep.subr.mxu0 0.0
    %7224 = vmatpush1.msra.mxu0 0.0
    %7225 = vmatprep.subr.mxu0 0.0
    %7226 = vmatpush1.msra.mxu0 0.0
    %7227 = vmatprep.subr.mxu0 0.0
    %7228 = vmatpush1.msra.mxu0 0.0
    %7229 = vmatprep.subr.mxu0 0.0
    %7230 = vmatpush1.msra.mxu0 0.0
    %7231 = vmatprep.subr.mxu0 0.0
    %7232 = vmatpush1.msra.mxu0 0.0
    %7233 = vmatprep.mubr.f32.mxu0 0.0
    %7234 = vmatmul.mubr.f32.gmra.mrb[0].mxu0 %v7096
    %v7235 = vpop.f32.mrb[0].mxu0
    %v7236 = vadd.f32 %v7088, %v7235
    %v7237 = vpop.f32.mrb[0].mxu0
    %v7238 = vadd.f32 %v7090, %v7237
    %7239 = vdwg.mxu0
    %v7240 = vld [vmem:[#allocation5 + $0x2] sm:$0x1]
    %v7241 = vld [vmem:[#allocation5 + $0x12] sm:$0x1]
    %s7242 = scalar_lea.vmem [#allocation12], 512
    %v7243 = vld [vmem:[%s7242] sm:$0xff]
    %v7244 = vld [vmem:[%s7242 + $0x8] sm:$0xff]
    %v7245 = vld [vmem:[%s7242 + $0x10] sm:$0xff]
    %v7246 = vld [vmem:[%s7242 + $0x18] sm:$0xff]
    %v7247 = vld [vmem:[%s7242 + $0x20] sm:$0xff]
    %v7248 = vld [vmem:[%s7242 + $0x28] sm:$0xff]
    %v7249 = vld [vmem:[%s7242 + $0x30] sm:$0xff]
    %v7250 = vld [vmem:[%s7242 + $0x38] sm:$0xff]
    %v7251 = vld [vmem:[%s7242 + $0x40] sm:$0xff]
    %v7252 = vld [vmem:[%s7242 + $0x48] sm:$0xff]
    %v7253 = vld [vmem:[%s7242 + $0x50] sm:$0xff]
    %v7254 = vld [vmem:[%s7242 + $0x58] sm:$0xff]
    %v7255 = vld [vmem:[%s7242 + $0x60] sm:$0xff]
    %v7256 = vld [vmem:[%s7242 + $0x68] sm:$0xff]
    %v7257 = vld [vmem:[%s7242 + $0x70] sm:$0xff]
    %v7258 = vld [vmem:[%s7242 + $0x78] sm:$0xff]
    %v7259 = vld [vmem:[%s7242 + $0x80] sm:$0xff]
    %v7260 = vld [vmem:[%s7242 + $0x88] sm:$0xff]
    %v7261 = vld [vmem:[%s7242 + $0x90] sm:$0xff]
    %v7262 = vld [vmem:[%s7242 + $0x98] sm:$0xff]
    %v7263 = vld [vmem:[%s7242 + $0xa0] sm:$0xff]
    %v7264 = vld [vmem:[%s7242 + $0xa8] sm:$0xff]
    %v7265 = vld [vmem:[%s7242 + $0xb0] sm:$0xff]
    %v7266 = vld [vmem:[%s7242 + $0xb8] sm:$0xff]
    %v7267 = vld [vmem:[%s7242 + $0xc0] sm:$0xff]
    %v7268 = vld [vmem:[%s7242 + $0xc8] sm:$0xff]
    %v7269 = vld [vmem:[%s7242 + $0xd0] sm:$0xff]
    %v7270 = vld [vmem:[%s7242 + $0xd8] sm:$0xff]
    %v7271 = vld [vmem:[%s7242 + $0xe0] sm:$0xff]
    %v7272 = vld [vmem:[%s7242 + $0xe8] sm:$0xff]
    %v7273 = vld [vmem:[%s7242 + $0xf0] sm:$0xff]
    %v7274 = vld [vmem:[%s7242 + $0xf8] sm:$0xff]
    %v7277 = vrot.slane %v7241, 7
    %v7278 = vsel %vm6946, %v7277, %v7240
    %v7279 = vsel %vm6817, %v7278, 0
    %7281 = vmatprep.subr.mxu0 %v7244
    %7282 = vmatpush1.msra.mxu0 %v7243
    %7283 = vmatprep.subr.mxu0 %v7248
    %7284 = vmatpush1.msra.mxu0 %v7247
    %7285 = vmatprep.subr.mxu0 %v7252
    %7286 = vmatpush1.msra.mxu0 %v7251
    %7287 = vmatprep.subr.mxu0 %v7256
    %7288 = vmatpush1.msra.mxu0 %v7255
    %7289 = vmatprep.subr.mxu0 %v7260
    %7290 = vmatpush1.msra.mxu0 %v7259
    %7291 = vmatprep.subr.mxu0 %v7264
    %7292 = vmatpush1.msra.mxu0 %v7263
    %7293 = vmatprep.subr.mxu0 %v7268
    %7294 = vmatpush1.msra.mxu0 %v7267
    %7295 = vmatprep.subr.mxu0 %v7272
    %7296 = vmatpush1.msra.mxu0 %v7271
    %7297 = vmatprep.subr.mxu0 0.0
    %7298 = vmatpush1.msra.mxu0 0.0
    %7299 = vmatprep.subr.mxu0 0.0
    %7300 = vmatpush1.msra.mxu0 0.0
    %7301 = vmatprep.subr.mxu0 0.0
    %7302 = vmatpush1.msra.mxu0 0.0
    %7303 = vmatprep.subr.mxu0 0.0
    %7304 = vmatpush1.msra.mxu0 0.0
    %7305 = vmatprep.subr.mxu0 0.0
    %7306 = vmatpush1.msra.mxu0 0.0
    %7307 = vmatprep.subr.mxu0 0.0
    %7308 = vmatpush1.msra.mxu0 0.0
    %7309 = vmatprep.subr.mxu0 0.0
    %7310 = vmatpush1.msra.mxu0 0.0
    %7311 = vmatprep.subr.mxu0 0.0
    %7312 = vmatpush1.msra.mxu0 0.0
    %7313 = vmatprep.subr.mxu0 0.0
    %7314 = vmatpush1.msra.mxu0 0.0
    %7315 = vmatprep.subr.mxu0 0.0
    %7316 = vmatpush1.msra.mxu0 0.0
    %7317 = vmatprep.subr.mxu0 0.0
    %7318 = vmatpush1.msra.mxu0 0.0
    %7319 = vmatprep.subr.mxu0 0.0
    %7320 = vmatpush1.msra.mxu0 0.0
    %7321 = vmatprep.subr.mxu0 0.0
    %7322 = vmatpush1.msra.mxu0 0.0
    %7323 = vmatprep.subr.mxu0 0.0
    %7324 = vmatpush1.msra.mxu0 0.0
    %7325 = vmatprep.subr.mxu0 0.0
    %7326 = vmatpush1.msra.mxu0 0.0
    %7327 = vmatprep.subr.mxu0 0.0
    %7328 = vmatpush1.msra.mxu0 0.0
    %7329 = vmatprep.subr.mxu0 0.0
    %7330 = vmatpush1.msra.mxu0 0.0
    %7331 = vmatprep.subr.mxu0 0.0
    %7332 = vmatpush1.msra.mxu0 0.0
    %7333 = vmatprep.subr.mxu0 0.0
    %7334 = vmatpush1.msra.mxu0 0.0
    %7335 = vmatprep.subr.mxu0 0.0
    %7336 = vmatpush1.msra.mxu0 0.0
    %7337 = vmatprep.subr.mxu0 0.0
    %7338 = vmatpush1.msra.mxu0 0.0
    %7339 = vmatprep.subr.mxu0 0.0
    %7340 = vmatpush1.msra.mxu0 0.0
    %7341 = vmatprep.subr.mxu0 0.0
    %7342 = vmatpush1.msra.mxu0 0.0
    %7343 = vmatprep.subr.mxu0 0.0
    %7344 = vmatpush1.msra.mxu0 0.0
    %7345 = vmatprep.mubr.f32.mxu0 0.0
    %7346 = vmatmul.mubr.f32.gmra.mrb[0].mxu0 %v7279
    %v7347 = vpop.f32.mrb[0].mxu0
    %v7348 = vadd.f32 0.0, %v7347
    %v7349 = vpop.f32.mrb[0].mxu0
    %v7350 = vadd.f32 0.0, %v7349
    %7351 = vdwg.mxu0
    %7352 = vmatprep.subr.mxu0 %v7246
    %7353 = vmatpush1.msra.mxu0 %v7245
    %7354 = vmatprep.subr.mxu0 %v7250
    %7355 = vmatpush1.msra.mxu0 %v7249
    %7356 = vmatprep.subr.mxu0 %v7254
    %7357 = vmatpush1.msra.mxu0 %v7253
    %7358 = vmatprep.subr.mxu0 %v7258
    %7359 = vmatpush1.msra.mxu0 %v7257
    %7360 = vmatprep.subr.mxu0 %v7262
    %7361 = vmatpush1.msra.mxu0 %v7261
    %7362 = vmatprep.subr.mxu0 %v7266
    %7363 = vmatpush1.msra.mxu0 %v7265
    %7364 = vmatprep.subr.mxu0 %v7270
    %7365 = vmatpush1.msra.mxu0 %v7269
    %7366 = vmatprep.subr.mxu0 %v7274
    %7367 = vmatpush1.msra.mxu0 %v7273
    %7368 = vmatprep.subr.mxu0 0.0
    %7369 = vmatpush1.msra.mxu0 0.0
    %7370 = vmatprep.subr.mxu0 0.0
    %7371 = vmatpush1.msra.mxu0 0.0
    %7372 = vmatprep.subr.mxu0 0.0
    %7373 = vmatpush1.msra.mxu0 0.0
    %7374 = vmatprep.subr.mxu0 0.0
    %7375 = vmatpush1.msra.mxu0 0.0
    %7376 = vmatprep.subr.mxu0 0.0
    %7377 = vmatpush1.msra.mxu0 0.0
    %7378 = vmatprep.subr.mxu0 0.0
    %7379 = vmatpush1.msra.mxu0 0.0
    %7380 = vmatprep.subr.mxu0 0.0
    %7381 = vmatpush1.msra.mxu0 0.0
    %7382 = vmatprep.subr.mxu0 0.0
    %7383 = vmatpush1.msra.mxu0 0.0
    %7384 = vmatprep.subr.mxu0 0.0
    %7385 = vmatpush1.msra.mxu0 0.0
    %7386 = vmatprep.subr.mxu0 0.0
    %7387 = vmatpush1.msra.mxu0 0.0
    %7388 = vmatprep.subr.mxu0 0.0
    %7389 = vmatpush1.msra.mxu0 0.0
    %7390 = vmatprep.subr.mxu0 0.0
    %7391 = vmatpush1.msra.mxu0 0.0
    %7392 = vmatprep.subr.mxu0 0.0
    %7393 = vmatpush1.msra.mxu0 0.0
    %7394 = vmatprep.subr.mxu0 0.0
    %7395 = vmatpush1.msra.mxu0 0.0
    %7396 = vmatprep.subr.mxu0 0.0
    %7397 = vmatpush1.msra.mxu0 0.0
    %7398 = vmatprep.subr.mxu0 0.0
    %7399 = vmatpush1.msra.mxu0 0.0
    %7400 = vmatprep.subr.mxu0 0.0
    %7401 = vmatpush1.msra.mxu0 0.0
    %7402 = vmatprep.subr.mxu0 0.0
    %7403 = vmatpush1.msra.mxu0 0.0
    %7404 = vmatprep.subr.mxu0 0.0
    %7405 = vmatpush1.msra.mxu0 0.0
    %7406 = vmatprep.subr.mxu0 0.0
    %7407 = vmatpush1.msra.mxu0 0.0
    %7408 = vmatprep.subr.mxu0 0.0
    %7409 = vmatpush1.msra.mxu0 0.0
    %7410 = vmatprep.subr.mxu0 0.0
    %7411 = vmatpush1.msra.mxu0 0.0
    %7412 = vmatprep.subr.mxu0 0.0
    %7413 = vmatpush1.msra.mxu0 0.0
    %7414 = vmatprep.subr.mxu0 0.0
    %7415 = vmatpush1.msra.mxu0 0.0
    %7416 = vmatprep.mubr.f32.mxu0 0.0
    %7417 = vmatmul.mubr.f32.gmra.mrb[0].mxu0 %v7279
    %v7418 = vpop.f32.mrb[0].mxu0
    %v7419 = vadd.f32 0.0, %v7418
    %v7420 = vpop.f32.mrb[0].mxu0
    %v7421 = vadd.f32 0.0, %v7420
    %7422 = vdwg.mxu0
    %v7423 = vadd.f32 %v7165, %v7348
    %v7424 = vadd.f32 %v7167, %v7350
    %v7425 = vadd.f32 %v7236, %v7419
    %v7426 = vadd.f32 %v7238, %v7421
    %v7427 = vld [vmem:[#allocation5 + $0x3] sm:$0x1]
    %v7428 = vld [vmem:[#allocation5 + $0x13] sm:$0x1]
    %s7429 = scalar_lea.vmem [#allocation12], 768
    %v7430 = vld [vmem:[%s7429] sm:$0xff]
    %v7431 = vld [vmem:[%s7429 + $0x8] sm:$0xff]
    %v7432 = vld [vmem:[%s7429 + $0x10] sm:$0xff]
    %v7433 = vld [vmem:[%s7429 + $0x18] sm:$0xff]
    %v7434 = vld [vmem:[%s7429 + $0x20] sm:$0xff]
    %v7435 = vld [vmem:[%s7429 + $0x28] sm:$0xff]
    %v7436 = vld [vmem:[%s7429 + $0x30] sm:$0xff]
    %v7437 = vld [vmem:[%s7429 + $0x38] sm:$0xff]
    %v7438 = vld [vmem:[%s7429 + $0x40] sm:$0xff]
    %v7439 = vld [vmem:[%s7429 + $0x48] sm:$0xff]
    %v7440 = vld [vmem:[%s7429 + $0x50] sm:$0xff]
    %v7441 = vld [vmem:[%s7429 + $0x58] sm:$0xff]
    %v7442 = vld [vmem:[%s7429 + $0x60] sm:$0xff]
    %v7443 = vld [vmem:[%s7429 + $0x68] sm:$0xff]
    %v7444 = vld [vmem:[%s7429 + $0x70] sm:$0xff]
    %v7445 = vld [vmem:[%s7429 + $0x78] sm:$0xff]
    %v7446 = vld [vmem:[%s7429 + $0x80] sm:$0xff]
    %v7447 = vld [vmem:[%s7429 + $0x88] sm:$0xff]
    %v7448 = vld [vmem:[%s7429 + $0x90] sm:$0xff]
    %v7449 = vld [vmem:[%s7429 + $0x98] sm:$0xff]
    %v7450 = vld [vmem:[%s7429 + $0xa0] sm:$0xff]
    %v7451 = vld [vmem:[%s7429 + $0xa8] sm:$0xff]
    %v7452 = vld [vmem:[%s7429 + $0xb0] sm:$0xff]
    %v7453 = vld [vmem:[%s7429 + $0xb8] sm:$0xff]
    %v7454 = vld [vmem:[%s7429 + $0xc0] sm:$0xff]
    %v7455 = vld [vmem:[%s7429 + $0xc8] sm:$0xff]
    %v7456 = vld [vmem:[%s7429 + $0xd0] sm:$0xff]
    %v7457 = vld [vmem:[%s7429 + $0xd8] sm:$0xff]
    %v7458 = vld [vmem:[%s7429 + $0xe0] sm:$0xff]
    %v7459 = vld [vmem:[%s7429 + $0xe8] sm:$0xff]
    %v7460 = vld [vmem:[%s7429 + $0xf0] sm:$0xff]
    %v7461 = vld [vmem:[%s7429 + $0xf8] sm:$0xff]
    %v7464 = vrot.slane %v7428, 7
    %v7465 = vsel %vm6946, %v7464, %v7427
    %v7466 = vsel %vm6817, %v7465, 0
    %7468 = vmatprep.subr.mxu0 %v7431
    %7469 = vmatpush1.msra.mxu0 %v7430
    %7470 = vmatprep.subr.mxu0 %v7435
    %7471 = vmatpush1.msra.mxu0 %v7434
    %7472 = vmatprep.subr.mxu0 %v7439
    %7473 = vmatpush1.msra.mxu0 %v7438
    %7474 = vmatprep.subr.mxu0 %v7443
    %7475 = vmatpush1.msra.mxu0 %v7442
    %7476 = vmatprep.subr.mxu0 %v7447
    %7477 = vmatpush1.msra.mxu0 %v7446
    %7478 = vmatprep.subr.mxu0 %v7451
    %7479 = vmatpush1.msra.mxu0 %v7450
    %7480 = vmatprep.subr.mxu0 %v7455
    %7481 = vmatpush1.msra.mxu0 %v7454
    %7482 = vmatprep.subr.mxu0 %v7459
    %7483 = vmatpush1.msra.mxu0 %v7458
    %7484 = vmatprep.subr.mxu0 0.0
    %7485 = vmatpush1.msra.mxu0 0.0
    %7486 = vmatprep.subr.mxu0 0.0
    %7487 = vmatpush1.msra.mxu0 0.0
    %7488 = vmatprep.subr.mxu0 0.0
    %7489 = vmatpush1.msra.mxu0 0.0
    %7490 = vmatprep.subr.mxu0 0.0
    %7491 = vmatpush1.msra.mxu0 0.0
    %7492 = vmatprep.subr.mxu0 0.0
    %7493 = vmatpush1.msra.mxu0 0.0
    %7494 = vmatprep.subr.mxu0 0.0
    %7495 = vmatpush1.msra.mxu0 0.0
    %7496 = vmatprep.subr.mxu0 0.0
    %7497 = vmatpush1.msra.mxu0 0.0
    %7498 = vmatprep.subr.mxu0 0.0
    %7499 = vmatpush1.msra.mxu0 0.0
    %7500 = vmatprep.subr.mxu0 0.0
    %7501 = vmatpush1.msra.mxu0 0.0
    %7502 = vmatprep.subr.mxu0 0.0
    %7503 = vmatpush1.msra.mxu0 0.0
    %7504 = vmatprep.subr.mxu0 0.0
    %7505 = vmatpush1.msra.mxu0 0.0
    %7506 = vmatprep.subr.mxu0 0.0
    %7507 = vmatpush1.msra.mxu0 0.0
    %7508 = vmatprep.subr.mxu0 0.0
    %7509 = vmatpush1.msra.mxu0 0.0
    %7510 = vmatprep.subr.mxu0 0.0
    %7511 = vmatpush1.msra.mxu0 0.0
    %7512 = vmatprep.subr.mxu0 0.0
    %7513 = vmatpush1.msra.mxu0 0.0
    %7514 = vmatprep.subr.mxu0 0.0
    %7515 = vmatpush1.msra.mxu0 0.0
    %7516 = vmatprep.subr.mxu0 0.0
    %7517 = vmatpush1.msra.mxu0 0.0
    %7518 = vmatprep.subr.mxu0 0.0
    %7519 = vmatpush1.msra.mxu0 0.0
    %7520 = vmatprep.subr.mxu0 0.0
    %7521 = vmatpush1.msra.mxu0 0.0
    %7522 = vmatprep.subr.mxu0 0.0
    %7523 = vmatpush1.msra.mxu0 0.0
    %7524 = vmatprep.subr.mxu0 0.0
    %7525 = vmatpush1.msra.mxu0 0.0
    %7526 = vmatprep.subr.mxu0 0.0
    %7527 = vmatpush1.msra.mxu0 0.0
    %7528 = vmatprep.subr.mxu0 0.0
    %7529 = vmatpush1.msra.mxu0 0.0
    %7530 = vmatprep.subr.mxu0 0.0
    %7531 = vmatpush1.msra.mxu0 0.0
    %7532 = vmatprep.mubr.f32.mxu0 0.0
    %7533 = vmatmul.mubr.f32.gmra.mrb[0].mxu0 %v7466
    %v7534 = vpop.f32.mrb[0].mxu0
    %v7535 = vadd.f32 0.0, %v7534
    %v7536 = vpop.f32.mrb[0].mxu0
    %v7537 = vadd.f32 0.0, %v7536
    %7538 = vdwg.mxu0
    %7539 = vmatprep.subr.mxu0 %v7433
    %7540 = vmatpush1.msra.mxu0 %v7432
    %7541 = vmatprep.subr.mxu0 %v7437
    %7542 = vmatpush1.msra.mxu0 %v7436
    %7543 = vmatprep.subr.mxu0 %v7441
    %7544 = vmatpush1.msra.mxu0 %v7440
    %7545 = vmatprep.subr.mxu0 %v7445
    %7546 = vmatpush1.msra.mxu0 %v7444
    %7547 = vmatprep.subr.mxu0 %v7449
    %7548 = vmatpush1.msra.mxu0 %v7448
    %7549 = vmatprep.subr.mxu0 %v7453
    %7550 = vmatpush1.msra.mxu0 %v7452
    %7551 = vmatprep.subr.mxu0 %v7457
    %7552 = vmatpush1.msra.mxu0 %v7456
    %7553 = vmatprep.subr.mxu0 %v7461
    %7554 = vmatpush1.msra.mxu0 %v7460
    %7555 = vmatprep.subr.mxu0 0.0
    %7556 = vmatpush1.msra.mxu0 0.0
    %7557 = vmatprep.subr.mxu0 0.0
    %7558 = vmatpush1.msra.mxu0 0.0
    %7559 = vmatprep.subr.mxu0 0.0
    %7560 = vmatpush1.msra.mxu0 0.0
    %7561 = vmatprep.subr.mxu0 0.0
    %7562 = vmatpush1.msra.mxu0 0.0
    %7563 = vmatprep.subr.mxu0 0.0
    %7564 = vmatpush1.msra.mxu0 0.0
    %7565 = vmatprep.subr.mxu0 0.0
    %7566 = vmatpush1.msra.mxu0 0.0
    %7567 = vmatprep.subr.mxu0 0.0
    %7568 = vmatpush1.msra.mxu0 0.0
    %7569 = vmatprep.subr.mxu0 0.0
    %7570 = vmatpush1.msra.mxu0 0.0
    %7571 = vmatprep.subr.mxu0 0.0
    %7572 = vmatpush1.msra.mxu0 0.0
    %7573 = vmatprep.subr.mxu0 0.0
    %7574 = vmatpush1.msra.mxu0 0.0
    %7575 = vmatprep.subr.mxu0 0.0
    %7576 = vmatpush1.msra.mxu0 0.0
    %7577 = vmatprep.subr.mxu0 0.0
    %7578 = vmatpush1.msra.mxu0 0.0
    %7579 = vmatprep.subr.mxu0 0.0
    %7580 = vmatpush1.msra.mxu0 0.0
    %7581 = vmatprep.subr.mxu0 0.0
    %7582 = vmatpush1.msra.mxu0 0.0
    %7583 = vmatprep.subr.mxu0 0.0
    %7584 = vmatpush1.msra.mxu0 0.0
    %7585 = vmatprep.subr.mxu0 0.0
    %7586 = vmatpush1.msra.mxu0 0.0
    %7587 = vmatprep.subr.mxu0 0.0
    %7588 = vmatpush1.msra.mxu0 0.0
    %7589 = vmatprep.subr.mxu0 0.0
    %7590 = vmatpush1.msra.mxu0 0.0
    %7591 = vmatprep.subr.mxu0 0.0
    %7592 = vmatpush1.msra.mxu0 0.0
    %7593 = vmatprep.subr.mxu0 0.0
    %7594 = vmatpush1.msra.mxu0 0.0
    %7595 = vmatprep.subr.mxu0 0.0
    %7596 = vmatpush1.msra.mxu0 0.0
    %7597 = vmatprep.subr.mxu0 0.0
    %7598 = vmatpush1.msra.mxu0 0.0
    %7599 = vmatprep.subr.mxu0 0.0
    %7600 = vmatpush1.msra.mxu0 0.0
    %7601 = vmatprep.subr.mxu0 0.0
    %7602 = vmatpush1.msra.mxu0 0.0
    %7603 = vmatprep.mubr.f32.mxu0 0.0
    %7604 = vmatmul.mubr.f32.gmra.mrb[0].mxu0 %v7466
    %v7605 = vpop.f32.mrb[0].mxu0
    %v7606 = vadd.f32 0.0, %v7605
    %v7607 = vpop.f32.mrb[0].mxu0
    %v7608 = vadd.f32 0.0, %v7607
    %7609 = vdwg.mxu0
    %v7610 = vadd.f32 %v7423, %v7535
    %v7611 = vadd.f32 %v7424, %v7537
    %v7612 = vadd.f32 %v7425, %v7606
    %v7613 = vadd.f32 %v7426, %v7608
    %s7614 = scalar_lea.vmem [#allocation5], 4
    %v7615 = vld [vmem:[%s7614] sm:$0x1]
    %v7616 = vld [vmem:[%s7614 + $0x10] sm:$0x1]
    %s7617 = scalar_lea.vmem [#allocation12], 1024
    %v7618 = vld [vmem:[%s7617] sm:$0xff]
    %v7619 = vld [vmem:[%s7617 + $0x8] sm:$0xff]
    %v7620 = vld [vmem:[%s7617 + $0x10] sm:$0xff]
    %v7621 = vld [vmem:[%s7617 + $0x18] sm:$0xff]
    %v7622 = vld [vmem:[%s7617 + $0x20] sm:$0xff]
    %v7623 = vld [vmem:[%s7617 + $0x28] sm:$0xff]
    %v7624 = vld [vmem:[%s7617 + $0x30] sm:$0xff]
    %v7625 = vld [vmem:[%s7617 + $0x38] sm:$0xff]
    %v7626 = vld [vmem:[%s7617 + $0x40] sm:$0xff]
    %v7627 = vld [vmem:[%s7617 + $0x48] sm:$0xff]
    %v7628 = vld [vmem:[%s7617 + $0x50] sm:$0xff]
    %v7629 = vld [vmem:[%s7617 + $0x58] sm:$0xff]
    %v7630 = vld [vmem:[%s7617 + $0x60] sm:$0xff]
    %v7631 = vld [vmem:[%s7617 + $0x68] sm:$0xff]
    %v7632 = vld [vmem:[%s7617 + $0x70] sm:$0xff]
    %v7633 = vld [vmem:[%s7617 + $0x78] sm:$0xff]
    %v7634 = vld [vmem:[%s7617 + $0x80] sm:$0xff]
    %v7635 = vld [vmem:[%s7617 + $0x88] sm:$0xff]
    %v7636 = vld [vmem:[%s7617 + $0x90] sm:$0xff]
    %v7637 = vld [vmem:[%s7617 + $0x98] sm:$0xff]
    %v7638 = vld [vmem:[%s7617 + $0xa0] sm:$0xff]
    %v7639 = vld [vmem:[%s7617 + $0xa8] sm:$0xff]
    %v7640 = vld [vmem:[%s7617 + $0xb0] sm:$0xff]
    %v7641 = vld [vmem:[%s7617 + $0xb8] sm:$0xff]
    %v7642 = vld [vmem:[%s7617 + $0xc0] sm:$0xff]
    %v7643 = vld [vmem:[%s7617 + $0xc8] sm:$0xff]
    %v7644 = vld [vmem:[%s7617 + $0xd0] sm:$0xff]
    %v7645 = vld [vmem:[%s7617 + $0xd8] sm:$0xff]
    %v7646 = vld [vmem:[%s7617 + $0xe0] sm:$0xff]
    %v7647 = vld [vmem:[%s7617 + $0xe8] sm:$0xff]
    %v7648 = vld [vmem:[%s7617 + $0xf0] sm:$0xff]
    %v7649 = vld [vmem:[%s7617 + $0xf8] sm:$0xff]
    %v7652 = vrot.slane %v7616, 7
    %v7653 = vsel %vm6946, %v7652, %v7615
    %v7654 = vsel %vm6817, %v7653, 0
    %7656 = vmatprep.subr.mxu0 %v7619
    %7657 = vmatpush1.msra.mxu0 %v7618
    %7658 = vmatprep.subr.mxu0 %v7623
    %7659 = vmatpush1.msra.mxu0 %v7622
    %7660 = vmatprep.subr.mxu0 %v7627
    %7661 = vmatpush1.msra.mxu0 %v7626
    %7662 = vmatprep.subr.mxu0 %v7631
    %7663 = vmatpush1.msra.mxu0 %v7630
    %7664 = vmatprep.subr.mxu0 %v7635
    %7665 = vmatpush1.msra.mxu0 %v7634
    %7666 = vmatprep.subr.mxu0 %v7639
    %7667 = vmatpush1.msra.mxu0 %v7638
    %7668 = vmatprep.subr.mxu0 %v7643
    %7669 = vmatpush1.msra.mxu0 %v7642
    %7670 = vmatprep.subr.mxu0 %v7647
    %7671 = vmatpush1.msra.mxu0 %v7646
    %7672 = vmatprep.subr.mxu0 0.0
    %7673 = vmatpush1.msra.mxu0 0.0
    %7674 = vmatprep.subr.mxu0 0.0
    %7675 = vmatpush1.msra.mxu0 0.0
    %7676 = vmatprep.subr.mxu0 0.0
    %7677 = vmatpush1.msra.mxu0 0.0
    %7678 = vmatprep.subr.mxu0 0.0
    %7679 = vmatpush1.msra.mxu0 0.0
    %7680 = vmatprep.subr.mxu0 0.0
    %7681 = vmatpush1.msra.mxu0 0.0
    %7682 = vmatprep.subr.mxu0 0.0
    %7683 = vmatpush1.msra.mxu0 0.0
    %7684 = vmatprep.subr.mxu0 0.0
    %7685 = vmatpush1.msra.mxu0 0.0
    %7686 = vmatprep.subr.mxu0 0.0
    %7687 = vmatpush1.msra.mxu0 0.0
    %7688 = vmatprep.subr.mxu0 0.0
    %7689 = vmatpush1.msra.mxu0 0.0
    %7690 = vmatprep.subr.mxu0 0.0
    %7691 = vmatpush1.msra.mxu0 0.0
    %7692 = vmatprep.subr.mxu0 0.0
    %7693 = vmatpush1.msra.mxu0 0.0
    %7694 = vmatprep.subr.mxu0 0.0
    %7695 = vmatpush1.msra.mxu0 0.0
    %7696 = vmatprep.subr.mxu0 0.0
    %7697 = vmatpush1.msra.mxu0 0.0
    %7698 = vmatprep.subr.mxu0 0.0
    %7699 = vmatpush1.msra.mxu0 0.0
    %7700 = vmatprep.subr.mxu0 0.0
    %7701 = vmatpush1.msra.mxu0 0.0
    %7702 = vmatprep.subr.mxu0 0.0
    %7703 = vmatpush1.msra.mxu0 0.0
    %7704 = vmatprep.subr.mxu0 0.0
    %7705 = vmatpush1.msra.mxu0 0.0
    %7706 = vmatprep.subr.mxu0 0.0
    %7707 = vmatpush1.msra.mxu0 0.0
    %7708 = vmatprep.subr.mxu0 0.0
    %7709 = vmatpush1.msra.mxu0 0.0
    %7710 = vmatprep.subr.mxu0 0.0
    %7711 = vmatpush1.msra.mxu0 0.0
    %7712 = vmatprep.subr.mxu0 0.0
    %7713 = vmatpush1.msra.mxu0 0.0
    %7714 = vmatprep.subr.mxu0 0.0
    %7715 = vmatpush1.msra.mxu0 0.0
    %7716 = vmatprep.subr.mxu0 0.0
    %7717 = vmatpush1.msra.mxu0 0.0
    %7718 = vmatprep.subr.mxu0 0.0
    %7719 = vmatpush1.msra.mxu0 0.0
    %7720 = vmatprep.mubr.f32.mxu0 0.0
    %7721 = vmatmul.mubr.f32.gmra.mrb[0].mxu0 %v7654
    %v7722 = vpop.f32.mrb[0].mxu0
    %v7723 = vadd.f32 0.0, %v7722
    %v7724 = vpop.f32.mrb[0].mxu0
    %v7725 = vadd.f32 0.0, %v7724
    %7726 = vdwg.mxu0
    %7727 = vmatprep.subr.mxu0 %v7621
    %7728 = vmatpush1.msra.mxu0 %v7620
    %7729 = vmatprep.subr.mxu0 %v7625
    %7730 = vmatpush1.msra.mxu0 %v7624
    %7731 = vmatprep.subr.mxu0 %v7629
    %7732 = vmatpush1.msra.mxu0 %v7628
    %7733 = vmatprep.subr.mxu0 %v7633
    %7734 = vmatpush1.msra.mxu0 %v7632
    %7735 = vmatprep.subr.mxu0 %v7637
    %7736 = vmatpush1.msra.mxu0 %v7636
    %7737 = vmatprep.subr.mxu0 %v7641
    %7738 = vmatpush1.msra.mxu0 %v7640
    %7739 = vmatprep.subr.mxu0 %v7645
    %7740 = vmatpush1.msra.mxu0 %v7644
    %7741 = vmatprep.subr.mxu0 %v7649
    %7742 = vmatpush1.msra.mxu0 %v7648
    %7743 = vmatprep.subr.mxu0 0.0
    %7744 = vmatpush1.msra.mxu0 0.0
    %7745 = vmatprep.subr.mxu0 0.0
    %7746 = vmatpush1.msra.mxu0 0.0
    %7747 = vmatprep.subr.mxu0 0.0
    %7748 = vmatpush1.msra.mxu0 0.0
    %7749 = vmatprep.subr.mxu0 0.0
    %7750 = vmatpush1.msra.mxu0 0.0
    %7751 = vmatprep.subr.mxu0 0.0
    %7752 = vmatpush1.msra.mxu0 0.0
    %7753 = vmatprep.subr.mxu0 0.0
    %7754 = vmatpush1.msra.mxu0 0.0
    %7755 = vmatprep.subr.mxu0 0.0
    %7756 = vmatpush1.msra.mxu0 0.0
    %7757 = vmatprep.subr.mxu0 0.0
    %7758 = vmatpush1.msra.mxu0 0.0
    %7759 = vmatprep.subr.mxu0 0.0
    %7760 = vmatpush1.msra.mxu0 0.0
    %7761 = vmatprep.subr.mxu0 0.0
    %7762 = vmatpush1.msra.mxu0 0.0
    %7763 = vmatprep.subr.mxu0 0.0
    %7764 = vmatpush1.msra.mxu0 0.0
    %7765 = vmatprep.subr.mxu0 0.0
    %7766 = vmatpush1.msra.mxu0 0.0
    %7767 = vmatprep.subr.mxu0 0.0
    %7768 = vmatpush1.msra.mxu0 0.0
    %7769 = vmatprep.subr.mxu0 0.0
    %7770 = vmatpush1.msra.mxu0 0.0
    %7771 = vmatprep.subr.mxu0 0.0
    %7772 = vmatpush1.msra.mxu0 0.0
    %7773 = vmatprep.subr.mxu0 0.0
    %7774 = vmatpush1.msra.mxu0 0.0
    %7775 = vmatprep.subr.mxu0 0.0
    %7776 = vmatpush1.msra.mxu0 0.0
    %7777 = vmatprep.subr.mxu0 0.0
    %7778 = vmatpush1.msra.mxu0 0.0
    %7779 = vmatprep.subr.mxu0 0.0
    %7780 = vmatpush1.msra.mxu0 0.0
    %7781 = vmatprep.subr.mxu0 0.0
    %7782 = vmatpush1.msra.mxu0 0.0
    %7783 = vmatprep.subr.mxu0 0.0
    %7784 = vmatpush1.msra.mxu0 0.0
    %7785 = vmatprep.subr.mxu0 0.0
    %7786 = vmatpush1.msra.mxu0 0.0
    %7787 = vmatprep.subr.mxu0 0.0
    %7788 = vmatpush1.msra.mxu0 0.0
    %7789 = vmatprep.subr.mxu0 0.0
    %7790 = vmatpush1.msra.mxu0 0.0
    %7791 = vmatprep.mubr.f32.mxu0 0.0
    %7792 = vmatmul.mubr.f32.gmra.mrb[0].mxu0 %v7654
    %v7793 = vpop.f32.mrb[0].mxu0
    %v7794 = vadd.f32 0.0, %v7793
    %v7795 = vpop.f32.mrb[0].mxu0
    %v7796 = vadd.f32 0.0, %v7795
    %7797 = vdwg.mxu0
    %v7798 = vadd.f32 %v7610, %v7723
    %v7799 = vadd.f32 %v7611, %v7725
    %v7800 = vadd.f32 %v7612, %v7794
    %v7801 = vadd.f32 %v7613, %v7796
    %v7802 = vld [vmem:[%s7614 + $0x1] sm:$0x1]
    %v7803 = vld [vmem:[%s7614 + $0x11] sm:$0x1]
    %s7804 = scalar_lea.vmem [#allocation12], 1280
    %v7805 = vld [vmem:[%s7804] sm:$0xff]
    %v7806 = vld [vmem:[%s7804 + $0x8] sm:$0xff]
    %v7807 = vld [vmem:[%s7804 + $0x10] sm:$0xff]
    %v7808 = vld [vmem:[%s7804 + $0x18] sm:$0xff]
    %v7809 = vld [vmem:[%s7804 + $0x20] sm:$0xff]
    %v7810 = vld [vmem:[%s7804 + $0x28] sm:$0xff]
    %v7811 = vld [vmem:[%s7804 + $0x30] sm:$0xff]
    %v7812 = vld [vmem:[%s7804 + $0x38] sm:$0xff]
    %v7813 = vld [vmem:[%s7804 + $0x40] sm:$0xff]
    %v7814 = vld [vmem:[%s7804 + $0x48] sm:$0xff]
    %v7815 = vld [vmem:[%s7804 + $0x50] sm:$0xff]
    %v7816 = vld [vmem:[%s7804 + $0x58] sm:$0xff]
    %v7817 = vld [vmem:[%s7804 + $0x60] sm:$0xff]
    %v7818 = vld [vmem:[%s7804 + $0x68] sm:$0xff]
    %v7819 = vld [vmem:[%s7804 + $0x70] sm:$0xff]
    %v7820 = vld [vmem:[%s7804 + $0x78] sm:$0xff]
    %v7821 = vld [vmem:[%s7804 + $0x80] sm:$0xff]
    %v7822 = vld [vmem:[%s7804 + $0x88] sm:$0xff]
    %v7823 = vld [vmem:[%s7804 + $0x90] sm:$0xff]
    %v7824 = vld [vmem:[%s7804 + $0x98] sm:$0xff]
    %v7825 = vld [vmem:[%s7804 + $0xa0] sm:$0xff]
    %v7826 = vld [vmem:[%s7804 + $0xa8] sm:$0xff]
    %v7827 = vld [vmem:[%s7804 + $0xb0] sm:$0xff]
    %v7828 = vld [vmem:[%s7804 + $0xb8] sm:$0xff]
    %v7829 = vld [vmem:[%s7804 + $0xc0] sm:$0xff]
    %v7830 = vld [vmem:[%s7804 + $0xc8] sm:$0xff]
    %v7831 = vld [vmem:[%s7804 + $0xd0] sm:$0xff]
    %v7832 = vld [vmem:[%s7804 + $0xd8] sm:$0xff]
    %v7833 = vld [vmem:[%s7804 + $0xe0] sm:$0xff]
    %v7834 = vld [vmem:[%s7804 + $0xe8] sm:$0xff]
    %v7835 = vld [vmem:[%s7804 + $0xf0] sm:$0xff]
    %v7836 = vld [vmem:[%s7804 + $0xf8] sm:$0xff]
    %v7839 = vrot.slane %v7803, 7
    %v7840 = vsel %vm6946, %v7839, %v7802
    %v7841 = vsel %vm6817, %v7840, 0
    %7843 = vmatprep.subr.mxu0 %v7806
    %7844 = vmatpush1.msra.mxu0 %v7805
    %7845 = vmatprep.subr.mxu0 %v7810
    %7846 = vmatpush1.msra.mxu0 %v7809
    %7847 = vmatprep.subr.mxu0 %v7814
    %7848 = vmatpush1.msra.mxu0 %v7813
    %7849 = vmatprep.subr.mxu0 %v7818
    %7850 = vmatpush1.msra.mxu0 %v7817
    %7851 = vmatprep.subr.mxu0 %v7822
    %7852 = vmatpush1.msra.mxu0 %v7821
    %7853 = vmatprep.subr.mxu0 %v7826
    %7854 = vmatpush1.msra.mxu0 %v7825
    %7855 = vmatprep.subr.mxu0 %v7830
    %7856 = vmatpush1.msra.mxu0 %v7829
    %7857 = vmatprep.subr.mxu0 %v7834
    %7858 = vmatpush1.msra.mxu0 %v7833
    %7859 = vmatprep.subr.mxu0 0.0
    %7860 = vmatpush1.msra.mxu0 0.0
    %7861 = vmatprep.subr.mxu0 0.0
    %7862 = vmatpush1.msra.mxu0 0.0
    %7863 = vmatprep.subr.mxu0 0.0
    %7864 = vmatpush1.msra.mxu0 0.0
    %7865 = vmatprep.subr.mxu0 0.0
    %7866 = vmatpush1.msra.mxu0 0.0
    %7867 = vmatprep.subr.mxu0 0.0
    %7868 = vmatpush1.msra.mxu0 0.0
    %7869 = vmatprep.subr.mxu0 0.0
    %7870 = vmatpush1.msra.mxu0 0.0
    %7871 = vmatprep.subr.mxu0 0.0
    %7872 = vmatpush1.msra.mxu0 0.0
    %7873 = vmatprep.subr.mxu0 0.0
    %7874 = vmatpush1.msra.mxu0 0.0
    %7875 = vmatprep.subr.mxu0 0.0
    %7876 = vmatpush1.msra.mxu0 0.0
    %7877 = vmatprep.subr.mxu0 0.0
    %7878 = vmatpush1.msra.mxu0 0.0
    %7879 = vmatprep.subr.mxu0 0.0
    %7880 = vmatpush1.msra.mxu0 0.0
    %7881 = vmatprep.subr.mxu0 0.0
    %7882 = vmatpush1.msra.mxu0 0.0
    %7883 = vmatprep.subr.mxu0 0.0
    %7884 = vmatpush1.msra.mxu0 0.0
    %7885 = vmatprep.subr.mxu0 0.0
    %7886 = vmatpush1.msra.mxu0 0.0
    %7887 = vmatprep.subr.mxu0 0.0
    %7888 = vmatpush1.msra.mxu0 0.0
    %7889 = vmatprep.subr.mxu0 0.0
    %7890 = vmatpush1.msra.mxu0 0.0
    %7891 = vmatprep.subr.mxu0 0.0
    %7892 = vmatpush1.msra.mxu0 0.0
    %7893 = vmatprep.subr.mxu0 0.0
    %7894 = vmatpush1.msra.mxu0 0.0
    %7895 = vmatprep.subr.mxu0 0.0
    %7896 = vmatpush1.msra.mxu0 0.0
    %7897 = vmatprep.subr.mxu0 0.0
    %7898 = vmatpush1.msra.mxu0 0.0
    %7899 = vmatprep.subr.mxu0 0.0
    %7900 = vmatpush1.msra.mxu0 0.0
    %7901 = vmatprep.subr.mxu0 0.0
    %7902 = vmatpush1.msra.mxu0 0.0
    %7903 = vmatprep.subr.mxu0 0.0
    %7904 = vmatpush1.msra.mxu0 0.0
    %7905 = vmatprep.subr.mxu0 0.0
    %7906 = vmatpush1.msra.mxu0 0.0
    %7907 = vmatprep.mubr.f32.mxu0 0.0
    %7908 = vmatmul.mubr.f32.gmra.mrb[0].mxu0 %v7841
    %v7909 = vpop.f32.mrb[0].mxu0
    %v7910 = vadd.f32 0.0, %v7909
    %v7911 = vpop.f32.mrb[0].mxu0
    %v7912 = vadd.f32 0.0, %v7911
    %7913 = vdwg.mxu0
    %7914 = vmatprep.subr.mxu0 %v7808
    %7915 = vmatpush1.msra.mxu0 %v7807
    %7916 = vmatprep.subr.mxu0 %v7812
    %7917 = vmatpush1.msra.mxu0 %v7811
    %7918 = vmatprep.subr.mxu0 %v7816
    %7919 = vmatpush1.msra.mxu0 %v7815
    %7920 = vmatprep.subr.mxu0 %v7820
    %7921 = vmatpush1.msra.mxu0 %v7819
    %7922 = vmatprep.subr.mxu0 %v7824
    %7923 = vmatpush1.msra.mxu0 %v7823
    %7924 = vmatprep.subr.mxu0 %v7828
    %7925 = vmatpush1.msra.mxu0 %v7827
    %7926 = vmatprep.subr.mxu0 %v7832
    %7927 = vmatpush1.msra.mxu0 %v7831
    %7928 = vmatprep.subr.mxu0 %v7836
    %7929 = vmatpush1.msra.mxu0 %v7835
    %7930 = vmatprep.subr.mxu0 0.0
    %7931 = vmatpush1.msra.mxu0 0.0
    %7932 = vmatprep.subr.mxu0 0.0
    %7933 = vmatpush1.msra.mxu0 0.0
    %7934 = vmatprep.subr.mxu0 0.0
    %7935 = vmatpush1.msra.mxu0 0.0
    %7936 = vmatprep.subr.mxu0 0.0
    %7937 = vmatpush1.msra.mxu0 0.0
    %7938 = vmatprep.subr.mxu0 0.0
    %7939 = vmatpush1.msra.mxu0 0.0
    %7940 = vmatprep.subr.mxu0 0.0
    %7941 = vmatpush1.msra.mxu0 0.0
    %7942 = vmatprep.subr.mxu0 0.0
    %7943 = vmatpush1.msra.mxu0 0.0
    %7944 = vmatprep.subr.mxu0 0.0
    %7945 = vmatpush1.msra.mxu0 0.0
    %7946 = vmatprep.subr.mxu0 0.0
    %7947 = vmatpush1.msra.mxu0 0.0
    %7948 = vmatprep.subr.mxu0 0.0
    %7949 = vmatpush1.msra.mxu0 0.0
    %7950 = vmatprep.subr.mxu0 0.0
    %7951 = vmatpush1.msra.mxu0 0.0
    %7952 = vmatprep.subr.mxu0 0.0
    %7953 = vmatpush1.msra.mxu0 0.0
    %7954 = vmatprep.subr.mxu0 0.0
    %7955 = vmatpush1.msra.mxu0 0.0
    %7956 = vmatprep.subr.mxu0 0.0
    %7957 = vmatpush1.msra.mxu0 0.0
    %7958 = vmatprep.subr.mxu0 0.0
    %7959 = vmatpush1.msra.mxu0 0.0
    %7960 = vmatprep.subr.mxu0 0.0
    %7961 = vmatpush1.msra.mxu0 0.0
    %7962 = vmatprep.subr.mxu0 0.0
    %7963 = vmatpush1.msra.mxu0 0.0
    %7964 = vmatprep.subr.mxu0 0.0
    %7965 = vmatpush1.msra.mxu0 0.0
    %7966 = vmatprep.subr.mxu0 0.0
    %7967 = vmatpush1.msra.mxu0 0.0
    %7968 = vmatprep.subr.mxu0 0.0
    %7969 = vmatpush1.msra.mxu0 0.0
    %7970 = vmatprep.subr.mxu0 0.0
    %7971 = vmatpush1.msra.mxu0 0.0
    %7972 = vmatprep.subr.mxu0 0.0
    %7973 = vmatpush1.msra.mxu0 0.0
    %7974 = vmatprep.subr.mxu0 0.0
    %7975 = vmatpush1.msra.mxu0 0.0
    %7976 = vmatprep.subr.mxu0 0.0
    %7977 = vmatpush1.msra.mxu0 0.0
    %7978 = vmatprep.mubr.f32.mxu0 0.0
    %7979 = vmatmul.mubr.f32.gmra.mrb[0].mxu0 %v7841
    %v7980 = vpop.f32.mrb[0].mxu0
    %v7981 = vadd.f32 0.0, %v7980
    %v7982 = vpop.f32.mrb[0].mxu0
    %v7983 = vadd.f32 0.0, %v7982
    %7984 = vdwg.mxu0
    %v7985 = vadd.f32 %v7798, %v7910
    %v7986 = vadd.f32 %v7799, %v7912
    %v7987 = vadd.f32 %v7800, %v7981
    %v7988 = vadd.f32 %v7801, %v7983
    %v7989 = vld [vmem:[%s7614 + $0x2] sm:$0x1]
    %v7990 = vld [vmem:[%s7614 + $0x12] sm:$0x1]
    %s7991 = scalar_lea.vmem [#allocation12], 1536
    %v7992 = vld [vmem:[%s7991] sm:$0xff]
    %v7993 = vld [vmem:[%s7991 + $0x8] sm:$0xff]
    %v7994 = vld [vmem:[%s7991 + $0x10] sm:$0xff]
    %v7995 = vld [vmem:[%s7991 + $0x18] sm:$0xff]
    %v7996 = vld [vmem:[%s7991 + $0x20] sm:$0xff]
    %v7997 = vld [vmem:[%s7991 + $0x28] sm:$0xff]
    %v7998 = vld [vmem:[%s7991 + $0x30] sm:$0xff]
    %v7999 = vld [vmem:[%s7991 + $0x38] sm:$0xff]
    %v8000 = vld [vmem:[%s7991 + $0x40] sm:$0xff]
    %v8001 = vld [vmem:[%s7991 + $0x48] sm:$0xff]
    %v8002 = vld [vmem:[%s7991 + $0x50] sm:$0xff]
    %v8003 = vld [vmem:[%s7991 + $0x58] sm:$0xff]
    %v8004 = vld [vmem:[%s7991 + $0x60] sm:$0xff]
    %v8005 = vld [vmem:[%s7991 + $0x68] sm:$0xff]
    %v8006 = vld [vmem:[%s7991 + $0x70] sm:$0xff]
    %v8007 = vld [vmem:[%s7991 + $0x78] sm:$0xff]
    %v8008 = vld [vmem:[%s7991 + $0x80] sm:$0xff]
    %v8009 = vld [vmem:[%s7991 + $0x88] sm:$0xff]
    %v8010 = vld [vmem:[%s7991 + $0x90] sm:$0xff]
    %v8011 = vld [vmem:[%s7991 + $0x98] sm:$0xff]
    %v8012 = vld [vmem:[%s7991 + $0xa0] sm:$0xff]
    %v8013 = vld [vmem:[%s7991 + $0xa8] sm:$0xff]
    %v8014 = vld [vmem:[%s7991 + $0xb0] sm:$0xff]
    %v8015 = vld [vmem:[%s7991 + $0xb8] sm:$0xff]
    %v8016 = vld [vmem:[%s7991 + $0xc0] sm:$0xff]
    %v8017 = vld [vmem:[%s7991 + $0xc8] sm:$0xff]
    %v8018 = vld [vmem:[%s7991 + $0xd0] sm:$0xff]
    %v8019 = vld [vmem:[%s7991 + $0xd8] sm:$0xff]
    %v8020 = vld [vmem:[%s7991 + $0xe0] sm:$0xff]
    %v8021 = vld [vmem:[%s7991 + $0xe8] sm:$0xff]
    %v8022 = vld [vmem:[%s7991 + $0xf0] sm:$0xff]
    %v8023 = vld [vmem:[%s7991 + $0xf8] sm:$0xff]
    %v8026 = vrot.slane %v7990, 7
    %v8027 = vsel %vm6946, %v8026, %v7989
    %v8028 = vsel %vm6817, %v8027, 0
    %8030 = vmatprep.subr.mxu0 %v7993
    %8031 = vmatpush1.msra.mxu0 %v7992
    %8032 = vmatprep.subr.mxu0 %v7997
    %8033 = vmatpush1.msra.mxu0 %v7996
    %8034 = vmatprep.subr.mxu0 %v8001
    %8035 = vmatpush1.msra.mxu0 %v8000
    %8036 = vmatprep.subr.mxu0 %v8005
    %8037 = vmatpush1.msra.mxu0 %v8004
    %8038 = vmatprep.subr.mxu0 %v8009
    %8039 = vmatpush1.msra.mxu0 %v8008
    %8040 = vmatprep.subr.mxu0 %v8013
    %8041 = vmatpush1.msra.mxu0 %v8012
    %8042 = vmatprep.subr.mxu0 %v8017
    %8043 = vmatpush1.msra.mxu0 %v8016
    %8044 = vmatprep.subr.mxu0 %v8021
    %8045 = vmatpush1.msra.mxu0 %v8020
    %8046 = vmatprep.subr.mxu0 0.0
    %8047 = vmatpush1.msra.mxu0 0.0
    %8048 = vmatprep.subr.mxu0 0.0
    %8049 = vmatpush1.msra.mxu0 0.0
    %8050 = vmatprep.subr.mxu0 0.0
    %8051 = vmatpush1.msra.mxu0 0.0
    %8052 = vmatprep.subr.mxu0 0.0
    %8053 = vmatpush1.msra.mxu0 0.0
    %8054 = vmatprep.subr.mxu0 0.0
    %8055 = vmatpush1.msra.mxu0 0.0
    %8056 = vmatprep.subr.mxu0 0.0
    %8057 = vmatpush1.msra.mxu0 0.0
    %8058 = vmatprep.subr.mxu0 0.0
    %8059 = vmatpush1.msra.mxu0 0.0
    %8060 = vmatprep.subr.mxu0 0.0
    %8061 = vmatpush1.msra.mxu0 0.0
    %8062 = vmatprep.subr.mxu0 0.0
    %8063 = vmatpush1.msra.mxu0 0.0
    %8064 = vmatprep.subr.mxu0 0.0
    %8065 = vmatpush1.msra.mxu0 0.0
    %8066 = vmatprep.subr.mxu0 0.0
    %8067 = vmatpush1.msra.mxu0 0.0
    %8068 = vmatprep.subr.mxu0 0.0
    %8069 = vmatpush1.msra.mxu0 0.0
    %8070 = vmatprep.subr.mxu0 0.0
    %8071 = vmatpush1.msra.mxu0 0.0
    %8072 = vmatprep.subr.mxu0 0.0
    %8073 = vmatpush1.msra.mxu0 0.0
    %8074 = vmatprep.subr.mxu0 0.0
    %8075 = vmatpush1.msra.mxu0 0.0
    %8076 = vmatprep.subr.mxu0 0.0
    %8077 = vmatpush1.msra.mxu0 0.0
    %8078 = vmatprep.subr.mxu0 0.0
    %8079 = vmatpush1.msra.mxu0 0.0
    %8080 = vmatprep.subr.mxu0 0.0
    %8081 = vmatpush1.msra.mxu0 0.0
    %8082 = vmatprep.subr.mxu0 0.0
    %8083 = vmatpush1.msra.mxu0 0.0
    %8084 = vmatprep.subr.mxu0 0.0
    %8085 = vmatpush1.msra.mxu0 0.0
    %8086 = vmatprep.subr.mxu0 0.0
    %8087 = vmatpush1.msra.mxu0 0.0
    %8088 = vmatprep.subr.mxu0 0.0
    %8089 = vmatpush1.msra.mxu0 0.0
    %8090 = vmatprep.subr.mxu0 0.0
    %8091 = vmatpush1.msra.mxu0 0.0
    %8092 = vmatprep.subr.mxu0 0.0
    %8093 = vmatpush1.msra.mxu0 0.0
    %8094 = vmatprep.mubr.f32.mxu0 0.0
    %8095 = vmatmul.mubr.f32.gmra.mrb[0].mxu0 %v8028
    %v8096 = vpop.f32.mrb[0].mxu0
    %v8097 = vadd.f32 0.0, %v8096
    %v8098 = vpop.f32.mrb[0].mxu0
    %v8099 = vadd.f32 0.0, %v8098
    %8100 = vdwg.mxu0
    %8101 = vmatprep.subr.mxu0 %v7995
    %8102 = vmatpush1.msra.mxu0 %v7994
    %8103 = vmatprep.subr.mxu0 %v7999
    %8104 = vmatpush1.msra.mxu0 %v7998
    %8105 = vmatprep.subr.mxu0 %v8003
    %8106 = vmatpush1.msra.mxu0 %v8002
    %8107 = vmatprep.subr.mxu0 %v8007
    %8108 = vmatpush1.msra.mxu0 %v8006
    %8109 = vmatprep.subr.mxu0 %v8011
    %8110 = vmatpush1.msra.mxu0 %v8010
    %8111 = vmatprep.subr.mxu0 %v8015
    %8112 = vmatpush1.msra.mxu0 %v8014
    %8113 = vmatprep.subr.mxu0 %v8019
    %8114 = vmatpush1.msra.mxu0 %v8018
    %8115 = vmatprep.subr.mxu0 %v8023
    %8116 = vmatpush1.msra.mxu0 %v8022
    %8117 = vmatprep.subr.mxu0 0.0
    %8118 = vmatpush1.msra.mxu0 0.0
    %8119 = vmatprep.subr.mxu0 0.0
    %8120 = vmatpush1.msra.mxu0 0.0
    %8121 = vmatprep.subr.mxu0 0.0
    %8122 = vmatpush1.msra.mxu0 0.0
    %8123 = vmatprep.subr.mxu0 0.0
    %8124 = vmatpush1.msra.mxu0 0.0
    %8125 = vmatprep.subr.mxu0 0.0
    %8126 = vmatpush1.msra.mxu0 0.0
    %8127 = vmatprep.subr.mxu0 0.0
    %8128 = vmatpush1.msra.mxu0 0.0
    %8129 = vmatprep.subr.mxu0 0.0
    %8130 = vmatpush1.msra.mxu0 0.0
    %8131 = vmatprep.subr.mxu0 0.0
    %8132 = vmatpush1.msra.mxu0 0.0
    %8133 = vmatprep.subr.mxu0 0.0
    %8134 = vmatpush1.msra.mxu0 0.0
    %8135 = vmatprep.subr.mxu0 0.0
    %8136 = vmatpush1.msra.mxu0 0.0
    %8137 = vmatprep.subr.mxu0 0.0
    %8138 = vmatpush1.msra.mxu0 0.0
    %8139 = vmatprep.subr.mxu0 0.0
    %8140 = vmatpush1.msra.mxu0 0.0
    %8141 = vmatprep.subr.mxu0 0.0
    %8142 = vmatpush1.msra.mxu0 0.0
    %8143 = vmatprep.subr.mxu0 0.0
    %8144 = vmatpush1.msra.mxu0 0.0
    %8145 = vmatprep.subr.mxu0 0.0
    %8146 = vmatpush1.msra.mxu0 0.0
    %8147 = vmatprep.subr.mxu0 0.0
    %8148 = vmatpush1.msra.mxu0 0.0
    %8149 = vmatprep.subr.mxu0 0.0
    %8150 = vmatpush1.msra.mxu0 0.0
    %8151 = vmatprep.subr.mxu0 0.0
    %8152 = vmatpush1.msra.mxu0 0.0
    %8153 = vmatprep.subr.mxu0 0.0
    %8154 = vmatpush1.msra.mxu0 0.0
    %8155 = vmatprep.subr.mxu0 0.0
    %8156 = vmatpush1.msra.mxu0 0.0
    %8157 = vmatprep.subr.mxu0 0.0
    %8158 = vmatpush1.msra.mxu0 0.0
    %8159 = vmatprep.subr.mxu0 0.0
    %8160 = vmatpush1.msra.mxu0 0.0
    %8161 = vmatprep.subr.mxu0 0.0
    %8162 = vmatpush1.msra.mxu0 0.0
    %8163 = vmatprep.subr.mxu0 0.0
    %8164 = vmatpush1.msra.mxu0 0.0
    %8165 = vmatprep.mubr.f32.mxu0 0.0
    %8166 = vmatmul.mubr.f32.gmra.mrb[0].mxu0 %v8028
    %v8167 = vpop.f32.mrb[0].mxu0
    %v8168 = vadd.f32 0.0, %v8167
    %v8169 = vpop.f32.mrb[0].mxu0
    %v8170 = vadd.f32 0.0, %v8169
    %8171 = vdwg.mxu0
    %v8172 = vadd.f32 %v7985, %v8097
    %v8173 = vadd.f32 %v7986, %v8099
    %v8174 = vadd.f32 %v7987, %v8168
    %v8175 = vadd.f32 %v7988, %v8170
    %v8176 = vld [vmem:[%s7614 + $0x3] sm:$0x1]
    %v8177 = vld [vmem:[%s7614 + $0x13] sm:$0x1]
    %s8178 = scalar_lea.vmem [#allocation12], 1792
    %v8179 = vld [vmem:[%s8178] sm:$0xff]
    %v8180 = vld [vmem:[%s8178 + $0x8] sm:$0xff]
    %v8181 = vld [vmem:[%s8178 + $0x10] sm:$0xff]
    %v8182 = vld [vmem:[%s8178 + $0x18] sm:$0xff]
    %v8183 = vld [vmem:[%s8178 + $0x20] sm:$0xff]
    %v8184 = vld [vmem:[%s8178 + $0x28] sm:$0xff]
    %v8185 = vld [vmem:[%s8178 + $0x30] sm:$0xff]
    %v8186 = vld [vmem:[%s8178 + $0x38] sm:$0xff]
    %v8187 = vld [vmem:[%s8178 + $0x40] sm:$0xff]
    %v8188 = vld [vmem:[%s8178 + $0x48] sm:$0xff]
    %v8189 = vld [vmem:[%s8178 + $0x50] sm:$0xff]
    %v8190 = vld [vmem:[%s8178 + $0x58] sm:$0xff]
    %v8191 = vld [vmem:[%s8178 + $0x60] sm:$0xff]
    %v8192 = vld [vmem:[%s8178 + $0x68] sm:$0xff]
    %v8193 = vld [vmem:[%s8178 + $0x70] sm:$0xff]
    %v8194 = vld [vmem:[%s8178 + $0x78] sm:$0xff]
    %v8195 = vld [vmem:[%s8178 + $0x80] sm:$0xff]
    %v8196 = vld [vmem:[%s8178 + $0x88] sm:$0xff]
    %v8197 = vld [vmem:[%s8178 + $0x90] sm:$0xff]
    %v8198 = vld [vmem:[%s8178 + $0x98] sm:$0xff]
    %v8199 = vld [vmem:[%s8178 + $0xa0] sm:$0xff]
    %v8200 = vld [vmem:[%s8178 + $0xa8] sm:$0xff]
    %v8201 = vld [vmem:[%s8178 + $0xb0] sm:$0xff]
    %v8202 = vld [vmem:[%s8178 + $0xb8] sm:$0xff]
    %v8203 = vld [vmem:[%s8178 + $0xc0] sm:$0xff]
    %v8204 = vld [vmem:[%s8178 + $0xc8] sm:$0xff]
    %v8205 = vld [vmem:[%s8178 + $0xd0] sm:$0xff]
    %v8206 = vld [vmem:[%s8178 + $0xd8] sm:$0xff]
    %v8207 = vld [vmem:[%s8178 + $0xe0] sm:$0xff]
    %v8208 = vld [vmem:[%s8178 + $0xe8] sm:$0xff]
    %v8209 = vld [vmem:[%s8178 + $0xf0] sm:$0xff]
    %v8210 = vld [vmem:[%s8178 + $0xf8] sm:$0xff]
    %v8213 = vrot.slane %v8177, 7
    %v8214 = vsel %vm6946, %v8213, %v8176
    %v8215 = vsel %vm6817, %v8214, 0
    %8217 = vmatprep.subr.mxu0 %v8180
    %8218 = vmatpush1.msra.mxu0 %v8179
    %8219 = vmatprep.subr.mxu0 %v8184
    %8220 = vmatpush1.msra.mxu0 %v8183
    %8221 = vmatprep.subr.mxu0 %v8188
    %8222 = vmatpush1.msra.mxu0 %v8187
    %8223 = vmatprep.subr.mxu0 %v8192
    %8224 = vmatpush1.msra.mxu0 %v8191
    %8225 = vmatprep.subr.mxu0 %v8196
    %8226 = vmatpush1.msra.mxu0 %v8195
    %8227 = vmatprep.subr.mxu0 %v8200
    %8228 = vmatpush1.msra.mxu0 %v8199
    %8229 = vmatprep.subr.mxu0 %v8204
    %8230 = vmatpush1.msra.mxu0 %v8203
    %8231 = vmatprep.subr.mxu0 %v8208
    %8232 = vmatpush1.msra.mxu0 %v8207
    %8233 = vmatprep.subr.mxu0 0.0
    %8234 = vmatpush1.msra.mxu0 0.0
    %8235 = vmatprep.subr.mxu0 0.0
    %8236 = vmatpush1.msra.mxu0 0.0
    %8237 = vmatprep.subr.mxu0 0.0
    %8238 = vmatpush1.msra.mxu0 0.0
    %8239 = vmatprep.subr.mxu0 0.0
    %8240 = vmatpush1.msra.mxu0 0.0
    %8241 = vmatprep.subr.mxu0 0.0
    %8242 = vmatpush1.msra.mxu0 0.0
    %8243 = vmatprep.subr.mxu0 0.0
    %8244 = vmatpush1.msra.mxu0 0.0
    %8245 = vmatprep.subr.mxu0 0.0
    %8246 = vmatpush1.msra.mxu0 0.0
    %8247 = vmatprep.subr.mxu0 0.0
    %8248 = vmatpush1.msra.mxu0 0.0
    %8249 = vmatprep.subr.mxu0 0.0
    %8250 = vmatpush1.msra.mxu0 0.0
    %8251 = vmatprep.subr.mxu0 0.0
    %8252 = vmatpush1.msra.mxu0 0.0
    %8253 = vmatprep.subr.mxu0 0.0
    %8254 = vmatpush1.msra.mxu0 0.0
    %8255 = vmatprep.subr.mxu0 0.0
    %8256 = vmatpush1.msra.mxu0 0.0
    %8257 = vmatprep.subr.mxu0 0.0
    %8258 = vmatpush1.msra.mxu0 0.0
    %8259 = vmatprep.subr.mxu0 0.0
    %8260 = vmatpush1.msra.mxu0 0.0
    %8261 = vmatprep.subr.mxu0 0.0
    %8262 = vmatpush1.msra.mxu0 0.0
    %8263 = vmatprep.subr.mxu0 0.0
    %8264 = vmatpush1.msra.mxu0 0.0
    %8265 = vmatprep.subr.mxu0 0.0
    %8266 = vmatpush1.msra.mxu0 0.0
    %8267 = vmatprep.subr.mxu0 0.0
    %8268 = vmatpush1.msra.mxu0 0.0
    %8269 = vmatprep.subr.mxu0 0.0
    %8270 = vmatpush1.msra.mxu0 0.0
    %8271 = vmatprep.subr.mxu0 0.0
    %8272 = vmatpush1.msra.mxu0 0.0
    %8273 = vmatprep.subr.mxu0 0.0
    %8274 = vmatpush1.msra.mxu0 0.0
    %8275 = vmatprep.subr.mxu0 0.0
    %8276 = vmatpush1.msra.mxu0 0.0
    %8277 = vmatprep.subr.mxu0 0.0
    %8278 = vmatpush1.msra.mxu0 0.0
    %8279 = vmatprep.subr.mxu0 0.0
    %8280 = vmatpush1.msra.mxu0 0.0
    %8281 = vmatprep.mubr.f32.mxu0 0.0
    %8282 = vmatmul.mubr.f32.gmra.mrb[0].mxu0 %v8215
    %v8283 = vpop.f32.mrb[0].mxu0
    %v8284 = vadd.f32 0.0, %v8283
    %v8285 = vpop.f32.mrb[0].mxu0
    %v8286 = vadd.f32 0.0, %v8285
    %8287 = vdwg.mxu0
    %8288 = vmatprep.subr.mxu0 %v8182
    %8289 = vmatpush1.msra.mxu0 %v8181
    %8290 = vmatprep.subr.mxu0 %v8186
    %8291 = vmatpush1.msra.mxu0 %v8185
    %8292 = vmatprep.subr.mxu0 %v8190
    %8293 = vmatpush1.msra.mxu0 %v8189
    %8294 = vmatprep.subr.mxu0 %v8194
    %8295 = vmatpush1.msra.mxu0 %v8193
    %8296 = vmatprep.subr.mxu0 %v8198
    %8297 = vmatpush1.msra.mxu0 %v8197
    %8298 = vmatprep.subr.mxu0 %v8202
    %8299 = vmatpush1.msra.mxu0 %v8201
    %8300 = vmatprep.subr.mxu0 %v8206
    %8301 = vmatpush1.msra.mxu0 %v8205
    %8302 = vmatprep.subr.mxu0 %v8210
    %8303 = vmatpush1.msra.mxu0 %v8209
    %8304 = vmatprep.subr.mxu0 0.0
    %8305 = vmatpush1.msra.mxu0 0.0
    %8306 = vmatprep.subr.mxu0 0.0
    %8307 = vmatpush1.msra.mxu0 0.0
    %8308 = vmatprep.subr.mxu0 0.0
    %8309 = vmatpush1.msra.mxu0 0.0
    %8310 = vmatprep.subr.mxu0 0.0
    %8311 = vmatpush1.msra.mxu0 0.0
    %8312 = vmatprep.subr.mxu0 0.0
    %8313 = vmatpush1.msra.mxu0 0.0
    %8314 = vmatprep.subr.mxu0 0.0
    %8315 = vmatpush1.msra.mxu0 0.0
    %8316 = vmatprep.subr.mxu0 0.0
    %8317 = vmatpush1.msra.mxu0 0.0
    %8318 = vmatprep.subr.mxu0 0.0
    %8319 = vmatpush1.msra.mxu0 0.0
    %8320 = vmatprep.subr.mxu0 0.0
    %8321 = vmatpush1.msra.mxu0 0.0
    %8322 = vmatprep.subr.mxu0 0.0
    %8323 = vmatpush1.msra.mxu0 0.0
    %8324 = vmatprep.subr.mxu0 0.0
    %8325 = vmatpush1.msra.mxu0 0.0
    %8326 = vmatprep.subr.mxu0 0.0
    %8327 = vmatpush1.msra.mxu0 0.0
    %8328 = vmatprep.subr.mxu0 0.0
    %8329 = vmatpush1.msra.mxu0 0.0
    %8330 = vmatprep.subr.mxu0 0.0
    %8331 = vmatpush1.msra.mxu0 0.0
    %8332 = vmatprep.subr.mxu0 0.0
    %8333 = vmatpush1.msra.mxu0 0.0
    %8334 = vmatprep.subr.mxu0 0.0
    %8335 = vmatpush1.msra.mxu0 0.0
    %8336 = vmatprep.subr.mxu0 0.0
    %8337 = vmatpush1.msra.mxu0 0.0
    %8338 = vmatprep.subr.mxu0 0.0
    %8339 = vmatpush1.msra.mxu0 0.0
    %8340 = vmatprep.subr.mxu0 0.0
    %8341 = vmatpush1.msra.mxu0 0.0
    %8342 = vmatprep.subr.mxu0 0.0
    %8343 = vmatpush1.msra.mxu0 0.0
    %8344 = vmatprep.subr.mxu0 0.0
    %8345 = vmatpush1.msra.mxu0 0.0
    %8346 = vmatprep.subr.mxu0 0.0
    %8347 = vmatpush1.msra.mxu0 0.0
    %8348 = vmatprep.subr.mxu0 0.0
    %8349 = vmatpush1.msra.mxu0 0.0
    %8350 = vmatprep.subr.mxu0 0.0
    %8351 = vmatpush1.msra.mxu0 0.0
    %8352 = vmatprep.mubr.f32.mxu0 0.0
    %8353 = vmatmul.mubr.f32.gmra.mrb[0].mxu0 %v8215
    %v8354 = vpop.f32.mrb[0].mxu0
    %v8355 = vadd.f32 0.0, %v8354
    %v8356 = vpop.f32.mrb[0].mxu0
    %v8357 = vadd.f32 0.0, %v8356
    %8358 = vdwg.mxu0
    %v8359 = vadd.f32 %v8172, %v8284
    %v8360 = vadd.f32 %v8173, %v8286
    %v8361 = vadd.f32 %v8174, %v8355
    %v8362 = vadd.f32 %v8175, %v8357
    %s8363 = scalar_lea.vmem [#allocation5], 8
    %v8364 = vld [vmem:[%s8363] sm:$0x1]
    %v8365 = vld [vmem:[%s8363 + $0x10] sm:$0x1]
    %s8366 = scalar_lea.vmem [#allocation12], 2048
    %v8367 = vld [vmem:[%s8366] sm:$0xff]
    %v8368 = vld [vmem:[%s8366 + $0x8] sm:$0xff]
    %v8369 = vld [vmem:[%s8366 + $0x10] sm:$0xff]
    %v8370 = vld [vmem:[%s8366 + $0x18] sm:$0xff]
    %v8371 = vld [vmem:[%s8366 + $0x20] sm:$0xff]
    %v8372 = vld [vmem:[%s8366 + $0x28] sm:$0xff]
    %v8373 = vld [vmem:[%s8366 + $0x30] sm:$0xff]
    %v8374 = vld [vmem:[%s8366 + $0x38] sm:$0xff]
    %v8375 = vld [vmem:[%s8366 + $0x40] sm:$0xff]
    %v8376 = vld [vmem:[%s8366 + $0x48] sm:$0xff]
    %v8377 = vld [vmem:[%s8366 + $0x50] sm:$0xff]
    %v8378 = vld [vmem:[%s8366 + $0x58] sm:$0xff]
    %v8379 = vld [vmem:[%s8366 + $0x60] sm:$0xff]
    %v8380 = vld [vmem:[%s8366 + $0x68] sm:$0xff]
    %v8381 = vld [vmem:[%s8366 + $0x70] sm:$0xff]
    %v8382 = vld [vmem:[%s8366 + $0x78] sm:$0xff]
    %v8383 = vld [vmem:[%s8366 + $0x80] sm:$0xff]
    %v8384 = vld [vmem:[%s8366 + $0x88] sm:$0xff]
    %v8385 = vld [vmem:[%s8366 + $0x90] sm:$0xff]
    %v8386 = vld [vmem:[%s8366 + $0x98] sm:$0xff]
    %v8387 = vld [vmem:[%s8366 + $0xa0] sm:$0xff]
    %v8388 = vld [vmem:[%s8366 + $0xa8] sm:$0xff]
    %v8389 = vld [vmem:[%s8366 + $0xb0] sm:$0xff]
    %v8390 = vld [vmem:[%s8366 + $0xb8] sm:$0xff]
    %v8391 = vld [vmem:[%s8366 + $0xc0] sm:$0xff]
    %v8392 = vld [vmem:[%s8366 + $0xc8] sm:$0xff]
    %v8393 = vld [vmem:[%s8366 + $0xd0] sm:$0xff]
    %v8394 = vld [vmem:[%s8366 + $0xd8] sm:$0xff]
    %v8395 = vld [vmem:[%s8366 + $0xe0] sm:$0xff]
    %v8396 = vld [vmem:[%s8366 + $0xe8] sm:$0xff]
    %v8397 = vld [vmem:[%s8366 + $0xf0] sm:$0xff]
    %v8398 = vld [vmem:[%s8366 + $0xf8] sm:$0xff]
    %v8401 = vrot.slane %v8365, 7
    %v8402 = vsel %vm6946, %v8401, %v8364
    %v8403 = vsel %vm6817, %v8402, 0
    %8405 = vmatprep.subr.mxu0 %v8368
    %8406 = vmatpush1.msra.mxu0 %v8367
    %8407 = vmatprep.subr.mxu0 %v8372
    %8408 = vmatpush1.msra.mxu0 %v8371
    %8409 = vmatprep.subr.mxu0 %v8376
    %8410 = vmatpush1.msra.mxu0 %v8375
    %8411 = vmatprep.subr.mxu0 %v8380
    %8412 = vmatpush1.msra.mxu0 %v8379
    %8413 = vmatprep.subr.mxu0 %v8384
    %8414 = vmatpush1.msra.mxu0 %v8383
    %8415 = vmatprep.subr.mxu0 %v8388
    %8416 = vmatpush1.msra.mxu0 %v8387
    %8417 = vmatprep.subr.mxu0 %v8392
    %8418 = vmatpush1.msra.mxu0 %v8391
    %8419 = vmatprep.subr.mxu0 %v8396
    %8420 = vmatpush1.msra.mxu0 %v8395
    %8421 = vmatprep.subr.mxu0 0.0
    %8422 = vmatpush1.msra.mxu0 0.0
    %8423 = vmatprep.subr.mxu0 0.0
    %8424 = vmatpush1.msra.mxu0 0.0
    %8425 = vmatprep.subr.mxu0 0.0
    %8426 = vmatpush1.msra.mxu0 0.0
    %8427 = vmatprep.subr.mxu0 0.0
    %8428 = vmatpush1.msra.mxu0 0.0
    %8429 = vmatprep.subr.mxu0 0.0
    %8430 = vmatpush1.msra.mxu0 0.0
    %8431 = vmatprep.subr.mxu0 0.0
    %8432 = vmatpush1.msra.mxu0 0.0
    %8433 = vmatprep.subr.mxu0 0.0
    %8434 = vmatpush1.msra.mxu0 0.0
    %8435 = vmatprep.subr.mxu0 0.0
    %8436 = vmatpush1.msra.mxu0 0.0
    %8437 = vmatprep.subr.mxu0 0.0
    %8438 = vmatpush1.msra.mxu0 0.0
    %8439 = vmatprep.subr.mxu0 0.0
    %8440 = vmatpush1.msra.mxu0 0.0
    %8441 = vmatprep.subr.mxu0 0.0
    %8442 = vmatpush1.msra.mxu0 0.0
    %8443 = vmatprep.subr.mxu0 0.0
    %8444 = vmatpush1.msra.mxu0 0.0
    %8445 = vmatprep.subr.mxu0 0.0
    %8446 = vmatpush1.msra.mxu0 0.0
    %8447 = vmatprep.subr.mxu0 0.0
    %8448 = vmatpush1.msra.mxu0 0.0
    %8449 = vmatprep.subr.mxu0 0.0
    %8450 = vmatpush1.msra.mxu0 0.0
    %8451 = vmatprep.subr.mxu0 0.0
    %8452 = vmatpush1.msra.mxu0 0.0
    %8453 = vmatprep.subr.mxu0 0.0
    %8454 = vmatpush1.msra.mxu0 0.0
    %8455 = vmatprep.subr.mxu0 0.0
    %8456 = vmatpush1.msra.mxu0 0.0
    %8457 = vmatprep.subr.mxu0 0.0
    %8458 = vmatpush1.msra.mxu0 0.0
    %8459 = vmatprep.subr.mxu0 0.0
    %8460 = vmatpush1.msra.mxu0 0.0
    %8461 = vmatprep.subr.mxu0 0.0
    %8462 = vmatpush1.msra.mxu0 0.0
    %8463 = vmatprep.subr.mxu0 0.0
    %8464 = vmatpush1.msra.mxu0 0.0
    %8465 = vmatprep.subr.mxu0 0.0
    %8466 = vmatpush1.msra.mxu0 0.0
    %8467 = vmatprep.subr.mxu0 0.0
    %8468 = vmatpush1.msra.mxu0 0.0
    %8469 = vmatprep.mubr.f32.mxu0 0.0
    %8470 = vmatmul.mubr.f32.gmra.mrb[0].mxu0 %v8403
    %v8471 = vpop.f32.mrb[0].mxu0
    %v8472 = vadd.f32 0.0, %v8471
    %v8473 = vpop.f32.mrb[0].mxu0
    %v8474 = vadd.f32 0.0, %v8473
    %8475 = vdwg.mxu0
    %8476 = vmatprep.subr.mxu0 %v8370
    %8477 = vmatpush1.msra.mxu0 %v8369
    %8478 = vmatprep.subr.mxu0 %v8374
    %8479 = vmatpush1.msra.mxu0 %v8373
    %8480 = vmatprep.subr.mxu0 %v8378
    %8481 = vmatpush1.msra.mxu0 %v8377
    %8482 = vmatprep.subr.mxu0 %v8382
    %8483 = vmatpush1.msra.mxu0 %v8381
    %8484 = vmatprep.subr.mxu0 %v8386
    %8485 = vmatpush1.msra.mxu0 %v8385
    %8486 = vmatprep.subr.mxu0 %v8390
    %8487 = vmatpush1.msra.mxu0 %v8389
    %8488 = vmatprep.subr.mxu0 %v8394
    %8489 = vmatpush1.msra.mxu0 %v8393
    %8490 = vmatprep.subr.mxu0 %v8398
    %8491 = vmatpush1.msra.mxu0 %v8397
    %8492 = vmatprep.subr.mxu0 0.0
    %8493 = vmatpush1.msra.mxu0 0.0
    %8494 = vmatprep.subr.mxu0 0.0
    %8495 = vmatpush1.msra.mxu0 0.0
    %8496 = vmatprep.subr.mxu0 0.0
    %8497 = vmatpush1.msra.mxu0 0.0
    %8498 = vmatprep.subr.mxu0 0.0
    %8499 = vmatpush1.msra.mxu0 0.0
    %8500 = vmatprep.subr.mxu0 0.0
    %8501 = vmatpush1.msra.mxu0 0.0
    %8502 = vmatprep.subr.mxu0 0.0
    %8503 = vmatpush1.msra.mxu0 0.0
    %8504 = vmatprep.subr.mxu0 0.0
    %8505 = vmatpush1.msra.mxu0 0.0
    %8506 = vmatprep.subr.mxu0 0.0
    %8507 = vmatpush1.msra.mxu0 0.0
    %8508 = vmatprep.subr.mxu0 0.0
    %8509 = vmatpush1.msra.mxu0 0.0
    %8510 = vmatprep.subr.mxu0 0.0
    %8511 = vmatpush1.msra.mxu0 0.0
    %8512 = vmatprep.subr.mxu0 0.0
    %8513 = vmatpush1.msra.mxu0 0.0
    %8514 = vmatprep.subr.mxu0 0.0
    %8515 = vmatpush1.msra.mxu0 0.0
    %8516 = vmatprep.subr.mxu0 0.0
    %8517 = vmatpush1.msra.mxu0 0.0
    %8518 = vmatprep.subr.mxu0 0.0
    %8519 = vmatpush1.msra.mxu0 0.0
    %8520 = vmatprep.subr.mxu0 0.0
    %8521 = vmatpush1.msra.mxu0 0.0
    %8522 = vmatprep.subr.mxu0 0.0
    %8523 = vmatpush1.msra.mxu0 0.0
    %8524 = vmatprep.subr.mxu0 0.0
    %8525 = vmatpush1.msra.mxu0 0.0
    %8526 = vmatprep.subr.mxu0 0.0
    %8527 = vmatpush1.msra.mxu0 0.0
    %8528 = vmatprep.subr.mxu0 0.0
    %8529 = vmatpush1.msra.mxu0 0.0
    %8530 = vmatprep.subr.mxu0 0.0
    %8531 = vmatpush1.msra.mxu0 0.0
    %8532 = vmatprep.subr.mxu0 0.0
    %8533 = vmatpush1.msra.mxu0 0.0
    %8534 = vmatprep.subr.mxu0 0.0
    %8535 = vmatpush1.msra.mxu0 0.0
    %8536 = vmatprep.subr.mxu0 0.0
    %8537 = vmatpush1.msra.mxu0 0.0
    %8538 = vmatprep.subr.mxu0 0.0
    %8539 = vmatpush1.msra.mxu0 0.0
    %8540 = vmatprep.mubr.f32.mxu0 0.0
    %8541 = vmatmul.mubr.f32.gmra.mrb[0].mxu0 %v8403
    %v8542 = vpop.f32.mrb[0].mxu0
    %v8543 = vadd.f32 0.0, %v8542
    %v8544 = vpop.f32.mrb[0].mxu0
    %v8545 = vadd.f32 0.0, %v8544
    %8546 = vdwg.mxu0
    %v8547 = vadd.f32 %v8359, %v8472
    %v8548 = vadd.f32 %v8360, %v8474
    %v8549 = vadd.f32 %v8361, %v8543
    %v8550 = vadd.f32 %v8362, %v8545
    %v8551 = vld [vmem:[%s8363 + $0x1] sm:$0x1]
    %v8552 = vld [vmem:[%s8363 + $0x11] sm:$0x1]
    %s8553 = scalar_lea.vmem [#allocation12], 2304
    %v8554 = vld [vmem:[%s8553] sm:$0xff]
    %v8555 = vld [vmem:[%s8553 + $0x8] sm:$0xff]
    %v8556 = vld [vmem:[%s8553 + $0x10] sm:$0xff]
    %v8557 = vld [vmem:[%s8553 + $0x18] sm:$0xff]
    %v8558 = vld [vmem:[%s8553 + $0x20] sm:$0xff]
    %v8559 = vld [vmem:[%s8553 + $0x28] sm:$0xff]
    %v8560 = vld [vmem:[%s8553 + $0x30] sm:$0xff]
    %v8561 = vld [vmem:[%s8553 + $0x38] sm:$0xff]
    %v8562 = vld [vmem:[%s8553 + $0x40] sm:$0xff]
    %v8563 = vld [vmem:[%s8553 + $0x48] sm:$0xff]
    %v8564 = vld [vmem:[%s8553 + $0x50] sm:$0xff]
    %v8565 = vld [vmem:[%s8553 + $0x58] sm:$0xff]
    %v8566 = vld [vmem:[%s8553 + $0x60] sm:$0xff]
    %v8567 = vld [vmem:[%s8553 + $0x68] sm:$0xff]
    %v8568 = vld [vmem:[%s8553 + $0x70] sm:$0xff]
    %v8569 = vld [vmem:[%s8553 + $0x78] sm:$0xff]
    %v8570 = vld [vmem:[%s8553 + $0x80] sm:$0xff]
    %v8571 = vld [vmem:[%s8553 + $0x88] sm:$0xff]
    %v8572 = vld [vmem:[%s8553 + $0x90] sm:$0xff]
    %v8573 = vld [vmem:[%s8553 + $0x98] sm:$0xff]
    %v8574 = vld [vmem:[%s8553 + $0xa0] sm:$0xff]
    %v8575 = vld [vmem:[%s8553 + $0xa8] sm:$0xff]
    %v8576 = vld [vmem:[%s8553 + $0xb0] sm:$0xff]
    %v8577 = vld [vmem:[%s8553 + $0xb8] sm:$0xff]
    %v8578 = vld [vmem:[%s8553 + $0xc0] sm:$0xff]
    %v8579 = vld [vmem:[%s8553 + $0xc8] sm:$0xff]
    %v8580 = vld [vmem:[%s8553 + $0xd0] sm:$0xff]
    %v8581 = vld [vmem:[%s8553 + $0xd8] sm:$0xff]
    %v8582 = vld [vmem:[%s8553 + $0xe0] sm:$0xff]
    %v8583 = vld [vmem:[%s8553 + $0xe8] sm:$0xff]
    %v8584 = vld [vmem:[%s8553 + $0xf0] sm:$0xff]
    %v8585 = vld [vmem:[%s8553 + $0xf8] sm:$0xff]
    %v8588 = vrot.slane %v8552, 7
    %v8589 = vsel %vm6946, %v8588, %v8551
    %v8590 = vsel %vm6817, %v8589, 0
    %8592 = vmatprep.subr.mxu0 %v8555
    %8593 = vmatpush1.msra.mxu0 %v8554
    %8594 = vmatprep.subr.mxu0 %v8559
    %8595 = vmatpush1.msra.mxu0 %v8558
    %8596 = vmatprep.subr.mxu0 %v8563
    %8597 = vmatpush1.msra.mxu0 %v8562
    %8598 = vmatprep.subr.mxu0 %v8567
    %8599 = vmatpush1.msra.mxu0 %v8566
    %8600 = vmatprep.subr.mxu0 %v8571
    %8601 = vmatpush1.msra.mxu0 %v8570
    %8602 = vmatprep.subr.mxu0 %v8575
    %8603 = vmatpush1.msra.mxu0 %v8574
    %8604 = vmatprep.subr.mxu0 %v8579
    %8605 = vmatpush1.msra.mxu0 %v8578
    %8606 = vmatprep.subr.mxu0 %v8583
    %8607 = vmatpush1.msra.mxu0 %v8582
    %8608 = vmatprep.subr.mxu0 0.0
    %8609 = vmatpush1.msra.mxu0 0.0
    %8610 = vmatprep.subr.mxu0 0.0
    %8611 = vmatpush1.msra.mxu0 0.0
    %8612 = vmatprep.subr.mxu0 0.0
    %8613 = vmatpush1.msra.mxu0 0.0
    %8614 = vmatprep.subr.mxu0 0.0
    %8615 = vmatpush1.msra.mxu0 0.0
    %8616 = vmatprep.subr.mxu0 0.0
    %8617 = vmatpush1.msra.mxu0 0.0
    %8618 = vmatprep.subr.mxu0 0.0
    %8619 = vmatpush1.msra.mxu0 0.0
    %8620 = vmatprep.subr.mxu0 0.0
    %8621 = vmatpush1.msra.mxu0 0.0
    %8622 = vmatprep.subr.mxu0 0.0
    %8623 = vmatpush1.msra.mxu0 0.0
    %8624 = vmatprep.subr.mxu0 0.0
    %8625 = vmatpush1.msra.mxu0 0.0
    %8626 = vmatprep.subr.mxu0 0.0
    %8627 = vmatpush1.msra.mxu0 0.0
    %8628 = vmatprep.subr.mxu0 0.0
    %8629 = vmatpush1.msra.mxu0 0.0
    %8630 = vmatprep.subr.mxu0 0.0
    %8631 = vmatpush1.msra.mxu0 0.0
    %8632 = vmatprep.subr.mxu0 0.0
    %8633 = vmatpush1.msra.mxu0 0.0
    %8634 = vmatprep.subr.mxu0 0.0
    %8635 = vmatpush1.msra.mxu0 0.0
    %8636 = vmatprep.subr.mxu0 0.0
    %8637 = vmatpush1.msra.mxu0 0.0
    %8638 = vmatprep.subr.mxu0 0.0
    %8639 = vmatpush1.msra.mxu0 0.0
    %8640 = vmatprep.subr.mxu0 0.0
    %8641 = vmatpush1.msra.mxu0 0.0
    %8642 = vmatprep.subr.mxu0 0.0
    %8643 = vmatpush1.msra.mxu0 0.0
    %8644 = vmatprep.subr.mxu0 0.0
    %8645 = vmatpush1.msra.mxu0 0.0
    %8646 = vmatprep.subr.mxu0 0.0
    %8647 = vmatpush1.msra.mxu0 0.0
    %8648 = vmatprep.subr.mxu0 0.0
    %8649 = vmatpush1.msra.mxu0 0.0
    %8650 = vmatprep.subr.mxu0 0.0
    %8651 = vmatpush1.msra.mxu0 0.0
    %8652 = vmatprep.subr.mxu0 0.0
    %8653 = vmatpush1.msra.mxu0 0.0
    %8654 = vmatprep.subr.mxu0 0.0
    %8655 = vmatpush1.msra.mxu0 0.0
    %8656 = vmatprep.mubr.f32.mxu0 0.0
    %8657 = vmatmul.mubr.f32.gmra.mrb[0].mxu0 %v8590
    %v8658 = vpop.f32.mrb[0].mxu0
    %v8659 = vadd.f32 0.0, %v8658
    %v8660 = vpop.f32.mrb[0].mxu0
    %v8661 = vadd.f32 0.0, %v8660
    %8662 = vdwg.mxu0
    %8663 = vmatprep.subr.mxu0 %v8557
    %8664 = vmatpush1.msra.mxu0 %v8556
    %8665 = vmatprep.subr.mxu0 %v8561
    %8666 = vmatpush1.msra.mxu0 %v8560
    %8667 = vmatprep.subr.mxu0 %v8565
    %8668 = vmatpush1.msra.mxu0 %v8564
    %8669 = vmatprep.subr.mxu0 %v8569
    %8670 = vmatpush1.msra.mxu0 %v8568
    %8671 = vmatprep.subr.mxu0 %v8573
    %8672 = vmatpush1.msra.mxu0 %v8572
    %8673 = vmatprep.subr.mxu0 %v8577
    %8674 = vmatpush1.msra.mxu0 %v8576
    %8675 = vmatprep.subr.mxu0 %v8581
    %8676 = vmatpush1.msra.mxu0 %v8580
    %8677 = vmatprep.subr.mxu0 %v8585
    %8678 = vmatpush1.msra.mxu0 %v8584
    %8679 = vmatprep.subr.mxu0 0.0
    %8680 = vmatpush1.msra.mxu0 0.0
    %8681 = vmatprep.subr.mxu0 0.0
    %8682 = vmatpush1.msra.mxu0 0.0
    %8683 = vmatprep.subr.mxu0 0.0
    %8684 = vmatpush1.msra.mxu0 0.0
    %8685 = vmatprep.subr.mxu0 0.0
    %8686 = vmatpush1.msra.mxu0 0.0
    %8687 = vmatprep.subr.mxu0 0.0
    %8688 = vmatpush1.msra.mxu0 0.0
    %8689 = vmatprep.subr.mxu0 0.0
    %8690 = vmatpush1.msra.mxu0 0.0
    %8691 = vmatprep.subr.mxu0 0.0
    %8692 = vmatpush1.msra.mxu0 0.0
    %8693 = vmatprep.subr.mxu0 0.0
    %8694 = vmatpush1.msra.mxu0 0.0
    %8695 = vmatprep.subr.mxu0 0.0
    %8696 = vmatpush1.msra.mxu0 0.0
    %8697 = vmatprep.subr.mxu0 0.0
    %8698 = vmatpush1.msra.mxu0 0.0
    %8699 = vmatprep.subr.mxu0 0.0
    %8700 = vmatpush1.msra.mxu0 0.0
    %8701 = vmatprep.subr.mxu0 0.0
    %8702 = vmatpush1.msra.mxu0 0.0
    %8703 = vmatprep.subr.mxu0 0.0
    %8704 = vmatpush1.msra.mxu0 0.0
    %8705 = vmatprep.subr.mxu0 0.0
    %8706 = vmatpush1.msra.mxu0 0.0
    %8707 = vmatprep.subr.mxu0 0.0
    %8708 = vmatpush1.msra.mxu0 0.0
    %8709 = vmatprep.subr.mxu0 0.0
    %8710 = vmatpush1.msra.mxu0 0.0
    %8711 = vmatprep.subr.mxu0 0.0
    %8712 = vmatpush1.msra.mxu0 0.0
    %8713 = vmatprep.subr.mxu0 0.0
    %8714 = vmatpush1.msra.mxu0 0.0
    %8715 = vmatprep.subr.mxu0 0.0
    %8716 = vmatpush1.msra.mxu0 0.0
    %8717 = vmatprep.subr.mxu0 0.0
    %8718 = vmatpush1.msra.mxu0 0.0
    %8719 = vmatprep.subr.mxu0 0.0
    %8720 = vmatpush1.msra.mxu0 0.0
    %8721 = vmatprep.subr.mxu0 0.0
    %8722 = vmatpush1.msra.mxu0 0.0
    %8723 = vmatprep.subr.mxu0 0.0
    %8724 = vmatpush1.msra.mxu0 0.0
    %8725 = vmatprep.subr.mxu0 0.0
    %8726 = vmatpush1.msra.mxu0 0.0
    %8727 = vmatprep.mubr.f32.mxu0 0.0
    %8728 = vmatmul.mubr.f32.gmra.mrb[0].mxu0 %v8590
    %v8729 = vpop.f32.mrb[0].mxu0
    %v8730 = vadd.f32 0.0, %v8729
    %v8731 = vpop.f32.mrb[0].mxu0
    %v8732 = vadd.f32 0.0, %v8731
    %8733 = vdwg.mxu0
    %v8734 = vadd.f32 %v8547, %v8659
    %v8735 = vadd.f32 %v8548, %v8661
    %v8736 = vadd.f32 %v8549, %v8730
    %v8737 = vadd.f32 %v8550, %v8732
    %v8738 = vld [vmem:[%s8363 + $0x2] sm:$0x1]
    %v8739 = vld [vmem:[%s8363 + $0x12] sm:$0x1]
    %s8740 = scalar_lea.vmem [#allocation12], 2560
    %v8741 = vld [vmem:[%s8740] sm:$0xff]
    %v8742 = vld [vmem:[%s8740 + $0x8] sm:$0xff]
    %v8743 = vld [vmem:[%s8740 + $0x10] sm:$0xff]
    %v8744 = vld [vmem:[%s8740 + $0x18] sm:$0xff]
    %v8745 = vld [vmem:[%s8740 + $0x20] sm:$0xff]
    %v8746 = vld [vmem:[%s8740 + $0x28] sm:$0xff]
    %v8747 = vld [vmem:[%s8740 + $0x30] sm:$0xff]
    %v8748 = vld [vmem:[%s8740 + $0x38] sm:$0xff]
    %v8749 = vld [vmem:[%s8740 + $0x40] sm:$0xff]
    %v8750 = vld [vmem:[%s8740 + $0x48] sm:$0xff]
    %v8751 = vld [vmem:[%s8740 + $0x50] sm:$0xff]
    %v8752 = vld [vmem:[%s8740 + $0x58] sm:$0xff]
    %v8753 = vld [vmem:[%s8740 + $0x60] sm:$0xff]
    %v8754 = vld [vmem:[%s8740 + $0x68] sm:$0xff]
    %v8755 = vld [vmem:[%s8740 + $0x70] sm:$0xff]
    %v8756 = vld [vmem:[%s8740 + $0x78] sm:$0xff]
    %v8757 = vld [vmem:[%s8740 + $0x80] sm:$0xff]
    %v8758 = vld [vmem:[%s8740 + $0x88] sm:$0xff]
    %v8759 = vld [vmem:[%s8740 + $0x90] sm:$0xff]
    %v8760 = vld [vmem:[%s8740 + $0x98] sm:$0xff]
    %v8761 = vld [vmem:[%s8740 + $0xa0] sm:$0xff]
    %v8762 = vld [vmem:[%s8740 + $0xa8] sm:$0xff]
    %v8763 = vld [vmem:[%s8740 + $0xb0] sm:$0xff]
    %v8764 = vld [vmem:[%s8740 + $0xb8] sm:$0xff]
    %v8765 = vld [vmem:[%s8740 + $0xc0] sm:$0xff]
    %v8766 = vld [vmem:[%s8740 + $0xc8] sm:$0xff]
    %v8767 = vld [vmem:[%s8740 + $0xd0] sm:$0xff]
    %v8768 = vld [vmem:[%s8740 + $0xd8] sm:$0xff]
    %v8769 = vld [vmem:[%s8740 + $0xe0] sm:$0xff]
    %v8770 = vld [vmem:[%s8740 + $0xe8] sm:$0xff]
    %v8771 = vld [vmem:[%s8740 + $0xf0] sm:$0xff]
    %v8772 = vld [vmem:[%s8740 + $0xf8] sm:$0xff]
    %v8775 = vrot.slane %v8739, 7
    %v8776 = vsel %vm6946, %v8775, %v8738
    %v8777 = vsel %vm6817, %v8776, 0
    %8779 = vmatprep.subr.mxu0 %v8742
    %8780 = vmatpush1.msra.mxu0 %v8741
    %8781 = vmatprep.subr.mxu0 %v8746
    %8782 = vmatpush1.msra.mxu0 %v8745
    %8783 = vmatprep.subr.mxu0 %v8750
    %8784 = vmatpush1.msra.mxu0 %v8749
    %8785 = vmatprep.subr.mxu0 %v8754
    %8786 = vmatpush1.msra.mxu0 %v8753
    %8787 = vmatprep.subr.mxu0 %v8758
    %8788 = vmatpush1.msra.mxu0 %v8757
    %8789 = vmatprep.subr.mxu0 %v8762
    %8790 = vmatpush1.msra.mxu0 %v8761
    %8791 = vmatprep.subr.mxu0 %v8766
    %8792 = vmatpush1.msra.mxu0 %v8765
    %8793 = vmatprep.subr.mxu0 %v8770
    %8794 = vmatpush1.msra.mxu0 %v8769
    %8795 = vmatprep.subr.mxu0 0.0
    %8796 = vmatpush1.msra.mxu0 0.0
    %8797 = vmatprep.subr.mxu0 0.0
    %8798 = vmatpush1.msra.mxu0 0.0
    %8799 = vmatprep.subr.mxu0 0.0
    %8800 = vmatpush1.msra.mxu0 0.0
    %8801 = vmatprep.subr.mxu0 0.0
    %8802 = vmatpush1.msra.mxu0 0.0
    %8803 = vmatprep.subr.mxu0 0.0
    %8804 = vmatpush1.msra.mxu0 0.0
    %8805 = vmatprep.subr.mxu0 0.0
    %8806 = vmatpush1.msra.mxu0 0.0
    %8807 = vmatprep.subr.mxu0 0.0
    %8808 = vmatpush1.msra.mxu0 0.0
    %8809 = vmatprep.subr.mxu0 0.0
    %8810 = vmatpush1.msra.mxu0 0.0
    %8811 = vmatprep.subr.mxu0 0.0
    %8812 = vmatpush1.msra.mxu0 0.0
    %8813 = vmatprep.subr.mxu0 0.0
    %8814 = vmatpush1.msra.mxu0 0.0
    %8815 = vmatprep.subr.mxu0 0.0
    %8816 = vmatpush1.msra.mxu0 0.0
    %8817 = vmatprep.subr.mxu0 0.0
    %8818 = vmatpush1.msra.mxu0 0.0
    %8819 = vmatprep.subr.mxu0 0.0
    %8820 = vmatpush1.msra.mxu0 0.0
    %8821 = vmatprep.subr.mxu0 0.0
    %8822 = vmatpush1.msra.mxu0 0.0
    %8823 = vmatprep.subr.mxu0 0.0
    %8824 = vmatpush1.msra.mxu0 0.0
    %8825 = vmatprep.subr.mxu0 0.0
    %8826 = vmatpush1.msra.mxu0 0.0
    %8827 = vmatprep.subr.mxu0 0.0
    %8828 = vmatpush1.msra.mxu0 0.0
    %8829 = vmatprep.subr.mxu0 0.0
    %8830 = vmatpush1.msra.mxu0 0.0
    %8831 = vmatprep.subr.mxu0 0.0
    %8832 = vmatpush1.msra.mxu0 0.0
    %8833 = vmatprep.subr.mxu0 0.0
    %8834 = vmatpush1.msra.mxu0 0.0
    %8835 = vmatprep.subr.mxu0 0.0
    %8836 = vmatpush1.msra.mxu0 0.0
    %8837 = vmatprep.subr.mxu0 0.0
    %8838 = vmatpush1.msra.mxu0 0.0
    %8839 = vmatprep.subr.mxu0 0.0
    %8840 = vmatpush1.msra.mxu0 0.0
    %8841 = vmatprep.subr.mxu0 0.0
    %8842 = vmatpush1.msra.mxu0 0.0
    %8843 = vmatprep.mubr.f32.mxu0 0.0
    %8844 = vmatmul.mubr.f32.gmra.mrb[0].mxu0 %v8777
    %v8845 = vpop.f32.mrb[0].mxu0
    %v8846 = vadd.f32 0.0, %v8845
    %v8847 = vpop.f32.mrb[0].mxu0
    %v8848 = vadd.f32 0.0, %v8847
    %8849 = vdwg.mxu0
    %8850 = vmatprep.subr.mxu0 %v8744
    %8851 = vmatpush1.msra.mxu0 %v8743
    %8852 = vmatprep.subr.mxu0 %v8748
    %8853 = vmatpush1.msra.mxu0 %v8747
    %8854 = vmatprep.subr.mxu0 %v8752
    %8855 = vmatpush1.msra.mxu0 %v8751
    %8856 = vmatprep.subr.mxu0 %v8756
    %8857 = vmatpush1.msra.mxu0 %v8755
    %8858 = vmatprep.subr.mxu0 %v8760
    %8859 = vmatpush1.msra.mxu0 %v8759
    %8860 = vmatprep.subr.mxu0 %v8764
    %8861 = vmatpush1.msra.mxu0 %v8763
    %8862 = vmatprep.subr.mxu0 %v8768
    %8863 = vmatpush1.msra.mxu0 %v8767
    %8864 = vmatprep.subr.mxu0 %v8772
    %8865 = vmatpush1.msra.mxu0 %v8771
    %8866 = vmatprep.subr.mxu0 0.0
    %8867 = vmatpush1.msra.mxu0 0.0
    %8868 = vmatprep.subr.mxu0 0.0
    %8869 = vmatpush1.msra.mxu0 0.0
    %8870 = vmatprep.subr.mxu0 0.0
    %8871 = vmatpush1.msra.mxu0 0.0
    %8872 = vmatprep.subr.mxu0 0.0
    %8873 = vmatpush1.msra.mxu0 0.0
    %8874 = vmatprep.subr.mxu0 0.0
    %8875 = vmatpush1.msra.mxu0 0.0
    %8876 = vmatprep.subr.mxu0 0.0
    %8877 = vmatpush1.msra.mxu0 0.0
    %8878 = vmatprep.subr.mxu0 0.0
    %8879 = vmatpush1.msra.mxu0 0.0
    %8880 = vmatprep.subr.mxu0 0.0
    %8881 = vmatpush1.msra.mxu0 0.0
    %8882 = vmatprep.subr.mxu0 0.0
    %8883 = vmatpush1.msra.mxu0 0.0
    %8884 = vmatprep.subr.mxu0 0.0
    %8885 = vmatpush1.msra.mxu0 0.0
    %8886 = vmatprep.subr.mxu0 0.0
    %8887 = vmatpush1.msra.mxu0 0.0
    %8888 = vmatprep.subr.mxu0 0.0
    %8889 = vmatpush1.msra.mxu0 0.0
    %8890 = vmatprep.subr.mxu0 0.0
    %8891 = vmatpush1.msra.mxu0 0.0
    %8892 = vmatprep.subr.mxu0 0.0
    %8893 = vmatpush1.msra.mxu0 0.0
    %8894 = vmatprep.subr.mxu0 0.0
    %8895 = vmatpush1.msra.mxu0 0.0
    %8896 = vmatprep.subr.mxu0 0.0
    %8897 = vmatpush1.msra.mxu0 0.0
    %8898 = vmatprep.subr.mxu0 0.0
    %8899 = vmatpush1.msra.mxu0 0.0
    %8900 = vmatprep.subr.mxu0 0.0
    %8901 = vmatpush1.msra.mxu0 0.0
    %8902 = vmatprep.subr.mxu0 0.0
    %8903 = vmatpush1.msra.mxu0 0.0
    %8904 = vmatprep.subr.mxu0 0.0
    %8905 = vmatpush1.msra.mxu0 0.0
    %8906 = vmatprep.subr.mxu0 0.0
    %8907 = vmatpush1.msra.mxu0 0.0
    %8908 = vmatprep.subr.mxu0 0.0
    %8909 = vmatpush1.msra.mxu0 0.0
    %8910 = vmatprep.subr.mxu0 0.0
    %8911 = vmatpush1.msra.mxu0 0.0
    %8912 = vmatprep.subr.mxu0 0.0
    %8913 = vmatpush1.msra.mxu0 0.0
    %8914 = vmatprep.mubr.f32.mxu0 0.0
    %8915 = vmatmul.mubr.f32.gmra.mrb[0].mxu0 %v8777
    %v8916 = vpop.f32.mrb[0].mxu0
    %v8917 = vadd.f32 0.0, %v8916
    %v8918 = vpop.f32.mrb[0].mxu0
    %v8919 = vadd.f32 0.0, %v8918
    %8920 = vdwg.mxu0
    %v8921 = vadd.f32 %v8734, %v8846
    %v8922 = vadd.f32 %v8735, %v8848
    %v8923 = vadd.f32 %v8736, %v8917
    %v8924 = vadd.f32 %v8737, %v8919
    %v8925 = vld [vmem:[%s8363 + $0x3] sm:$0x1]
    %v8926 = vld [vmem:[%s8363 + $0x13] sm:$0x1]
    %s8927 = scalar_lea.vmem [#allocation12], 2816
    %v8928 = vld [vmem:[%s8927] sm:$0xff]
    %v8929 = vld [vmem:[%s8927 + $0x8] sm:$0xff]
    %v8930 = vld [vmem:[%s8927 + $0x10] sm:$0xff]
    %v8931 = vld [vmem:[%s8927 + $0x18] sm:$0xff]
    %v8932 = vld [vmem:[%s8927 + $0x20] sm:$0xff]
    %v8933 = vld [vmem:[%s8927 + $0x28] sm:$0xff]
    %v8934 = vld [vmem:[%s8927 + $0x30] sm:$0xff]
    %v8935 = vld [vmem:[%s8927 + $0x38] sm:$0xff]
    %v8936 = vld [vmem:[%s8927 + $0x40] sm:$0xff]
    %v8937 = vld [vmem:[%s8927 + $0x48] sm:$0xff]
    %v8938 = vld [vmem:[%s8927 + $0x50] sm:$0xff]
    %v8939 = vld [vmem:[%s8927 + $0x58] sm:$0xff]
    %v8940 = vld [vmem:[%s8927 + $0x60] sm:$0xff]
    %v8941 = vld [vmem:[%s8927 + $0x68] sm:$0xff]
    %v8942 = vld [vmem:[%s8927 + $0x70] sm:$0xff]
    %v8943 = vld [vmem:[%s8927 + $0x78] sm:$0xff]
    %v8944 = vld [vmem:[%s8927 + $0x80] sm:$0xff]
    %v8945 = vld [vmem:[%s8927 + $0x88] sm:$0xff]
    %v8946 = vld [vmem:[%s8927 + $0x90] sm:$0xff]
    %v8947 = vld [vmem:[%s8927 + $0x98] sm:$0xff]
    %v8948 = vld [vmem:[%s8927 + $0xa0] sm:$0xff]
    %v8949 = vld [vmem:[%s8927 + $0xa8] sm:$0xff]
    %v8950 = vld [vmem:[%s8927 + $0xb0] sm:$0xff]
    %v8951 = vld [vmem:[%s8927 + $0xb8] sm:$0xff]
    %v8952 = vld [vmem:[%s8927 + $0xc0] sm:$0xff]
    %v8953 = vld [vmem:[%s8927 + $0xc8] sm:$0xff]
    %v8954 = vld [vmem:[%s8927 + $0xd0] sm:$0xff]
    %v8955 = vld [vmem:[%s8927 + $0xd8] sm:$0xff]
    %v8956 = vld [vmem:[%s8927 + $0xe0] sm:$0xff]
    %v8957 = vld [vmem:[%s8927 + $0xe8] sm:$0xff]
    %v8958 = vld [vmem:[%s8927 + $0xf0] sm:$0xff]
    %v8959 = vld [vmem:[%s8927 + $0xf8] sm:$0xff]
    %v8962 = vrot.slane %v8926, 7
    %v8963 = vsel %vm6946, %v8962, %v8925
    %v8964 = vsel %vm6817, %v8963, 0
    %8966 = vmatprep.subr.mxu0 %v8929
    %8967 = vmatpush1.msra.mxu0 %v8928
    %8968 = vmatprep.subr.mxu0 %v8933
    %8969 = vmatpush1.msra.mxu0 %v8932
    %8970 = vmatprep.subr.mxu0 %v8937
    %8971 = vmatpush1.msra.mxu0 %v8936
    %8972 = vmatprep.subr.mxu0 %v8941
    %8973 = vmatpush1.msra.mxu0 %v8940
    %8974 = vmatprep.subr.mxu0 %v8945
    %8975 = vmatpush1.msra.mxu0 %v8944
    %8976 = vmatprep.subr.mxu0 %v8949
    %8977 = vmatpush1.msra.mxu0 %v8948
    %8978 = vmatprep.subr.mxu0 %v8953
    %8979 = vmatpush1.msra.mxu0 %v8952
    %8980 = vmatprep.subr.mxu0 %v8957
    %8981 = vmatpush1.msra.mxu0 %v8956
    %8982 = vmatprep.subr.mxu0 0.0
    %8983 = vmatpush1.msra.mxu0 0.0
    %8984 = vmatprep.subr.mxu0 0.0
    %8985 = vmatpush1.msra.mxu0 0.0
    %8986 = vmatprep.subr.mxu0 0.0
    %8987 = vmatpush1.msra.mxu0 0.0
    %8988 = vmatprep.subr.mxu0 0.0
    %8989 = vmatpush1.msra.mxu0 0.0
    %8990 = vmatprep.subr.mxu0 0.0
    %8991 = vmatpush1.msra.mxu0 0.0
    %8992 = vmatprep.subr.mxu0 0.0
    %8993 = vmatpush1.msra.mxu0 0.0
    %8994 = vmatprep.subr.mxu0 0.0
    %8995 = vmatpush1.msra.mxu0 0.0
    %8996 = vmatprep.subr.mxu0 0.0
    %8997 = vmatpush1.msra.mxu0 0.0
    %8998 = vmatprep.subr.mxu0 0.0
    %8999 = vmatpush1.msra.mxu0 0.0
    %9000 = vmatprep.subr.mxu0 0.0
    %9001 = vmatpush1.msra.mxu0 0.0
    %9002 = vmatprep.subr.mxu0 0.0
    %9003 = vmatpush1.msra.mxu0 0.0
    %9004 = vmatprep.subr.mxu0 0.0
    %9005 = vmatpush1.msra.mxu0 0.0
    %9006 = vmatprep.subr.mxu0 0.0
    %9007 = vmatpush1.msra.mxu0 0.0
    %9008 = vmatprep.subr.mxu0 0.0
    %9009 = vmatpush1.msra.mxu0 0.0
    %9010 = vmatprep.subr.mxu0 0.0
    %9011 = vmatpush1.msra.mxu0 0.0
    %9012 = vmatprep.subr.mxu0 0.0
    %9013 = vmatpush1.msra.mxu0 0.0
    %9014 = vmatprep.subr.mxu0 0.0
    %9015 = vmatpush1.msra.mxu0 0.0
    %9016 = vmatprep.subr.mxu0 0.0
    %9017 = vmatpush1.msra.mxu0 0.0
    %9018 = vmatprep.subr.mxu0 0.0
    %9019 = vmatpush1.msra.mxu0 0.0
    %9020 = vmatprep.subr.mxu0 0.0
    %9021 = vmatpush1.msra.mxu0 0.0
    %9022 = vmatprep.subr.mxu0 0.0
    %9023 = vmatpush1.msra.mxu0 0.0
    %9024 = vmatprep.subr.mxu0 0.0
    %9025 = vmatpush1.msra.mxu0 0.0
    %9026 = vmatprep.subr.mxu0 0.0
    %9027 = vmatpush1.msra.mxu0 0.0
    %9028 = vmatprep.subr.mxu0 0.0
    %9029 = vmatpush1.msra.mxu0 0.0
    %9030 = vmatprep.mubr.f32.mxu0 0.0
    %9031 = vmatmul.mubr.f32.gmra.mrb[0].mxu0 %v8964
    %v9032 = vpop.f32.mrb[0].mxu0
    %v9033 = vadd.f32 0.0, %v9032
    %v9034 = vpop.f32.mrb[0].mxu0
    %v9035 = vadd.f32 0.0, %v9034
    %9036 = vdwg.mxu0
    %9037 = vmatprep.subr.mxu0 %v8931
    %9038 = vmatpush1.msra.mxu0 %v8930
    %9039 = vmatprep.subr.mxu0 %v8935
    %9040 = vmatpush1.msra.mxu0 %v8934
    %9041 = vmatprep.subr.mxu0 %v8939
    %9042 = vmatpush1.msra.mxu0 %v8938
    %9043 = vmatprep.subr.mxu0 %v8943
    %9044 = vmatpush1.msra.mxu0 %v8942
    %9045 = vmatprep.subr.mxu0 %v8947
    %9046 = vmatpush1.msra.mxu0 %v8946
    %9047 = vmatprep.subr.mxu0 %v8951
    %9048 = vmatpush1.msra.mxu0 %v8950
    %9049 = vmatprep.subr.mxu0 %v8955
    %9050 = vmatpush1.msra.mxu0 %v8954
    %9051 = vmatprep.subr.mxu0 %v8959
    %9052 = vmatpush1.msra.mxu0 %v8958
    %9053 = vmatprep.subr.mxu0 0.0
    %9054 = vmatpush1.msra.mxu0 0.0
    %9055 = vmatprep.subr.mxu0 0.0
    %9056 = vmatpush1.msra.mxu0 0.0
    %9057 = vmatprep.subr.mxu0 0.0
    %9058 = vmatpush1.msra.mxu0 0.0
    %9059 = vmatprep.subr.mxu0 0.0
    %9060 = vmatpush1.msra.mxu0 0.0
    %9061 = vmatprep.subr.mxu0 0.0
    %9062 = vmatpush1.msra.mxu0 0.0
    %9063 = vmatprep.subr.mxu0 0.0
    %9064 = vmatpush1.msra.mxu0 0.0
    %9065 = vmatprep.subr.mxu0 0.0
    %9066 = vmatpush1.msra.mxu0 0.0
    %9067 = vmatprep.subr.mxu0 0.0
    %9068 = vmatpush1.msra.mxu0 0.0
    %9069 = vmatprep.subr.mxu0 0.0
    %9070 = vmatpush1.msra.mxu0 0.0
    %9071 = vmatprep.subr.mxu0 0.0
    %9072 = vmatpush1.msra.mxu0 0.0
    %9073 = vmatprep.subr.mxu0 0.0
    %9074 = vmatpush1.msra.mxu0 0.0
    %9075 = vmatprep.subr.mxu0 0.0
    %9076 = vmatpush1.msra.mxu0 0.0
    %9077 = vmatprep.subr.mxu0 0.0
    %9078 = vmatpush1.msra.mxu0 0.0
    %9079 = vmatprep.subr.mxu0 0.0
    %9080 = vmatpush1.msra.mxu0 0.0
    %9081 = vmatprep.subr.mxu0 0.0
    %9082 = vmatpush1.msra.mxu0 0.0
    %9083 = vmatprep.subr.mxu0 0.0
    %9084 = vmatpush1.msra.mxu0 0.0
    %9085 = vmatprep.subr.mxu0 0.0
    %9086 = vmatpush1.msra.mxu0 0.0
    %9087 = vmatprep.subr.mxu0 0.0
    %9088 = vmatpush1.msra.mxu0 0.0
    %9089 = vmatprep.subr.mxu0 0.0
    %9090 = vmatpush1.msra.mxu0 0.0
    %9091 = vmatprep.subr.mxu0 0.0
    %9092 = vmatpush1.msra.mxu0 0.0
    %9093 = vmatprep.subr.mxu0 0.0
    %9094 = vmatpush1.msra.mxu0 0.0
    %9095 = vmatprep.subr.mxu0 0.0
    %9096 = vmatpush1.msra.mxu0 0.0
    %9097 = vmatprep.subr.mxu0 0.0
    %9098 = vmatpush1.msra.mxu0 0.0
    %9099 = vmatprep.subr.mxu0 0.0
    %9100 = vmatpush1.msra.mxu0 0.0
    %9101 = vmatprep.mubr.f32.mxu0 0.0
    %9102 = vmatmul.mubr.f32.gmra.mrb[0].mxu0 %v8964
    %v9103 = vpop.f32.mrb[0].mxu0
    %v9104 = vadd.f32 0.0, %v9103
    %v9105 = vpop.f32.mrb[0].mxu0
    %v9106 = vadd.f32 0.0, %v9105
    %9107 = vdwg.mxu0
    %v9108 = vadd.f32 %v8921, %v9033
    %v9109 = vadd.f32 %v8922, %v9035
    %v9110 = vadd.f32 %v8923, %v9104
    %v9111 = vadd.f32 %v8924, %v9106
    %s9112 = scalar_lea.vmem [#allocation5], 12
    %v9113 = vld [vmem:[%s9112] sm:$0x1]
    %v9114 = vld [vmem:[%s9112 + $0x10] sm:$0x1]
    %s9115 = scalar_lea.vmem [#allocation12], 3072
    %v9116 = vld [vmem:[%s9115] sm:$0xff]
    %v9117 = vld [vmem:[%s9115 + $0x8] sm:$0xff]
    %v9118 = vld [vmem:[%s9115 + $0x10] sm:$0xff]
    %v9119 = vld [vmem:[%s9115 + $0x18] sm:$0xff]
    %v9120 = vld [vmem:[%s9115 + $0x20] sm:$0xff]
    %v9121 = vld [vmem:[%s9115 + $0x28] sm:$0xff]
    %v9122 = vld [vmem:[%s9115 + $0x30] sm:$0xff]
    %v9123 = vld [vmem:[%s9115 + $0x38] sm:$0xff]
    %v9124 = vld [vmem:[%s9115 + $0x40] sm:$0xff]
    %v9125 = vld [vmem:[%s9115 + $0x48] sm:$0xff]
    %v9126 = vld [vmem:[%s9115 + $0x50] sm:$0xff]
    %v9127 = vld [vmem:[%s9115 + $0x58] sm:$0xff]
    %v9128 = vld [vmem:[%s9115 + $0x60] sm:$0xff]
    %v9129 = vld [vmem:[%s9115 + $0x68] sm:$0xff]
    %v9130 = vld [vmem:[%s9115 + $0x70] sm:$0xff]
    %v9131 = vld [vmem:[%s9115 + $0x78] sm:$0xff]
    %v9132 = vld [vmem:[%s9115 + $0x80] sm:$0xff]
    %v9133 = vld [vmem:[%s9115 + $0x88] sm:$0xff]
    %v9134 = vld [vmem:[%s9115 + $0x90] sm:$0xff]
    %v9135 = vld [vmem:[%s9115 + $0x98] sm:$0xff]
    %v9136 = vld [vmem:[%s9115 + $0xa0] sm:$0xff]
    %v9137 = vld [vmem:[%s9115 + $0xa8] sm:$0xff]
    %v9138 = vld [vmem:[%s9115 + $0xb0] sm:$0xff]
    %v9139 = vld [vmem:[%s9115 + $0xb8] sm:$0xff]
    %v9140 = vld [vmem:[%s9115 + $0xc0] sm:$0xff]
    %v9141 = vld [vmem:[%s9115 + $0xc8] sm:$0xff]
    %v9142 = vld [vmem:[%s9115 + $0xd0] sm:$0xff]
    %v9143 = vld [vmem:[%s9115 + $0xd8] sm:$0xff]
    %v9144 = vld [vmem:[%s9115 + $0xe0] sm:$0xff]
    %v9145 = vld [vmem:[%s9115 + $0xe8] sm:$0xff]
    %v9146 = vld [vmem:[%s9115 + $0xf0] sm:$0xff]
    %v9147 = vld [vmem:[%s9115 + $0xf8] sm:$0xff]
    %v9150 = vrot.slane %v9114, 7
    %v9151 = vsel %vm6946, %v9150, %v9113
    %v9152 = vsel %vm6817, %v9151, 0
    %9154 = vmatprep.subr.mxu0 %v9117
    %9155 = vmatpush1.msra.mxu0 %v9116
    %9156 = vmatprep.subr.mxu0 %v9121
    %9157 = vmatpush1.msra.mxu0 %v9120
    %9158 = vmatprep.subr.mxu0 %v9125
    %9159 = vmatpush1.msra.mxu0 %v9124
    %9160 = vmatprep.subr.mxu0 %v9129
    %9161 = vmatpush1.msra.mxu0 %v9128
    %9162 = vmatprep.subr.mxu0 %v9133
    %9163 = vmatpush1.msra.mxu0 %v9132
    %9164 = vmatprep.subr.mxu0 %v9137
    %9165 = vmatpush1.msra.mxu0 %v9136
    %9166 = vmatprep.subr.mxu0 %v9141
    %9167 = vmatpush1.msra.mxu0 %v9140
    %9168 = vmatprep.subr.mxu0 %v9145
    %9169 = vmatpush1.msra.mxu0 %v9144
    %9170 = vmatprep.subr.mxu0 0.0
    %9171 = vmatpush1.msra.mxu0 0.0
    %9172 = vmatprep.subr.mxu0 0.0
    %9173 = vmatpush1.msra.mxu0 0.0
    %9174 = vmatprep.subr.mxu0 0.0
    %9175 = vmatpush1.msra.mxu0 0.0
    %9176 = vmatprep.subr.mxu0 0.0
    %9177 = vmatpush1.msra.mxu0 0.0
    %9178 = vmatprep.subr.mxu0 0.0
    %9179 = vmatpush1.msra.mxu0 0.0
    %9180 = vmatprep.subr.mxu0 0.0
    %9181 = vmatpush1.msra.mxu0 0.0
    %9182 = vmatprep.subr.mxu0 0.0
    %9183 = vmatpush1.msra.mxu0 0.0
    %9184 = vmatprep.subr.mxu0 0.0
    %9185 = vmatpush1.msra.mxu0 0.0
    %9186 = vmatprep.subr.mxu0 0.0
    %9187 = vmatpush1.msra.mxu0 0.0
    %9188 = vmatprep.subr.mxu0 0.0
    %9189 = vmatpush1.msra.mxu0 0.0
    %9190 = vmatprep.subr.mxu0 0.0
    %9191 = vmatpush1.msra.mxu0 0.0
    %9192 = vmatprep.subr.mxu0 0.0
    %9193 = vmatpush1.msra.mxu0 0.0
    %9194 = vmatprep.subr.mxu0 0.0
    %9195 = vmatpush1.msra.mxu0 0.0
    %9196 = vmatprep.subr.mxu0 0.0
    %9197 = vmatpush1.msra.mxu0 0.0
    %9198 = vmatprep.subr.mxu0 0.0
    %9199 = vmatpush1.msra.mxu0 0.0
    %9200 = vmatprep.subr.mxu0 0.0
    %9201 = vmatpush1.msra.mxu0 0.0
    %9202 = vmatprep.subr.mxu0 0.0
    %9203 = vmatpush1.msra.mxu0 0.0
    %9204 = vmatprep.subr.mxu0 0.0
    %9205 = vmatpush1.msra.mxu0 0.0
    %9206 = vmatprep.subr.mxu0 0.0
    %9207 = vmatpush1.msra.mxu0 0.0
    %9208 = vmatprep.subr.mxu0 0.0
    %9209 = vmatpush1.msra.mxu0 0.0
    %9210 = vmatprep.subr.mxu0 0.0
    %9211 = vmatpush1.msra.mxu0 0.0
    %9212 = vmatprep.subr.mxu0 0.0
    %9213 = vmatpush1.msra.mxu0 0.0
    %9214 = vmatprep.subr.mxu0 0.0
    %9215 = vmatpush1.msra.mxu0 0.0
    %9216 = vmatprep.subr.mxu0 0.0
    %9217 = vmatpush1.msra.mxu0 0.0
    %9218 = vmatprep.mubr.f32.mxu0 0.0
    %9219 = vmatmul.mubr.f32.gmra.mrb[0].mxu0 %v9152
    %v9220 = vpop.f32.mrb[0].mxu0
    %v9221 = vadd.f32 0.0, %v9220
    %v9222 = vpop.f32.mrb[0].mxu0
    %v9223 = vadd.f32 0.0, %v9222
    %9224 = vdwg.mxu0
    %9225 = vmatprep.subr.mxu0 %v9119
    %9226 = vmatpush1.msra.mxu0 %v9118
    %9227 = vmatprep.subr.mxu0 %v9123
    %9228 = vmatpush1.msra.mxu0 %v9122
    %9229 = vmatprep.subr.mxu0 %v9127
    %9230 = vmatpush1.msra.mxu0 %v9126
    %9231 = vmatprep.subr.mxu0 %v9131
    %9232 = vmatpush1.msra.mxu0 %v9130
    %9233 = vmatprep.subr.mxu0 %v9135
    %9234 = vmatpush1.msra.mxu0 %v9134
    %9235 = vmatprep.subr.mxu0 %v9139
    %9236 = vmatpush1.msra.mxu0 %v9138
    %9237 = vmatprep.subr.mxu0 %v9143
    %9238 = vmatpush1.msra.mxu0 %v9142
    %9239 = vmatprep.subr.mxu0 %v9147
    %9240 = vmatpush1.msra.mxu0 %v9146
    %9241 = vmatprep.subr.mxu0 0.0
    %9242 = vmatpush1.msra.mxu0 0.0
    %9243 = vmatprep.subr.mxu0 0.0
    %9244 = vmatpush1.msra.mxu0 0.0
    %9245 = vmatprep.subr.mxu0 0.0
    %9246 = vmatpush1.msra.mxu0 0.0
    %9247 = vmatprep.subr.mxu0 0.0
    %9248 = vmatpush1.msra.mxu0 0.0
    %9249 = vmatprep.subr.mxu0 0.0
    %9250 = vmatpush1.msra.mxu0 0.0
    %9251 = vmatprep.subr.mxu0 0.0
    %9252 = vmatpush1.msra.mxu0 0.0
    %9253 = vmatprep.subr.mxu0 0.0
    %9254 = vmatpush1.msra.mxu0 0.0
    %9255 = vmatprep.subr.mxu0 0.0
    %9256 = vmatpush1.msra.mxu0 0.0
    %9257 = vmatprep.subr.mxu0 0.0
    %9258 = vmatpush1.msra.mxu0 0.0
    %9259 = vmatprep.subr.mxu0 0.0
    %9260 = vmatpush1.msra.mxu0 0.0
    %9261 = vmatprep.subr.mxu0 0.0
    %9262 = vmatpush1.msra.mxu0 0.0
    %9263 = vmatprep.subr.mxu0 0.0
    %9264 = vmatpush1.msra.mxu0 0.0
    %9265 = vmatprep.subr.mxu0 0.0
    %9266 = vmatpush1.msra.mxu0 0.0
    %9267 = vmatprep.subr.mxu0 0.0
    %9268 = vmatpush1.msra.mxu0 0.0
    %9269 = vmatprep.subr.mxu0 0.0
    %9270 = vmatpush1.msra.mxu0 0.0
    %9271 = vmatprep.subr.mxu0 0.0
    %9272 = vmatpush1.msra.mxu0 0.0
    %9273 = vmatprep.subr.mxu0 0.0
    %9274 = vmatpush1.msra.mxu0 0.0
    %9275 = vmatprep.subr.mxu0 0.0
    %9276 = vmatpush1.msra.mxu0 0.0
    %9277 = vmatprep.subr.mxu0 0.0
    %9278 = vmatpush1.msra.mxu0 0.0
    %9279 = vmatprep.subr.mxu0 0.0
    %9280 = vmatpush1.msra.mxu0 0.0
    %9281 = vmatprep.subr.mxu0 0.0
    %9282 = vmatpush1.msra.mxu0 0.0
    %9283 = vmatprep.subr.mxu0 0.0
    %9284 = vmatpush1.msra.mxu0 0.0
    %9285 = vmatprep.subr.mxu0 0.0
    %9286 = vmatpush1.msra.mxu0 0.0
    %9287 = vmatprep.subr.mxu0 0.0
    %9288 = vmatpush1.msra.mxu0 0.0
    %9289 = vmatprep.mubr.f32.mxu0 0.0
    %9290 = vmatmul.mubr.f32.gmra.mrb[0].mxu0 %v9152
    %v9291 = vpop.f32.mrb[0].mxu0
    %v9292 = vadd.f32 0.0, %v9291
    %v9293 = vpop.f32.mrb[0].mxu0
    %v9294 = vadd.f32 0.0, %v9293
    %9295 = vdwg.mxu0
    %v9296 = vadd.f32 %v9108, %v9221
    %v9297 = vadd.f32 %v9109, %v9223
    %v9298 = vadd.f32 %v9110, %v9292
    %v9299 = vadd.f32 %v9111, %v9294
    %v9300 = vld [vmem:[%s9112 + $0x1] sm:$0x1]
    %v9301 = vld [vmem:[%s9112 + $0x11] sm:$0x1]
    %s9302 = scalar_lea.vmem [#allocation12], 3328
    %v9303 = vld [vmem:[%s9302] sm:$0xff]
    %v9304 = vld [vmem:[%s9302 + $0x8] sm:$0xff]
    %v9305 = vld [vmem:[%s9302 + $0x10] sm:$0xff]
    %v9306 = vld [vmem:[%s9302 + $0x18] sm:$0xff]
    %v9307 = vld [vmem:[%s9302 + $0x20] sm:$0xff]
    %v9308 = vld [vmem:[%s9302 + $0x28] sm:$0xff]
    %v9309 = vld [vmem:[%s9302 + $0x30] sm:$0xff]
    %v9310 = vld [vmem:[%s9302 + $0x38] sm:$0xff]
    %v9311 = vld [vmem:[%s9302 + $0x40] sm:$0xff]
    %v9312 = vld [vmem:[%s9302 + $0x48] sm:$0xff]
    %v9313 = vld [vmem:[%s9302 + $0x50] sm:$0xff]
    %v9314 = vld [vmem:[%s9302 + $0x58] sm:$0xff]
    %v9315 = vld [vmem:[%s9302 + $0x60] sm:$0xff]
    %v9316 = vld [vmem:[%s9302 + $0x68] sm:$0xff]
    %v9317 = vld [vmem:[%s9302 + $0x70] sm:$0xff]
    %v9318 = vld [vmem:[%s9302 + $0x78] sm:$0xff]
    %v9319 = vld [vmem:[%s9302 + $0x80] sm:$0xff]
    %v9320 = vld [vmem:[%s9302 + $0x88] sm:$0xff]
    %v9321 = vld [vmem:[%s9302 + $0x90] sm:$0xff]
    %v9322 = vld [vmem:[%s9302 + $0x98] sm:$0xff]
    %v9323 = vld [vmem:[%s9302 + $0xa0] sm:$0xff]
    %v9324 = vld [vmem:[%s9302 + $0xa8] sm:$0xff]
    %v9325 = vld [vmem:[%s9302 + $0xb0] sm:$0xff]
    %v9326 = vld [vmem:[%s9302 + $0xb8] sm:$0xff]
    %v9327 = vld [vmem:[%s9302 + $0xc0] sm:$0xff]
    %v9328 = vld [vmem:[%s9302 + $0xc8] sm:$0xff]
    %v9329 = vld [vmem:[%s9302 + $0xd0] sm:$0xff]
    %v9330 = vld [vmem:[%s9302 + $0xd8] sm:$0xff]
    %v9331 = vld [vmem:[%s9302 + $0xe0] sm:$0xff]
    %v9332 = vld [vmem:[%s9302 + $0xe8] sm:$0xff]
    %v9333 = vld [vmem:[%s9302 + $0xf0] sm:$0xff]
    %v9334 = vld [vmem:[%s9302 + $0xf8] sm:$0xff]
    %v9337 = vrot.slane %v9301, 7
    %v9338 = vsel %vm6946, %v9337, %v9300
    %v9339 = vsel %vm6817, %v9338, 0
    %9341 = vmatprep.subr.mxu0 %v9304
    %9342 = vmatpush1.msra.mxu0 %v9303
    %9343 = vmatprep.subr.mxu0 %v9308
    %9344 = vmatpush1.msra.mxu0 %v9307
    %9345 = vmatprep.subr.mxu0 %v9312
    %9346 = vmatpush1.msra.mxu0 %v9311
    %9347 = vmatprep.subr.mxu0 %v9316
    %9348 = vmatpush1.msra.mxu0 %v9315
    %9349 = vmatprep.subr.mxu0 %v9320
    %9350 = vmatpush1.msra.mxu0 %v9319
    %9351 = vmatprep.subr.mxu0 %v9324
    %9352 = vmatpush1.msra.mxu0 %v9323
    %9353 = vmatprep.subr.mxu0 %v9328
    %9354 = vmatpush1.msra.mxu0 %v9327
    %9355 = vmatprep.subr.mxu0 %v9332
    %9356 = vmatpush1.msra.mxu0 %v9331
    %9357 = vmatprep.subr.mxu0 0.0
    %9358 = vmatpush1.msra.mxu0 0.0
    %9359 = vmatprep.subr.mxu0 0.0
    %9360 = vmatpush1.msra.mxu0 0.0
    %9361 = vmatprep.subr.mxu0 0.0
    %9362 = vmatpush1.msra.mxu0 0.0
    %9363 = vmatprep.subr.mxu0 0.0
    %9364 = vmatpush1.msra.mxu0 0.0
    %9365 = vmatprep.subr.mxu0 0.0
    %9366 = vmatpush1.msra.mxu0 0.0
    %9367 = vmatprep.subr.mxu0 0.0
    %9368 = vmatpush1.msra.mxu0 0.0
    %9369 = vmatprep.subr.mxu0 0.0
    %9370 = vmatpush1.msra.mxu0 0.0
    %9371 = vmatprep.subr.mxu0 0.0
    %9372 = vmatpush1.msra.mxu0 0.0
    %9373 = vmatprep.subr.mxu0 0.0
    %9374 = vmatpush1.msra.mxu0 0.0
    %9375 = vmatprep.subr.mxu0 0.0
    %9376 = vmatpush1.msra.mxu0 0.0
    %9377 = vmatprep.subr.mxu0 0.0
    %9378 = vmatpush1.msra.mxu0 0.0
    %9379 = vmatprep.subr.mxu0 0.0
    %9380 = vmatpush1.msra.mxu0 0.0
    %9381 = vmatprep.subr.mxu0 0.0
    %9382 = vmatpush1.msra.mxu0 0.0
    %9383 = vmatprep.subr.mxu0 0.0
    %9384 = vmatpush1.msra.mxu0 0.0
    %9385 = vmatprep.subr.mxu0 0.0
    %9386 = vmatpush1.msra.mxu0 0.0
    %9387 = vmatprep.subr.mxu0 0.0
    %9388 = vmatpush1.msra.mxu0 0.0
    %9389 = vmatprep.subr.mxu0 0.0
    %9390 = vmatpush1.msra.mxu0 0.0
    %9391 = vmatprep.subr.mxu0 0.0
    %9392 = vmatpush1.msra.mxu0 0.0
    %9393 = vmatprep.subr.mxu0 0.0
    %9394 = vmatpush1.msra.mxu0 0.0
    %9395 = vmatprep.subr.mxu0 0.0
    %9396 = vmatpush1.msra.mxu0 0.0
    %9397 = vmatprep.subr.mxu0 0.0
    %9398 = vmatpush1.msra.mxu0 0.0
    %9399 = vmatprep.subr.mxu0 0.0
    %9400 = vmatpush1.msra.mxu0 0.0
    %9401 = vmatprep.subr.mxu0 0.0
    %9402 = vmatpush1.msra.mxu0 0.0
    %9403 = vmatprep.subr.mxu0 0.0
    %9404 = vmatpush1.msra.mxu0 0.0
    %9405 = vmatprep.mubr.f32.mxu0 0.0
    %9406 = vmatmul.mubr.f32.gmra.mrb[0].mxu0 %v9339
    %v9407 = vpop.f32.mrb[0].mxu0
    %v9408 = vadd.f32 0.0, %v9407
    %v9409 = vpop.f32.mrb[0].mxu0
    %v9410 = vadd.f32 0.0, %v9409
    %9411 = vdwg.mxu0
    %9412 = vmatprep.subr.mxu0 %v9306
    %9413 = vmatpush1.msra.mxu0 %v9305
    %9414 = vmatprep.subr.mxu0 %v9310
    %9415 = vmatpush1.msra.mxu0 %v9309
    %9416 = vmatprep.subr.mxu0 %v9314
    %9417 = vmatpush1.msra.mxu0 %v9313
    %9418 = vmatprep.subr.mxu0 %v9318
    %9419 = vmatpush1.msra.mxu0 %v9317
    %9420 = vmatprep.subr.mxu0 %v9322
    %9421 = vmatpush1.msra.mxu0 %v9321
    %9422 = vmatprep.subr.mxu0 %v9326
    %9423 = vmatpush1.msra.mxu0 %v9325
    %9424 = vmatprep.subr.mxu0 %v9330
    %9425 = vmatpush1.msra.mxu0 %v9329
    %9426 = vmatprep.subr.mxu0 %v9334
    %9427 = vmatpush1.msra.mxu0 %v9333
    %9428 = vmatprep.subr.mxu0 0.0
    %9429 = vmatpush1.msra.mxu0 0.0
    %9430 = vmatprep.subr.mxu0 0.0
    %9431 = vmatpush1.msra.mxu0 0.0
    %9432 = vmatprep.subr.mxu0 0.0
    %9433 = vmatpush1.msra.mxu0 0.0
    %9434 = vmatprep.subr.mxu0 0.0
    %9435 = vmatpush1.msra.mxu0 0.0
    %9436 = vmatprep.subr.mxu0 0.0
    %9437 = vmatpush1.msra.mxu0 0.0
    %9438 = vmatprep.subr.mxu0 0.0
    %9439 = vmatpush1.msra.mxu0 0.0
    %9440 = vmatprep.subr.mxu0 0.0
    %9441 = vmatpush1.msra.mxu0 0.0
    %9442 = vmatprep.subr.mxu0 0.0
    %9443 = vmatpush1.msra.mxu0 0.0
    %9444 = vmatprep.subr.mxu0 0.0
    %9445 = vmatpush1.msra.mxu0 0.0
    %9446 = vmatprep.subr.mxu0 0.0
    %9447 = vmatpush1.msra.mxu0 0.0
    %9448 = vmatprep.subr.mxu0 0.0
    %9449 = vmatpush1.msra.mxu0 0.0
    %9450 = vmatprep.subr.mxu0 0.0
    %9451 = vmatpush1.msra.mxu0 0.0
    %9452 = vmatprep.subr.mxu0 0.0
    %9453 = vmatpush1.msra.mxu0 0.0
    %9454 = vmatprep.subr.mxu0 0.0
    %9455 = vmatpush1.msra.mxu0 0.0
    %9456 = vmatprep.subr.mxu0 0.0
    %9457 = vmatpush1.msra.mxu0 0.0
    %9458 = vmatprep.subr.mxu0 0.0
    %9459 = vmatpush1.msra.mxu0 0.0
    %9460 = vmatprep.subr.mxu0 0.0
    %9461 = vmatpush1.msra.mxu0 0.0
    %9462 = vmatprep.subr.mxu0 0.0
    %9463 = vmatpush1.msra.mxu0 0.0
    %9464 = vmatprep.subr.mxu0 0.0
    %9465 = vmatpush1.msra.mxu0 0.0
    %9466 = vmatprep.subr.mxu0 0.0
    %9467 = vmatpush1.msra.mxu0 0.0
    %9468 = vmatprep.subr.mxu0 0.0
    %9469 = vmatpush1.msra.mxu0 0.0
    %9470 = vmatprep.subr.mxu0 0.0
    %9471 = vmatpush1.msra.mxu0 0.0
    %9472 = vmatprep.subr.mxu0 0.0
    %9473 = vmatpush1.msra.mxu0 0.0
    %9474 = vmatprep.subr.mxu0 0.0
    %9475 = vmatpush1.msra.mxu0 0.0
    %9476 = vmatprep.mubr.f32.mxu0 0.0
    %9477 = vmatmul.mubr.f32.gmra.mrb[0].mxu0 %v9339
    %v9478 = vpop.f32.mrb[0].mxu0
    %v9479 = vadd.f32 0.0, %v9478
    %v9480 = vpop.f32.mrb[0].mxu0
    %v9481 = vadd.f32 0.0, %v9480
    %9482 = vdwg.mxu0
    %v9483 = vadd.f32 %v9296, %v9408
    %v9484 = vadd.f32 %v9297, %v9410
    %v9485 = vadd.f32 %v9298, %v9479
    %v9486 = vadd.f32 %v9299, %v9481
    %v9487 = vld [vmem:[%s9112 + $0x2] sm:$0x1]
    %v9488 = vld [vmem:[%s9112 + $0x12] sm:$0x1]
    %s9489 = scalar_lea.vmem [#allocation12], 3584
    %v9490 = vld [vmem:[%s9489] sm:$0xff]
    %v9491 = vld [vmem:[%s9489 + $0x8] sm:$0xff]
    %v9492 = vld [vmem:[%s9489 + $0x10] sm:$0xff]
    %v9493 = vld [vmem:[%s9489 + $0x18] sm:$0xff]
    %v9494 = vld [vmem:[%s9489 + $0x20] sm:$0xff]
    %v9495 = vld [vmem:[%s9489 + $0x28] sm:$0xff]
    %v9496 = vld [vmem:[%s9489 + $0x30] sm:$0xff]
    %v9497 = vld [vmem:[%s9489 + $0x38] sm:$0xff]
    %v9498 = vld [vmem:[%s9489 + $0x40] sm:$0xff]
    %v9499 = vld [vmem:[%s9489 + $0x48] sm:$0xff]
    %v9500 = vld [vmem:[%s9489 + $0x50] sm:$0xff]
    %v9501 = vld [vmem:[%s9489 + $0x58] sm:$0xff]
    %v9502 = vld [vmem:[%s9489 + $0x60] sm:$0xff]
    %v9503 = vld [vmem:[%s9489 + $0x68] sm:$0xff]
    %v9504 = vld [vmem:[%s9489 + $0x70] sm:$0xff]
    %v9505 = vld [vmem:[%s9489 + $0x78] sm:$0xff]
    %v9506 = vld [vmem:[%s9489 + $0x80] sm:$0xff]
    %v9507 = vld [vmem:[%s9489 + $0x88] sm:$0xff]
    %v9508 = vld [vmem:[%s9489 + $0x90] sm:$0xff]
    %v9509 = vld [vmem:[%s9489 + $0x98] sm:$0xff]
    %v9510 = vld [vmem:[%s9489 + $0xa0] sm:$0xff]
    %v9511 = vld [vmem:[%s9489 + $0xa8] sm:$0xff]
    %v9512 = vld [vmem:[%s9489 + $0xb0] sm:$0xff]
    %v9513 = vld [vmem:[%s9489 + $0xb8] sm:$0xff]
    %v9514 = vld [vmem:[%s9489 + $0xc0] sm:$0xff]
    %v9515 = vld [vmem:[%s9489 + $0xc8] sm:$0xff]
    %v9516 = vld [vmem:[%s9489 + $0xd0] sm:$0xff]
    %v9517 = vld [vmem:[%s9489 + $0xd8] sm:$0xff]
    %v9518 = vld [vmem:[%s9489 + $0xe0] sm:$0xff]
    %v9519 = vld [vmem:[%s9489 + $0xe8] sm:$0xff]
    %v9520 = vld [vmem:[%s9489 + $0xf0] sm:$0xff]
    %v9521 = vld [vmem:[%s9489 + $0xf8] sm:$0xff]
    %v9524 = vrot.slane %v9488, 7
    %v9525 = vsel %vm6946, %v9524, %v9487
    %v9526 = vsel %vm6817, %v9525, 0
    %9528 = vmatprep.subr.mxu0 %v9491
    %9529 = vmatpush1.msra.mxu0 %v9490
    %9530 = vmatprep.subr.mxu0 %v9495
    %9531 = vmatpush1.msra.mxu0 %v9494
    %9532 = vmatprep.subr.mxu0 %v9499
    %9533 = vmatpush1.msra.mxu0 %v9498
    %9534 = vmatprep.subr.mxu0 %v9503
    %9535 = vmatpush1.msra.mxu0 %v9502
    %9536 = vmatprep.subr.mxu0 %v9507
    %9537 = vmatpush1.msra.mxu0 %v9506
    %9538 = vmatprep.subr.mxu0 %v9511
    %9539 = vmatpush1.msra.mxu0 %v9510
    %9540 = vmatprep.subr.mxu0 %v9515
    %9541 = vmatpush1.msra.mxu0 %v9514
    %9542 = vmatprep.subr.mxu0 %v9519
    %9543 = vmatpush1.msra.mxu0 %v9518
    %9544 = vmatprep.subr.mxu0 0.0
    %9545 = vmatpush1.msra.mxu0 0.0
    %9546 = vmatprep.subr.mxu0 0.0
    %9547 = vmatpush1.msra.mxu0 0.0
    %9548 = vmatprep.subr.mxu0 0.0
    %9549 = vmatpush1.msra.mxu0 0.0
    %9550 = vmatprep.subr.mxu0 0.0
    %9551 = vmatpush1.msra.mxu0 0.0
    %9552 = vmatprep.subr.mxu0 0.0
    %9553 = vmatpush1.msra.mxu0 0.0
    %9554 = vmatprep.subr.mxu0 0.0
    %9555 = vmatpush1.msra.mxu0 0.0
    %9556 = vmatprep.subr.mxu0 0.0
    %9557 = vmatpush1.msra.mxu0 0.0
    %9558 = vmatprep.subr.mxu0 0.0
    %9559 = vmatpush1.msra.mxu0 0.0
    %9560 = vmatprep.subr.mxu0 0.0
    %9561 = vmatpush1.msra.mxu0 0.0
    %9562 = vmatprep.subr.mxu0 0.0
    %9563 = vmatpush1.msra.mxu0 0.0
    %9564 = vmatprep.subr.mxu0 0.0
    %9565 = vmatpush1.msra.mxu0 0.0
    %9566 = vmatprep.subr.mxu0 0.0
    %9567 = vmatpush1.msra.mxu0 0.0
    %9568 = vmatprep.subr.mxu0 0.0
    %9569 = vmatpush1.msra.mxu0 0.0
    %9570 = vmatprep.subr.mxu0 0.0
    %9571 = vmatpush1.msra.mxu0 0.0
    %9572 = vmatprep.subr.mxu0 0.0
    %9573 = vmatpush1.msra.mxu0 0.0
    %9574 = vmatprep.subr.mxu0 0.0
    %9575 = vmatpush1.msra.mxu0 0.0
    %9576 = vmatprep.subr.mxu0 0.0
    %9577 = vmatpush1.msra.mxu0 0.0
    %9578 = vmatprep.subr.mxu0 0.0
    %9579 = vmatpush1.msra.mxu0 0.0
    %9580 = vmatprep.subr.mxu0 0.0
    %9581 = vmatpush1.msra.mxu0 0.0
    %9582 = vmatprep.subr.mxu0 0.0
    %9583 = vmatpush1.msra.mxu0 0.0
    %9584 = vmatprep.subr.mxu0 0.0
    %9585 = vmatpush1.msra.mxu0 0.0
    %9586 = vmatprep.subr.mxu0 0.0
    %9587 = vmatpush1.msra.mxu0 0.0
    %9588 = vmatprep.subr.mxu0 0.0
    %9589 = vmatpush1.msra.mxu0 0.0
    %9590 = vmatprep.subr.mxu0 0.0
    %9591 = vmatpush1.msra.mxu0 0.0
    %9592 = vmatprep.mubr.f32.mxu0 0.0
    %9593 = vmatmul.mubr.f32.gmra.mrb[0].mxu0 %v9526
    %v9594 = vpop.f32.mrb[0].mxu0
    %v9595 = vadd.f32 0.0, %v9594
    %v9596 = vpop.f32.mrb[0].mxu0
    %v9597 = vadd.f32 0.0, %v9596
    %9598 = vdwg.mxu0
    %9599 = vmatprep.subr.mxu0 %v9493
    %9600 = vmatpush1.msra.mxu0 %v9492
    %9601 = vmatprep.subr.mxu0 %v9497
    %9602 = vmatpush1.msra.mxu0 %v9496
    %9603 = vmatprep.subr.mxu0 %v9501
    %9604 = vmatpush1.msra.mxu0 %v9500
    %9605 = vmatprep.subr.mxu0 %v9505
    %9606 = vmatpush1.msra.mxu0 %v9504
    %9607 = vmatprep.subr.mxu0 %v9509
    %9608 = vmatpush1.msra.mxu0 %v9508
    %9609 = vmatprep.subr.mxu0 %v9513
    %9610 = vmatpush1.msra.mxu0 %v9512
    %9611 = vmatprep.subr.mxu0 %v9517
    %9612 = vmatpush1.msra.mxu0 %v9516
    %9613 = vmatprep.subr.mxu0 %v9521
    %9614 = vmatpush1.msra.mxu0 %v9520
    %9615 = vmatprep.subr.mxu0 0.0
    %9616 = vmatpush1.msra.mxu0 0.0
    %9617 = vmatprep.subr.mxu0 0.0
    %9618 = vmatpush1.msra.mxu0 0.0
    %9619 = vmatprep.subr.mxu0 0.0
    %9620 = vmatpush1.msra.mxu0 0.0
    %9621 = vmatprep.subr.mxu0 0.0
    %9622 = vmatpush1.msra.mxu0 0.0
    %9623 = vmatprep.subr.mxu0 0.0
    %9624 = vmatpush1.msra.mxu0 0.0
    %9625 = vmatprep.subr.mxu0 0.0
    %9626 = vmatpush1.msra.mxu0 0.0
    %9627 = vmatprep.subr.mxu0 0.0
    %9628 = vmatpush1.msra.mxu0 0.0
    %9629 = vmatprep.subr.mxu0 0.0
    %9630 = vmatpush1.msra.mxu0 0.0
    %9631 = vmatprep.subr.mxu0 0.0
    %9632 = vmatpush1.msra.mxu0 0.0
    %9633 = vmatprep.subr.mxu0 0.0
    %9634 = vmatpush1.msra.mxu0 0.0
    %9635 = vmatprep.subr.mxu0 0.0
    %9636 = vmatpush1.msra.mxu0 0.0
    %9637 = vmatprep.subr.mxu0 0.0
    %9638 = vmatpush1.msra.mxu0 0.0
    %9639 = vmatprep.subr.mxu0 0.0
    %9640 = vmatpush1.msra.mxu0 0.0
    %9641 = vmatprep.subr.mxu0 0.0
    %9642 = vmatpush1.msra.mxu0 0.0
    %9643 = vmatprep.subr.mxu0 0.0
    %9644 = vmatpush1.msra.mxu0 0.0
    %9645 = vmatprep.subr.mxu0 0.0
    %9646 = vmatpush1.msra.mxu0 0.0
    %9647 = vmatprep.subr.mxu0 0.0
    %9648 = vmatpush1.msra.mxu0 0.0
    %9649 = vmatprep.subr.mxu0 0.0
    %9650 = vmatpush1.msra.mxu0 0.0
    %9651 = vmatprep.subr.mxu0 0.0
    %9652 = vmatpush1.msra.mxu0 0.0
    %9653 = vmatprep.subr.mxu0 0.0
    %9654 = vmatpush1.msra.mxu0 0.0
    %9655 = vmatprep.subr.mxu0 0.0
    %9656 = vmatpush1.msra.mxu0 0.0
    %9657 = vmatprep.subr.mxu0 0.0
    %9658 = vmatpush1.msra.mxu0 0.0
    %9659 = vmatprep.subr.mxu0 0.0
    %9660 = vmatpush1.msra.mxu0 0.0
    %9661 = vmatprep.subr.mxu0 0.0
    %9662 = vmatpush1.msra.mxu0 0.0
    %9663 = vmatprep.mubr.f32.mxu0 0.0
    %9664 = vmatmul.mubr.f32.gmra.mrb[0].mxu0 %v9526
    %v9665 = vpop.f32.mrb[0].mxu0
    %v9666 = vadd.f32 0.0, %v9665
    %v9667 = vpop.f32.mrb[0].mxu0
    %v9668 = vadd.f32 0.0, %v9667
    %9669 = vdwg.mxu0
    %v9670 = vadd.f32 %v9483, %v9595
    %v9671 = vadd.f32 %v9484, %v9597
    %v9672 = vadd.f32 %v9485, %v9666
    %v9673 = vadd.f32 %v9486, %v9668
    %v9674 = vld [vmem:[%s9112 + $0x3] sm:$0x1]
    %v9675 = vld [vmem:[%s9112 + $0x13] sm:$0x1]
    %s9676 = scalar_lea.vmem [#allocation12], 3840
    %v9677 = vld [vmem:[%s9676] sm:$0xff]
    %v9678 = vld [vmem:[%s9676 + $0x8] sm:$0xff]
    %v9679 = vld [vmem:[%s9676 + $0x10] sm:$0xff]
    %v9680 = vld [vmem:[%s9676 + $0x18] sm:$0xff]
    %v9681 = vld [vmem:[%s9676 + $0x20] sm:$0xff]
    %v9682 = vld [vmem:[%s9676 + $0x28] sm:$0xff]
    %v9683 = vld [vmem:[%s9676 + $0x30] sm:$0xff]
    %v9684 = vld [vmem:[%s9676 + $0x38] sm:$0xff]
    %v9685 = vld [vmem:[%s9676 + $0x40] sm:$0xff]
    %v9686 = vld [vmem:[%s9676 + $0x48] sm:$0xff]
    %v9687 = vld [vmem:[%s9676 + $0x50] sm:$0xff]
    %v9688 = vld [vmem:[%s9676 + $0x58] sm:$0xff]
    %v9689 = vld [vmem:[%s9676 + $0x60] sm:$0xff]
    %v9690 = vld [vmem:[%s9676 + $0x68] sm:$0xff]
    %v9691 = vld [vmem:[%s9676 + $0x70] sm:$0xff]
    %v9692 = vld [vmem:[%s9676 + $0x78] sm:$0xff]
    %v9693 = vld [vmem:[%s9676 + $0x80] sm:$0xff]
    %v9694 = vld [vmem:[%s9676 + $0x88] sm:$0xff]
    %v9695 = vld [vmem:[%s9676 + $0x90] sm:$0xff]
    %v9696 = vld [vmem:[%s9676 + $0x98] sm:$0xff]
    %v9697 = vld [vmem:[%s9676 + $0xa0] sm:$0xff]
    %v9698 = vld [vmem:[%s9676 + $0xa8] sm:$0xff]
    %v9699 = vld [vmem:[%s9676 + $0xb0] sm:$0xff]
    %v9700 = vld [vmem:[%s9676 + $0xb8] sm:$0xff]
    %v9701 = vld [vmem:[%s9676 + $0xc0] sm:$0xff]
    %v9702 = vld [vmem:[%s9676 + $0xc8] sm:$0xff]
    %v9703 = vld [vmem:[%s9676 + $0xd0] sm:$0xff]
    %v9704 = vld [vmem:[%s9676 + $0xd8] sm:$0xff]
    %v9705 = vld [vmem:[%s9676 + $0xe0] sm:$0xff]
    %v9706 = vld [vmem:[%s9676 + $0xe8] sm:$0xff]
    %v9707 = vld [vmem:[%s9676 + $0xf0] sm:$0xff]
    %v9708 = vld [vmem:[%s9676 + $0xf8] sm:$0xff]
    %v9711 = vrot.slane %v9675, 7
    %v9712 = vsel %vm6946, %v9711, %v9674
    %v9713 = vsel %vm6817, %v9712, 0
    %9715 = vmatprep.subr.mxu0 %v9678
    %9716 = vmatpush1.msra.mxu0 %v9677
    %9717 = vmatprep.subr.mxu0 %v9682
    %9718 = vmatpush1.msra.mxu0 %v9681
    %9719 = vmatprep.subr.mxu0 %v9686
    %9720 = vmatpush1.msra.mxu0 %v9685
    %9721 = vmatprep.subr.mxu0 %v9690
    %9722 = vmatpush1.msra.mxu0 %v9689
    %9723 = vmatprep.subr.mxu0 %v9694
    %9724 = vmatpush1.msra.mxu0 %v9693
    %9725 = vmatprep.subr.mxu0 %v9698
    %9726 = vmatpush1.msra.mxu0 %v9697
    %9727 = vmatprep.subr.mxu0 %v9702
    %9728 = vmatpush1.msra.mxu0 %v9701
    %9729 = vmatprep.subr.mxu0 %v9706
    %9730 = vmatpush1.msra.mxu0 %v9705
    %9731 = vmatprep.subr.mxu0 0.0
    %9732 = vmatpush1.msra.mxu0 0.0
    %9733 = vmatprep.subr.mxu0 0.0
    %9734 = vmatpush1.msra.mxu0 0.0
    %9735 = vmatprep.subr.mxu0 0.0
    %9736 = vmatpush1.msra.mxu0 0.0
    %9737 = vmatprep.subr.mxu0 0.0
    %9738 = vmatpush1.msra.mxu0 0.0
    %9739 = vmatprep.subr.mxu0 0.0
    %9740 = vmatpush1.msra.mxu0 0.0
    %9741 = vmatprep.subr.mxu0 0.0
    %9742 = vmatpush1.msra.mxu0 0.0
    %9743 = vmatprep.subr.mxu0 0.0
    %9744 = vmatpush1.msra.mxu0 0.0
    %9745 = vmatprep.subr.mxu0 0.0
    %9746 = vmatpush1.msra.mxu0 0.0
    %9747 = vmatprep.subr.mxu0 0.0
    %9748 = vmatpush1.msra.mxu0 0.0
    %9749 = vmatprep.subr.mxu0 0.0
    %9750 = vmatpush1.msra.mxu0 0.0
    %9751 = vmatprep.subr.mxu0 0.0
    %9752 = vmatpush1.msra.mxu0 0.0
    %9753 = vmatprep.subr.mxu0 0.0
    %9754 = vmatpush1.msra.mxu0 0.0
    %9755 = vmatprep.subr.mxu0 0.0
    %9756 = vmatpush1.msra.mxu0 0.0
    %9757 = vmatprep.subr.mxu0 0.0
    %9758 = vmatpush1.msra.mxu0 0.0
    %9759 = vmatprep.subr.mxu0 0.0
    %9760 = vmatpush1.msra.mxu0 0.0
    %9761 = vmatprep.subr.mxu0 0.0
    %9762 = vmatpush1.msra.mxu0 0.0
    %9763 = vmatprep.subr.mxu0 0.0
    %9764 = vmatpush1.msra.mxu0 0.0
    %9765 = vmatprep.subr.mxu0 0.0
    %9766 = vmatpush1.msra.mxu0 0.0
    %9767 = vmatprep.subr.mxu0 0.0
    %9768 = vmatpush1.msra.mxu0 0.0
    %9769 = vmatprep.subr.mxu0 0.0
    %9770 = vmatpush1.msra.mxu0 0.0
    %9771 = vmatprep.subr.mxu0 0.0
    %9772 = vmatpush1.msra.mxu0 0.0
    %9773 = vmatprep.subr.mxu0 0.0
    %9774 = vmatpush1.msra.mxu0 0.0
    %9775 = vmatprep.subr.mxu0 0.0
    %9776 = vmatpush1.msra.mxu0 0.0
    %9777 = vmatprep.subr.mxu0 0.0
    %9778 = vmatpush1.msra.mxu0 0.0
    %9779 = vmatprep.mubr.f32.mxu0 0.0
    %9780 = vmatmul.mubr.f32.gmra.mrb[0].mxu0 %v9713
    %v9781 = vpop.f32.mrb[0].mxu0
    %v9782 = vadd.f32 0.0, %v9781
    %v9783 = vpop.f32.mrb[0].mxu0
    %v9784 = vadd.f32 0.0, %v9783
    %9785 = vdwg.mxu0
    %9786 = vmatprep.subr.mxu0 %v9680
    %9787 = vmatpush1.msra.mxu0 %v9679
    %9788 = vmatprep.subr.mxu0 %v9684
    %9789 = vmatpush1.msra.mxu0 %v9683
    %9790 = vmatprep.subr.mxu0 %v9688
    %9791 = vmatpush1.msra.mxu0 %v9687
    %9792 = vmatprep.subr.mxu0 %v9692
    %9793 = vmatpush1.msra.mxu0 %v9691
    %9794 = vmatprep.subr.mxu0 %v9696
    %9795 = vmatpush1.msra.mxu0 %v9695
    %9796 = vmatprep.subr.mxu0 %v9700
    %9797 = vmatpush1.msra.mxu0 %v9699
    %9798 = vmatprep.subr.mxu0 %v9704
    %9799 = vmatpush1.msra.mxu0 %v9703
    %9800 = vmatprep.subr.mxu0 %v9708
    %9801 = vmatpush1.msra.mxu0 %v9707
    %9802 = vmatprep.subr.mxu0 0.0
    %9803 = vmatpush1.msra.mxu0 0.0
    %9804 = vmatprep.subr.mxu0 0.0
    %9805 = vmatpush1.msra.mxu0 0.0
    %9806 = vmatprep.subr.mxu0 0.0
    %9807 = vmatpush1.msra.mxu0 0.0
    %9808 = vmatprep.subr.mxu0 0.0
    %9809 = vmatpush1.msra.mxu0 0.0
    %9810 = vmatprep.subr.mxu0 0.0
    %9811 = vmatpush1.msra.mxu0 0.0
    %9812 = vmatprep.subr.mxu0 0.0
    %9813 = vmatpush1.msra.mxu0 0.0
    %9814 = vmatprep.subr.mxu0 0.0
    %9815 = vmatpush1.msra.mxu0 0.0
    %9816 = vmatprep.subr.mxu0 0.0
    %9817 = vmatpush1.msra.mxu0 0.0
    %9818 = vmatprep.subr.mxu0 0.0
    %9819 = vmatpush1.msra.mxu0 0.0
    %9820 = vmatprep.subr.mxu0 0.0
    %9821 = vmatpush1.msra.mxu0 0.0
    %9822 = vmatprep.subr.mxu0 0.0
    %9823 = vmatpush1.msra.mxu0 0.0
    %9824 = vmatprep.subr.mxu0 0.0
    %9825 = vmatpush1.msra.mxu0 0.0
    %9826 = vmatprep.subr.mxu0 0.0
    %9827 = vmatpush1.msra.mxu0 0.0
    %9828 = vmatprep.subr.mxu0 0.0
    %9829 = vmatpush1.msra.mxu0 0.0
    %9830 = vmatprep.subr.mxu0 0.0
    %9831 = vmatpush1.msra.mxu0 0.0
    %9832 = vmatprep.subr.mxu0 0.0
    %9833 = vmatpush1.msra.mxu0 0.0
    %9834 = vmatprep.subr.mxu0 0.0
    %9835 = vmatpush1.msra.mxu0 0.0
    %9836 = vmatprep.subr.mxu0 0.0
    %9837 = vmatpush1.msra.mxu0 0.0
    %9838 = vmatprep.subr.mxu0 0.0
    %9839 = vmatpush1.msra.mxu0 0.0
    %9840 = vmatprep.subr.mxu0 0.0
    %9841 = vmatpush1.msra.mxu0 0.0
    %9842 = vmatprep.subr.mxu0 0.0
    %9843 = vmatpush1.msra.mxu0 0.0
    %9844 = vmatprep.subr.mxu0 0.0
    %9845 = vmatpush1.msra.mxu0 0.0
    %9846 = vmatprep.subr.mxu0 0.0
    %9847 = vmatpush1.msra.mxu0 0.0
    %9848 = vmatprep.subr.mxu0 0.0
    %9849 = vmatpush1.msra.mxu0 0.0
    %9850 = vmatprep.mubr.f32.mxu0 0.0
    %9851 = vmatmul.mubr.f32.gmra.mrb[0].mxu0 %v9713
    %v9852 = vpop.f32.mrb[0].mxu0
    %v9853 = vadd.f32 0.0, %v9852
    %v9854 = vpop.f32.mrb[0].mxu0
    %v9855 = vadd.f32 0.0, %v9854
    %9856 = vdwg.mxu0
    %v9857 = vadd.f32 %v9670, %v9782
    %v9858 = vadd.f32 %v9671, %v9784
    %v9859 = vadd.f32 %v9672, %v9853
    %v9860 = vadd.f32 %v9673, %v9855
    %v9861 = vld [vmem:[#allocation14] sm:$0xf]
    %v9863 = vlaneseq
    %v9864 = vshrl.u32 %v9863, 7
    %v9865 = vsub.s32 0, %v9864
    %v9866 = vrot.slane %v9861, %v9865
    %v9867 = vlaneseq
    %v9868 = vshrl.u32 %v9867, 7
    %v9869 = vsub.s32 1, %v9868
    %v9870 = vrot.slane %v9861, %v9869
    %v9871 = vlaneseq
    %v9872 = vshrl.u32 %v9871, 7
    %v9873 = vsub.s32 2, %v9872
    %v9874 = vrot.slane %v9861, %v9873
    %v9875 = vlaneseq
    %v9876 = vshrl.u32 %v9875, 7
    %v9877 = vsub.s32 3, %v9876
    %v9878 = vrot.slane %v9861, %v9877
    %v9883 = vadd.f32 %v9857, %v9866
    %v9884 = vadd.f32 %v9858, %v9870
    %v9885 = vadd.f32 %v9859, %v9874
    %v9886 = vadd.f32 %v9860, %v9878
    %v9887 = vmax.f32 %v9883, 0.0
    %v9888 = vmax.f32 %v9884, 0.0
    %v9889 = vmax.f32 %v9885, 0.0
    %v9890 = vmax.f32 %v9886, 0.0
    %v9891 = vld [vmem:[%s7] sm:$0xff]
    %v9892 = vld [vmem:[%s7 + $0x8] sm:$0xff]
    %v9893 = vld [vmem:[%s7 + $0x10] sm:$0xff]
    %v9894 = vld [vmem:[%s7 + $0x18] sm:$0xff]
    %v9895 = vld [vmem:[%s7 + $0x20] sm:$0xff]
    %v9896 = vld [vmem:[%s7 + $0x28] sm:$0xff]
    %v9897 = vld [vmem:[%s7 + $0x30] sm:$0xff]
    %v9898 = vld [vmem:[%s7 + $0x38] sm:$0xff]
    %v9899 = vld [vmem:[%s7 + $0x40] sm:$0xff]
    %v9900 = vld [vmem:[%s7 + $0x48] sm:$0xff]
    %v9901 = vld [vmem:[%s7 + $0x50] sm:$0xff]
    %v9902 = vld [vmem:[%s7 + $0x58] sm:$0xff]
    %v9903 = vld [vmem:[%s7 + $0x60] sm:$0xff]
    %v9904 = vld [vmem:[%s7 + $0x68] sm:$0xff]
    %v9905 = vld [vmem:[%s7 + $0x70] sm:$0xff]
    %v9906 = vld [vmem:[%s7 + $0x78] sm:$0xff]
    %v9907 = vld [vmem:[%s7 + $0x80] sm:$0xff]
    %v9908 = vld [vmem:[%s7 + $0x88] sm:$0xff]
    %v9909 = vld [vmem:[%s7 + $0x90] sm:$0xff]
    %v9910 = vld [vmem:[%s7 + $0x98] sm:$0xff]
    %v9911 = vld [vmem:[%s7 + $0xa0] sm:$0xff]
    %v9912 = vld [vmem:[%s7 + $0xa8] sm:$0xff]
    %v9913 = vld [vmem:[%s7 + $0xb0] sm:$0xff]
    %v9914 = vld [vmem:[%s7 + $0xb8] sm:$0xff]
    %v9915 = vld [vmem:[%s7 + $0xc0] sm:$0xff]
    %v9916 = vld [vmem:[%s7 + $0xc8] sm:$0xff]
    %v9917 = vld [vmem:[%s7 + $0xd0] sm:$0xff]
    %v9918 = vld [vmem:[%s7 + $0xd8] sm:$0xff]
    %v9919 = vld [vmem:[%s7 + $0xe0] sm:$0xff]
    %v9920 = vld [vmem:[%s7 + $0xe8] sm:$0xff]
    %v9921 = vld [vmem:[%s7 + $0xf0] sm:$0xff]
    %v9922 = vld [vmem:[%s7 + $0xf8] sm:$0xff]
    %v9923 = vld [vmem:[%s7 + $0x100] sm:$0xff]
    %v9924 = vld [vmem:[%s7 + $0x108] sm:$0xff]
    %v9925 = vld [vmem:[%s7 + $0x110] sm:$0xff]
    %v9926 = vld [vmem:[%s7 + $0x118] sm:$0xff]
    %v9927 = vld [vmem:[%s7 + $0x120] sm:$0xff]
    %v9928 = vld [vmem:[%s7 + $0x128] sm:$0xff]
    %v9929 = vld [vmem:[%s7 + $0x130] sm:$0xff]
    %v9930 = vld [vmem:[%s7 + $0x138] sm:$0xff]
    %v9931 = vld [vmem:[%s7 + $0x140] sm:$0xff]
    %v9932 = vld [vmem:[%s7 + $0x148] sm:$0xff]
    %v9933 = vld [vmem:[%s7 + $0x150] sm:$0xff]
    %v9934 = vld [vmem:[%s7 + $0x158] sm:$0xff]
    %v9935 = vld [vmem:[%s7 + $0x160] sm:$0xff]
    %v9936 = vld [vmem:[%s7 + $0x168] sm:$0xff]
    %v9937 = vld [vmem:[%s7 + $0x170] sm:$0xff]
    %v9938 = vld [vmem:[%s7 + $0x178] sm:$0xff]
    %v9939 = vld [vmem:[%s7 + $0x180] sm:$0xff]
    %v9940 = vld [vmem:[%s7 + $0x188] sm:$0xff]
    %v9941 = vld [vmem:[%s7 + $0x190] sm:$0xff]
    %v9942 = vld [vmem:[%s7 + $0x198] sm:$0xff]
    %v9943 = vld [vmem:[%s7 + $0x1a0] sm:$0xff]
    %v9944 = vld [vmem:[%s7 + $0x1a8] sm:$0xff]
    %v9945 = vld [vmem:[%s7 + $0x1b0] sm:$0xff]
    %v9946 = vld [vmem:[%s7 + $0x1b8] sm:$0xff]
    %v9947 = vld [vmem:[%s7 + $0x1c0] sm:$0xff]
    %v9948 = vld [vmem:[%s7 + $0x1c8] sm:$0xff]
    %v9949 = vld [vmem:[%s7 + $0x1d0] sm:$0xff]
    %v9950 = vld [vmem:[%s7 + $0x1d8] sm:$0xff]
    %v9951 = vld [vmem:[%s7 + $0x1e0] sm:$0xff]
    %v9952 = vld [vmem:[%s7 + $0x1e8] sm:$0xff]
    %v9953 = vld [vmem:[%s7 + $0x1f0] sm:$0xff]
    %v9954 = vld [vmem:[%s7 + $0x1f8] sm:$0xff]
    %v9955 = vld [vmem:[%s7 + $0x200] sm:$0xff]
    %v9956 = vld [vmem:[%s7 + $0x208] sm:$0xff]
    %v9957 = vld [vmem:[%s7 + $0x210] sm:$0xff]
    %v9958 = vld [vmem:[%s7 + $0x218] sm:$0xff]
    %v9959 = vld [vmem:[%s7 + $0x220] sm:$0xff]
    %v9960 = vld [vmem:[%s7 + $0x228] sm:$0xff]
    %v9961 = vld [vmem:[%s7 + $0x230] sm:$0xff]
    %v9962 = vld [vmem:[%s7 + $0x238] sm:$0xff]
    %v9963 = vld [vmem:[%s7 + $0x240] sm:$0xff]
    %v9964 = vld [vmem:[%s7 + $0x248] sm:$0xff]
    %v9965 = vld [vmem:[%s7 + $0x250] sm:$0xff]
    %v9966 = vld [vmem:[%s7 + $0x258] sm:$0xff]
    %v9967 = vld [vmem:[%s7 + $0x260] sm:$0xff]
    %v9968 = vld [vmem:[%s7 + $0x268] sm:$0xff]
    %v9969 = vld [vmem:[%s7 + $0x270] sm:$0xff]
    %v9970 = vld [vmem:[%s7 + $0x278] sm:$0xff]
    %v9971 = vld [vmem:[%s7 + $0x280] sm:$0xff]
    %v9972 = vld [vmem:[%s7 + $0x288] sm:$0xff]
    %v9973 = vld [vmem:[%s7 + $0x290] sm:$0xff]
    %v9974 = vld [vmem:[%s7 + $0x298] sm:$0xff]
    %v9975 = vld [vmem:[%s7 + $0x2a0] sm:$0xff]
    %v9976 = vld [vmem:[%s7 + $0x2a8] sm:$0xff]
    %v9977 = vld [vmem:[%s7 + $0x2b0] sm:$0xff]
    %v9978 = vld [vmem:[%s7 + $0x2b8] sm:$0xff]
    %v9979 = vld [vmem:[%s7 + $0x2c0] sm:$0xff]
    %v9980 = vld [vmem:[%s7 + $0x2c8] sm:$0xff]
    %v9981 = vld [vmem:[%s7 + $0x2d0] sm:$0xff]
    %v9982 = vld [vmem:[%s7 + $0x2d8] sm:$0xff]
    %v9983 = vld [vmem:[%s7 + $0x2e0] sm:$0xff]
    %v9984 = vld [vmem:[%s7 + $0x2e8] sm:$0xff]
    %v9985 = vld [vmem:[%s7 + $0x2f0] sm:$0xff]
    %v9986 = vld [vmem:[%s7 + $0x2f8] sm:$0xff]
    %v9987 = vld [vmem:[%s7 + $0x300] sm:$0xff]
    %v9988 = vld [vmem:[%s7 + $0x308] sm:$0xff]
    %v9989 = vld [vmem:[%s7 + $0x310] sm:$0xff]
    %v9990 = vld [vmem:[%s7 + $0x318] sm:$0xff]
    %v9991 = vld [vmem:[%s7 + $0x320] sm:$0xff]
    %v9992 = vld [vmem:[%s7 + $0x328] sm:$0xff]
    %v9993 = vld [vmem:[%s7 + $0x330] sm:$0xff]
    %v9994 = vld [vmem:[%s7 + $0x338] sm:$0xff]
    %v9995 = vld [vmem:[%s7 + $0x340] sm:$0xff]
    %v9996 = vld [vmem:[%s7 + $0x348] sm:$0xff]
    %v9997 = vld [vmem:[%s7 + $0x350] sm:$0xff]
    %v9998 = vld [vmem:[%s7 + $0x358] sm:$0xff]
    %v9999 = vld [vmem:[%s7 + $0x360] sm:$0xff]
    %v10000 = vld [vmem:[%s7 + $0x368] sm:$0xff]
    %v10001 = vld [vmem:[%s7 + $0x370] sm:$0xff]
    %v10002 = vld [vmem:[%s7 + $0x378] sm:$0xff]
    %v10003 = vld [vmem:[%s7 + $0x380] sm:$0xff]
    %v10004 = vld [vmem:[%s7 + $0x388] sm:$0xff]
    %v10005 = vld [vmem:[%s7 + $0x390] sm:$0xff]
    %v10006 = vld [vmem:[%s7 + $0x398] sm:$0xff]
    %v10007 = vld [vmem:[%s7 + $0x3a0] sm:$0xff]
    %v10008 = vld [vmem:[%s7 + $0x3a8] sm:$0xff]
    %v10009 = vld [vmem:[%s7 + $0x3b0] sm:$0xff]
    %v10010 = vld [vmem:[%s7 + $0x3b8] sm:$0xff]
    %v10011 = vld [vmem:[%s7 + $0x3c0] sm:$0xff]
    %v10012 = vld [vmem:[%s7 + $0x3c8] sm:$0xff]
    %v10013 = vld [vmem:[%s7 + $0x3d0] sm:$0xff]
    %v10014 = vld [vmem:[%s7 + $0x3d8] sm:$0xff]
    %v10015 = vld [vmem:[%s7 + $0x3e0] sm:$0xff]
    %v10016 = vld [vmem:[%s7 + $0x3e8] sm:$0xff]
    %v10017 = vld [vmem:[%s7 + $0x3f0] sm:$0xff]
    %v10018 = vld [vmem:[%s7 + $0x3f8] sm:$0xff]
    %v10019 = vld [vmem:[#allocation15] sm:$0x3]
    %v10021 = vlaneseq
    %v10022 = vshrl.u32 %v10021, 7
    %v10023 = vsub.s32 0, %v10022
    %v10024 = vrot.slane %v10019, %v10023
    %v10025 = vlaneseq
    %v10026 = vshrl.u32 %v10025, 7
    %v10027 = vsub.s32 1, %v10026
    %v10028 = vrot.slane %v10019, %v10027
    %10031 = vmatprep.subr.mxu0 %v9892
    %10032 = vmatpush1.msra.mxu0 %v9891
    %10033 = vmatprep.subr.mxu0 %v9894
    %10034 = vmatpush1.msra.mxu0 %v9893
    %10035 = vmatprep.subr.mxu0 %v9896
    %10036 = vmatpush1.msra.mxu0 %v9895
    %10037 = vmatprep.subr.mxu0 %v9898
    %10038 = vmatpush1.msra.mxu0 %v9897
    %10039 = vmatprep.subr.mxu0 %v9900
    %10040 = vmatpush1.msra.mxu0 %v9899
    %10041 = vmatprep.subr.mxu0 %v9902
    %10042 = vmatpush1.msra.mxu0 %v9901
    %10043 = vmatprep.subr.mxu0 %v9904
    %10044 = vmatpush1.msra.mxu0 %v9903
    %10045 = vmatprep.subr.mxu0 %v9906
    %10046 = vmatpush1.msra.mxu0 %v9905
    %10047 = vmatprep.subr.mxu0 %v9908
    %10048 = vmatpush1.msra.mxu0 %v9907
    %10049 = vmatprep.subr.mxu0 %v9910
    %10050 = vmatpush1.msra.mxu0 %v9909
    %10051 = vmatprep.subr.mxu0 %v9912
    %10052 = vmatpush1.msra.mxu0 %v9911
    %10053 = vmatprep.subr.mxu0 %v9914
    %10054 = vmatpush1.msra.mxu0 %v9913
    %10055 = vmatprep.subr.mxu0 %v9916
    %10056 = vmatpush1.msra.mxu0 %v9915
    %10057 = vmatprep.subr.mxu0 %v9918
    %10058 = vmatpush1.msra.mxu0 %v9917
    %10059 = vmatprep.subr.mxu0 %v9920
    %10060 = vmatpush1.msra.mxu0 %v9919
    %10061 = vmatprep.subr.mxu0 %v9922
    %10062 = vmatpush1.msra.mxu0 %v9921
    %10063 = vmatprep.subr.mxu0 %v9924
    %10064 = vmatpush1.msra.mxu0 %v9923
    %10065 = vmatprep.subr.mxu0 %v9926
    %10066 = vmatpush1.msra.mxu0 %v9925
    %10067 = vmatprep.subr.mxu0 %v9928
    %10068 = vmatpush1.msra.mxu0 %v9927
    %10069 = vmatprep.subr.mxu0 %v9930
    %10070 = vmatpush1.msra.mxu0 %v9929
    %10071 = vmatprep.subr.mxu0 %v9932
    %10072 = vmatpush1.msra.mxu0 %v9931
    %10073 = vmatprep.subr.mxu0 %v9934
    %10074 = vmatpush1.msra.mxu0 %v9933
    %10075 = vmatprep.subr.mxu0 %v9936
    %10076 = vmatpush1.msra.mxu0 %v9935
    %10077 = vmatprep.subr.mxu0 %v9938
    %10078 = vmatpush1.msra.mxu0 %v9937
    %10079 = vmatprep.subr.mxu0 %v9940
    %10080 = vmatpush1.msra.mxu0 %v9939
    %10081 = vmatprep.subr.mxu0 %v9942
    %10082 = vmatpush1.msra.mxu0 %v9941
    %10083 = vmatprep.subr.mxu0 %v9944
    %10084 = vmatpush1.msra.mxu0 %v9943
    %10085 = vmatprep.subr.mxu0 %v9946
    %10086 = vmatpush1.msra.mxu0 %v9945
    %10087 = vmatprep.subr.mxu0 %v9948
    %10088 = vmatpush1.msra.mxu0 %v9947
    %10089 = vmatprep.subr.mxu0 %v9950
    %10090 = vmatpush1.msra.mxu0 %v9949
    %10091 = vmatprep.subr.mxu0 %v9952
    %10092 = vmatpush1.msra.mxu0 %v9951
    %10093 = vmatprep.subr.mxu0 %v9954
    %10094 = vmatpush1.msra.mxu0 %v9953
    %10095 = vmatprep.mubr.f32.mxu0 %v9888
    %10096 = vmatmul.mubr.f32.gmra.mrb[0].mxu0 %v9887
    %v10097 = vpop.f32.mrb[0].mxu0
    %v10098 = vadd.f32 %v10024, %v10097
    %v10099 = vpop.f32.mrb[0].mxu0
    %v10100 = vadd.f32 %v10028, %v10099
    %10101 = vdwg.mxu0
    %10102 = vmatprep.subr.mxu0 %v9956
    %10103 = vmatpush1.msra.mxu0 %v9955
    %10104 = vmatprep.subr.mxu0 %v9958
    %10105 = vmatpush1.msra.mxu0 %v9957
    %10106 = vmatprep.subr.mxu0 %v9960
    %10107 = vmatpush1.msra.mxu0 %v9959
    %10108 = vmatprep.subr.mxu0 %v9962
    %10109 = vmatpush1.msra.mxu0 %v9961
    %10110 = vmatprep.subr.mxu0 %v9964
    %10111 = vmatpush1.msra.mxu0 %v9963
    %10112 = vmatprep.subr.mxu0 %v9966
    %10113 = vmatpush1.msra.mxu0 %v9965
    %10114 = vmatprep.subr.mxu0 %v9968
    %10115 = vmatpush1.msra.mxu0 %v9967
    %10116 = vmatprep.subr.mxu0 %v9970
    %10117 = vmatpush1.msra.mxu0 %v9969
    %10118 = vmatprep.subr.mxu0 %v9972
    %10119 = vmatpush1.msra.mxu0 %v9971
    %10120 = vmatprep.subr.mxu0 %v9974
    %10121 = vmatpush1.msra.mxu0 %v9973
    %10122 = vmatprep.subr.mxu0 %v9976
    %10123 = vmatpush1.msra.mxu0 %v9975
    %10124 = vmatprep.subr.mxu0 %v9978
    %10125 = vmatpush1.msra.mxu0 %v9977
    %10126 = vmatprep.subr.mxu0 %v9980
    %10127 = vmatpush1.msra.mxu0 %v9979
    %10128 = vmatprep.subr.mxu0 %v9982
    %10129 = vmatpush1.msra.mxu0 %v9981
    %10130 = vmatprep.subr.mxu0 %v9984
    %10131 = vmatpush1.msra.mxu0 %v9983
    %10132 = vmatprep.subr.mxu0 %v9986
    %10133 = vmatpush1.msra.mxu0 %v9985
    %10134 = vmatprep.subr.mxu0 %v9988
    %10135 = vmatpush1.msra.mxu0 %v9987
    %10136 = vmatprep.subr.mxu0 %v9990
    %10137 = vmatpush1.msra.mxu0 %v9989
    %10138 = vmatprep.subr.mxu0 %v9992
    %10139 = vmatpush1.msra.mxu0 %v9991
    %10140 = vmatprep.subr.mxu0 %v9994
    %10141 = vmatpush1.msra.mxu0 %v9993
    %10142 = vmatprep.subr.mxu0 %v9996
    %10143 = vmatpush1.msra.mxu0 %v9995
    %10144 = vmatprep.subr.mxu0 %v9998
    %10145 = vmatpush1.msra.mxu0 %v9997
    %10146 = vmatprep.subr.mxu0 %v10000
    %10147 = vmatpush1.msra.mxu0 %v9999
    %10148 = vmatprep.subr.mxu0 %v10002
    %10149 = vmatpush1.msra.mxu0 %v10001
    %10150 = vmatprep.subr.mxu0 %v10004
    %10151 = vmatpush1.msra.mxu0 %v10003
    %10152 = vmatprep.subr.mxu0 %v10006
    %10153 = vmatpush1.msra.mxu0 %v10005
    %10154 = vmatprep.subr.mxu0 %v10008
    %10155 = vmatpush1.msra.mxu0 %v10007
    %10156 = vmatprep.subr.mxu0 %v10010
    %10157 = vmatpush1.msra.mxu0 %v10009
    %10158 = vmatprep.subr.mxu0 %v10012
    %10159 = vmatpush1.msra.mxu0 %v10011
    %10160 = vmatprep.subr.mxu0 %v10014
    %10161 = vmatpush1.msra.mxu0 %v10013
    %10162 = vmatprep.subr.mxu0 %v10016
    %10163 = vmatpush1.msra.mxu0 %v10015
    %10164 = vmatprep.subr.mxu0 %v10018
    %10165 = vmatpush1.msra.mxu0 %v10017
    %10166 = vmatprep.mubr.f32.mxu0 %v9890
    %10167 = vmatmul.mubr.f32.gmra.mrb[0].mxu0 %v9889
    %v10168 = vpop.f32.mrb[0].mxu0
    %v10169 = vadd.f32 %v10098, %v10168
    %v10170 = vpop.f32.mrb[0].mxu0
    %v10171 = vadd.f32 %v10100, %v10170
    %10172 = vdwg.mxu0
    %v10173 = vmax.f32 %v10169, 0.0
    %v10174 = vmax.f32 %v10171, 0.0
    %v10175 = vld [vmem:[%s9] sm:$0xff]
    %v10176 = vld [vmem:[%s9 + $0x8] sm:$0xff]
    %v10177 = vld [vmem:[%s9 + $0x10] sm:$0xff]
    %v10178 = vld [vmem:[%s9 + $0x18] sm:$0xff]
    %v10179 = vld [vmem:[%s9 + $0x20] sm:$0xff]
    %v10180 = vld [vmem:[%s9 + $0x28] sm:$0xff]
    %v10181 = vld [vmem:[%s9 + $0x30] sm:$0xff]
    %v10182 = vld [vmem:[%s9 + $0x38] sm:$0xff]
    %v10183 = vld [vmem:[%s9 + $0x40] sm:$0xff]
    %v10184 = vld [vmem:[%s9 + $0x48] sm:$0xff]
    %v10185 = vld [vmem:[%s9 + $0x50] sm:$0xff]
    %v10186 = vld [vmem:[%s9 + $0x58] sm:$0xff]
    %v10187 = vld [vmem:[%s9 + $0x60] sm:$0xff]
    %v10188 = vld [vmem:[%s9 + $0x68] sm:$0xff]
    %v10189 = vld [vmem:[%s9 + $0x70] sm:$0xff]
    %v10190 = vld [vmem:[%s9 + $0x78] sm:$0xff]
    %v10191 = vld [vmem:[%s9 + $0x80] sm:$0xff]
    %v10192 = vld [vmem:[%s9 + $0x88] sm:$0xff]
    %v10193 = vld [vmem:[%s9 + $0x90] sm:$0xff]
    %v10194 = vld [vmem:[%s9 + $0x98] sm:$0xff]
    %v10195 = vld [vmem:[%s9 + $0xa0] sm:$0xff]
    %v10196 = vld [vmem:[%s9 + $0xa8] sm:$0xff]
    %v10197 = vld [vmem:[%s9 + $0xb0] sm:$0xff]
    %v10198 = vld [vmem:[%s9 + $0xb8] sm:$0xff]
    %v10199 = vld [vmem:[%s9 + $0xc0] sm:$0xff]
    %v10200 = vld [vmem:[%s9 + $0xc8] sm:$0xff]
    %v10201 = vld [vmem:[%s9 + $0xd0] sm:$0xff]
    %v10202 = vld [vmem:[%s9 + $0xd8] sm:$0xff]
    %v10203 = vld [vmem:[%s9 + $0xe0] sm:$0xff]
    %v10204 = vld [vmem:[%s9 + $0xe8] sm:$0xff]
    %v10205 = vld [vmem:[%s9 + $0xf0] sm:$0xff]
    %v10206 = vld [vmem:[%s9 + $0xf8] sm:$0xff]
    %v10207 = vld [vmem:[#allocation17] sm:$0x1]
    %v10209 = vlaneseq
    %v10210 = vshrl.u32 %v10209, 7
    %v10211 = vsub.s32 0, %v10210
    %v10212 = vrot.slane %v10207, %v10211
    %10214 = vmatprep.subr.mxu0 0.0
    %10215 = vmatpush1.msra.mxu0 %v10175
    %10216 = vmatprep.subr.mxu0 0.0
    %10217 = vmatpush1.msra.mxu0 %v10176
    %10218 = vmatprep.subr.mxu0 0.0
    %10219 = vmatpush1.msra.mxu0 %v10177
    %10220 = vmatprep.subr.mxu0 0.0
    %10221 = vmatpush1.msra.mxu0 %v10178
    %10222 = vmatprep.subr.mxu0 0.0
    %10223 = vmatpush1.msra.mxu0 %v10179
    %10224 = vmatprep.subr.mxu0 0.0
    %10225 = vmatpush1.msra.mxu0 %v10180
    %10226 = vmatprep.subr.mxu0 0.0
    %10227 = vmatpush1.msra.mxu0 %v10181
    %10228 = vmatprep.subr.mxu0 0.0
    %10229 = vmatpush1.msra.mxu0 %v10182
    %10230 = vmatprep.subr.mxu0 0.0
    %10231 = vmatpush1.msra.mxu0 %v10183
    %10232 = vmatprep.subr.mxu0 0.0
    %10233 = vmatpush1.msra.mxu0 %v10184
    %10234 = vmatprep.subr.mxu0 0.0
    %10235 = vmatpush1.msra.mxu0 %v10185
    %10236 = vmatprep.subr.mxu0 0.0
    %10237 = vmatpush1.msra.mxu0 %v10186
    %10238 = vmatprep.subr.mxu0 0.0
    %10239 = vmatpush1.msra.mxu0 %v10187
    %10240 = vmatprep.subr.mxu0 0.0
    %10241 = vmatpush1.msra.mxu0 %v10188
    %10242 = vmatprep.subr.mxu0 0.0
    %10243 = vmatpush1.msra.mxu0 %v10189
    %10244 = vmatprep.subr.mxu0 0.0
    %10245 = vmatpush1.msra.mxu0 %v10190
    %10246 = vmatprep.subr.mxu0 0.0
    %10247 = vmatpush1.msra.mxu0 %v10191
    %10248 = vmatprep.subr.mxu0 0.0
    %10249 = vmatpush1.msra.mxu0 %v10192
    %10250 = vmatprep.subr.mxu0 0.0
    %10251 = vmatpush1.msra.mxu0 %v10193
    %10252 = vmatprep.subr.mxu0 0.0
    %10253 = vmatpush1.msra.mxu0 %v10194
    %10254 = vmatprep.subr.mxu0 0.0
    %10255 = vmatpush1.msra.mxu0 %v10195
    %10256 = vmatprep.subr.mxu0 0.0
    %10257 = vmatpush1.msra.mxu0 %v10196
    %10258 = vmatprep.subr.mxu0 0.0
    %10259 = vmatpush1.msra.mxu0 %v10197
    %10260 = vmatprep.subr.mxu0 0.0
    %10261 = vmatpush1.msra.mxu0 %v10198
    %10262 = vmatprep.subr.mxu0 0.0
    %10263 = vmatpush1.msra.mxu0 %v10199
    %10264 = vmatprep.subr.mxu0 0.0
    %10265 = vmatpush1.msra.mxu0 %v10200
    %10266 = vmatprep.subr.mxu0 0.0
    %10267 = vmatpush1.msra.mxu0 %v10201
    %10268 = vmatprep.subr.mxu0 0.0
    %10269 = vmatpush1.msra.mxu0 %v10202
    %10270 = vmatprep.subr.mxu0 0.0
    %10271 = vmatpush1.msra.mxu0 %v10203
    %10272 = vmatprep.subr.mxu0 0.0
    %10273 = vmatpush1.msra.mxu0 %v10204
    %10274 = vmatprep.subr.mxu0 0.0
    %10275 = vmatpush1.msra.mxu0 %v10205
    %10276 = vmatprep.subr.mxu0 0.0
    %10277 = vmatpush1.msra.mxu0 %v10206
    %10278 = vmatprep.mubr.f32.mxu0 %v10174
    %10279 = vmatmul.mubr.f32.gmra.mrb[0].mxu0 %v10173
    %v10280 = vpop.f32.mrb[0].mxu0
    %v10281 = vadd.f32 %v10212, %v10280
    %v10282 = vpop.f32.mrb[0].mxu0
    %10283 = vdwg.mxu0
    %vm10284 = vcmask 25600
    %10285 = vst.msk [vmem:[#allocation18] sm:$0x3] %vm10284, %v10281
    // Predicated region
    $region74: #{net_forward.1} parent=1 // pred_check
      _
    $region75: #{net_forward.1} parent=1 // pred_check_branch
      %10287 = sbr.rel (0) target = $region77
    $region76: #{net_forward.1} parent=1 // pred_region
      %s10289 = ssub.s32 32, 32
      %10290 = vsyncadd [#allocation8], %s10289
      %s10292 = sshll.u32 [#allocation18], 4
      %s10293 = int_to_ptr.vmem [resolvable:$true] %s10292
      %10295 = dma.vmem_to_hbm [thread:$0]  %s10293, 32, %s11, [#allocation8]
    $region77: #{net_forward.1} parent=1 // pred_fallthru
      _
    // Predicated region
    $region78: #{net_forward.1} parent=1 // pred_check
      _
    $region79: #{net_forward.1} parent=1 // pred_check_branch
      %10297 = sbr.rel (0) target = $region81
    $region80: #{net_forward.1} parent=1 // pred_region
      %10298 = dma.done [#allocation8], 32
    $region81: #{net_forward.1} parent=1 // pred_fallthru
      _
    %10299 = vsyncpa [#allocation7], 1
    %10300 = vsyncpa [#allocation10], 1
    %10301 = vsyncpa [#allocation13], 1
    %10302 = vsyncpa [#allocation16], 1
    %10303 = vsyncpa [#allocation8], 1

</llo_original>
